<compile_context>
chip_gen: v7x
topology: tpu7x:2x2x1
jax: 0.10.0
libtpu: 0.0.40
codegen_flags: <defaults>
</compile_context>

<pallas_src>
import jax
import jax.numpy as jnp
from jax import lax
from jax.experimental import pallas as pl
from jax.experimental.pallas import tpu as pltpu

# Module constants (from the PyTorch file).
CLASSES = 10
NUM_HIDDEN = 256
NUM_INPUTS = 28
NUM_LAYER = 2          # hard-coded as two explicit stacked cells below
SEQ_LEN = 28


def _rnn_kernel(x_ref, wih0_ref, whh0_ref, b0_ref,
                wih1_ref, whh1_ref, b1_ref, wfc_ref, bfc_ref,
                out_ref, xp_ref):
    """Single invocation: preamble projection + unrolled recurrence + fused FC."""
    TB, I = x_ref.shape           # (T*Bp, I), bf16
    T, H, Cp = wfc_ref.shape      # (T, H, 128), bf16
    Bp = TB // T

    # ---- Preamble: hoisted non-recurrent layer-0 input projection -----------
    # One (T*Bp, I) @ (I, H) bf16 matmul, bias folded in once (off the serial
    # path); f32 accumulation into the VMEM scratch.
    xp_ref[...] = (jnp.dot(x_ref[...], wih0_ref[...],
                           preferred_element_type=jnp.float32)
                   + b0_ref[...])

    # Small hoisted broadcast only (2 vregs); weight tiles are NOT hoisted —
    # they are read from their VMEM refs inside the loop at each dot so no
    # 64/128-vreg value stays live across the 28 unrolled iterations.
    b1 = jnp.broadcast_to(b1_ref[...], (Bp, H))

    def step(t, carry):
        h0, h1, acc = carry
        row = pl.multiple_of(t * Bp, Bp)

        # Recurrent matmul of layer 1 depends only on h1_{t-1}: issue it first
        # so it overlaps layer-0's matmul + tanh on the serial chain.
        rec1 = jnp.dot(h1.astype(jnp.bfloat16), whh1_ref[...],
                       preferred_element_type=jnp.float32)

        # Layer 0: only the recurrent matmul remains on the serial path.
        h0 = jnp.tanh(xp_ref[pl.ds(row, Bp), :]
                      + jnp.dot(h0.astype(jnp.bfloat16), whh0_ref[...],
                                preferred_element_type=jnp.float32))

        # Layer 1: only the tanh(h0)-dependent K=256 matmul is serialized.
        h1 = jnp.tanh(jnp.dot(h0.astype(jnp.bfloat16), wih1_ref[...],
                              preferred_element_type=jnp.float32)
                      + rec1 + b1)

        # Fused flatten + Linear (off the recurrent dependency chain; filler).
        acc = acc + jnp.dot(h1.astype(jnp.bfloat16), wfc_ref[t],
                            preferred_element_type=jnp.float32)
        return h0, h1, acc

    init = (jnp.zeros((Bp, H), jnp.float32),
            jnp.zeros((Bp, H), jnp.float32),
            jnp.zeros((Bp, Cp), jnp.float32))
    _, _, acc = lax.fori_loop(0, T, step, init, unroll=True)

    out_ref[...] = acc + bfc_ref[...]


@jax.jit
def rnn_forward(x, params):
    """x: (B, T, I) float32 batch-first (PyTorch convention). Returns (B, CLASSES)."""
    B, T, I = x.shape
    H = NUM_HIDDEN
    C = CLASSES
    Bp = ((B + 7) // 8) * 8       # pad batch to a full sublane tile
    Cp = 128                      # pad FC output lanes 10 -> 128 (lane-dense)

    bf16 = jnp.bfloat16

    # Time-major, batch-padded, flattened to (T*Bp, I) for the preamble matmul.
    x_tm = jnp.transpose(x, (1, 0, 2))                              # (T, B, I)
    x_tm = jnp.pad(x_tm, ((0, 0), (0, Bp - B), (0, 0)))             # (T, Bp, I)
    x2d = x_tm.reshape(T * Bp, I).astype(bf16)

    # Weights as bf16 matmul operands (f32 accumulation in-kernel).
    wih0 = params["w_ih0"].astype(bf16)
    whh0 = params["w_hh0"].astype(bf16)
    wih1 = params["w_ih1"].astype(bf16)
    whh1 = params["w_hh1"].astype(bf16)

    # FC weight as per-timestep (H, Cp) slices, lane-padded to 128.
    wfc = params["w_fc"].reshape(T, H, C)
    wfc = jnp.pad(wfc, ((0, 0), (0, 0), (0, Cp - C))).astype(bf16)  # (T, H, Cp)
    bfc = jnp.pad(params["b_fc"], ((0, 0), (0, Cp - C)))            # (1, Cp) f32

    def full(shape):
        return pl.BlockSpec(shape, lambda i: (0,) * len(shape))

    out = pl.pallas_call(
        _rnn_kernel,
        out_shape=jax.ShapeDtypeStruct((Bp, Cp), jnp.float32),
        grid_spec=pltpu.PrefetchScalarGridSpec(
            num_scalar_prefetch=0,
            grid=(1,),                                   # single invocation
            in_specs=[
                full((T * Bp, I)),    # x, time-major rows (T*Bp, I) bf16
                full((I, H)),         # W_ih layer 0 (bf16)
                full((H, H)),         # W_hh layer 0 (bf16)
                full((1, H)),         # b layer 0 (b_ih + b_hh, f32)
                full((H, H)),         # W_ih layer 1 (bf16)
                full((H, H)),         # W_hh layer 1 (bf16)
                full((1, H)),         # b layer 1 (b_ih + b_hh, f32)
                full((T, H, Cp)),     # FC weight slices, lane-padded (bf16)
                full((1, Cp)),        # FC bias, lane-padded (f32)
            ],
            out_specs=full((Bp, Cp)),
            scratch_shapes=[pltpu.VMEM((T * Bp, H), jnp.float32)],  # hoisted x-proj
        ),
        compiler_params=pltpu.CompilerParams(
            dimension_semantics=("arbitrary",),
            vmem_limit_bytes=32 * 1024 * 1024),          # headroom incl. v5e
    )(x2d, wih0, whh0, params["b0"],
      wih1, whh1, params["b1"], wfc, bfc)

    return out[:B, :C]


def init_params(key):
    """Deterministic init mirroring PyTorch default U(-1/sqrt(fan), 1/sqrt(fan))."""
    H, I, T, C = NUM_HIDDEN, NUM_INPUTS, SEQ_LEN, CLASSES
    ks = jax.random.split(key, 9)
    k_rnn = 1.0 / jnp.sqrt(jnp.float32(H))
    k_fc = 1.0 / jnp.sqrt(jnp.float32(H * T))

    def u(k, shape, bound):
        return jax.random.uniform(k, shape, jnp.float32, -bound, bound)

    return {
        # stored transposed (in_features, out_features) for row-major matmul
        "w_ih0": u(ks[0], (I, H), k_rnn),
        "w_hh0": u(ks[1], (H, H), k_rnn),
        "b0":    u(ks[2], (1, H), k_rnn) + u(ks[3], (1, H), k_rnn),   # b_ih_l0 + b_hh_l0
        "w_ih1": u(ks[4], (H, H), k_rnn),
        "w_hh1": u(ks[5], (H, H), k_rnn),
        "b1":    u(ks[6], (1, H), k_rnn) + u(ks[7], (1, H), k_rnn),   # b_ih_l1 + b_hh_l1
        "w_fc":  u(ks[8], (T * H, C), k_fc),
        "b_fc":  jnp.zeros((1, C), jnp.float32),
    }


def rnn_forward_ref(x, params):
    """Pure-JAX reference of the PyTorch forward pass."""
    B, T, I = x.shape
    H = NUM_HIDDEN
    h0 = jnp.zeros((B, H), jnp.float32)
    h1 = jnp.zeros((B, H), jnp.float32)
    outs = []
    for t in range(T):
        h0 = jnp.tanh(x[:, t, :] @ params["w_ih0"] + h0 @ params["w_hh0"] + params["b0"])
        h1 = jnp.tanh(h0 @ params["w_ih1"] + h1 @ params["w_hh1"] + params["b1"])
        outs.append(h1)
    out = jnp.stack(outs, axis=1).reshape(B, T * H)
    return out @ params["w_fc"] + params["b_fc"]


if __name__ == "__main__":
    key = jax.random.PRNGKey(0)
    k_p, k_x = jax.random.split(key)
    params = init_params(k_p)

    batch = 2
    x = jax.random.normal(k_x, (batch, SEQ_LEN, NUM_INPUTS), jnp.float32)

    out = jax.block_until_ready(rnn_forward(x, params))
    ref = rnn_forward_ref(x, params)

    assert out.shape == (batch, CLASSES)
    max_err = float(jnp.max(jnp.abs(out - ref)))
    assert max_err < 5e-2, f"mismatch vs reference: {max_err}"

    print("KERNEL_OK")
</pallas_src>

<mosaic_0001>
module attributes {stable_mosaic.version = 11 : i64} {
  func.func @_rnn_kernel(%arg0: i32, %arg1: memref<224x28xbf16, #tpu.memory_space<vmem>>, %arg2: memref<28x256xbf16, #tpu.memory_space<vmem>>, %arg3: memref<256x256xbf16, #tpu.memory_space<vmem>>, %arg4: memref<1x256xf32, #tpu.memory_space<vmem>>, %arg5: memref<256x256xbf16, #tpu.memory_space<vmem>>, %arg6: memref<256x256xbf16, #tpu.memory_space<vmem>>, %arg7: memref<1x256xf32, #tpu.memory_space<vmem>>, %arg8: memref<28x256x128xbf16, #tpu.memory_space<vmem>>, %arg9: memref<1x128xf32, #tpu.memory_space<vmem>>, %arg10: memref<8x128xf32, #tpu.memory_space<vmem>>, %arg11: memref<224x256xf32, #tpu.memory_space<vmem>>) attributes {dimension_semantics = [#tpu.dimension_semantics<arbitrary>], iteration_bounds = array<i64: 1>, scalar_prefetch = 0 : i64, scratch_operands = 1 : i64, tpu.core_type = #tpu.core_type<tc>, window_params = [{pipeline_mode = #tpu.pipeline_mode<synchronous>, transform_indices = @transform_0, window_bounds = array<i64: 224, 28>}, {pipeline_mode = #tpu.pipeline_mode<synchronous>, transform_indices = @transform_1, window_bounds = array<i64: 28, 256>}, {pipeline_mode = #tpu.pipeline_mode<synchronous>, transform_indices = @transform_2, window_bounds = array<i64: 256, 256>}, {pipeline_mode = #tpu.pipeline_mode<synchronous>, transform_indices = @transform_3, window_bounds = array<i64: 1, 256>}, {pipeline_mode = #tpu.pipeline_mode<synchronous>, transform_indices = @transform_4, window_bounds = array<i64: 256, 256>}, {pipeline_mode = #tpu.pipeline_mode<synchronous>, transform_indices = @transform_5, window_bounds = array<i64: 256, 256>}, {pipeline_mode = #tpu.pipeline_mode<synchronous>, transform_indices = @transform_6, window_bounds = array<i64: 1, 256>}, {pipeline_mode = #tpu.pipeline_mode<synchronous>, transform_indices = @transform_7, window_bounds = array<i64: 28, 256, 128>}, {pipeline_mode = #tpu.pipeline_mode<synchronous>, transform_indices = @transform_8, window_bounds = array<i64: 1, 128>}, {pipeline_mode = #tpu.pipeline_mode<synchronous>, transform_indices = @transform_9, window_bounds = array<i64: 8, 128>}]} {
    %c0 = arith.constant 0 : index
    %c0_0 = arith.constant 0 : index
    %0 = vector.load %arg1[%c0, %c0_0] : memref<224x28xbf16, #tpu.memory_space<vmem>>, vector<224x28xbf16>
    %c0_1 = arith.constant 0 : index
    %c0_2 = arith.constant 0 : index
    %1 = vector.load %arg2[%c0_1, %c0_2] : memref<28x256xbf16, #tpu.memory_space<vmem>>, vector<28x256xbf16>
    %cst = arith.constant dense<0.000000e+00> : vector<224x256xf32>
    %2 = tpu.matmul %0, %1, %cst {dimension_numbers = #tpu.dot_dimension_numbers<[1], [0], [0], [1], [0, 0, 1, 1], [], []>} : vector<224x28xbf16>, vector<28x256xbf16>, vector<224x256xf32> -> vector<224x256xf32>
    %c0_3 = arith.constant 0 : index
    %c0_4 = arith.constant 0 : index
    %3 = vector.load %arg4[%c0_3, %c0_4] : memref<1x256xf32, #tpu.memory_space<vmem>>, vector<1x256xf32>
    %4 = vector.broadcast %3 : vector<1x256xf32> to vector<224x256xf32>
    %5 = arith.addf %2, %4 : vector<224x256xf32>
    %c0_5 = arith.constant 0 : index
    %c0_6 = arith.constant 0 : index
    %6 = vector.load %arg11[%c0_5, %c0_6] : memref<224x256xf32, #tpu.memory_space<vmem>>, vector<224x256xf32>
    tpu.vector_store %arg11[%c0_5, %c0_6], %5 {strides = array<i32>} : memref<224x256xf32, #tpu.memory_space<vmem>>, vector<224x256xf32>,
    %c0_7 = arith.constant 0 : index
    %c0_8 = arith.constant 0 : index
    %7 = vector.load %arg7[%c0_7, %c0_8] : memref<1x256xf32, #tpu.memory_space<vmem>>, vector<1x256xf32>
    %8 = vector.shape_cast %7 : vector<1x256xf32> to vector<1x256xf32>
    %9 = vector.broadcast %8 : vector<1x256xf32> to vector<8x256xf32>
    %cst_9 = arith.constant 0.000000e+00 : f32
    %10 = vector.broadcast %cst_9 : f32 to vector<8x256xf32>
    %cst_10 = arith.constant 0.000000e+00 : f32
    %11 = vector.broadcast %cst_10 : f32 to vector<8x256xf32>
    %cst_11 = arith.constant 0.000000e+00 : f32
    %12 = vector.broadcast %cst_11 : f32 to vector<8x128xf32>
    %c0_i32 = arith.constant 0 : i32
    %c8_i32 = arith.constant 8 : i32
    %13 = arith.muli %c0_i32, %c8_i32 : i32
    %14 = tpu.assume_multiple %13, 8 : i32
    %15 = arith.truncf %11 : vector<8x256xf32> to vector<8x256xbf16>
    %c0_12 = arith.constant 0 : index
    %c0_13 = arith.constant 0 : index
    %16 = vector.load %arg6[%c0_12, %c0_13] : memref<256x256xbf16, #tpu.memory_space<vmem>>, vector<256x256xbf16>
    %cst_14 = arith.constant dense<0.000000e+00> : vector<8x256xf32>
    %17 = tpu.matmul %15, %16, %cst_14 {dimension_numbers = #tpu.dot_dimension_numbers<[1], [0], [0], [1], [0, 0, 1, 1], [], []>} : vector<8x256xbf16>, vector<256x256xbf16>, vector<8x256xf32> -> vector<8x256xf32>
    %18 = arith.index_cast %14 : i32 to index
    %c0_15 = arith.constant 0 : index
    %19 = vector.load %arg11[%18, %c0_15] : memref<224x256xf32, #tpu.memory_space<vmem>>, vector<8x256xf32>
    %20 = arith.truncf %10 : vector<8x256xf32> to vector<8x256xbf16>
    %c0_16 = arith.constant 0 : index
    %c0_17 = arith.constant 0 : index
    %21 = vector.load %arg3[%c0_16, %c0_17] : memref<256x256xbf16, #tpu.memory_space<vmem>>, vector<256x256xbf16>
    %cst_18 = arith.constant dense<0.000000e+00> : vector<8x256xf32>
    %22 = tpu.matmul %20, %21, %cst_18 {dimension_numbers = #tpu.dot_dimension_numbers<[1], [0], [0], [1], [0, 0, 1, 1], [], []>} : vector<8x256xbf16>, vector<256x256xbf16>, vector<8x256xf32> -> vector<8x256xf32>
    %23 = arith.addf %19, %22 : vector<8x256xf32>
    %24 = math.tanh %23 : vector<8x256xf32>
    %25 = arith.truncf %24 : vector<8x256xf32> to vector<8x256xbf16>
    %c0_19 = arith.constant 0 : index
    %c0_20 = arith.constant 0 : index
    %26 = vector.load %arg5[%c0_19, %c0_20] : memref<256x256xbf16, #tpu.memory_space<vmem>>, vector<256x256xbf16>
    %cst_21 = arith.constant dense<0.000000e+00> : vector<8x256xf32>
    %27 = tpu.matmul %25, %26, %cst_21 {dimension_numbers = #tpu.dot_dimension_numbers<[1], [0], [0], [1], [0, 0, 1, 1], [], []>} : vector<8x256xbf16>, vector<256x256xbf16>, vector<8x256xf32> -> vector<8x256xf32>
    %28 = arith.addf %27, %17 : vector<8x256xf32>
    %29 = arith.addf %28, %9 : vector<8x256xf32>
    %30 = math.tanh %29 : vector<8x256xf32>
    %31 = arith.truncf %30 : vector<8x256xf32> to vector<8x256xbf16>
    %32 = arith.index_cast %c0_i32 : i32 to index
    %c0_22 = arith.constant 0 : index
    %c0_23 = arith.constant 0 : index
    %33 = vector.load %arg8[%32, %c0_22, %c0_23] : memref<28x256x128xbf16, #tpu.memory_space<vmem>>, vector<1x256x128xbf16>
    %34 = vector.shape_cast %33 : vector<1x256x128xbf16> to vector<256x128xbf16>
    %cst_24 = arith.constant dense<0.000000e+00> : vector<8x128xf32>
    %35 = tpu.matmul %31, %34, %cst_24 {dimension_numbers = #tpu.dot_dimension_numbers<[1], [0], [0], [1], [0, 0, 1, 1], [], []>} : vector<8x256xbf16>, vector<256x128xbf16>, vector<8x128xf32> -> vector<8x128xf32>
    %36 = arith.addf %12, %35 : vector<8x128xf32>
    %c1_i32 = arith.constant 1 : i32
    %c8_i32_25 = arith.constant 8 : i32
    %37 = arith.muli %c1_i32, %c8_i32_25 : i32
    %38 = tpu.assume_multiple %37, 8 : i32
    %39 = arith.truncf %30 : vector<8x256xf32> to vector<8x256xbf16>
    %c0_26 = arith.constant 0 : index
    %c0_27 = arith.constant 0 : index
    %40 = vector.load %arg6[%c0_26, %c0_27] : memref<256x256xbf16, #tpu.memory_space<vmem>>, vector<256x256xbf16>
    %cst_28 = arith.constant dense<0.000000e+00> : vector<8x256xf32>
    %41 = tpu.matmul %39, %40, %cst_28 {dimension_numbers = #tpu.dot_dimension_numbers<[1], [0], [0], [1], [0, 0, 1, 1], [], []>} : vector<8x256xbf16>, vector<256x256xbf16>, vector<8x256xf32> -> vector<8x256xf32>
    %42 = arith.index_cast %38 : i32 to index
    %c0_29 = arith.constant 0 : index
    %43 = vector.load %arg11[%42, %c0_29] : memref<224x256xf32, #tpu.memory_space<vmem>>, vector<8x256xf32>
    %44 = arith.truncf %24 : vector<8x256xf32> to vector<8x256xbf16>
    %c0_30 = arith.constant 0 : index
    %c0_31 = arith.constant 0 : index
    %45 = vector.load %arg3[%c0_30, %c0_31] : memref<256x256xbf16, #tpu.memory_space<vmem>>, vector<256x256xbf16>
    %cst_32 = arith.constant dense<0.000000e+00> : vector<8x256xf32>
    %46 = tpu.matmul %44, %45, %cst_32 {dimension_numbers = #tpu.dot_dimension_numbers<[1], [0], [0], [1], [0, 0, 1, 1], [], []>} : vector<8x256xbf16>, vector<256x256xbf16>, vector<8x256xf32> -> vector<8x256xf32>
    %47 = arith.addf %43, %46 : vector<8x256xf32>
    %48 = math.tanh %47 : vector<8x256xf32>
    %49 = arith.truncf %48 : vector<8x256xf32> to vector<8x256xbf16>
    %c0_33 = arith.constant 0 : index
    %c0_34 = arith.constant 0 : index
    %50 = vector.load %arg5[%c0_33, %c0_34] : memref<256x256xbf16, #tpu.memory_space<vmem>>, vector<256x256xbf16>
    %cst_35 = arith.constant dense<0.000000e+00> : vector<8x256xf32>
    %51 = tpu.matmul %49, %50, %cst_35 {dimension_numbers = #tpu.dot_dimension_numbers<[1], [0], [0], [1], [0, 0, 1, 1], [], []>} : vector<8x256xbf16>, vector<256x256xbf16>, vector<8x256xf32> -> vector<8x256xf32>
    %52 = arith.addf %51, %41 : vector<8x256xf32>
    %53 = arith.addf %52, %9 : vector<8x256xf32>
    %54 = math.tanh %53 : vector<8x256xf32>
    %55 = arith.truncf %54 : vector<8x256xf32> to vector<8x256xbf16>
    %56 = arith.index_cast %c1_i32 : i32 to index
    %c0_36 = arith.constant 0 : index
    %c0_37 = arith.constant 0 : index
    %57 = vector.load %arg8[%56, %c0_36, %c0_37] : memref<28x256x128xbf16, #tpu.memory_space<vmem>>, vector<1x256x128xbf16>
    %58 = vector.shape_cast %57 : vector<1x256x128xbf16> to vector<256x128xbf16>
    %cst_38 = arith.constant dense<0.000000e+00> : vector<8x128xf32>
    %59 = tpu.matmul %55, %58, %cst_38 {dimension_numbers = #tpu.dot_dimension_numbers<[1], [0], [0], [1], [0, 0, 1, 1], [], []>} : vector<8x256xbf16>, vector<256x128xbf16>, vector<8x128xf32> -> vector<8x128xf32>
    %60 = arith.addf %36, %59 : vector<8x128xf32>
    %c2_i32 = arith.constant 2 : i32
    %c8_i32_39 = arith.constant 8 : i32
    %61 = arith.muli %c2_i32, %c8_i32_39 : i32
    %62 = tpu.assume_multiple %61, 8 : i32
    %63 = arith.truncf %54 : vector<8x256xf32> to vector<8x256xbf16>
    %c0_40 = arith.constant 0 : index
    %c0_41 = arith.constant 0 : index
    %64 = vector.load %arg6[%c0_40, %c0_41] : memref<256x256xbf16, #tpu.memory_space<vmem>>, vector<256x256xbf16>
    %cst_42 = arith.constant dense<0.000000e+00> : vector<8x256xf32>
    %65 = tpu.matmul %63, %64, %cst_42 {dimension_numbers = #tpu.dot_dimension_numbers<[1], [0], [0], [1], [0, 0, 1, 1], [], []>} : vector<8x256xbf16>, vector<256x256xbf16>, vector<8x256xf32> -> vector<8x256xf32>
    %66 = arith.index_cast %62 : i32 to index
    %c0_43 = arith.constant 0 : index
    %67 = vector.load %arg11[%66, %c0_43] : memref<224x256xf32, #tpu.memory_space<vmem>>, vector<8x256xf32>
    %68 = arith.truncf %48 : vector<8x256xf32> to vector<8x256xbf16>
    %c0_44 = arith.constant 0 : index
    %c0_45 = arith.constant 0 : index
    %69 = vector.load %arg3[%c0_44, %c0_45] : memref<256x256xbf16, #tpu.memory_space<vmem>>, vector<256x256xbf16>
    %cst_46 = arith.constant dense<0.000000e+00> : vector<8x256xf32>
    %70 = tpu.matmul %68, %69, %cst_46 {dimension_numbers = #tpu.dot_dimension_numbers<[1], [0], [0], [1], [0, 0, 1, 1], [], []>} : vector<8x256xbf16>, vector<256x256xbf16>, vector<8x256xf32> -> vector<8x256xf32>
    %71 = arith.addf %67, %70 : vector<8x256xf32>
    %72 = math.tanh %71 : vector<8x256xf32>
    %73 = arith.truncf %72 : vector<8x256xf32> to vector<8x256xbf16>
    %c0_47 = arith.constant 0 : index
    %c0_48 = arith.constant 0 : index
    %74 = vector.load %arg5[%c0_47, %c0_48] : memref<256x256xbf16, #tpu.memory_space<vmem>>, vector<256x256xbf16>
    %cst_49 = arith.constant dense<0.000000e+00> : vector<8x256xf32>
    %75 = tpu.matmul %73, %74, %cst_49 {dimension_numbers = #tpu.dot_dimension_numbers<[1], [0], [0], [1], [0, 0, 1, 1], [], []>} : vector<8x256xbf16>, vector<256x256xbf16>, vector<8x256xf32> -> vector<8x256xf32>
    %76 = arith.addf %75, %65 : vector<8x256xf32>
    %77 = arith.addf %76, %9 : vector<8x256xf32>
    %78 = math.tanh %77 : vector<8x256xf32>
    %79 = arith.truncf %78 : vector<8x256xf32> to vector<8x256xbf16>
    %80 = arith.index_cast %c2_i32 : i32 to index
    %c0_50 = arith.constant 0 : index
    %c0_51 = arith.constant 0 : index
    %81 = vector.load %arg8[%80, %c0_50, %c0_51] : memref<28x256x128xbf16, #tpu.memory_space<vmem>>, vector<1x256x128xbf16>
    %82 = vector.shape_cast %81 : vector<1x256x128xbf16> to vector<256x128xbf16>
    %cst_52 = arith.constant dense<0.000000e+00> : vector<8x128xf32>
    %83 = tpu.matmul %79, %82, %cst_52 {dimension_numbers = #tpu.dot_dimension_numbers<[1], [0], [0], [1], [0, 0, 1, 1], [], []>} : vector<8x256xbf16>, vector<256x128xbf16>, vector<8x128xf32> -> vector<8x128xf32>
    %84 = arith.addf %60, %83 : vector<8x128xf32>
    %c3_i32 = arith.constant 3 : i32
    %c8_i32_53 = arith.constant 8 : i32
    %85 = arith.muli %c3_i32, %c8_i32_53 : i32
    %86 = tpu.assume_multiple %85, 8 : i32
    %87 = arith.truncf %78 : vector<8x256xf32> to vector<8x256xbf16>
    %c0_54 = arith.constant 0 : index
    %c0_55 = arith.constant 0 : index
    %88 = vector.load %arg6[%c0_54, %c0_55] : memref<256x256xbf16, #tpu.memory_space<vmem>>, vector<256x256xbf16>
    %cst_56 = arith.constant dense<0.000000e+00> : vector<8x256xf32>
    %89 = tpu.matmul %87, %88, %cst_56 {dimension_numbers = #tpu.dot_dimension_numbers<[1], [0], [0], [1], [0, 0, 1, 1], [], []>} : vector<8x256xbf16>, vector<256x256xbf16>, vector<8x256xf32> -> vector<8x256xf32>
    %90 = arith.index_cast %86 : i32 to index
    %c0_57 = arith.constant 0 : index
    %91 = vector.load %arg11[%90, %c0_57] : memref<224x256xf32, #tpu.memory_space<vmem>>, vector<8x256xf32>
    %92 = arith.truncf %72 : vector<8x256xf32> to vector<8x256xbf16>
    %c0_58 = arith.constant 0 : index
    %c0_59 = arith.constant 0 : index
    %93 = vector.load %arg3[%c0_58, %c0_59] : memref<256x256xbf16, #tpu.memory_space<vmem>>, vector<256x256xbf16>
    %cst_60 = arith.constant dense<0.000000e+00> : vector<8x256xf32>
    %94 = tpu.matmul %92, %93, %cst_60 {dimension_numbers = #tpu.dot_dimension_numbers<[1], [0], [0], [1], [0, 0, 1, 1], [], []>} : vector<8x256xbf16>, vector<256x256xbf16>, vector<8x256xf32> -> vector<8x256xf32>
    %95 = arith.addf %91, %94 : vector<8x256xf32>
    %96 = math.tanh %95 : vector<8x256xf32>
    %97 = arith.truncf %96 : vector<8x256xf32> to vector<8x256xbf16>
    %c0_61 = arith.constant 0 : index
    %c0_62 = arith.constant 0 : index
    %98 = vector.load %arg5[%c0_61, %c0_62] : memref<256x256xbf16, #tpu.memory_space<vmem>>, vector<256x256xbf16>
    %cst_63 = arith.constant dense<0.000000e+00> : vector<8x256xf32>
    %99 = tpu.matmul %97, %98, %cst_63 {dimension_numbers = #tpu.dot_dimension_numbers<[1], [0], [0], [1], [0, 0, 1, 1], [], []>} : vector<8x256xbf16>, vector<256x256xbf16>, vector<8x256xf32> -> vector<8x256xf32>
    %100 = arith.addf %99, %89 : vector<8x256xf32>
    %101 = arith.addf %100, %9 : vector<8x256xf32>
    %102 = math.tanh %101 : vector<8x256xf32>
    %103 = arith.truncf %102 : vector<8x256xf32> to vector<8x256xbf16>
    %104 = arith.index_cast %c3_i32 : i32 to index
    %c0_64 = arith.constant 0 : index
    %c0_65 = arith.constant 0 : index
    %105 = vector.load %arg8[%104, %c0_64, %c0_65] : memref<28x256x128xbf16, #tpu.memory_space<vmem>>, vector<1x256x128xbf16>
    %106 = vector.shape_cast %105 : vector<1x256x128xbf16> to vector<256x128xbf16>
    %cst_66 = arith.constant dense<0.000000e+00> : vector<8x128xf32>
    %107 = tpu.matmul %103, %106, %cst_66 {dimension_numbers = #tpu.dot_dimension_numbers<[1], [0], [0], [1], [0, 0, 1, 1], [], []>} : vector<8x256xbf16>, vector<256x128xbf16>, vector<8x128xf32> -> vector<8x128xf32>
    %108 = arith.addf %84, %107 : vector<8x128xf32>
    %c4_i32 = arith.constant 4 : i32
    %c8_i32_67 = arith.constant 8 : i32
    %109 = arith.muli %c4_i32, %c8_i32_67 : i32
    %110 = tpu.assume_multiple %109, 8 : i32
    %111 = arith.truncf %102 : vector<8x256xf32> to vector<8x256xbf16>
    %c0_68 = arith.constant 0 : index
    %c0_69 = arith.constant 0 : index
    %112 = vector.load %arg6[%c0_68, %c0_69] : memref<256x256xbf16, #tpu.memory_space<vmem>>, vector<256x256xbf16>
    %cst_70 = arith.constant dense<0.000000e+00> : vector<8x256xf32>
    %113 = tpu.matmul %111, %112, %cst_70 {dimension_numbers = #tpu.dot_dimension_numbers<[1], [0], [0], [1], [0, 0, 1, 1], [], []>} : vector<8x256xbf16>, vector<256x256xbf16>, vector<8x256xf32> -> vector<8x256xf32>
    %114 = arith.index_cast %110 : i32 to index
    %c0_71 = arith.constant 0 : index
    %115 = vector.load %arg11[%114, %c0_71] : memref<224x256xf32, #tpu.memory_space<vmem>>, vector<8x256xf32>
    %116 = arith.truncf %96 : vector<8x256xf32> to vector<8x256xbf16>
    %c0_72 = arith.constant 0 : index
    %c0_73 = arith.constant 0 : index
    %117 = vector.load %arg3[%c0_72, %c0_73] : memref<256x256xbf16, #tpu.memory_space<vmem>>, vector<256x256xbf16>
    %cst_74 = arith.constant dense<0.000000e+00> : vector<8x256xf32>
    %118 = tpu.matmul %116, %117, %cst_74 {dimension_numbers = #tpu.dot_dimension_numbers<[1], [0], [0], [1], [0, 0, 1, 1], [], []>} : vector<8x256xbf16>, vector<256x256xbf16>, vector<8x256xf32> -> vector<8x256xf32>
    %119 = arith.addf %115, %118 : vector<8x256xf32>
    %120 = math.tanh %119 : vector<8x256xf32>
    %121 = arith.truncf %120 : vector<8x256xf32> to vector<8x256xbf16>
    %c0_75 = arith.constant 0 : index
    %c0_76 = arith.constant 0 : index
    %122 = vector.load %arg5[%c0_75, %c0_76] : memref<256x256xbf16, #tpu.memory_space<vmem>>, vector<256x256xbf16>
    %cst_77 = arith.constant dense<0.000000e+00> : vector<8x256xf32>
    %123 = tpu.matmul %121, %122, %cst_77 {dimension_numbers = #tpu.dot_dimension_numbers<[1], [0], [0], [1], [0, 0, 1, 1], [], []>} : vector<8x256xbf16>, vector<256x256xbf16>, vector<8x256xf32> -> vector<8x256xf32>
    %124 = arith.addf %123, %113 : vector<8x256xf32>
    %125 = arith.addf %124, %9 : vector<8x256xf32>
    %126 = math.tanh %125 : vector<8x256xf32>
    %127 = arith.truncf %126 : vector<8x256xf32> to vector<8x256xbf16>
    %128 = arith.index_cast %c4_i32 : i32 to index
    %c0_78 = arith.constant 0 : index
    %c0_79 = arith.constant 0 : index
    %129 = vector.load %arg8[%128, %c0_78, %c0_79] : memref<28x256x128xbf16, #tpu.memory_space<vmem>>, vector<1x256x128xbf16>
    %130 = vector.shape_cast %129 : vector<1x256x128xbf16> to vector<256x128xbf16>
    %cst_80 = arith.constant dense<0.000000e+00> : vector<8x128xf32>
    %131 = tpu.matmul %127, %130, %cst_80 {dimension_numbers = #tpu.dot_dimension_numbers<[1], [0], [0], [1], [0, 0, 1, 1], [], []>} : vector<8x256xbf16>, vector<256x128xbf16>, vector<8x128xf32> -> vector<8x128xf32>
    %132 = arith.addf %108, %131 : vector<8x128xf32>
    %c5_i32 = arith.constant 5 : i32
    %c8_i32_81 = arith.constant 8 : i32
    %133 = arith.muli %c5_i32, %c8_i32_81 : i32
    %134 = tpu.assume_multiple %133, 8 : i32
    %135 = arith.truncf %126 : vector<8x256xf32> to vector<8x256xbf16>
    %c0_82 = arith.constant 0 : index
    %c0_83 = arith.constant 0 : index
    %136 = vector.load %arg6[%c0_82, %c0_83] : memref<256x256xbf16, #tpu.memory_space<vmem>>, vector<256x256xbf16>
    %cst_84 = arith.constant dense<0.000000e+00> : vector<8x256xf32>
    %137 = tpu.matmul %135, %136, %cst_84 {dimension_numbers = #tpu.dot_dimension_numbers<[1], [0], [0], [1], [0, 0, 1, 1], [], []>} : vector<8x256xbf16>, vector<256x256xbf16>, vector<8x256xf32> -> vector<8x256xf32>
    %138 = arith.index_cast %134 : i32 to index
    %c0_85 = arith.constant 0 : index
    %139 = vector.load %arg11[%138, %c0_85] : memref<224x256xf32, #tpu.memory_space<vmem>>, vector<8x256xf32>
    %140 = arith.truncf %120 : vector<8x256xf32> to vector<8x256xbf16>
    %c0_86 = arith.constant 0 : index
    %c0_87 = arith.constant 0 : index
    %141 = vector.load %arg3[%c0_86, %c0_87] : memref<256x256xbf16, #tpu.memory_space<vmem>>, vector<256x256xbf16>
    %cst_88 = arith.constant dense<0.000000e+00> : vector<8x256xf32>
    %142 = tpu.matmul %140, %141, %cst_88 {dimension_numbers = #tpu.dot_dimension_numbers<[1], [0], [0], [1], [0, 0, 1, 1], [], []>} : vector<8x256xbf16>, vector<256x256xbf16>, vector<8x256xf32> -> vector<8x256xf32>
    %143 = arith.addf %139, %142 : vector<8x256xf32>
    %144 = math.tanh %143 : vector<8x256xf32>
    %145 = arith.truncf %144 : vector<8x256xf32> to vector<8x256xbf16>
    %c0_89 = arith.constant 0 : index
    %c0_90 = arith.constant 0 : index
    %146 = vector.load %arg5[%c0_89, %c0_90] : memref<256x256xbf16, #tpu.memory_space<vmem>>, vector<256x256xbf16>
    %cst_91 = arith.constant dense<0.000000e+00> : vector<8x256xf32>
    %147 = tpu.matmul %145, %146, %cst_91 {dimension_numbers = #tpu.dot_dimension_numbers<[1], [0], [0], [1], [0, 0, 1, 1], [], []>} : vector<8x256xbf16>, vector<256x256xbf16>, vector<8x256xf32> -> vector<8x256xf32>
    %148 = arith.addf %147, %137 : vector<8x256xf32>
    %149 = arith.addf %148, %9 : vector<8x256xf32>
    %150 = math.tanh %149 : vector<8x256xf32>
    %151 = arith.truncf %150 : vector<8x256xf32> to vector<8x256xbf16>
    %152 = arith.index_cast %c5_i32 : i32 to index
    %c0_92 = arith.constant 0 : index
    %c0_93 = arith.constant 0 : index
    %153 = vector.load %arg8[%152, %c0_92, %c0_93] : memref<28x256x128xbf16, #tpu.memory_space<vmem>>, vector<1x256x128xbf16>
    %154 = vector.shape_cast %153 : vector<1x256x128xbf16> to vector<256x128xbf16>
    %cst_94 = arith.constant dense<0.000000e+00> : vector<8x128xf32>
    %155 = tpu.matmul %151, %154, %cst_94 {dimension_numbers = #tpu.dot_dimension_numbers<[1], [0], [0], [1], [0, 0, 1, 1], [], []>} : vector<8x256xbf16>, vector<256x128xbf16>, vector<8x128xf32> -> vector<8x128xf32>
    %156 = arith.addf %132, %155 : vector<8x128xf32>
    %c6_i32 = arith.constant 6 : i32
    %c8_i32_95 = arith.constant 8 : i32
    %157 = arith.muli %c6_i32, %c8_i32_95 : i32
    %158 = tpu.assume_multiple %157, 8 : i32
    %159 = arith.truncf %150 : vector<8x256xf32> to vector<8x256xbf16>
    %c0_96 = arith.constant 0 : index
    %c0_97 = arith.constant 0 : index
    %160 = vector.load %arg6[%c0_96, %c0_97] : memref<256x256xbf16, #tpu.memory_space<vmem>>, vector<256x256xbf16>
    %cst_98 = arith.constant dense<0.000000e+00> : vector<8x256xf32>
    %161 = tpu.matmul %159, %160, %cst_98 {dimension_numbers = #tpu.dot_dimension_numbers<[1], [0], [0], [1], [0, 0, 1, 1], [], []>} : vector<8x256xbf16>, vector<256x256xbf16>, vector<8x256xf32> -> vector<8x256xf32>
    %162 = arith.index_cast %158 : i32 to index
    %c0_99 = arith.constant 0 : index
    %163 = vector.load %arg11[%162, %c0_99] : memref<224x256xf32, #tpu.memory_space<vmem>>, vector<8x256xf32>
    %164 = arith.truncf %144 : vector<8x256xf32> to vector<8x256xbf16>
    %c0_100 = arith.constant 0 : index
    %c0_101 = arith.constant 0 : index
    %165 = vector.load %arg3[%c0_100, %c0_101] : memref<256x256xbf16, #tpu.memory_space<vmem>>, vector<256x256xbf16>
    %cst_102 = arith.constant dense<0.000000e+00> : vector<8x256xf32>
    %166 = tpu.matmul %164, %165, %cst_102 {dimension_numbers = #tpu.dot_dimension_numbers<[1], [0], [0], [1], [0, 0, 1, 1], [], []>} : vector<8x256xbf16>, vector<256x256xbf16>, vector<8x256xf32> -> vector<8x256xf32>
    %167 = arith.addf %163, %166 : vector<8x256xf32>
    %168 = math.tanh %167 : vector<8x256xf32>
    %169 = arith.truncf %168 : vector<8x256xf32> to vector<8x256xbf16>
    %c0_103 = arith.constant 0 : index
    %c0_104 = arith.constant 0 : index
    %170 = vector.load %arg5[%c0_103, %c0_104] : memref<256x256xbf16, #tpu.memory_space<vmem>>, vector<256x256xbf16>
    %cst_105 = arith.constant dense<0.000000e+00> : vector<8x256xf32>
    %171 = tpu.matmul %169, %170, %cst_105 {dimension_numbers = #tpu.dot_dimension_numbers<[1], [0], [0], [1], [0, 0, 1, 1], [], []>} : vector<8x256xbf16>, vector<256x256xbf16>, vector<8x256xf32> -> vector<8x256xf32>
    %172 = arith.addf %171, %161 : vector<8x256xf32>
    %173 = arith.addf %172, %9 : vector<8x256xf32>
    %174 = math.tanh %173 : vector<8x256xf32>
    %175 = arith.truncf %174 : vector<8x256xf32> to vector<8x256xbf16>
    %176 = arith.index_cast %c6_i32 : i32 to index
    %c0_106 = arith.constant 0 : index
    %c0_107 = arith.constant 0 : index
    %177 = vector.load %arg8[%176, %c0_106, %c0_107] : memref<28x256x128xbf16, #tpu.memory_space<vmem>>, vector<1x256x128xbf16>
    %178 = vector.shape_cast %177 : vector<1x256x128xbf16> to vector<256x128xbf16>
    %cst_108 = arith.constant dense<0.000000e+00> : vector<8x128xf32>
    %179 = tpu.matmul %175, %178, %cst_108 {dimension_numbers = #tpu.dot_dimension_numbers<[1], [0], [0], [1], [0, 0, 1, 1], [], []>} : vector<8x256xbf16>, vector<256x128xbf16>, vector<8x128xf32> -> vector<8x128xf32>
    %180 = arith.addf %156, %179 : vector<8x128xf32>
    %c7_i32 = arith.constant 7 : i32
    %c8_i32_109 = arith.constant 8 : i32
    %181 = arith.muli %c7_i32, %c8_i32_109 : i32
    %182 = tpu.assume_multiple %181, 8 : i32
    %183 = arith.truncf %174 : vector<8x256xf32> to vector<8x256xbf16>
    %c0_110 = arith.constant 0 : index
    %c0_111 = arith.constant 0 : index
    %184 = vector.load %arg6[%c0_110, %c0_111] : memref<256x256xbf16, #tpu.memory_space<vmem>>, vector<256x256xbf16>
    %cst_112 = arith.constant dense<0.000000e+00> : vector<8x256xf32>
    %185 = tpu.matmul %183, %184, %cst_112 {dimension_numbers = #tpu.dot_dimension_numbers<[1], [0], [0], [1], [0, 0, 1, 1], [], []>} : vector<8x256xbf16>, vector<256x256xbf16>, vector<8x256xf32> -> vector<8x256xf32>
    %186 = arith.index_cast %182 : i32 to index
    %c0_113 = arith.constant 0 : index
    %187 = vector.load %arg11[%186, %c0_113] : memref<224x256xf32, #tpu.memory_space<vmem>>, vector<8x256xf32>
    %188 = arith.truncf %168 : vector<8x256xf32> to vector<8x256xbf16>
    %c0_114 = arith.constant 0 : index
    %c0_115 = arith.constant 0 : index
    %189 = vector.load %arg3[%c0_114, %c0_115] : memref<256x256xbf16, #tpu.memory_space<vmem>>, vector<256x256xbf16>
    %cst_116 = arith.constant dense<0.000000e+00> : vector<8x256xf32>
    %190 = tpu.matmul %188, %189, %cst_116 {dimension_numbers = #tpu.dot_dimension_numbers<[1], [0], [0], [1], [0, 0, 1, 1], [], []>} : vector<8x256xbf16>, vector<256x256xbf16>, vector<8x256xf32> -> vector<8x256xf32>
    %191 = arith.addf %187, %190 : vector<8x256xf32>
    %192 = math.tanh %191 : vector<8x256xf32>
    %193 = arith.truncf %192 : vector<8x256xf32> to vector<8x256xbf16>
    %c0_117 = arith.constant 0 : index
    %c0_118 = arith.constant 0 : index
    %194 = vector.load %arg5[%c0_117, %c0_118] : memref<256x256xbf16, #tpu.memory_space<vmem>>, vector<256x256xbf16>
    %cst_119 = arith.constant dense<0.000000e+00> : vector<8x256xf32>
    %195 = tpu.matmul %193, %194, %cst_119 {dimension_numbers = #tpu.dot_dimension_numbers<[1], [0], [0], [1], [0, 0, 1, 1], [], []>} : vector<8x256xbf16>, vector<256x256xbf16>, vector<8x256xf32> -> vector<8x256xf32>
    %196 = arith.addf %195, %185 : vector<8x256xf32>
    %197 = arith.addf %196, %9 : vector<8x256xf32>
    %198 = math.tanh %197 : vector<8x256xf32>
    %199 = arith.truncf %198 : vector<8x256xf32> to vector<8x256xbf16>
    %200 = arith.index_cast %c7_i32 : i32 to index
    %c0_120 = arith.constant 0 : index
    %c0_121 = arith.constant 0 : index
    %201 = vector.load %arg8[%200, %c0_120, %c0_121] : memref<28x256x128xbf16, #tpu.memory_space<vmem>>, vector<1x256x128xbf16>
    %202 = vector.shape_cast %201 : vector<1x256x128xbf16> to vector<256x128xbf16>
    %cst_122 = arith.constant dense<0.000000e+00> : vector<8x128xf32>
    %203 = tpu.matmul %199, %202, %cst_122 {dimension_numbers = #tpu.dot_dimension_numbers<[1], [0], [0], [1], [0, 0, 1, 1], [], []>} : vector<8x256xbf16>, vector<256x128xbf16>, vector<8x128xf32> -> vector<8x128xf32>
    %204 = arith.addf %180, %203 : vector<8x128xf32>
    %c8_i32_123 = arith.constant 8 : i32
    %c8_i32_124 = arith.constant 8 : i32
    %205 = arith.muli %c8_i32_123, %c8_i32_124 : i32
    %206 = tpu.assume_multiple %205, 8 : i32
    %207 = arith.truncf %198 : vector<8x256xf32> to vector<8x256xbf16>
    %c0_125 = arith.constant 0 : index
    %c0_126 = arith.constant 0 : index
    %208 = vector.load %arg6[%c0_125, %c0_126] : memref<256x256xbf16, #tpu.memory_space<vmem>>, vector<256x256xbf16>
    %cst_127 = arith.constant dense<0.000000e+00> : vector<8x256xf32>
    %209 = tpu.matmul %207, %208, %cst_127 {dimension_numbers = #tpu.dot_dimension_numbers<[1], [0], [0], [1], [0, 0, 1, 1], [], []>} : vector<8x256xbf16>, vector<256x256xbf16>, vector<8x256xf32> -> vector<8x256xf32>
    %210 = arith.index_cast %206 : i32 to index
    %c0_128 = arith.constant 0 : index
    %211 = vector.load %arg11[%210, %c0_128] : memref<224x256xf32, #tpu.memory_space<vmem>>, vector<8x256xf32>
    %212 = arith.truncf %192 : vector<8x256xf32> to vector<8x256xbf16>
    %c0_129 = arith.constant 0 : index
    %c0_130 = arith.constant 0 : index
    %213 = vector.load %arg3[%c0_129, %c0_130] : memref<256x256xbf16, #tpu.memory_space<vmem>>, vector<256x256xbf16>
    %cst_131 = arith.constant dense<0.000000e+00> : vector<8x256xf32>
    %214 = tpu.matmul %212, %213, %cst_131 {dimension_numbers = #tpu.dot_dimension_numbers<[1], [0], [0], [1], [0, 0, 1, 1], [], []>} : vector<8x256xbf16>, vector<256x256xbf16>, vector<8x256xf32> -> vector<8x256xf32>
    %215 = arith.addf %211, %214 : vector<8x256xf32>
    %216 = math.tanh %215 : vector<8x256xf32>
    %217 = arith.truncf %216 : vector<8x256xf32> to vector<8x256xbf16>
    %c0_132 = arith.constant 0 : index
    %c0_133 = arith.constant 0 : index
    %218 = vector.load %arg5[%c0_132, %c0_133] : memref<256x256xbf16, #tpu.memory_space<vmem>>, vector<256x256xbf16>
    %cst_134 = arith.constant dense<0.000000e+00> : vector<8x256xf32>
    %219 = tpu.matmul %217, %218, %cst_134 {dimension_numbers = #tpu.dot_dimension_numbers<[1], [0], [0], [1], [0, 0, 1, 1], [], []>} : vector<8x256xbf16>, vector<256x256xbf16>, vector<8x256xf32> -> vector<8x256xf32>
    %220 = arith.addf %219, %209 : vector<8x256xf32>
    %221 = arith.addf %220, %9 : vector<8x256xf32>
    %222 = math.tanh %221 : vector<8x256xf32>
    %223 = arith.truncf %222 : vector<8x256xf32> to vector<8x256xbf16>
    %224 = arith.index_cast %c8_i32_123 : i32 to index
    %c0_135 = arith.constant 0 : index
    %c0_136 = arith.constant 0 : index
    %225 = vector.load %arg8[%224, %c0_135, %c0_136] : memref<28x256x128xbf16, #tpu.memory_space<vmem>>, vector<1x256x128xbf16>
    %226 = vector.shape_cast %225 : vector<1x256x128xbf16> to vector<256x128xbf16>
    %cst_137 = arith.constant dense<0.000000e+00> : vector<8x128xf32>
    %227 = tpu.matmul %223, %226, %cst_137 {dimension_numbers = #tpu.dot_dimension_numbers<[1], [0], [0], [1], [0, 0, 1, 1], [], []>} : vector<8x256xbf16>, vector<256x128xbf16>, vector<8x128xf32> -> vector<8x128xf32>
    %228 = arith.addf %204, %227 : vector<8x128xf32>
    %c9_i32 = arith.constant 9 : i32
    %c8_i32_138 = arith.constant 8 : i32
    %229 = arith.muli %c9_i32, %c8_i32_138 : i32
    %230 = tpu.assume_multiple %229, 8 : i32
    %231 = arith.truncf %222 : vector<8x256xf32> to vector<8x256xbf16>
    %c0_139 = arith.constant 0 : index
    %c0_140 = arith.constant 0 : index
    %232 = vector.load %arg6[%c0_139, %c0_140] : memref<256x256xbf16, #tpu.memory_space<vmem>>, vector<256x256xbf16>
    %cst_141 = arith.constant dense<0.000000e+00> : vector<8x256xf32>
    %233 = tpu.matmul %231, %232, %cst_141 {dimension_numbers = #tpu.dot_dimension_numbers<[1], [0], [0], [1], [0, 0, 1, 1], [], []>} : vector<8x256xbf16>, vector<256x256xbf16>, vector<8x256xf32> -> vector<8x256xf32>
    %234 = arith.index_cast %230 : i32 to index
    %c0_142 = arith.constant 0 : index
    %235 = vector.load %arg11[%234, %c0_142] : memref<224x256xf32, #tpu.memory_space<vmem>>, vector<8x256xf32>
    %236 = arith.truncf %216 : vector<8x256xf32> to vector<8x256xbf16>
    %c0_143 = arith.constant 0 : index
    %c0_144 = arith.constant 0 : index
    %237 = vector.load %arg3[%c0_143, %c0_144] : memref<256x256xbf16, #tpu.memory_space<vmem>>, vector<256x256xbf16>
    %cst_145 = arith.constant dense<0.000000e+00> : vector<8x256xf32>
    %238 = tpu.matmul %236, %237, %cst_145 {dimension_numbers = #tpu.dot_dimension_numbers<[1], [0], [0], [1], [0, 0, 1, 1], [], []>} : vector<8x256xbf16>, vector<256x256xbf16>, vector<8x256xf32> -> vector<8x256xf32>
    %239 = arith.addf %235, %238 : vector<8x256xf32>
    %240 = math.tanh %239 : vector<8x256xf32>
    %241 = arith.truncf %240 : vector<8x256xf32> to vector<8x256xbf16>
    %c0_146 = arith.constant 0 : index
    %c0_147 = arith.constant 0 : index
    %242 = vector.load %arg5[%c0_146, %c0_147] : memref<256x256xbf16, #tpu.memory_space<vmem>>, vector<256x256xbf16>
    %cst_148 = arith.constant dense<0.000000e+00> : vector<8x256xf32>
    %243 = tpu.matmul %241, %242, %cst_148 {dimension_numbers = #tpu.dot_dimension_numbers<[1], [0], [0], [1], [0, 0, 1, 1], [], []>} : vector<8x256xbf16>, vector<256x256xbf16>, vector<8x256xf32> -> vector<8x256xf32>
    %244 = arith.addf %243, %233 : vector<8x256xf32>
    %245 = arith.addf %244, %9 : vector<8x256xf32>
    %246 = math.tanh %245 : vector<8x256xf32>
    %247 = arith.truncf %246 : vector<8x256xf32> to vector<8x256xbf16>
    %248 = arith.index_cast %c9_i32 : i32 to index
    %c0_149 = arith.constant 0 : index
    %c0_150 = arith.constant 0 : index
    %249 = vector.load %arg8[%248, %c0_149, %c0_150] : memref<28x256x128xbf16, #tpu.memory_space<vmem>>, vector<1x256x128xbf16>
    %250 = vector.shape_cast %249 : vector<1x256x128xbf16> to vector<256x128xbf16>
    %cst_151 = arith.constant dense<0.000000e+00> : vector<8x128xf32>
    %251 = tpu.matmul %247, %250, %cst_151 {dimension_numbers = #tpu.dot_dimension_numbers<[1], [0], [0], [1], [0, 0, 1, 1], [], []>} : vector<8x256xbf16>, vector<256x128xbf16>, vector<8x128xf32> -> vector<8x128xf32>
    %252 = arith.addf %228, %251 : vector<8x128xf32>
    %c10_i32 = arith.constant 10 : i32
    %c8_i32_152 = arith.constant 8 : i32
    %253 = arith.muli %c10_i32, %c8_i32_152 : i32
    %254 = tpu.assume_multiple %253, 8 : i32
    %255 = arith.truncf %246 : vector<8x256xf32> to vector<8x256xbf16>
    %c0_153 = arith.constant 0 : index
    %c0_154 = arith.constant 0 : index
    %256 = vector.load %arg6[%c0_153, %c0_154] : memref<256x256xbf16, #tpu.memory_space<vmem>>, vector<256x256xbf16>
    %cst_155 = arith.constant dense<0.000000e+00> : vector<8x256xf32>
    %257 = tpu.matmul %255, %256, %cst_155 {dimension_numbers = #tpu.dot_dimension_numbers<[1], [0], [0], [1], [0, 0, 1, 1], [], []>} : vector<8x256xbf16>, vector<256x256xbf16>, vector<8x256xf32> -> vector<8x256xf32>
    %258 = arith.index_cast %254 : i32 to index
    %c0_156 = arith.constant 0 : index
    %259 = vector.load %arg11[%258, %c0_156] : memref<224x256xf32, #tpu.memory_space<vmem>>, vector<8x256xf32>
    %260 = arith.truncf %240 : vector<8x256xf32> to vector<8x256xbf16>
    %c0_157 = arith.constant 0 : index
    %c0_158 = arith.constant 0 : index
    %261 = vector.load %arg3[%c0_157, %c0_158] : memref<256x256xbf16, #tpu.memory_space<vmem>>, vector<256x256xbf16>
    %cst_159 = arith.constant dense<0.000000e+00> : vector<8x256xf32>
    %262 = tpu.matmul %260, %261, %cst_159 {dimension_numbers = #tpu.dot_dimension_numbers<[1], [0], [0], [1], [0, 0, 1, 1], [], []>} : vector<8x256xbf16>, vector<256x256xbf16>, vector<8x256xf32> -> vector<8x256xf32>
    %263 = arith.addf %259, %262 : vector<8x256xf32>
    %264 = math.tanh %263 : vector<8x256xf32>
    %265 = arith.truncf %264 : vector<8x256xf32> to vector<8x256xbf16>
    %c0_160 = arith.constant 0 : index
    %c0_161 = arith.constant 0 : index
    %266 = vector.load %arg5[%c0_160, %c0_161] : memref<256x256xbf16, #tpu.memory_space<vmem>>, vector<256x256xbf16>
    %cst_162 = arith.constant dense<0.000000e+00> : vector<8x256xf32>
    %267 = tpu.matmul %265, %266, %cst_162 {dimension_numbers = #tpu.dot_dimension_numbers<[1], [0], [0], [1], [0, 0, 1, 1], [], []>} : vector<8x256xbf16>, vector<256x256xbf16>, vector<8x256xf32> -> vector<8x256xf32>
    %268 = arith.addf %267, %257 : vector<8x256xf32>
    %269 = arith.addf %268, %9 : vector<8x256xf32>
    %270 = math.tanh %269 : vector<8x256xf32>
    %271 = arith.truncf %270 : vector<8x256xf32> to vector<8x256xbf16>
    %272 = arith.index_cast %c10_i32 : i32 to index
    %c0_163 = arith.constant 0 : index
    %c0_164 = arith.constant 0 : index
    %273 = vector.load %arg8[%272, %c0_163, %c0_164] : memref<28x256x128xbf16, #tpu.memory_space<vmem>>, vector<1x256x128xbf16>
    %274 = vector.shape_cast %273 : vector<1x256x128xbf16> to vector<256x128xbf16>
    %cst_165 = arith.constant dense<0.000000e+00> : vector<8x128xf32>
    %275 = tpu.matmul %271, %274, %cst_165 {dimension_numbers = #tpu.dot_dimension_numbers<[1], [0], [0], [1], [0, 0, 1, 1], [], []>} : vector<8x256xbf16>, vector<256x128xbf16>, vector<8x128xf32> -> vector<8x128xf32>
    %276 = arith.addf %252, %275 : vector<8x128xf32>
    %c11_i32 = arith.constant 11 : i32
    %c8_i32_166 = arith.constant 8 : i32
    %277 = arith.muli %c11_i32, %c8_i32_166 : i32
    %278 = tpu.assume_multiple %277, 8 : i32
    %279 = arith.truncf %270 : vector<8x256xf32> to vector<8x256xbf16>
    %c0_167 = arith.constant 0 : index
    %c0_168 = arith.constant 0 : index
    %280 = vector.load %arg6[%c0_167, %c0_168] : memref<256x256xbf16, #tpu.memory_space<vmem>>, vector<256x256xbf16>
    %cst_169 = arith.constant dense<0.000000e+00> : vector<8x256xf32>
    %281 = tpu.matmul %279, %280, %cst_169 {dimension_numbers = #tpu.dot_dimension_numbers<[1], [0], [0], [1], [0, 0, 1, 1], [], []>} : vector<8x256xbf16>, vector<256x256xbf16>, vector<8x256xf32> -> vector<8x256xf32>
    %282 = arith.index_cast %278 : i32 to index
    %c0_170 = arith.constant 0 : index
    %283 = vector.load %arg11[%282, %c0_170] : memref<224x256xf32, #tpu.memory_space<vmem>>, vector<8x256xf32>
    %284 = arith.truncf %264 : vector<8x256xf32> to vector<8x256xbf16>
    %c0_171 = arith.constant 0 : index
    %c0_172 = arith.constant 0 : index
    %285 = vector.load %arg3[%c0_171, %c0_172] : memref<256x256xbf16, #tpu.memory_space<vmem>>, vector<256x256xbf16>
    %cst_173 = arith.constant dense<0.000000e+00> : vector<8x256xf32>
    %286 = tpu.matmul %284, %285, %cst_173 {dimension_numbers = #tpu.dot_dimension_numbers<[1], [0], [0], [1], [0, 0, 1, 1], [], []>} : vector<8x256xbf16>, vector<256x256xbf16>, vector<8x256xf32> -> vector<8x256xf32>
    %287 = arith.addf %283, %286 : vector<8x256xf32>
    %288 = math.tanh %287 : vector<8x256xf32>
    %289 = arith.truncf %288 : vector<8x256xf32> to vector<8x256xbf16>
    %c0_174 = arith.constant 0 : index
    %c0_175 = arith.constant 0 : index
    %290 = vector.load %arg5[%c0_174, %c0_175] : memref<256x256xbf16, #tpu.memory_space<vmem>>, vector<256x256xbf16>
    %cst_176 = arith.constant dense<0.000000e+00> : vector<8x256xf32>
    %291 = tpu.matmul %289, %290, %cst_176 {dimension_numbers = #tpu.dot_dimension_numbers<[1], [0], [0], [1], [0, 0, 1, 1], [], []>} : vector<8x256xbf16>, vector<256x256xbf16>, vector<8x256xf32> -> vector<8x256xf32>
    %292 = arith.addf %291, %281 : vector<8x256xf32>
    %293 = arith.addf %292, %9 : vector<8x256xf32>
    %294 = math.tanh %293 : vector<8x256xf32>
    %295 = arith.truncf %294 : vector<8x256xf32> to vector<8x256xbf16>
    %296 = arith.index_cast %c11_i32 : i32 to index
    %c0_177 = arith.constant 0 : index
    %c0_178 = arith.constant 0 : index
    %297 = vector.load %arg8[%296, %c0_177, %c0_178] : memref<28x256x128xbf16, #tpu.memory_space<vmem>>, vector<1x256x128xbf16>
    %298 = vector.shape_cast %297 : vector<1x256x128xbf16> to vector<256x128xbf16>
    %cst_179 = arith.constant dense<0.000000e+00> : vector<8x128xf32>
    %299 = tpu.matmul %295, %298, %cst_179 {dimension_numbers = #tpu.dot_dimension_numbers<[1], [0], [0], [1], [0, 0, 1, 1], [], []>} : vector<8x256xbf16>, vector<256x128xbf16>, vector<8x128xf32> -> vector<8x128xf32>
    %300 = arith.addf %276, %299 : vector<8x128xf32>
    %c12_i32 = arith.constant 12 : i32
    %c8_i32_180 = arith.constant 8 : i32
    %301 = arith.muli %c12_i32, %c8_i32_180 : i32
    %302 = tpu.assume_multiple %301, 8 : i32
    %303 = arith.truncf %294 : vector<8x256xf32> to vector<8x256xbf16>
    %c0_181 = arith.constant 0 : index
    %c0_182 = arith.constant 0 : index
    %304 = vector.load %arg6[%c0_181, %c0_182] : memref<256x256xbf16, #tpu.memory_space<vmem>>, vector<256x256xbf16>
    %cst_183 = arith.constant dense<0.000000e+00> : vector<8x256xf32>
    %305 = tpu.matmul %303, %304, %cst_183 {dimension_numbers = #tpu.dot_dimension_numbers<[1], [0], [0], [1], [0, 0, 1, 1], [], []>} : vector<8x256xbf16>, vector<256x256xbf16>, vector<8x256xf32> -> vector<8x256xf32>
    %306 = arith.index_cast %302 : i32 to index
    %c0_184 = arith.constant 0 : index
    %307 = vector.load %arg11[%306, %c0_184] : memref<224x256xf32, #tpu.memory_space<vmem>>, vector<8x256xf32>
    %308 = arith.truncf %288 : vector<8x256xf32> to vector<8x256xbf16>
    %c0_185 = arith.constant 0 : index
    %c0_186 = arith.constant 0 : index
    %309 = vector.load %arg3[%c0_185, %c0_186] : memref<256x256xbf16, #tpu.memory_space<vmem>>, vector<256x256xbf16>
    %cst_187 = arith.constant dense<0.000000e+00> : vector<8x256xf32>
    %310 = tpu.matmul %308, %309, %cst_187 {dimension_numbers = #tpu.dot_dimension_numbers<[1], [0], [0], [1], [0, 0, 1, 1], [], []>} : vector<8x256xbf16>, vector<256x256xbf16>, vector<8x256xf32> -> vector<8x256xf32>
    %311 = arith.addf %307, %310 : vector<8x256xf32>
    %312 = math.tanh %311 : vector<8x256xf32>
    %313 = arith.truncf %312 : vector<8x256xf32> to vector<8x256xbf16>
    %c0_188 = arith.constant 0 : index
    %c0_189 = arith.constant 0 : index
    %314 = vector.load %arg5[%c0_188, %c0_189] : memref<256x256xbf16, #tpu.memory_space<vmem>>, vector<256x256xbf16>
    %cst_190 = arith.constant dense<0.000000e+00> : vector<8x256xf32>
    %315 = tpu.matmul %313, %314, %cst_190 {dimension_numbers = #tpu.dot_dimension_numbers<[1], [0], [0], [1], [0, 0, 1, 1], [], []>} : vector<8x256xbf16>, vector<256x256xbf16>, vector<8x256xf32> -> vector<8x256xf32>
    %316 = arith.addf %315, %305 : vector<8x256xf32>
    %317 = arith.addf %316, %9 : vector<8x256xf32>
    %318 = math.tanh %317 : vector<8x256xf32>
    %319 = arith.truncf %318 : vector<8x256xf32> to vector<8x256xbf16>
    %320 = arith.index_cast %c12_i32 : i32 to index
    %c0_191 = arith.constant 0 : index
    %c0_192 = arith.constant 0 : index
    %321 = vector.load %arg8[%320, %c0_191, %c0_192] : memref<28x256x128xbf16, #tpu.memory_space<vmem>>, vector<1x256x128xbf16>
    %322 = vector.shape_cast %321 : vector<1x256x128xbf16> to vector<256x128xbf16>
    %cst_193 = arith.constant dense<0.000000e+00> : vector<8x128xf32>
    %323 = tpu.matmul %319, %322, %cst_193 {dimension_numbers = #tpu.dot_dimension_numbers<[1], [0], [0], [1], [0, 0, 1, 1], [], []>} : vector<8x256xbf16>, vector<256x128xbf16>, vector<8x128xf32> -> vector<8x128xf32>
    %324 = arith.addf %300, %323 : vector<8x128xf32>
    %c13_i32 = arith.constant 13 : i32
    %c8_i32_194 = arith.constant 8 : i32
    %325 = arith.muli %c13_i32, %c8_i32_194 : i32
    %326 = tpu.assume_multiple %325, 8 : i32
    %327 = arith.truncf %318 : vector<8x256xf32> to vector<8x256xbf16>
    %c0_195 = arith.constant 0 : index
    %c0_196 = arith.constant 0 : index
    %328 = vector.load %arg6[%c0_195, %c0_196] : memref<256x256xbf16, #tpu.memory_space<vmem>>, vector<256x256xbf16>
    %cst_197 = arith.constant dense<0.000000e+00> : vector<8x256xf32>
    %329 = tpu.matmul %327, %328, %cst_197 {dimension_numbers = #tpu.dot_dimension_numbers<[1], [0], [0], [1], [0, 0, 1, 1], [], []>} : vector<8x256xbf16>, vector<256x256xbf16>, vector<8x256xf32> -> vector<8x256xf32>
    %330 = arith.index_cast %326 : i32 to index
    %c0_198 = arith.constant 0 : index
    %331 = vector.load %arg11[%330, %c0_198] : memref<224x256xf32, #tpu.memory_space<vmem>>, vector<8x256xf32>
    %332 = arith.truncf %312 : vector<8x256xf32> to vector<8x256xbf16>
    %c0_199 = arith.constant 0 : index
    %c0_200 = arith.constant 0 : index
    %333 = vector.load %arg3[%c0_199, %c0_200] : memref<256x256xbf16, #tpu.memory_space<vmem>>, vector<256x256xbf16>
    %cst_201 = arith.constant dense<0.000000e+00> : vector<8x256xf32>
    %334 = tpu.matmul %332, %333, %cst_201 {dimension_numbers = #tpu.dot_dimension_numbers<[1], [0], [0], [1], [0, 0, 1, 1], [], []>} : vector<8x256xbf16>, vector<256x256xbf16>, vector<8x256xf32> -> vector<8x256xf32>
    %335 = arith.addf %331, %334 : vector<8x256xf32>
    %336 = math.tanh %335 : vector<8x256xf32>
    %337 = arith.truncf %336 : vector<8x256xf32> to vector<8x256xbf16>
    %c0_202 = arith.constant 0 : index
    %c0_203 = arith.constant 0 : index
    %338 = vector.load %arg5[%c0_202, %c0_203] : memref<256x256xbf16, #tpu.memory_space<vmem>>, vector<256x256xbf16>
    %cst_204 = arith.constant dense<0.000000e+00> : vector<8x256xf32>
    %339 = tpu.matmul %337, %338, %cst_204 {dimension_numbers = #tpu.dot_dimension_numbers<[1], [0], [0], [1], [0, 0, 1, 1], [], []>} : vector<8x256xbf16>, vector<256x256xbf16>, vector<8x256xf32> -> vector<8x256xf32>
    %340 = arith.addf %339, %329 : vector<8x256xf32>
    %341 = arith.addf %340, %9 : vector<8x256xf32>
    %342 = math.tanh %341 : vector<8x256xf32>
    %343 = arith.truncf %342 : vector<8x256xf32> to vector<8x256xbf16>
    %344 = arith.index_cast %c13_i32 : i32 to index
    %c0_205 = arith.constant 0 : index
    %c0_206 = arith.constant 0 : index
    %345 = vector.load %arg8[%344, %c0_205, %c0_206] : memref<28x256x128xbf16, #tpu.memory_space<vmem>>, vector<1x256x128xbf16>
    %346 = vector.shape_cast %345 : vector<1x256x128xbf16> to vector<256x128xbf16>
    %cst_207 = arith.constant dense<0.000000e+00> : vector<8x128xf32>
    %347 = tpu.matmul %343, %346, %cst_207 {dimension_numbers = #tpu.dot_dimension_numbers<[1], [0], [0], [1], [0, 0, 1, 1], [], []>} : vector<8x256xbf16>, vector<256x128xbf16>, vector<8x128xf32> -> vector<8x128xf32>
    %348 = arith.addf %324, %347 : vector<8x128xf32>
    %c14_i32 = arith.constant 14 : i32
    %c8_i32_208 = arith.constant 8 : i32
    %349 = arith.muli %c14_i32, %c8_i32_208 : i32
    %350 = tpu.assume_multiple %349, 8 : i32
    %351 = arith.truncf %342 : vector<8x256xf32> to vector<8x256xbf16>
    %c0_209 = arith.constant 0 : index
    %c0_210 = arith.constant 0 : index
    %352 = vector.load %arg6[%c0_209, %c0_210] : memref<256x256xbf16, #tpu.memory_space<vmem>>, vector<256x256xbf16>
    %cst_211 = arith.constant dense<0.000000e+00> : vector<8x256xf32>
    %353 = tpu.matmul %351, %352, %cst_211 {dimension_numbers = #tpu.dot_dimension_numbers<[1], [0], [0], [1], [0, 0, 1, 1], [], []>} : vector<8x256xbf16>, vector<256x256xbf16>, vector<8x256xf32> -> vector<8x256xf32>
    %354 = arith.index_cast %350 : i32 to index
    %c0_212 = arith.constant 0 : index
    %355 = vector.load %arg11[%354, %c0_212] : memref<224x256xf32, #tpu.memory_space<vmem>>, vector<8x256xf32>
    %356 = arith.truncf %336 : vector<8x256xf32> to vector<8x256xbf16>
    %c0_213 = arith.constant 0 : index
    %c0_214 = arith.constant 0 : index
    %357 = vector.load %arg3[%c0_213, %c0_214] : memref<256x256xbf16, #tpu.memory_space<vmem>>, vector<256x256xbf16>
    %cst_215 = arith.constant dense<0.000000e+00> : vector<8x256xf32>
    %358 = tpu.matmul %356, %357, %cst_215 {dimension_numbers = #tpu.dot_dimension_numbers<[1], [0], [0], [1], [0, 0, 1, 1], [], []>} : vector<8x256xbf16>, vector<256x256xbf16>, vector<8x256xf32> -> vector<8x256xf32>
    %359 = arith.addf %355, %358 : vector<8x256xf32>
    %360 = math.tanh %359 : vector<8x256xf32>
    %361 = arith.truncf %360 : vector<8x256xf32> to vector<8x256xbf16>
    %c0_216 = arith.constant 0 : index
    %c0_217 = arith.constant 0 : index
    %362 = vector.load %arg5[%c0_216, %c0_217] : memref<256x256xbf16, #tpu.memory_space<vmem>>, vector<256x256xbf16>
    %cst_218 = arith.constant dense<0.000000e+00> : vector<8x256xf32>
    %363 = tpu.matmul %361, %362, %cst_218 {dimension_numbers = #tpu.dot_dimension_numbers<[1], [0], [0], [1], [0, 0, 1, 1], [], []>} : vector<8x256xbf16>, vector<256x256xbf16>, vector<8x256xf32> -> vector<8x256xf32>
    %364 = arith.addf %363, %353 : vector<8x256xf32>
    %365 = arith.addf %364, %9 : vector<8x256xf32>
    %366 = math.tanh %365 : vector<8x256xf32>
    %367 = arith.truncf %366 : vector<8x256xf32> to vector<8x256xbf16>
    %368 = arith.index_cast %c14_i32 : i32 to index
    %c0_219 = arith.constant 0 : index
    %c0_220 = arith.constant 0 : index
    %369 = vector.load %arg8[%368, %c0_219, %c0_220] : memref<28x256x128xbf16, #tpu.memory_space<vmem>>, vector<1x256x128xbf16>
    %370 = vector.shape_cast %369 : vector<1x256x128xbf16> to vector<256x128xbf16>
    %cst_221 = arith.constant dense<0.000000e+00> : vector<8x128xf32>
    %371 = tpu.matmul %367, %370, %cst_221 {dimension_numbers = #tpu.dot_dimension_numbers<[1], [0], [0], [1], [0, 0, 1, 1], [], []>} : vector<8x256xbf16>, vector<256x128xbf16>, vector<8x128xf32> -> vector<8x128xf32>
    %372 = arith.addf %348, %371 : vector<8x128xf32>
    %c15_i32 = arith.constant 15 : i32
    %c8_i32_222 = arith.constant 8 : i32
    %373 = arith.muli %c15_i32, %c8_i32_222 : i32
    %374 = tpu.assume_multiple %373, 8 : i32
    %375 = arith.truncf %366 : vector<8x256xf32> to vector<8x256xbf16>
    %c0_223 = arith.constant 0 : index
    %c0_224 = arith.constant 0 : index
    %376 = vector.load %arg6[%c0_223, %c0_224] : memref<256x256xbf16, #tpu.memory_space<vmem>>, vector<256x256xbf16>
    %cst_225 = arith.constant dense<0.000000e+00> : vector<8x256xf32>
    %377 = tpu.matmul %375, %376, %cst_225 {dimension_numbers = #tpu.dot_dimension_numbers<[1], [0], [0], [1], [0, 0, 1, 1], [], []>} : vector<8x256xbf16>, vector<256x256xbf16>, vector<8x256xf32> -> vector<8x256xf32>
    %378 = arith.index_cast %374 : i32 to index
    %c0_226 = arith.constant 0 : index
    %379 = vector.load %arg11[%378, %c0_226] : memref<224x256xf32, #tpu.memory_space<vmem>>, vector<8x256xf32>
    %380 = arith.truncf %360 : vector<8x256xf32> to vector<8x256xbf16>
    %c0_227 = arith.constant 0 : index
    %c0_228 = arith.constant 0 : index
    %381 = vector.load %arg3[%c0_227, %c0_228] : memref<256x256xbf16, #tpu.memory_space<vmem>>, vector<256x256xbf16>
    %cst_229 = arith.constant dense<0.000000e+00> : vector<8x256xf32>
    %382 = tpu.matmul %380, %381, %cst_229 {dimension_numbers = #tpu.dot_dimension_numbers<[1], [0], [0], [1], [0, 0, 1, 1], [], []>} : vector<8x256xbf16>, vector<256x256xbf16>, vector<8x256xf32> -> vector<8x256xf32>
    %383 = arith.addf %379, %382 : vector<8x256xf32>
    %384 = math.tanh %383 : vector<8x256xf32>
    %385 = arith.truncf %384 : vector<8x256xf32> to vector<8x256xbf16>
    %c0_230 = arith.constant 0 : index
    %c0_231 = arith.constant 0 : index
    %386 = vector.load %arg5[%c0_230, %c0_231] : memref<256x256xbf16, #tpu.memory_space<vmem>>, vector<256x256xbf16>
    %cst_232 = arith.constant dense<0.000000e+00> : vector<8x256xf32>
    %387 = tpu.matmul %385, %386, %cst_232 {dimension_numbers = #tpu.dot_dimension_numbers<[1], [0], [0], [1], [0, 0, 1, 1], [], []>} : vector<8x256xbf16>, vector<256x256xbf16>, vector<8x256xf32> -> vector<8x256xf32>
    %388 = arith.addf %387, %377 : vector<8x256xf32>
    %389 = arith.addf %388, %9 : vector<8x256xf32>
    %390 = math.tanh %389 : vector<8x256xf32>
    %391 = arith.truncf %390 : vector<8x256xf32> to vector<8x256xbf16>
    %392 = arith.index_cast %c15_i32 : i32 to index
    %c0_233 = arith.constant 0 : index
    %c0_234 = arith.constant 0 : index
    %393 = vector.load %arg8[%392, %c0_233, %c0_234] : memref<28x256x128xbf16, #tpu.memory_space<vmem>>, vector<1x256x128xbf16>
    %394 = vector.shape_cast %393 : vector<1x256x128xbf16> to vector<256x128xbf16>
    %cst_235 = arith.constant dense<0.000000e+00> : vector<8x128xf32>
    %395 = tpu.matmul %391, %394, %cst_235 {dimension_numbers = #tpu.dot_dimension_numbers<[1], [0], [0], [1], [0, 0, 1, 1], [], []>} : vector<8x256xbf16>, vector<256x128xbf16>, vector<8x128xf32> -> vector<8x128xf32>
    %396 = arith.addf %372, %395 : vector<8x128xf32>
    %c16_i32 = arith.constant 16 : i32
    %c8_i32_236 = arith.constant 8 : i32
    %397 = arith.muli %c16_i32, %c8_i32_236 : i32
    %398 = tpu.assume_multiple %397, 8 : i32
    %399 = arith.truncf %390 : vector<8x256xf32> to vector<8x256xbf16>
    %c0_237 = arith.constant 0 : index
    %c0_238 = arith.constant 0 : index
    %400 = vector.load %arg6[%c0_237, %c0_238] : memref<256x256xbf16, #tpu.memory_space<vmem>>, vector<256x256xbf16>
    %cst_239 = arith.constant dense<0.000000e+00> : vector<8x256xf32>
    %401 = tpu.matmul %399, %400, %cst_239 {dimension_numbers = #tpu.dot_dimension_numbers<[1], [0], [0], [1], [0, 0, 1, 1], [], []>} : vector<8x256xbf16>, vector<256x256xbf16>, vector<8x256xf32> -> vector<8x256xf32>
    %402 = arith.index_cast %398 : i32 to index
    %c0_240 = arith.constant 0 : index
    %403 = vector.load %arg11[%402, %c0_240] : memref<224x256xf32, #tpu.memory_space<vmem>>, vector<8x256xf32>
    %404 = arith.truncf %384 : vector<8x256xf32> to vector<8x256xbf16>
    %c0_241 = arith.constant 0 : index
    %c0_242 = arith.constant 0 : index
    %405 = vector.load %arg3[%c0_241, %c0_242] : memref<256x256xbf16, #tpu.memory_space<vmem>>, vector<256x256xbf16>
    %cst_243 = arith.constant dense<0.000000e+00> : vector<8x256xf32>
    %406 = tpu.matmul %404, %405, %cst_243 {dimension_numbers = #tpu.dot_dimension_numbers<[1], [0], [0], [1], [0, 0, 1, 1], [], []>} : vector<8x256xbf16>, vector<256x256xbf16>, vector<8x256xf32> -> vector<8x256xf32>
    %407 = arith.addf %403, %406 : vector<8x256xf32>
    %408 = math.tanh %407 : vector<8x256xf32>
    %409 = arith.truncf %408 : vector<8x256xf32> to vector<8x256xbf16>
    %c0_244 = arith.constant 0 : index
    %c0_245 = arith.constant 0 : index
    %410 = vector.load %arg5[%c0_244, %c0_245] : memref<256x256xbf16, #tpu.memory_space<vmem>>, vector<256x256xbf16>
    %cst_246 = arith.constant dense<0.000000e+00> : vector<8x256xf32>
    %411 = tpu.matmul %409, %410, %cst_246 {dimension_numbers = #tpu.dot_dimension_numbers<[1], [0], [0], [1], [0, 0, 1, 1], [], []>} : vector<8x256xbf16>, vector<256x256xbf16>, vector<8x256xf32> -> vector<8x256xf32>
    %412 = arith.addf %411, %401 : vector<8x256xf32>
    %413 = arith.addf %412, %9 : vector<8x256xf32>
    %414 = math.tanh %413 : vector<8x256xf32>
    %415 = arith.truncf %414 : vector<8x256xf32> to vector<8x256xbf16>
    %416 = arith.index_cast %c16_i32 : i32 to index
    %c0_247 = arith.constant 0 : index
    %c0_248 = arith.constant 0 : index
    %417 = vector.load %arg8[%416, %c0_247, %c0_248] : memref<28x256x128xbf16, #tpu.memory_space<vmem>>, vector<1x256x128xbf16>
    %418 = vector.shape_cast %417 : vector<1x256x128xbf16> to vector<256x128xbf16>
    %cst_249 = arith.constant dense<0.000000e+00> : vector<8x128xf32>
    %419 = tpu.matmul %415, %418, %cst_249 {dimension_numbers = #tpu.dot_dimension_numbers<[1], [0], [0], [1], [0, 0, 1, 1], [], []>} : vector<8x256xbf16>, vector<256x128xbf16>, vector<8x128xf32> -> vector<8x128xf32>
    %420 = arith.addf %396, %419 : vector<8x128xf32>
    %c17_i32 = arith.constant 17 : i32
    %c8_i32_250 = arith.constant 8 : i32
    %421 = arith.muli %c17_i32, %c8_i32_250 : i32
    %422 = tpu.assume_multiple %421, 8 : i32
    %423 = arith.truncf %414 : vector<8x256xf32> to vector<8x256xbf16>
    %c0_251 = arith.constant 0 : index
    %c0_252 = arith.constant 0 : index
    %424 = vector.load %arg6[%c0_251, %c0_252] : memref<256x256xbf16, #tpu.memory_space<vmem>>, vector<256x256xbf16>
    %cst_253 = arith.constant dense<0.000000e+00> : vector<8x256xf32>
    %425 = tpu.matmul %423, %424, %cst_253 {dimension_numbers = #tpu.dot_dimension_numbers<[1], [0], [0], [1], [0, 0, 1, 1], [], []>} : vector<8x256xbf16>, vector<256x256xbf16>, vector<8x256xf32> -> vector<8x256xf32>
    %426 = arith.index_cast %422 : i32 to index
    %c0_254 = arith.constant 0 : index
    %427 = vector.load %arg11[%426, %c0_254] : memref<224x256xf32, #tpu.memory_space<vmem>>, vector<8x256xf32>
    %428 = arith.truncf %408 : vector<8x256xf32> to vector<8x256xbf16>
    %c0_255 = arith.constant 0 : index
    %c0_256 = arith.constant 0 : index
    %429 = vector.load %arg3[%c0_255, %c0_256] : memref<256x256xbf16, #tpu.memory_space<vmem>>, vector<256x256xbf16>
    %cst_257 = arith.constant dense<0.000000e+00> : vector<8x256xf32>
    %430 = tpu.matmul %428, %429, %cst_257 {dimension_numbers = #tpu.dot_dimension_numbers<[1], [0], [0], [1], [0, 0, 1, 1], [], []>} : vector<8x256xbf16>, vector<256x256xbf16>, vector<8x256xf32> -> vector<8x256xf32>
    %431 = arith.addf %427, %430 : vector<8x256xf32>
    %432 = math.tanh %431 : vector<8x256xf32>
    %433 = arith.truncf %432 : vector<8x256xf32> to vector<8x256xbf16>
    %c0_258 = arith.constant 0 : index
    %c0_259 = arith.constant 0 : index
    %434 = vector.load %arg5[%c0_258, %c0_259] : memref<256x256xbf16, #tpu.memory_space<vmem>>, vector<256x256xbf16>
    %cst_260 = arith.constant dense<0.000000e+00> : vector<8x256xf32>
    %435 = tpu.matmul %433, %434, %cst_260 {dimension_numbers = #tpu.dot_dimension_numbers<[1], [0], [0], [1], [0, 0, 1, 1], [], []>} : vector<8x256xbf16>, vector<256x256xbf16>, vector<8x256xf32> -> vector<8x256xf32>
    %436 = arith.addf %435, %425 : vector<8x256xf32>
    %437 = arith.addf %436, %9 : vector<8x256xf32>
    %438 = math.tanh %437 : vector<8x256xf32>
    %439 = arith.truncf %438 : vector<8x256xf32> to vector<8x256xbf16>
    %440 = arith.index_cast %c17_i32 : i32 to index
    %c0_261 = arith.constant 0 : index
    %c0_262 = arith.constant 0 : index
    %441 = vector.load %arg8[%440, %c0_261, %c0_262] : memref<28x256x128xbf16, #tpu.memory_space<vmem>>, vector<1x256x128xbf16>
    %442 = vector.shape_cast %441 : vector<1x256x128xbf16> to vector<256x128xbf16>
    %cst_263 = arith.constant dense<0.000000e+00> : vector<8x128xf32>
    %443 = tpu.matmul %439, %442, %cst_263 {dimension_numbers = #tpu.dot_dimension_numbers<[1], [0], [0], [1], [0, 0, 1, 1], [], []>} : vector<8x256xbf16>, vector<256x128xbf16>, vector<8x128xf32> -> vector<8x128xf32>
    %444 = arith.addf %420, %443 : vector<8x128xf32>
    %c18_i32 = arith.constant 18 : i32
    %c8_i32_264 = arith.constant 8 : i32
    %445 = arith.muli %c18_i32, %c8_i32_264 : i32
    %446 = tpu.assume_multiple %445, 8 : i32
    %447 = arith.truncf %438 : vector<8x256xf32> to vector<8x256xbf16>
    %c0_265 = arith.constant 0 : index
    %c0_266 = arith.constant 0 : index
    %448 = vector.load %arg6[%c0_265, %c0_266] : memref<256x256xbf16, #tpu.memory_space<vmem>>, vector<256x256xbf16>
    %cst_267 = arith.constant dense<0.000000e+00> : vector<8x256xf32>
    %449 = tpu.matmul %447, %448, %cst_267 {dimension_numbers = #tpu.dot_dimension_numbers<[1], [0], [0], [1], [0, 0, 1, 1], [], []>} : vector<8x256xbf16>, vector<256x256xbf16>, vector<8x256xf32> -> vector<8x256xf32>
    %450 = arith.index_cast %446 : i32 to index
    %c0_268 = arith.constant 0 : index
    %451 = vector.load %arg11[%450, %c0_268] : memref<224x256xf32, #tpu.memory_space<vmem>>, vector<8x256xf32>
    %452 = arith.truncf %432 : vector<8x256xf32> to vector<8x256xbf16>
    %c0_269 = arith.constant 0 : index
    %c0_270 = arith.constant 0 : index
    %453 = vector.load %arg3[%c0_269, %c0_270] : memref<256x256xbf16, #tpu.memory_space<vmem>>, vector<256x256xbf16>
    %cst_271 = arith.constant dense<0.000000e+00> : vector<8x256xf32>
    %454 = tpu.matmul %452, %453, %cst_271 {dimension_numbers = #tpu.dot_dimension_numbers<[1], [0], [0], [1], [0, 0, 1, 1], [], []>} : vector<8x256xbf16>, vector<256x256xbf16>, vector<8x256xf32> -> vector<8x256xf32>
    %455 = arith.addf %451, %454 : vector<8x256xf32>
    %456 = math.tanh %455 : vector<8x256xf32>
    %457 = arith.truncf %456 : vector<8x256xf32> to vector<8x256xbf16>
    %c0_272 = arith.constant 0 : index
    %c0_273 = arith.constant 0 : index
    %458 = vector.load %arg5[%c0_272, %c0_273] : memref<256x256xbf16, #tpu.memory_space<vmem>>, vector<256x256xbf16>
    %cst_274 = arith.constant dense<0.000000e+00> : vector<8x256xf32>
    %459 = tpu.matmul %457, %458, %cst_274 {dimension_numbers = #tpu.dot_dimension_numbers<[1], [0], [0], [1], [0, 0, 1, 1], [], []>} : vector<8x256xbf16>, vector<256x256xbf16>, vector<8x256xf32> -> vector<8x256xf32>
    %460 = arith.addf %459, %449 : vector<8x256xf32>
    %461 = arith.addf %460, %9 : vector<8x256xf32>
    %462 = math.tanh %461 : vector<8x256xf32>
    %463 = arith.truncf %462 : vector<8x256xf32> to vector<8x256xbf16>
    %464 = arith.index_cast %c18_i32 : i32 to index
    %c0_275 = arith.constant 0 : index
    %c0_276 = arith.constant 0 : index
    %465 = vector.load %arg8[%464, %c0_275, %c0_276] : memref<28x256x128xbf16, #tpu.memory_space<vmem>>, vector<1x256x128xbf16>
    %466 = vector.shape_cast %465 : vector<1x256x128xbf16> to vector<256x128xbf16>
    %cst_277 = arith.constant dense<0.000000e+00> : vector<8x128xf32>
    %467 = tpu.matmul %463, %466, %cst_277 {dimension_numbers = #tpu.dot_dimension_numbers<[1], [0], [0], [1], [0, 0, 1, 1], [], []>} : vector<8x256xbf16>, vector<256x128xbf16>, vector<8x128xf32> -> vector<8x128xf32>
    %468 = arith.addf %444, %467 : vector<8x128xf32>
    %c19_i32 = arith.constant 19 : i32
    %c8_i32_278 = arith.constant 8 : i32
    %469 = arith.muli %c19_i32, %c8_i32_278 : i32
    %470 = tpu.assume_multiple %469, 8 : i32
    %471 = arith.truncf %462 : vector<8x256xf32> to vector<8x256xbf16>
    %c0_279 = arith.constant 0 : index
    %c0_280 = arith.constant 0 : index
    %472 = vector.load %arg6[%c0_279, %c0_280] : memref<256x256xbf16, #tpu.memory_space<vmem>>, vector<256x256xbf16>
    %cst_281 = arith.constant dense<0.000000e+00> : vector<8x256xf32>
    %473 = tpu.matmul %471, %472, %cst_281 {dimension_numbers = #tpu.dot_dimension_numbers<[1], [0], [0], [1], [0, 0, 1, 1], [], []>} : vector<8x256xbf16>, vector<256x256xbf16>, vector<8x256xf32> -> vector<8x256xf32>
    %474 = arith.index_cast %470 : i32 to index
    %c0_282 = arith.constant 0 : index
    %475 = vector.load %arg11[%474, %c0_282] : memref<224x256xf32, #tpu.memory_space<vmem>>, vector<8x256xf32>
    %476 = arith.truncf %456 : vector<8x256xf32> to vector<8x256xbf16>
    %c0_283 = arith.constant 0 : index
    %c0_284 = arith.constant 0 : index
    %477 = vector.load %arg3[%c0_283, %c0_284] : memref<256x256xbf16, #tpu.memory_space<vmem>>, vector<256x256xbf16>
    %cst_285 = arith.constant dense<0.000000e+00> : vector<8x256xf32>
    %478 = tpu.matmul %476, %477, %cst_285 {dimension_numbers = #tpu.dot_dimension_numbers<[1], [0], [0], [1], [0, 0, 1, 1], [], []>} : vector<8x256xbf16>, vector<256x256xbf16>, vector<8x256xf32> -> vector<8x256xf32>
    %479 = arith.addf %475, %478 : vector<8x256xf32>
    %480 = math.tanh %479 : vector<8x256xf32>
    %481 = arith.truncf %480 : vector<8x256xf32> to vector<8x256xbf16>
    %c0_286 = arith.constant 0 : index
    %c0_287 = arith.constant 0 : index
    %482 = vector.load %arg5[%c0_286, %c0_287] : memref<256x256xbf16, #tpu.memory_space<vmem>>, vector<256x256xbf16>
    %cst_288 = arith.constant dense<0.000000e+00> : vector<8x256xf32>
    %483 = tpu.matmul %481, %482, %cst_288 {dimension_numbers = #tpu.dot_dimension_numbers<[1], [0], [0], [1], [0, 0, 1, 1], [], []>} : vector<8x256xbf16>, vector<256x256xbf16>, vector<8x256xf32> -> vector<8x256xf32>
    %484 = arith.addf %483, %473 : vector<8x256xf32>
    %485 = arith.addf %484, %9 : vector<8x256xf32>
    %486 = math.tanh %485 : vector<8x256xf32>
    %487 = arith.truncf %486 : vector<8x256xf32> to vector<8x256xbf16>
    %488 = arith.index_cast %c19_i32 : i32 to index
    %c0_289 = arith.constant 0 : index
    %c0_290 = arith.constant 0 : index
    %489 = vector.load %arg8[%488, %c0_289, %c0_290] : memref<28x256x128xbf16, #tpu.memory_space<vmem>>, vector<1x256x128xbf16>
    %490 = vector.shape_cast %489 : vector<1x256x128xbf16> to vector<256x128xbf16>
    %cst_291 = arith.constant dense<0.000000e+00> : vector<8x128xf32>
    %491 = tpu.matmul %487, %490, %cst_291 {dimension_numbers = #tpu.dot_dimension_numbers<[1], [0], [0], [1], [0, 0, 1, 1], [], []>} : vector<8x256xbf16>, vector<256x128xbf16>, vector<8x128xf32> -> vector<8x128xf32>
    %492 = arith.addf %468, %491 : vector<8x128xf32>
    %c20_i32 = arith.constant 20 : i32
    %c8_i32_292 = arith.constant 8 : i32
    %493 = arith.muli %c20_i32, %c8_i32_292 : i32
    %494 = tpu.assume_multiple %493, 8 : i32
    %495 = arith.truncf %486 : vector<8x256xf32> to vector<8x256xbf16>
    %c0_293 = arith.constant 0 : index
    %c0_294 = arith.constant 0 : index
    %496 = vector.load %arg6[%c0_293, %c0_294] : memref<256x256xbf16, #tpu.memory_space<vmem>>, vector<256x256xbf16>
    %cst_295 = arith.constant dense<0.000000e+00> : vector<8x256xf32>
    %497 = tpu.matmul %495, %496, %cst_295 {dimension_numbers = #tpu.dot_dimension_numbers<[1], [0], [0], [1], [0, 0, 1, 1], [], []>} : vector<8x256xbf16>, vector<256x256xbf16>, vector<8x256xf32> -> vector<8x256xf32>
    %498 = arith.index_cast %494 : i32 to index
    %c0_296 = arith.constant 0 : index
    %499 = vector.load %arg11[%498, %c0_296] : memref<224x256xf32, #tpu.memory_space<vmem>>, vector<8x256xf32>
    %500 = arith.truncf %480 : vector<8x256xf32> to vector<8x256xbf16>
    %c0_297 = arith.constant 0 : index
    %c0_298 = arith.constant 0 : index
    %501 = vector.load %arg3[%c0_297, %c0_298] : memref<256x256xbf16, #tpu.memory_space<vmem>>, vector<256x256xbf16>
    %cst_299 = arith.constant dense<0.000000e+00> : vector<8x256xf32>
    %502 = tpu.matmul %500, %501, %cst_299 {dimension_numbers = #tpu.dot_dimension_numbers<[1], [0], [0], [1], [0, 0, 1, 1], [], []>} : vector<8x256xbf16>, vector<256x256xbf16>, vector<8x256xf32> -> vector<8x256xf32>
    %503 = arith.addf %499, %502 : vector<8x256xf32>
    %504 = math.tanh %503 : vector<8x256xf32>
    %505 = arith.truncf %504 : vector<8x256xf32> to vector<8x256xbf16>
    %c0_300 = arith.constant 0 : index
    %c0_301 = arith.constant 0 : index
    %506 = vector.load %arg5[%c0_300, %c0_301] : memref<256x256xbf16, #tpu.memory_space<vmem>>, vector<256x256xbf16>
    %cst_302 = arith.constant dense<0.000000e+00> : vector<8x256xf32>
    %507 = tpu.matmul %505, %506, %cst_302 {dimension_numbers = #tpu.dot_dimension_numbers<[1], [0], [0], [1], [0, 0, 1, 1], [], []>} : vector<8x256xbf16>, vector<256x256xbf16>, vector<8x256xf32> -> vector<8x256xf32>
    %508 = arith.addf %507, %497 : vector<8x256xf32>
    %509 = arith.addf %508, %9 : vector<8x256xf32>
    %510 = math.tanh %509 : vector<8x256xf32>
    %511 = arith.truncf %510 : vector<8x256xf32> to vector<8x256xbf16>
    %512 = arith.index_cast %c20_i32 : i32 to index
    %c0_303 = arith.constant 0 : index
    %c0_304 = arith.constant 0 : index
    %513 = vector.load %arg8[%512, %c0_303, %c0_304] : memref<28x256x128xbf16, #tpu.memory_space<vmem>>, vector<1x256x128xbf16>
    %514 = vector.shape_cast %513 : vector<1x256x128xbf16> to vector<256x128xbf16>
    %cst_305 = arith.constant dense<0.000000e+00> : vector<8x128xf32>
    %515 = tpu.matmul %511, %514, %cst_305 {dimension_numbers = #tpu.dot_dimension_numbers<[1], [0], [0], [1], [0, 0, 1, 1], [], []>} : vector<8x256xbf16>, vector<256x128xbf16>, vector<8x128xf32> -> vector<8x128xf32>
    %516 = arith.addf %492, %515 : vector<8x128xf32>
    %c21_i32 = arith.constant 21 : i32
    %c8_i32_306 = arith.constant 8 : i32
    %517 = arith.muli %c21_i32, %c8_i32_306 : i32
    %518 = tpu.assume_multiple %517, 8 : i32
    %519 = arith.truncf %510 : vector<8x256xf32> to vector<8x256xbf16>
    %c0_307 = arith.constant 0 : index
    %c0_308 = arith.constant 0 : index
    %520 = vector.load %arg6[%c0_307, %c0_308] : memref<256x256xbf16, #tpu.memory_space<vmem>>, vector<256x256xbf16>
    %cst_309 = arith.constant dense<0.000000e+00> : vector<8x256xf32>
    %521 = tpu.matmul %519, %520, %cst_309 {dimension_numbers = #tpu.dot_dimension_numbers<[1], [0], [0], [1], [0, 0, 1, 1], [], []>} : vector<8x256xbf16>, vector<256x256xbf16>, vector<8x256xf32> -> vector<8x256xf32>
    %522 = arith.index_cast %518 : i32 to index
    %c0_310 = arith.constant 0 : index
    %523 = vector.load %arg11[%522, %c0_310] : memref<224x256xf32, #tpu.memory_space<vmem>>, vector<8x256xf32>
    %524 = arith.truncf %504 : vector<8x256xf32> to vector<8x256xbf16>
    %c0_311 = arith.constant 0 : index
    %c0_312 = arith.constant 0 : index
    %525 = vector.load %arg3[%c0_311, %c0_312] : memref<256x256xbf16, #tpu.memory_space<vmem>>, vector<256x256xbf16>
    %cst_313 = arith.constant dense<0.000000e+00> : vector<8x256xf32>
    %526 = tpu.matmul %524, %525, %cst_313 {dimension_numbers = #tpu.dot_dimension_numbers<[1], [0], [0], [1], [0, 0, 1, 1], [], []>} : vector<8x256xbf16>, vector<256x256xbf16>, vector<8x256xf32> -> vector<8x256xf32>
    %527 = arith.addf %523, %526 : vector<8x256xf32>
    %528 = math.tanh %527 : vector<8x256xf32>
    %529 = arith.truncf %528 : vector<8x256xf32> to vector<8x256xbf16>
    %c0_314 = arith.constant 0 : index
    %c0_315 = arith.constant 0 : index
    %530 = vector.load %arg5[%c0_314, %c0_315] : memref<256x256xbf16, #tpu.memory_space<vmem>>, vector<256x256xbf16>
    %cst_316 = arith.constant dense<0.000000e+00> : vector<8x256xf32>
    %531 = tpu.matmul %529, %530, %cst_316 {dimension_numbers = #tpu.dot_dimension_numbers<[1], [0], [0], [1], [0, 0, 1, 1], [], []>} : vector<8x256xbf16>, vector<256x256xbf16>, vector<8x256xf32> -> vector<8x256xf32>
    %532 = arith.addf %531, %521 : vector<8x256xf32>
    %533 = arith.addf %532, %9 : vector<8x256xf32>
    %534 = math.tanh %533 : vector<8x256xf32>
    %535 = arith.truncf %534 : vector<8x256xf32> to vector<8x256xbf16>
    %536 = arith.index_cast %c21_i32 : i32 to index
    %c0_317 = arith.constant 0 : index
    %c0_318 = arith.constant 0 : index
    %537 = vector.load %arg8[%536, %c0_317, %c0_318] : memref<28x256x128xbf16, #tpu.memory_space<vmem>>, vector<1x256x128xbf16>
    %538 = vector.shape_cast %537 : vector<1x256x128xbf16> to vector<256x128xbf16>
    %cst_319 = arith.constant dense<0.000000e+00> : vector<8x128xf32>
    %539 = tpu.matmul %535, %538, %cst_319 {dimension_numbers = #tpu.dot_dimension_numbers<[1], [0], [0], [1], [0, 0, 1, 1], [], []>} : vector<8x256xbf16>, vector<256x128xbf16>, vector<8x128xf32> -> vector<8x128xf32>
    %540 = arith.addf %516, %539 : vector<8x128xf32>
    %c22_i32 = arith.constant 22 : i32
    %c8_i32_320 = arith.constant 8 : i32
    %541 = arith.muli %c22_i32, %c8_i32_320 : i32
    %542 = tpu.assume_multiple %541, 8 : i32
    %543 = arith.truncf %534 : vector<8x256xf32> to vector<8x256xbf16>
    %c0_321 = arith.constant 0 : index
    %c0_322 = arith.constant 0 : index
    %544 = vector.load %arg6[%c0_321, %c0_322] : memref<256x256xbf16, #tpu.memory_space<vmem>>, vector<256x256xbf16>
    %cst_323 = arith.constant dense<0.000000e+00> : vector<8x256xf32>
    %545 = tpu.matmul %543, %544, %cst_323 {dimension_numbers = #tpu.dot_dimension_numbers<[1], [0], [0], [1], [0, 0, 1, 1], [], []>} : vector<8x256xbf16>, vector<256x256xbf16>, vector<8x256xf32> -> vector<8x256xf32>
    %546 = arith.index_cast %542 : i32 to index
    %c0_324 = arith.constant 0 : index
    %547 = vector.load %arg11[%546, %c0_324] : memref<224x256xf32, #tpu.memory_space<vmem>>, vector<8x256xf32>
    %548 = arith.truncf %528 : vector<8x256xf32> to vector<8x256xbf16>
    %c0_325 = arith.constant 0 : index
    %c0_326 = arith.constant 0 : index
    %549 = vector.load %arg3[%c0_325, %c0_326] : memref<256x256xbf16, #tpu.memory_space<vmem>>, vector<256x256xbf16>
    %cst_327 = arith.constant dense<0.000000e+00> : vector<8x256xf32>
    %550 = tpu.matmul %548, %549, %cst_327 {dimension_numbers = #tpu.dot_dimension_numbers<[1], [0], [0], [1], [0, 0, 1, 1], [], []>} : vector<8x256xbf16>, vector<256x256xbf16>, vector<8x256xf32> -> vector<8x256xf32>
    %551 = arith.addf %547, %550 : vector<8x256xf32>
    %552 = math.tanh %551 : vector<8x256xf32>
    %553 = arith.truncf %552 : vector<8x256xf32> to vector<8x256xbf16>
    %c0_328 = arith.constant 0 : index
    %c0_329 = arith.constant 0 : index
    %554 = vector.load %arg5[%c0_328, %c0_329] : memref<256x256xbf16, #tpu.memory_space<vmem>>, vector<256x256xbf16>
    %cst_330 = arith.constant dense<0.000000e+00> : vector<8x256xf32>
    %555 = tpu.matmul %553, %554, %cst_330 {dimension_numbers = #tpu.dot_dimension_numbers<[1], [0], [0], [1], [0, 0, 1, 1], [], []>} : vector<8x256xbf16>, vector<256x256xbf16>, vector<8x256xf32> -> vector<8x256xf32>
    %556 = arith.addf %555, %545 : vector<8x256xf32>
    %557 = arith.addf %556, %9 : vector<8x256xf32>
    %558 = math.tanh %557 : vector<8x256xf32>
    %559 = arith.truncf %558 : vector<8x256xf32> to vector<8x256xbf16>
    %560 = arith.index_cast %c22_i32 : i32 to index
    %c0_331 = arith.constant 0 : index
    %c0_332 = arith.constant 0 : index
    %561 = vector.load %arg8[%560, %c0_331, %c0_332] : memref<28x256x128xbf16, #tpu.memory_space<vmem>>, vector<1x256x128xbf16>
    %562 = vector.shape_cast %561 : vector<1x256x128xbf16> to vector<256x128xbf16>
    %cst_333 = arith.constant dense<0.000000e+00> : vector<8x128xf32>
    %563 = tpu.matmul %559, %562, %cst_333 {dimension_numbers = #tpu.dot_dimension_numbers<[1], [0], [0], [1], [0, 0, 1, 1], [], []>} : vector<8x256xbf16>, vector<256x128xbf16>, vector<8x128xf32> -> vector<8x128xf32>
    %564 = arith.addf %540, %563 : vector<8x128xf32>
    %c23_i32 = arith.constant 23 : i32
    %c8_i32_334 = arith.constant 8 : i32
    %565 = arith.muli %c23_i32, %c8_i32_334 : i32
    %566 = tpu.assume_multiple %565, 8 : i32
    %567 = arith.truncf %558 : vector<8x256xf32> to vector<8x256xbf16>
    %c0_335 = arith.constant 0 : index
    %c0_336 = arith.constant 0 : index
    %568 = vector.load %arg6[%c0_335, %c0_336] : memref<256x256xbf16, #tpu.memory_space<vmem>>, vector<256x256xbf16>
    %cst_337 = arith.constant dense<0.000000e+00> : vector<8x256xf32>
    %569 = tpu.matmul %567, %568, %cst_337 {dimension_numbers = #tpu.dot_dimension_numbers<[1], [0], [0], [1], [0, 0, 1, 1], [], []>} : vector<8x256xbf16>, vector<256x256xbf16>, vector<8x256xf32> -> vector<8x256xf32>
    %570 = arith.index_cast %566 : i32 to index
    %c0_338 = arith.constant 0 : index
    %571 = vector.load %arg11[%570, %c0_338] : memref<224x256xf32, #tpu.memory_space<vmem>>, vector<8x256xf32>
    %572 = arith.truncf %552 : vector<8x256xf32> to vector<8x256xbf16>
    %c0_339 = arith.constant 0 : index
    %c0_340 = arith.constant 0 : index
    %573 = vector.load %arg3[%c0_339, %c0_340] : memref<256x256xbf16, #tpu.memory_space<vmem>>, vector<256x256xbf16>
    %cst_341 = arith.constant dense<0.000000e+00> : vector<8x256xf32>
    %574 = tpu.matmul %572, %573, %cst_341 {dimension_numbers = #tpu.dot_dimension_numbers<[1], [0], [0], [1], [0, 0, 1, 1], [], []>} : vector<8x256xbf16>, vector<256x256xbf16>, vector<8x256xf32> -> vector<8x256xf32>
    %575 = arith.addf %571, %574 : vector<8x256xf32>
    %576 = math.tanh %575 : vector<8x256xf32>
    %577 = arith.truncf %576 : vector<8x256xf32> to vector<8x256xbf16>
    %c0_342 = arith.constant 0 : index
    %c0_343 = arith.constant 0 : index
    %578 = vector.load %arg5[%c0_342, %c0_343] : memref<256x256xbf16, #tpu.memory_space<vmem>>, vector<256x256xbf16>
    %cst_344 = arith.constant dense<0.000000e+00> : vector<8x256xf32>
    %579 = tpu.matmul %577, %578, %cst_344 {dimension_numbers = #tpu.dot_dimension_numbers<[1], [0], [0], [1], [0, 0, 1, 1], [], []>} : vector<8x256xbf16>, vector<256x256xbf16>, vector<8x256xf32> -> vector<8x256xf32>
    %580 = arith.addf %579, %569 : vector<8x256xf32>
    %581 = arith.addf %580, %9 : vector<8x256xf32>
    %582 = math.tanh %581 : vector<8x256xf32>
    %583 = arith.truncf %582 : vector<8x256xf32> to vector<8x256xbf16>
    %584 = arith.index_cast %c23_i32 : i32 to index
    %c0_345 = arith.constant 0 : index
    %c0_346 = arith.constant 0 : index
    %585 = vector.load %arg8[%584, %c0_345, %c0_346] : memref<28x256x128xbf16, #tpu.memory_space<vmem>>, vector<1x256x128xbf16>
    %586 = vector.shape_cast %585 : vector<1x256x128xbf16> to vector<256x128xbf16>
    %cst_347 = arith.constant dense<0.000000e+00> : vector<8x128xf32>
    %587 = tpu.matmul %583, %586, %cst_347 {dimension_numbers = #tpu.dot_dimension_numbers<[1], [0], [0], [1], [0, 0, 1, 1], [], []>} : vector<8x256xbf16>, vector<256x128xbf16>, vector<8x128xf32> -> vector<8x128xf32>
    %588 = arith.addf %564, %587 : vector<8x128xf32>
    %c24_i32 = arith.constant 24 : i32
    %c8_i32_348 = arith.constant 8 : i32
    %589 = arith.muli %c24_i32, %c8_i32_348 : i32
    %590 = tpu.assume_multiple %589, 8 : i32
    %591 = arith.truncf %582 : vector<8x256xf32> to vector<8x256xbf16>
    %c0_349 = arith.constant 0 : index
    %c0_350 = arith.constant 0 : index
    %592 = vector.load %arg6[%c0_349, %c0_350] : memref<256x256xbf16, #tpu.memory_space<vmem>>, vector<256x256xbf16>
    %cst_351 = arith.constant dense<0.000000e+00> : vector<8x256xf32>
    %593 = tpu.matmul %591, %592, %cst_351 {dimension_numbers = #tpu.dot_dimension_numbers<[1], [0], [0], [1], [0, 0, 1, 1], [], []>} : vector<8x256xbf16>, vector<256x256xbf16>, vector<8x256xf32> -> vector<8x256xf32>
    %594 = arith.index_cast %590 : i32 to index
    %c0_352 = arith.constant 0 : index
    %595 = vector.load %arg11[%594, %c0_352] : memref<224x256xf32, #tpu.memory_space<vmem>>, vector<8x256xf32>
    %596 = arith.truncf %576 : vector<8x256xf32> to vector<8x256xbf16>
    %c0_353 = arith.constant 0 : index
    %c0_354 = arith.constant 0 : index
    %597 = vector.load %arg3[%c0_353, %c0_354] : memref<256x256xbf16, #tpu.memory_space<vmem>>, vector<256x256xbf16>
    %cst_355 = arith.constant dense<0.000000e+00> : vector<8x256xf32>
    %598 = tpu.matmul %596, %597, %cst_355 {dimension_numbers = #tpu.dot_dimension_numbers<[1], [0], [0], [1], [0, 0, 1, 1], [], []>} : vector<8x256xbf16>, vector<256x256xbf16>, vector<8x256xf32> -> vector<8x256xf32>
    %599 = arith.addf %595, %598 : vector<8x256xf32>
    %600 = math.tanh %599 : vector<8x256xf32>
    %601 = arith.truncf %600 : vector<8x256xf32> to vector<8x256xbf16>
    %c0_356 = arith.constant 0 : index
    %c0_357 = arith.constant 0 : index
    %602 = vector.load %arg5[%c0_356, %c0_357] : memref<256x256xbf16, #tpu.memory_space<vmem>>, vector<256x256xbf16>
    %cst_358 = arith.constant dense<0.000000e+00> : vector<8x256xf32>
    %603 = tpu.matmul %601, %602, %cst_358 {dimension_numbers = #tpu.dot_dimension_numbers<[1], [0], [0], [1], [0, 0, 1, 1], [], []>} : vector<8x256xbf16>, vector<256x256xbf16>, vector<8x256xf32> -> vector<8x256xf32>
    %604 = arith.addf %603, %593 : vector<8x256xf32>
    %605 = arith.addf %604, %9 : vector<8x256xf32>
    %606 = math.tanh %605 : vector<8x256xf32>
    %607 = arith.truncf %606 : vector<8x256xf32> to vector<8x256xbf16>
    %608 = arith.index_cast %c24_i32 : i32 to index
    %c0_359 = arith.constant 0 : index
    %c0_360 = arith.constant 0 : index
    %609 = vector.load %arg8[%608, %c0_359, %c0_360] : memref<28x256x128xbf16, #tpu.memory_space<vmem>>, vector<1x256x128xbf16>
    %610 = vector.shape_cast %609 : vector<1x256x128xbf16> to vector<256x128xbf16>
    %cst_361 = arith.constant dense<0.000000e+00> : vector<8x128xf32>
    %611 = tpu.matmul %607, %610, %cst_361 {dimension_numbers = #tpu.dot_dimension_numbers<[1], [0], [0], [1], [0, 0, 1, 1], [], []>} : vector<8x256xbf16>, vector<256x128xbf16>, vector<8x128xf32> -> vector<8x128xf32>
    %612 = arith.addf %588, %611 : vector<8x128xf32>
    %c25_i32 = arith.constant 25 : i32
    %c8_i32_362 = arith.constant 8 : i32
    %613 = arith.muli %c25_i32, %c8_i32_362 : i32
    %614 = tpu.assume_multiple %613, 8 : i32
    %615 = arith.truncf %606 : vector<8x256xf32> to vector<8x256xbf16>
    %c0_363 = arith.constant 0 : index
    %c0_364 = arith.constant 0 : index
    %616 = vector.load %arg6[%c0_363, %c0_364] : memref<256x256xbf16, #tpu.memory_space<vmem>>, vector<256x256xbf16>
    %cst_365 = arith.constant dense<0.000000e+00> : vector<8x256xf32>
    %617 = tpu.matmul %615, %616, %cst_365 {dimension_numbers = #tpu.dot_dimension_numbers<[1], [0], [0], [1], [0, 0, 1, 1], [], []>} : vector<8x256xbf16>, vector<256x256xbf16>, vector<8x256xf32> -> vector<8x256xf32>
    %618 = arith.index_cast %614 : i32 to index
    %c0_366 = arith.constant 0 : index
    %619 = vector.load %arg11[%618, %c0_366] : memref<224x256xf32, #tpu.memory_space<vmem>>, vector<8x256xf32>
    %620 = arith.truncf %600 : vector<8x256xf32> to vector<8x256xbf16>
    %c0_367 = arith.constant 0 : index
    %c0_368 = arith.constant 0 : index
    %621 = vector.load %arg3[%c0_367, %c0_368] : memref<256x256xbf16, #tpu.memory_space<vmem>>, vector<256x256xbf16>
    %cst_369 = arith.constant dense<0.000000e+00> : vector<8x256xf32>
    %622 = tpu.matmul %620, %621, %cst_369 {dimension_numbers = #tpu.dot_dimension_numbers<[1], [0], [0], [1], [0, 0, 1, 1], [], []>} : vector<8x256xbf16>, vector<256x256xbf16>, vector<8x256xf32> -> vector<8x256xf32>
    %623 = arith.addf %619, %622 : vector<8x256xf32>
    %624 = math.tanh %623 : vector<8x256xf32>
    %625 = arith.truncf %624 : vector<8x256xf32> to vector<8x256xbf16>
    %c0_370 = arith.constant 0 : index
    %c0_371 = arith.constant 0 : index
    %626 = vector.load %arg5[%c0_370, %c0_371] : memref<256x256xbf16, #tpu.memory_space<vmem>>, vector<256x256xbf16>
    %cst_372 = arith.constant dense<0.000000e+00> : vector<8x256xf32>
    %627 = tpu.matmul %625, %626, %cst_372 {dimension_numbers = #tpu.dot_dimension_numbers<[1], [0], [0], [1], [0, 0, 1, 1], [], []>} : vector<8x256xbf16>, vector<256x256xbf16>, vector<8x256xf32> -> vector<8x256xf32>
    %628 = arith.addf %627, %617 : vector<8x256xf32>
    %629 = arith.addf %628, %9 : vector<8x256xf32>
    %630 = math.tanh %629 : vector<8x256xf32>
    %631 = arith.truncf %630 : vector<8x256xf32> to vector<8x256xbf16>
    %632 = arith.index_cast %c25_i32 : i32 to index
    %c0_373 = arith.constant 0 : index
    %c0_374 = arith.constant 0 : index
    %633 = vector.load %arg8[%632, %c0_373, %c0_374] : memref<28x256x128xbf16, #tpu.memory_space<vmem>>, vector<1x256x128xbf16>
    %634 = vector.shape_cast %633 : vector<1x256x128xbf16> to vector<256x128xbf16>
    %cst_375 = arith.constant dense<0.000000e+00> : vector<8x128xf32>
    %635 = tpu.matmul %631, %634, %cst_375 {dimension_numbers = #tpu.dot_dimension_numbers<[1], [0], [0], [1], [0, 0, 1, 1], [], []>} : vector<8x256xbf16>, vector<256x128xbf16>, vector<8x128xf32> -> vector<8x128xf32>
    %636 = arith.addf %612, %635 : vector<8x128xf32>
    %c26_i32 = arith.constant 26 : i32
    %c8_i32_376 = arith.constant 8 : i32
    %637 = arith.muli %c26_i32, %c8_i32_376 : i32
    %638 = tpu.assume_multiple %637, 8 : i32
    %639 = arith.truncf %630 : vector<8x256xf32> to vector<8x256xbf16>
    %c0_377 = arith.constant 0 : index
    %c0_378 = arith.constant 0 : index
    %640 = vector.load %arg6[%c0_377, %c0_378] : memref<256x256xbf16, #tpu.memory_space<vmem>>, vector<256x256xbf16>
    %cst_379 = arith.constant dense<0.000000e+00> : vector<8x256xf32>
    %641 = tpu.matmul %639, %640, %cst_379 {dimension_numbers = #tpu.dot_dimension_numbers<[1], [0], [0], [1], [0, 0, 1, 1], [], []>} : vector<8x256xbf16>, vector<256x256xbf16>, vector<8x256xf32> -> vector<8x256xf32>
    %642 = arith.index_cast %638 : i32 to index
    %c0_380 = arith.constant 0 : index
    %643 = vector.load %arg11[%642, %c0_380] : memref<224x256xf32, #tpu.memory_space<vmem>>, vector<8x256xf32>
    %644 = arith.truncf %624 : vector<8x256xf32> to vector<8x256xbf16>
    %c0_381 = arith.constant 0 : index
    %c0_382 = arith.constant 0 : index
    %645 = vector.load %arg3[%c0_381, %c0_382] : memref<256x256xbf16, #tpu.memory_space<vmem>>, vector<256x256xbf16>
    %cst_383 = arith.constant dense<0.000000e+00> : vector<8x256xf32>
    %646 = tpu.matmul %644, %645, %cst_383 {dimension_numbers = #tpu.dot_dimension_numbers<[1], [0], [0], [1], [0, 0, 1, 1], [], []>} : vector<8x256xbf16>, vector<256x256xbf16>, vector<8x256xf32> -> vector<8x256xf32>
    %647 = arith.addf %643, %646 : vector<8x256xf32>
    %648 = math.tanh %647 : vector<8x256xf32>
    %649 = arith.truncf %648 : vector<8x256xf32> to vector<8x256xbf16>
    %c0_384 = arith.constant 0 : index
    %c0_385 = arith.constant 0 : index
    %650 = vector.load %arg5[%c0_384, %c0_385] : memref<256x256xbf16, #tpu.memory_space<vmem>>, vector<256x256xbf16>
    %cst_386 = arith.constant dense<0.000000e+00> : vector<8x256xf32>
    %651 = tpu.matmul %649, %650, %cst_386 {dimension_numbers = #tpu.dot_dimension_numbers<[1], [0], [0], [1], [0, 0, 1, 1], [], []>} : vector<8x256xbf16>, vector<256x256xbf16>, vector<8x256xf32> -> vector<8x256xf32>
    %652 = arith.addf %651, %641 : vector<8x256xf32>
    %653 = arith.addf %652, %9 : vector<8x256xf32>
    %654 = math.tanh %653 : vector<8x256xf32>
    %655 = arith.truncf %654 : vector<8x256xf32> to vector<8x256xbf16>
    %656 = arith.index_cast %c26_i32 : i32 to index
    %c0_387 = arith.constant 0 : index
    %c0_388 = arith.constant 0 : index
    %657 = vector.load %arg8[%656, %c0_387, %c0_388] : memref<28x256x128xbf16, #tpu.memory_space<vmem>>, vector<1x256x128xbf16>
    %658 = vector.shape_cast %657 : vector<1x256x128xbf16> to vector<256x128xbf16>
    %cst_389 = arith.constant dense<0.000000e+00> : vector<8x128xf32>
    %659 = tpu.matmul %655, %658, %cst_389 {dimension_numbers = #tpu.dot_dimension_numbers<[1], [0], [0], [1], [0, 0, 1, 1], [], []>} : vector<8x256xbf16>, vector<256x128xbf16>, vector<8x128xf32> -> vector<8x128xf32>
    %660 = arith.addf %636, %659 : vector<8x128xf32>
    %c27_i32 = arith.constant 27 : i32
    %c8_i32_390 = arith.constant 8 : i32
    %661 = arith.muli %c27_i32, %c8_i32_390 : i32
    %662 = tpu.assume_multiple %661, 8 : i32
    %663 = arith.truncf %654 : vector<8x256xf32> to vector<8x256xbf16>
    %c0_391 = arith.constant 0 : index
    %c0_392 = arith.constant 0 : index
    %664 = vector.load %arg6[%c0_391, %c0_392] : memref<256x256xbf16, #tpu.memory_space<vmem>>, vector<256x256xbf16>
    %cst_393 = arith.constant dense<0.000000e+00> : vector<8x256xf32>
    %665 = tpu.matmul %663, %664, %cst_393 {dimension_numbers = #tpu.dot_dimension_numbers<[1], [0], [0], [1], [0, 0, 1, 1], [], []>} : vector<8x256xbf16>, vector<256x256xbf16>, vector<8x256xf32> -> vector<8x256xf32>
    %666 = arith.index_cast %662 : i32 to index
    %c0_394 = arith.constant 0 : index
    %667 = vector.load %arg11[%666, %c0_394] : memref<224x256xf32, #tpu.memory_space<vmem>>, vector<8x256xf32>
    %668 = arith.truncf %648 : vector<8x256xf32> to vector<8x256xbf16>
    %c0_395 = arith.constant 0 : index
    %c0_396 = arith.constant 0 : index
    %669 = vector.load %arg3[%c0_395, %c0_396] : memref<256x256xbf16, #tpu.memory_space<vmem>>, vector<256x256xbf16>
    %cst_397 = arith.constant dense<0.000000e+00> : vector<8x256xf32>
    %670 = tpu.matmul %668, %669, %cst_397 {dimension_numbers = #tpu.dot_dimension_numbers<[1], [0], [0], [1], [0, 0, 1, 1], [], []>} : vector<8x256xbf16>, vector<256x256xbf16>, vector<8x256xf32> -> vector<8x256xf32>
    %671 = arith.addf %667, %670 : vector<8x256xf32>
    %672 = math.tanh %671 : vector<8x256xf32>
    %673 = arith.truncf %672 : vector<8x256xf32> to vector<8x256xbf16>
    %c0_398 = arith.constant 0 : index
    %c0_399 = arith.constant 0 : index
    %674 = vector.load %arg5[%c0_398, %c0_399] : memref<256x256xbf16, #tpu.memory_space<vmem>>, vector<256x256xbf16>
    %cst_400 = arith.constant dense<0.000000e+00> : vector<8x256xf32>
    %675 = tpu.matmul %673, %674, %cst_400 {dimension_numbers = #tpu.dot_dimension_numbers<[1], [0], [0], [1], [0, 0, 1, 1], [], []>} : vector<8x256xbf16>, vector<256x256xbf16>, vector<8x256xf32> -> vector<8x256xf32>
    %676 = arith.addf %675, %665 : vector<8x256xf32>
    %677 = arith.addf %676, %9 : vector<8x256xf32>
    %678 = math.tanh %677 : vector<8x256xf32>
    %679 = arith.truncf %678 : vector<8x256xf32> to vector<8x256xbf16>
    %680 = arith.index_cast %c27_i32 : i32 to index
    %c0_401 = arith.constant 0 : index
    %c0_402 = arith.constant 0 : index
    %681 = vector.load %arg8[%680, %c0_401, %c0_402] : memref<28x256x128xbf16, #tpu.memory_space<vmem>>, vector<1x256x128xbf16>
    %682 = vector.shape_cast %681 : vector<1x256x128xbf16> to vector<256x128xbf16>
    %cst_403 = arith.constant dense<0.000000e+00> : vector<8x128xf32>
    %683 = tpu.matmul %679, %682, %cst_403 {dimension_numbers = #tpu.dot_dimension_numbers<[1], [0], [0], [1], [0, 0, 1, 1], [], []>} : vector<8x256xbf16>, vector<256x128xbf16>, vector<8x128xf32> -> vector<8x128xf32>
    %684 = arith.addf %660, %683 : vector<8x128xf32>
    %c28_i32 = arith.constant 28 : i32
    %c0_404 = arith.constant 0 : index
    %c0_405 = arith.constant 0 : index
    %685 = vector.load %arg9[%c0_404, %c0_405] : memref<1x128xf32, #tpu.memory_space<vmem>>, vector<1x128xf32>
    %686 = vector.broadcast %685 : vector<1x128xf32> to vector<8x128xf32>
    %687 = arith.addf %684, %686 : vector<8x128xf32>
    %c0_406 = arith.constant 0 : index
    %c0_407 = arith.constant 0 : index
    %688 = vector.load %arg10[%c0_406, %c0_407] : memref<8x128xf32, #tpu.memory_space<vmem>>, vector<8x128xf32>
    tpu.vector_store %arg10[%c0_406, %c0_407], %687 {strides = array<i32>} : memref<8x128xf32, #tpu.memory_space<vmem>>, vector<8x128xf32>,
    return
  }
  func.func @transform_0(%arg0: i32) -> (i32, i32) {
    %c0_i32 = arith.constant 0 : i32
    %c0_i32_0 = arith.constant 0 : i32
    %c0_i32_1 = arith.constant 0 : i32
    return %c0_i32, %c0_i32_0 : i32, i32
  }
  func.func @transform_1(%arg0: i32) -> (i32, i32) {
    %c0_i32 = arith.constant 0 : i32
    %c0_i32_0 = arith.constant 0 : i32
    %c0_i32_1 = arith.constant 0 : i32
    return %c0_i32, %c0_i32_0 : i32, i32
  }
  func.func @transform_2(%arg0: i32) -> (i32, i32) {
    %c0_i32 = arith.constant 0 : i32
    %c0_i32_0 = arith.constant 0 : i32
    %c0_i32_1 = arith.constant 0 : i32
    return %c0_i32, %c0_i32_0 : i32, i32
  }
  func.func @transform_3(%arg0: i32) -> (i32, i32) {
    %c0_i32 = arith.constant 0 : i32
    %c0_i32_0 = arith.constant 0 : i32
    %c0_i32_1 = arith.constant 0 : i32
    return %c0_i32, %c0_i32_0 : i32, i32
  }
  func.func @transform_4(%arg0: i32) -> (i32, i32) {
    %c0_i32 = arith.constant 0 : i32
    %c0_i32_0 = arith.constant 0 : i32
    %c0_i32_1 = arith.constant 0 : i32
    return %c0_i32, %c0_i32_0 : i32, i32
  }
  func.func @transform_5(%arg0: i32) -> (i32, i32) {
    %c0_i32 = arith.constant 0 : i32
    %c0_i32_0 = arith.constant 0 : i32
    %c0_i32_1 = arith.constant 0 : i32
    return %c0_i32, %c0_i32_0 : i32, i32
  }
  func.func @transform_6(%arg0: i32) -> (i32, i32) {
    %c0_i32 = arith.constant 0 : i32
    %c0_i32_0 = arith.constant 0 : i32
    %c0_i32_1 = arith.constant 0 : i32
    return %c0_i32, %c0_i32_0 : i32, i32
  }
  func.func @transform_7(%arg0: i32) -> (i32, i32, i32) {
    %c0_i32 = arith.constant 0 : i32
    %c0_i32_0 = arith.constant 0 : i32
    %c0_i32_1 = arith.constant 0 : i32
    %c0_i32_2 = arith.constant 0 : i32
    return %c0_i32, %c0_i32_0, %c0_i32_1 : i32, i32, i32
  }
  func.func @transform_8(%arg0: i32) -> (i32, i32) {
    %c0_i32 = arith.constant 0 : i32
    %c0_i32_0 = arith.constant 0 : i32
    %c0_i32_1 = arith.constant 0 : i32
    return %c0_i32, %c0_i32_0 : i32, i32
  }
  func.func @transform_9(%arg0: i32) -> (i32, i32) {
    %c0_i32 = arith.constant 0 : i32
    %c0_i32_0 = arith.constant 0 : i32
    %c0_i32_1 = arith.constant 0 : i32
    return %c0_i32, %c0_i32_0 : i32, i32
  }
}

</mosaic_0001>

<llo_original>
// kernel: rnn_forward.1
$region0: #{rnn_forward.1}
  #allocation0 [shape = 'u32[]', space=smem, size = 0x4, offset = 0x4, fixed_abs, tag = 'smem constant byte address 0x4 - core index']
  #allocation1 [shape = 'u32[144,128]{1,0:T(1,128)}', space=vmem, size = 0x12000, scoped, tag = 'internal scratch']
  #allocation2 [shape = 'f32[224,256]{1,0:T(8,128)}', space=vmem, size = 0x38000, scoped, tag = 'scratch operand']
  %s0 = inlined_call_operand.vmem [shape: bf16[224,28], index: 0, kind: input, shape index: {}]
  %s1 = inlined_call_operand.vmem [shape: bf16[28,256], index: 1, kind: input, shape index: {}]
  %s2 = inlined_call_operand.vmem [shape: bf16[256,256], index: 2, kind: input, shape index: {}]
  %s3 = inlined_call_operand.vmem [shape: f32[1,256], index: 3, kind: input, shape index: {}]
  %s4 = inlined_call_operand.vmem [shape: bf16[256,256], index: 4, kind: input, shape index: {}]
  %s5 = inlined_call_operand.vmem [shape: bf16[256,256], index: 5, kind: input, shape index: {}]
  %s6 = inlined_call_operand.vmem [shape: f32[1,256], index: 6, kind: input, shape index: {}]
  %s7 = inlined_call_operand.vmem [shape: bf16[28,256,128], index: 7, kind: input, shape index: {}]
  %s8 = inlined_call_operand.vmem [shape: f32[1,128], index: 8, kind: input, shape index: {}]
  %s9 = inlined_call_operand.vmem [shape: f32[8,128], index: 9, kind: output, shape index: {}]
  %s10 = sld [smem:[#allocation0]]
  $region46: #{rnn_forward.1} parent=0
    _
  %s12 = ssub.s32 1, %s10
  %s13 = scalar_select 0, %s12, %s10
  // Predicated region
  $region2: #{rnn_forward.1} parent=0 // pred_check
    _
  $region3: #{rnn_forward.1} parent=0 // pred_check_branch
    %15 = sbr.rel (0) target = $region5
  $region4: #{rnn_forward.1} parent=0 // pred_region
    _
  $region5: #{rnn_forward.1} parent=0 // pred_fallthru
    _
  // Predicated region
  $region6: #{rnn_forward.1} parent=0 // pred_check
    _
  $region7: #{rnn_forward.1} parent=0 // pred_check_branch
    %17 = sbr.rel (0) target = $region9
  $region8: #{rnn_forward.1} parent=0 // pred_region
    _
  $region9: #{rnn_forward.1} parent=0 // pred_fallthru
    _
  // Predicated region
  $region10: #{rnn_forward.1} parent=0 // pred_check
    _
  $region11: #{rnn_forward.1} parent=0 // pred_check_branch
    %19 = sbr.rel (0) target = $region13
  $region12: #{rnn_forward.1} parent=0 // pred_region
    _
  $region13: #{rnn_forward.1} parent=0 // pred_fallthru
    _
  // Predicated region
  $region14: #{rnn_forward.1} parent=0 // pred_check
    _
  $region15: #{rnn_forward.1} parent=0 // pred_check_branch
    %21 = sbr.rel (0) target = $region17
  $region16: #{rnn_forward.1} parent=0 // pred_region
    _
  $region17: #{rnn_forward.1} parent=0 // pred_fallthru
    _
  // Predicated region
  $region18: #{rnn_forward.1} parent=0 // pred_check
    _
  $region19: #{rnn_forward.1} parent=0 // pred_check_branch
    %23 = sbr.rel (0) target = $region21
  $region20: #{rnn_forward.1} parent=0 // pred_region
    _
  $region21: #{rnn_forward.1} parent=0 // pred_fallthru
    _
  // Predicated region
  $region22: #{rnn_forward.1} parent=0 // pred_check
    _
  $region23: #{rnn_forward.1} parent=0 // pred_check_branch
    %25 = sbr.rel (0) target = $region25
  $region24: #{rnn_forward.1} parent=0 // pred_region
    _
  $region25: #{rnn_forward.1} parent=0 // pred_fallthru
    _
  // Predicated region
  $region26: #{rnn_forward.1} parent=0 // pred_check
    _
  $region27: #{rnn_forward.1} parent=0 // pred_check_branch
    %27 = sbr.rel (0) target = $region29
  $region28: #{rnn_forward.1} parent=0 // pred_region
    _
  $region29: #{rnn_forward.1} parent=0 // pred_fallthru
    _
  // Predicated region
  $region30: #{rnn_forward.1} parent=0 // pred_check
    _
  $region31: #{rnn_forward.1} parent=0 // pred_check_branch
    %29 = sbr.rel (0) target = $region33
  $region32: #{rnn_forward.1} parent=0 // pred_region
    _
  $region33: #{rnn_forward.1} parent=0 // pred_fallthru
    _
  // Predicated region
  $region34: #{rnn_forward.1} parent=0 // pred_check
    _
  $region35: #{rnn_forward.1} parent=0 // pred_check_branch
    %31 = sbr.rel (0) target = $region37
  $region36: #{rnn_forward.1} parent=0 // pred_region
    _
  $region37: #{rnn_forward.1} parent=0 // pred_fallthru
    _
  %v33 = vld [vmem:[%s0] sm:$0xf]
  %v34 = vld [vmem:[%s0 + $0x4] sm:$0xf]
  %v35 = vld [vmem:[%s0 + $0x8] sm:$0xf]
  %v36 = vld [vmem:[%s0 + $0xc] sm:$0xf]
  %v37 = vld [vmem:[%s0 + $0x10] sm:$0xf]
  %v38 = vld [vmem:[%s0 + $0x14] sm:$0xf]
  %v39 = vld [vmem:[%s0 + $0x18] sm:$0xf]
  %v40 = vld [vmem:[%s0 + $0x1c] sm:$0xf]
  %v41 = vld [vmem:[%s0 + $0x20] sm:$0xf]
  %v42 = vld [vmem:[%s0 + $0x24] sm:$0xf]
  %v43 = vld [vmem:[%s0 + $0x28] sm:$0xf]
  %v44 = vld [vmem:[%s0 + $0x2c] sm:$0xf]
  %v45 = vld [vmem:[%s0 + $0x30] sm:$0xf]
  %v46 = vld [vmem:[%s0 + $0x34] sm:$0xf]
  %v47 = vld [vmem:[%s0 + $0x38] sm:$0xf]
  %v48 = vld [vmem:[%s0 + $0x3c] sm:$0xf]
  %v49 = vld [vmem:[%s0 + $0x40] sm:$0xf]
  %v50 = vld [vmem:[%s0 + $0x44] sm:$0xf]
  %v51 = vld [vmem:[%s0 + $0x48] sm:$0xf]
  %v52 = vld [vmem:[%s0 + $0x4c] sm:$0xf]
  %v53 = vld [vmem:[%s0 + $0x50] sm:$0xf]
  %v54 = vld [vmem:[%s0 + $0x54] sm:$0xf]
  %v55 = vld [vmem:[%s0 + $0x58] sm:$0xf]
  %v56 = vld [vmem:[%s0 + $0x5c] sm:$0xf]
  %v57 = vld [vmem:[%s0 + $0x60] sm:$0xf]
  %v58 = vld [vmem:[%s0 + $0x64] sm:$0xf]
  %v59 = vld [vmem:[%s0 + $0x68] sm:$0xf]
  %v60 = vld [vmem:[%s0 + $0x6c] sm:$0xf]
  %v61 = vld [vmem:[%s1] sm:$0xff]
  %v62 = vld [vmem:[%s1 + $0x8] sm:$0xff]
  %v63 = vld [vmem:[%s1 + $0x10] sm:$0xff]
  %v64 = vld [vmem:[%s1 + $0x18] sm:$0x33]
  %v65 = vld [vmem:[%s3] sm:$0x3]
  %v67 = vlaneseq
  %v68 = vshrl.u32 %v67, 7
  %v69 = vsub.s32 0, %v68
  %v70 = vrot.slane %v65, %v69
  %v71 = vlaneseq
  %v72 = vshrl.u32 %v71, 7
  %v73 = vsub.s32 1, %v72
  %v74 = vrot.slane %v65, %v73
  %v105 = vunpack.c.l.b16 %v33
  %v106 = vunpack.c.l.b16 %v34
  %v107 = vunpack.c.l.b16 %v35
  %v108 = vunpack.c.l.b16 %v36
  %v109 = vunpack.c.l.b16 %v37
  %v110 = vunpack.c.l.b16 %v38
  %v111 = vunpack.c.l.b16 %v39
  %v112 = vunpack.c.l.b16 %v40
  %v113 = vunpack.c.l.b16 %v41
  %v114 = vunpack.c.l.b16 %v42
  %v115 = vunpack.c.l.b16 %v43
  %v116 = vunpack.c.l.b16 %v44
  %v117 = vunpack.c.l.b16 %v45
  %v118 = vunpack.c.l.b16 %v46
  %v119 = vunpack.c.l.b16 %v47
  %v120 = vunpack.c.l.b16 %v48
  %v121 = vunpack.c.l.b16 %v49
  %v122 = vunpack.c.l.b16 %v50
  %v123 = vunpack.c.l.b16 %v51
  %v124 = vunpack.c.l.b16 %v52
  %v125 = vunpack.c.l.b16 %v53
  %v126 = vunpack.c.l.b16 %v54
  %v127 = vunpack.c.l.b16 %v55
  %v128 = vunpack.c.l.b16 %v56
  %v129 = vunpack.c.l.b16 %v57
  %v130 = vunpack.c.l.b16 %v58
  %v131 = vunpack.c.l.b16 %v59
  %v132 = vunpack.c.l.b16 %v60
  %v133 = vpack.c.b16 %v106, %v105
  %v134 = vpack.c.b16 %v108, %v107
  %v135 = vpack.c.b16 %v110, %v109
  %v136 = vpack.c.b16 %v112, %v111
  %v137 = vpack.c.b16 %v114, %v113
  %v138 = vpack.c.b16 %v116, %v115
  %v139 = vpack.c.b16 %v118, %v117
  %v140 = vpack.c.b16 %v120, %v119
  %v141 = vpack.c.b16 %v122, %v121
  %v142 = vpack.c.b16 %v124, %v123
  %v143 = vpack.c.b16 %v126, %v125
  %v144 = vpack.c.b16 %v128, %v127
  %v145 = vpack.c.b16 %v130, %v129
  %v146 = vpack.c.b16 %v132, %v131
  %v151 = vunpack.c.l.b16 %v61
  %v152 = vunpack.c.h.b16 %v61
  %v153 = vunpack.c.l.b16 %v62
  %v154 = vunpack.c.h.b16 %v62
  %v155 = vunpack.c.l.b16 %v63
  %v156 = vunpack.c.h.b16 %v63
  %v157 = vunpack.c.l.b16 %v64
  %v158 = vunpack.c.h.b16 %v64
  %v159 = vpack.c.b16 %v153, %v151
  %v160 = vpack.c.b16 %v154, %v152
  %v161 = vpack.c.b16 %v157, %v155
  %v162 = vpack.c.b16 %v158, %v156
  %vm165 = vcmask 228352
  %v167 = vsel %vm165, %v133, 0
  %v170 = vsel %vm165, %v134, 0
  %v173 = vsel %vm165, %v135, 0
  %v176 = vsel %vm165, %v136, 0
  %v179 = vsel %vm165, %v137, 0
  %v182 = vsel %vm165, %v138, 0
  %v185 = vsel %vm165, %v139, 0
  %v188 = vsel %vm165, %v140, 0
  %v191 = vsel %vm165, %v141, 0
  %v194 = vsel %vm165, %v142, 0
  %v197 = vsel %vm165, %v143, 0
  %v200 = vsel %vm165, %v144, 0
  %v203 = vsel %vm165, %v145, 0
  %v206 = vsel %vm165, %v146, 0
  %vm208 = vcmask 1045504
  %v210 = vsel %vm208, %v161, 0
  %v213 = vsel %vm208, %v162, 0
  %215 = vmatprep.subr.bf16.mxu0 %v160
  %216 = vmatpush1.bf16.msra.mxu0 %v159
  %217 = vmatprep.subr.bf16.mxu0 %v213
  %218 = vmatpush1.bf16.msra.mxu0 %v210
  %219 = vmatprep.subr.bf16.mxu0 0
  %220 = vmatpush1.bf16.msra.mxu0 0
  %221 = vmatprep.subr.bf16.mxu0 0
  %222 = vmatpush1.bf16.msra.mxu0 0
  %223 = vmatprep.subr.bf16.mxu0 0
  %224 = vmatpush1.bf16.msra.mxu0 0
  %225 = vmatprep.subr.bf16.mxu0 0
  %226 = vmatpush1.bf16.msra.mxu0 0
  %227 = vmatprep.subr.bf16.mxu0 0
  %228 = vmatpush1.bf16.msra.mxu0 0
  %229 = vmatprep.subr.bf16.mxu0 0
  %230 = vmatpush1.bf16.msra.mxu0 0
  %231 = vmatprep.subr.bf16.mxu0 0
  %232 = vmatpush1.bf16.msra.mxu0 0
  %233 = vmatprep.subr.bf16.mxu0 0
  %234 = vmatpush1.bf16.msra.mxu0 0
  %235 = vmatprep.subr.bf16.mxu0 0
  %236 = vmatpush1.bf16.msra.mxu0 0
  %237 = vmatprep.subr.bf16.mxu0 0
  %238 = vmatpush1.bf16.msra.mxu0 0
  %239 = vmatprep.subr.bf16.mxu0 0
  %240 = vmatpush1.bf16.msra.mxu0 0
  %241 = vmatprep.subr.bf16.mxu0 0
  %242 = vmatpush1.bf16.msra.mxu0 0
  %243 = vmatprep.subr.bf16.mxu0 0
  %244 = vmatpush1.bf16.msra.mxu0 0
  %245 = vmatprep.subr.bf16.mxu0 0
  %246 = vmatpush1.bf16.msra.mxu0 0
  %247 = vmatprep.mubr.bf16.mxu0 0
  %248 = vmatmul.mubr.bf16.gmra.mrb[0].mxu0 %v167
  %v249 = vpop.f32.mrb[0].mxu0
  %v250 = vadd.f32 %v70, %v249
  %v251 = vpop.f32.mrb[0].mxu0
  %v252 = vadd.f32 %v74, %v251
  %v253 = vpop.f32.mrb[0].mxu0
  %v254 = vadd.f32 %v70, %v253
  %v255 = vpop.f32.mrb[0].mxu0
  %v256 = vadd.f32 %v74, %v255
  %257 = vmatprep.mubr.bf16.mxu0 0
  %258 = vmatmul.mubr.bf16.gmra.mrb[0].mxu0 %v170
  %v259 = vpop.f32.mrb[0].mxu0
  %v260 = vadd.f32 %v70, %v259
  %v261 = vpop.f32.mrb[0].mxu0
  %v262 = vadd.f32 %v74, %v261
  %v263 = vpop.f32.mrb[0].mxu0
  %v264 = vadd.f32 %v70, %v263
  %v265 = vpop.f32.mrb[0].mxu0
  %v266 = vadd.f32 %v74, %v265
  %267 = vmatprep.mubr.bf16.mxu0 0
  %268 = vmatmul.mubr.bf16.gmra.mrb[0].mxu0 %v173
  %v269 = vpop.f32.mrb[0].mxu0
  %v270 = vadd.f32 %v70, %v269
  %v271 = vpop.f32.mrb[0].mxu0
  %v272 = vadd.f32 %v74, %v271
  %v273 = vpop.f32.mrb[0].mxu0
  %v274 = vadd.f32 %v70, %v273
  %v275 = vpop.f32.mrb[0].mxu0
  %v276 = vadd.f32 %v74, %v275
  %277 = vmatprep.mubr.bf16.mxu0 0
  %278 = vmatmul.mubr.bf16.gmra.mrb[0].mxu0 %v176
  %v279 = vpop.f32.mrb[0].mxu0
  %v280 = vadd.f32 %v70, %v279
  %v281 = vpop.f32.mrb[0].mxu0
  %v282 = vadd.f32 %v74, %v281
  %v283 = vpop.f32.mrb[0].mxu0
  %v284 = vadd.f32 %v70, %v283
  %v285 = vpop.f32.mrb[0].mxu0
  %v286 = vadd.f32 %v74, %v285
  %287 = vmatprep.mubr.bf16.mxu0 0
  %288 = vmatmul.mubr.bf16.gmra.mrb[0].mxu0 %v179
  %v289 = vpop.f32.mrb[0].mxu0
  %v290 = vadd.f32 %v70, %v289
  %v291 = vpop.f32.mrb[0].mxu0
  %v292 = vadd.f32 %v74, %v291
  %v293 = vpop.f32.mrb[0].mxu0
  %v294 = vadd.f32 %v70, %v293
  %v295 = vpop.f32.mrb[0].mxu0
  %v296 = vadd.f32 %v74, %v295
  %297 = vmatprep.mubr.bf16.mxu0 0
  %298 = vmatmul.mubr.bf16.gmra.mrb[0].mxu0 %v182
  %v299 = vpop.f32.mrb[0].mxu0
  %v300 = vadd.f32 %v70, %v299
  %v301 = vpop.f32.mrb[0].mxu0
  %v302 = vadd.f32 %v74, %v301
  %v303 = vpop.f32.mrb[0].mxu0
  %v304 = vadd.f32 %v70, %v303
  %v305 = vpop.f32.mrb[0].mxu0
  %v306 = vadd.f32 %v74, %v305
  %307 = vmatprep.mubr.bf16.mxu0 0
  %308 = vmatmul.mubr.bf16.gmra.mrb[0].mxu0 %v185
  %v309 = vpop.f32.mrb[0].mxu0
  %v310 = vadd.f32 %v70, %v309
  %v311 = vpop.f32.mrb[0].mxu0
  %v312 = vadd.f32 %v74, %v311
  %v313 = vpop.f32.mrb[0].mxu0
  %v314 = vadd.f32 %v70, %v313
  %v315 = vpop.f32.mrb[0].mxu0
  %v316 = vadd.f32 %v74, %v315
  %317 = vmatprep.mubr.bf16.mxu0 0
  %318 = vmatmul.mubr.bf16.gmra.mrb[0].mxu0 %v188
  %v319 = vpop.f32.mrb[0].mxu0
  %v320 = vadd.f32 %v70, %v319
  %v321 = vpop.f32.mrb[0].mxu0
  %v322 = vadd.f32 %v74, %v321
  %v323 = vpop.f32.mrb[0].mxu0
  %v324 = vadd.f32 %v70, %v323
  %v325 = vpop.f32.mrb[0].mxu0
  %v326 = vadd.f32 %v74, %v325
  %327 = vmatprep.mubr.bf16.mxu0 0
  %328 = vmatmul.mubr.bf16.gmra.mrb[0].mxu0 %v191
  %v329 = vpop.f32.mrb[0].mxu0
  %v330 = vadd.f32 %v70, %v329
  %v331 = vpop.f32.mrb[0].mxu0
  %v332 = vadd.f32 %v74, %v331
  %v333 = vpop.f32.mrb[0].mxu0
  %v334 = vadd.f32 %v70, %v333
  %v335 = vpop.f32.mrb[0].mxu0
  %v336 = vadd.f32 %v74, %v335
  %337 = vmatprep.mubr.bf16.mxu0 0
  %338 = vmatmul.mubr.bf16.gmra.mrb[0].mxu0 %v194
  %v339 = vpop.f32.mrb[0].mxu0
  %v340 = vadd.f32 %v70, %v339
  %v341 = vpop.f32.mrb[0].mxu0
  %v342 = vadd.f32 %v74, %v341
  %v343 = vpop.f32.mrb[0].mxu0
  %v344 = vadd.f32 %v70, %v343
  %v345 = vpop.f32.mrb[0].mxu0
  %v346 = vadd.f32 %v74, %v345
  %347 = vmatprep.mubr.bf16.mxu0 0
  %348 = vmatmul.mubr.bf16.gmra.mrb[0].mxu0 %v197
  %v349 = vpop.f32.mrb[0].mxu0
  %v350 = vadd.f32 %v70, %v349
  %v351 = vpop.f32.mrb[0].mxu0
  %v352 = vadd.f32 %v74, %v351
  %v353 = vpop.f32.mrb[0].mxu0
  %v354 = vadd.f32 %v70, %v353
  %v355 = vpop.f32.mrb[0].mxu0
  %v356 = vadd.f32 %v74, %v355
  %357 = vmatprep.mubr.bf16.mxu0 0
  %358 = vmatmul.mubr.bf16.gmra.mrb[0].mxu0 %v200
  %v359 = vpop.f32.mrb[0].mxu0
  %v360 = vadd.f32 %v70, %v359
  %v361 = vpop.f32.mrb[0].mxu0
  %v362 = vadd.f32 %v74, %v361
  %v363 = vpop.f32.mrb[0].mxu0
  %v364 = vadd.f32 %v70, %v363
  %v365 = vpop.f32.mrb[0].mxu0
  %v366 = vadd.f32 %v74, %v365
  %367 = vmatprep.mubr.bf16.mxu0 0
  %368 = vmatmul.mubr.bf16.gmra.mrb[0].mxu0 %v203
  %v369 = vpop.f32.mrb[0].mxu0
  %v370 = vadd.f32 %v70, %v369
  %v371 = vpop.f32.mrb[0].mxu0
  %v372 = vadd.f32 %v74, %v371
  %v373 = vpop.f32.mrb[0].mxu0
  %v374 = vadd.f32 %v70, %v373
  %v375 = vpop.f32.mrb[0].mxu0
  %v376 = vadd.f32 %v74, %v375
  %377 = vmatprep.mubr.bf16.mxu0 0
  %378 = vmatmul.mubr.bf16.gmra.mrb[0].mxu0 %v206
  %v379 = vpop.f32.mrb[0].mxu0
  %v380 = vadd.f32 %v70, %v379
  %v381 = vpop.f32.mrb[0].mxu0
  %v382 = vadd.f32 %v74, %v381
  %v383 = vpop.f32.mrb[0].mxu0
  %v384 = vadd.f32 %v70, %v383
  %v385 = vpop.f32.mrb[0].mxu0
  %v386 = vadd.f32 %v74, %v385
  %387 = vdwg.mxu0
  %388 = vst [vmem:[#allocation2] sm:$0xff] %v250
  %389 = vst [vmem:[#allocation2 + $0x8] sm:$0xff] %v252
  %390 = vst [vmem:[#allocation2 + $0x10] sm:$0xff] %v254
  %391 = vst [vmem:[#allocation2 + $0x18] sm:$0xff] %v256
  %392 = vst [vmem:[#allocation2 + $0x20] sm:$0xff] %v260
  %393 = vst [vmem:[#allocation2 + $0x28] sm:$0xff] %v262
  %394 = vst [vmem:[#allocation2 + $0x30] sm:$0xff] %v264
  %395 = vst [vmem:[#allocation2 + $0x38] sm:$0xff] %v266
  %396 = vst [vmem:[#allocation2 + $0x40] sm:$0xff] %v270
  %397 = vst [vmem:[#allocation2 + $0x48] sm:$0xff] %v272
  %398 = vst [vmem:[#allocation2 + $0x50] sm:$0xff] %v274
  %399 = vst [vmem:[#allocation2 + $0x58] sm:$0xff] %v276
  %400 = vst [vmem:[#allocation2 + $0x60] sm:$0xff] %v280
  %401 = vst [vmem:[#allocation2 + $0x68] sm:$0xff] %v282
  %402 = vst [vmem:[#allocation2 + $0x70] sm:$0xff] %v284
  %403 = vst [vmem:[#allocation2 + $0x78] sm:$0xff] %v286
  %404 = vst [vmem:[#allocation2 + $0x80] sm:$0xff] %v290
  %405 = vst [vmem:[#allocation2 + $0x88] sm:$0xff] %v292
  %406 = vst [vmem:[#allocation2 + $0x90] sm:$0xff] %v294
  %407 = vst [vmem:[#allocation2 + $0x98] sm:$0xff] %v296
  %408 = vst [vmem:[#allocation2 + $0xa0] sm:$0xff] %v300
  %409 = vst [vmem:[#allocation2 + $0xa8] sm:$0xff] %v302
  %410 = vst [vmem:[#allocation2 + $0xb0] sm:$0xff] %v304
  %411 = vst [vmem:[#allocation2 + $0xb8] sm:$0xff] %v306
  %412 = vst [vmem:[#allocation2 + $0xc0] sm:$0xff] %v310
  %413 = vst [vmem:[#allocation2 + $0xc8] sm:$0xff] %v312
  %414 = vst [vmem:[#allocation2 + $0xd0] sm:$0xff] %v314
  %415 = vst [vmem:[#allocation2 + $0xd8] sm:$0xff] %v316
  %416 = vst [vmem:[#allocation2 + $0xe0] sm:$0xff] %v320
  %417 = vst [vmem:[#allocation2 + $0xe8] sm:$0xff] %v322
  %418 = vst [vmem:[#allocation2 + $0xf0] sm:$0xff] %v324
  %419 = vst [vmem:[#allocation2 + $0xf8] sm:$0xff] %v326
  %420 = vst [vmem:[#allocation2 + $0x100] sm:$0xff] %v330
  %421 = vst [vmem:[#allocation2 + $0x108] sm:$0xff] %v332
  %422 = vst [vmem:[#allocation2 + $0x110] sm:$0xff] %v334
  %423 = vst [vmem:[#allocation2 + $0x118] sm:$0xff] %v336
  %424 = vst [vmem:[#allocation2 + $0x120] sm:$0xff] %v340
  %425 = vst [vmem:[#allocation2 + $0x128] sm:$0xff] %v342
  %426 = vst [vmem:[#allocation2 + $0x130] sm:$0xff] %v344
  %427 = vst [vmem:[#allocation2 + $0x138] sm:$0xff] %v346
  %428 = vst [vmem:[#allocation2 + $0x140] sm:$0xff] %v350
  %429 = vst [vmem:[#allocation2 + $0x148] sm:$0xff] %v352
  %430 = vst [vmem:[#allocation2 + $0x150] sm:$0xff] %v354
  %431 = vst [vmem:[#allocation2 + $0x158] sm:$0xff] %v356
  %432 = vst [vmem:[#allocation2 + $0x160] sm:$0xff] %v360
  %433 = vst [vmem:[#allocation2 + $0x168] sm:$0xff] %v362
  %434 = vst [vmem:[#allocation2 + $0x170] sm:$0xff] %v364
  %435 = vst [vmem:[#allocation2 + $0x178] sm:$0xff] %v366
  %436 = vst [vmem:[#allocation2 + $0x180] sm:$0xff] %v370
  %437 = vst [vmem:[#allocation2 + $0x188] sm:$0xff] %v372
  %438 = vst [vmem:[#allocation2 + $0x190] sm:$0xff] %v374
  %439 = vst [vmem:[#allocation2 + $0x198] sm:$0xff] %v376
  %440 = vst [vmem:[#allocation2 + $0x1a0] sm:$0xff] %v380
  %441 = vst [vmem:[#allocation2 + $0x1a8] sm:$0xff] %v382
  %442 = vst [vmem:[#allocation2 + $0x1b0] sm:$0xff] %v384
  %443 = vst [vmem:[#allocation2 + $0x1b8] sm:$0xff] %v386
  %v444 = vld [vmem:[%s6] sm:$0x3]
  %v446 = vlaneseq
  %v447 = vshrl.u32 %v446, 7
  %v448 = vsub.s32 0, %v447
  %v449 = vrot.slane %v444, %v448
  %v450 = vlaneseq
  %v451 = vshrl.u32 %v450, 7
  %v452 = vsub.s32 1, %v451
  %v453 = vrot.slane %v444, %v452
  %v456 = vld [vmem:[%s5] sm:$0xff]
  %v457 = vld [vmem:[%s5 + $0x8] sm:$0xff]
  %v458 = vld [vmem:[%s5 + $0x10] sm:$0xff]
  %v459 = vld [vmem:[%s5 + $0x18] sm:$0xff]
  %v460 = vld [vmem:[%s5 + $0x20] sm:$0xff]
  %v461 = vld [vmem:[%s5 + $0x28] sm:$0xff]
  %v462 = vld [vmem:[%s5 + $0x30] sm:$0xff]
  %v463 = vld [vmem:[%s5 + $0x38] sm:$0xff]
  %v464 = vld [vmem:[%s5 + $0x40] sm:$0xff]
  %v465 = vld [vmem:[%s5 + $0x48] sm:$0xff]
  %v466 = vld [vmem:[%s5 + $0x50] sm:$0xff]
  %v467 = vld [vmem:[%s5 + $0x58] sm:$0xff]
  %v468 = vld [vmem:[%s5 + $0x60] sm:$0xff]
  %v469 = vld [vmem:[%s5 + $0x68] sm:$0xff]
  %v470 = vld [vmem:[%s5 + $0x70] sm:$0xff]
  %v471 = vld [vmem:[%s5 + $0x78] sm:$0xff]
  %v472 = vld [vmem:[%s5 + $0x80] sm:$0xff]
  %v473 = vld [vmem:[%s5 + $0x88] sm:$0xff]
  %v474 = vld [vmem:[%s5 + $0x90] sm:$0xff]
  %v475 = vld [vmem:[%s5 + $0x98] sm:$0xff]
  %v476 = vld [vmem:[%s5 + $0xa0] sm:$0xff]
  %v477 = vld [vmem:[%s5 + $0xa8] sm:$0xff]
  %v478 = vld [vmem:[%s5 + $0xb0] sm:$0xff]
  %v479 = vld [vmem:[%s5 + $0xb8] sm:$0xff]
  %v480 = vld [vmem:[%s5 + $0xc0] sm:$0xff]
  %v481 = vld [vmem:[%s5 + $0xc8] sm:$0xff]
  %v482 = vld [vmem:[%s5 + $0xd0] sm:$0xff]
  %v483 = vld [vmem:[%s5 + $0xd8] sm:$0xff]
  %v484 = vld [vmem:[%s5 + $0xe0] sm:$0xff]
  %v485 = vld [vmem:[%s5 + $0xe8] sm:$0xff]
  %v486 = vld [vmem:[%s5 + $0xf0] sm:$0xff]
  %v487 = vld [vmem:[%s5 + $0xf8] sm:$0xff]
  %v520 = vunpack.c.l.b16 %v456
  %v521 = vunpack.c.h.b16 %v456
  %v522 = vunpack.c.l.b16 %v457
  %v523 = vunpack.c.h.b16 %v457
  %v524 = vunpack.c.l.b16 %v458
  %v525 = vunpack.c.h.b16 %v458
  %v526 = vunpack.c.l.b16 %v459
  %v527 = vunpack.c.h.b16 %v459
  %v528 = vunpack.c.l.b16 %v460
  %v529 = vunpack.c.h.b16 %v460
  %v530 = vunpack.c.l.b16 %v461
  %v531 = vunpack.c.h.b16 %v461
  %v532 = vunpack.c.l.b16 %v462
  %v533 = vunpack.c.h.b16 %v462
  %v534 = vunpack.c.l.b16 %v463
  %v535 = vunpack.c.h.b16 %v463
  %v536 = vunpack.c.l.b16 %v464
  %v537 = vunpack.c.h.b16 %v464
  %v538 = vunpack.c.l.b16 %v465
  %v539 = vunpack.c.h.b16 %v465
  %v540 = vunpack.c.l.b16 %v466
  %v541 = vunpack.c.h.b16 %v466
  %v542 = vunpack.c.l.b16 %v467
  %v543 = vunpack.c.h.b16 %v467
  %v544 = vunpack.c.l.b16 %v468
  %v545 = vunpack.c.h.b16 %v468
  %v546 = vunpack.c.l.b16 %v469
  %v547 = vunpack.c.h.b16 %v469
  %v548 = vunpack.c.l.b16 %v470
  %v549 = vunpack.c.h.b16 %v470
  %v550 = vunpack.c.l.b16 %v471
  %v551 = vunpack.c.h.b16 %v471
  %v552 = vunpack.c.l.b16 %v472
  %v553 = vunpack.c.h.b16 %v472
  %v554 = vunpack.c.l.b16 %v473
  %v555 = vunpack.c.h.b16 %v473
  %v556 = vunpack.c.l.b16 %v474
  %v557 = vunpack.c.h.b16 %v474
  %v558 = vunpack.c.l.b16 %v475
  %v559 = vunpack.c.h.b16 %v475
  %v560 = vunpack.c.l.b16 %v476
  %v561 = vunpack.c.h.b16 %v476
  %v562 = vunpack.c.l.b16 %v477
  %v563 = vunpack.c.h.b16 %v477
  %v564 = vunpack.c.l.b16 %v478
  %v565 = vunpack.c.h.b16 %v478
  %v566 = vunpack.c.l.b16 %v479
  %v567 = vunpack.c.h.b16 %v479
  %v568 = vunpack.c.l.b16 %v480
  %v569 = vunpack.c.h.b16 %v480
  %v570 = vunpack.c.l.b16 %v481
  %v571 = vunpack.c.h.b16 %v481
  %v572 = vunpack.c.l.b16 %v482
  %v573 = vunpack.c.h.b16 %v482
  %v574 = vunpack.c.l.b16 %v483
  %v575 = vunpack.c.h.b16 %v483
  %v576 = vunpack.c.l.b16 %v484
  %v577 = vunpack.c.h.b16 %v484
  %v578 = vunpack.c.l.b16 %v485
  %v579 = vunpack.c.h.b16 %v485
  %v580 = vunpack.c.l.b16 %v486
  %v581 = vunpack.c.h.b16 %v486
  %v582 = vunpack.c.l.b16 %v487
  %v583 = vunpack.c.h.b16 %v487
  %v584 = vpack.c.b16 %v522, %v520
  %v585 = vpack.c.b16 %v523, %v521
  %v586 = vpack.c.b16 %v526, %v524
  %v587 = vpack.c.b16 %v527, %v525
  %v588 = vpack.c.b16 %v530, %v528
  %v589 = vpack.c.b16 %v531, %v529
  %v590 = vpack.c.b16 %v534, %v532
  %v591 = vpack.c.b16 %v535, %v533
  %v592 = vpack.c.b16 %v538, %v536
  %v593 = vpack.c.b16 %v539, %v537
  %v594 = vpack.c.b16 %v542, %v540
  %v595 = vpack.c.b16 %v543, %v541
  %v596 = vpack.c.b16 %v546, %v544
  %v597 = vpack.c.b16 %v547, %v545
  %v598 = vpack.c.b16 %v550, %v548
  %v599 = vpack.c.b16 %v551, %v549
  %v600 = vpack.c.b16 %v554, %v552
  %v601 = vpack.c.b16 %v555, %v553
  %v602 = vpack.c.b16 %v558, %v556
  %v603 = vpack.c.b16 %v559, %v557
  %v604 = vpack.c.b16 %v562, %v560
  %v605 = vpack.c.b16 %v563, %v561
  %v606 = vpack.c.b16 %v566, %v564
  %v607 = vpack.c.b16 %v567, %v565
  %v608 = vpack.c.b16 %v570, %v568
  %v609 = vpack.c.b16 %v571, %v569
  %v610 = vpack.c.b16 %v574, %v572
  %v611 = vpack.c.b16 %v575, %v573
  %v612 = vpack.c.b16 %v578, %v576
  %v613 = vpack.c.b16 %v579, %v577
  %v614 = vpack.c.b16 %v582, %v580
  %v615 = vpack.c.b16 %v583, %v581
  %648 = vmatprep.subr.bf16.mxu0 %v585
  %649 = vmatpush1.bf16.msra.mxu0 %v584
  %650 = vmatprep.subr.bf16.mxu0 %v587
  %651 = vmatpush1.bf16.msra.mxu0 %v586
  %652 = vmatprep.subr.bf16.mxu0 %v589
  %653 = vmatpush1.bf16.msra.mxu0 %v588
  %654 = vmatprep.subr.bf16.mxu0 %v591
  %655 = vmatpush1.bf16.msra.mxu0 %v590
  %656 = vmatprep.subr.bf16.mxu0 %v593
  %657 = vmatpush1.bf16.msra.mxu0 %v592
  %658 = vmatprep.subr.bf16.mxu0 %v595
  %659 = vmatpush1.bf16.msra.mxu0 %v594
  %660 = vmatprep.subr.bf16.mxu0 %v597
  %661 = vmatpush1.bf16.msra.mxu0 %v596
  %662 = vmatprep.subr.bf16.mxu0 %v599
  %663 = vmatpush1.bf16.msra.mxu0 %v598
  %664 = vmatprep.subr.bf16.mxu0 %v601
  %665 = vmatpush1.bf16.msra.mxu0 %v600
  %666 = vmatprep.subr.bf16.mxu0 %v603
  %667 = vmatpush1.bf16.msra.mxu0 %v602
  %668 = vmatprep.subr.bf16.mxu0 %v605
  %669 = vmatpush1.bf16.msra.mxu0 %v604
  %670 = vmatprep.subr.bf16.mxu0 %v607
  %671 = vmatpush1.bf16.msra.mxu0 %v606
  %672 = vmatprep.subr.bf16.mxu0 %v609
  %673 = vmatpush1.bf16.msra.mxu0 %v608
  %674 = vmatprep.subr.bf16.mxu0 %v611
  %675 = vmatpush1.bf16.msra.mxu0 %v610
  %676 = vmatprep.subr.bf16.mxu0 %v613
  %677 = vmatpush1.bf16.msra.mxu0 %v612
  %678 = vmatprep.subr.bf16.mxu0 %v615
  %679 = vmatpush1.bf16.msra.mxu0 %v614
  %680 = vmatprep.mubr.bf16.mxu0 0
  %681 = vmatmul.mubr.bf16.gmra.mrb[0].mxu0 0
  %v682 = vpop.f32.mrb[0].mxu0
  %v683 = vadd.f32 0.0, %v682
  %v684 = vpop.f32.mrb[0].mxu0
  %v685 = vadd.f32 0.0, %v684
  %v686 = vpop.f32.mrb[0].mxu0
  %v687 = vpop.f32.mrb[0].mxu0
  %688 = vdwg.mxu0
  %s689 = smul.u32 0, 2
  %s690 = smul.addr %s689, 8
  %s691 = scalar_lea.vmem [#allocation2], %s690
  %v692 = vld [vmem:[%s691] sm:$0xff]
  %v693 = vld [vmem:[%s691 + $0x8] sm:$0xff]
  %v694 = vld [vmem:[%s2] sm:$0xff]
  %v695 = vld [vmem:[%s2 + $0x8] sm:$0xff]
  %v696 = vld [vmem:[%s2 + $0x10] sm:$0xff]
  %v697 = vld [vmem:[%s2 + $0x18] sm:$0xff]
  %v698 = vld [vmem:[%s2 + $0x20] sm:$0xff]
  %v699 = vld [vmem:[%s2 + $0x28] sm:$0xff]
  %v700 = vld [vmem:[%s2 + $0x30] sm:$0xff]
  %v701 = vld [vmem:[%s2 + $0x38] sm:$0xff]
  %v702 = vld [vmem:[%s2 + $0x40] sm:$0xff]
  %v703 = vld [vmem:[%s2 + $0x48] sm:$0xff]
  %v704 = vld [vmem:[%s2 + $0x50] sm:$0xff]
  %v705 = vld [vmem:[%s2 + $0x58] sm:$0xff]
  %v706 = vld [vmem:[%s2 + $0x60] sm:$0xff]
  %v707 = vld [vmem:[%s2 + $0x68] sm:$0xff]
  %v708 = vld [vmem:[%s2 + $0x70] sm:$0xff]
  %v709 = vld [vmem:[%s2 + $0x78] sm:$0xff]
  %v710 = vld [vmem:[%s2 + $0x80] sm:$0xff]
  %v711 = vld [vmem:[%s2 + $0x88] sm:$0xff]
  %v712 = vld [vmem:[%s2 + $0x90] sm:$0xff]
  %v713 = vld [vmem:[%s2 + $0x98] sm:$0xff]
  %v714 = vld [vmem:[%s2 + $0xa0] sm:$0xff]
  %v715 = vld [vmem:[%s2 + $0xa8] sm:$0xff]
  %v716 = vld [vmem:[%s2 + $0xb0] sm:$0xff]
  %v717 = vld [vmem:[%s2 + $0xb8] sm:$0xff]
  %v718 = vld [vmem:[%s2 + $0xc0] sm:$0xff]
  %v719 = vld [vmem:[%s2 + $0xc8] sm:$0xff]
  %v720 = vld [vmem:[%s2 + $0xd0] sm:$0xff]
  %v721 = vld [vmem:[%s2 + $0xd8] sm:$0xff]
  %v722 = vld [vmem:[%s2 + $0xe0] sm:$0xff]
  %v723 = vld [vmem:[%s2 + $0xe8] sm:$0xff]
  %v724 = vld [vmem:[%s2 + $0xf0] sm:$0xff]
  %v725 = vld [vmem:[%s2 + $0xf8] sm:$0xff]
  %v758 = vunpack.c.l.b16 %v694
  %v759 = vunpack.c.h.b16 %v694
  %v760 = vunpack.c.l.b16 %v695
  %v761 = vunpack.c.h.b16 %v695
  %v762 = vunpack.c.l.b16 %v696
  %v763 = vunpack.c.h.b16 %v696
  %v764 = vunpack.c.l.b16 %v697
  %v765 = vunpack.c.h.b16 %v697
  %v766 = vunpack.c.l.b16 %v698
  %v767 = vunpack.c.h.b16 %v698
  %v768 = vunpack.c.l.b16 %v699
  %v769 = vunpack.c.h.b16 %v699
  %v770 = vunpack.c.l.b16 %v700
  %v771 = vunpack.c.h.b16 %v700
  %v772 = vunpack.c.l.b16 %v701
  %v773 = vunpack.c.h.b16 %v701
  %v774 = vunpack.c.l.b16 %v702
  %v775 = vunpack.c.h.b16 %v702
  %v776 = vunpack.c.l.b16 %v703
  %v777 = vunpack.c.h.b16 %v703
  %v778 = vunpack.c.l.b16 %v704
  %v779 = vunpack.c.h.b16 %v704
  %v780 = vunpack.c.l.b16 %v705
  %v781 = vunpack.c.h.b16 %v705
  %v782 = vunpack.c.l.b16 %v706
  %v783 = vunpack.c.h.b16 %v706
  %v784 = vunpack.c.l.b16 %v707
  %v785 = vunpack.c.h.b16 %v707
  %v786 = vunpack.c.l.b16 %v708
  %v787 = vunpack.c.h.b16 %v708
  %v788 = vunpack.c.l.b16 %v709
  %v789 = vunpack.c.h.b16 %v709
  %v790 = vunpack.c.l.b16 %v710
  %v791 = vunpack.c.h.b16 %v710
  %v792 = vunpack.c.l.b16 %v711
  %v793 = vunpack.c.h.b16 %v711
  %v794 = vunpack.c.l.b16 %v712
  %v795 = vunpack.c.h.b16 %v712
  %v796 = vunpack.c.l.b16 %v713
  %v797 = vunpack.c.h.b16 %v713
  %v798 = vunpack.c.l.b16 %v714
  %v799 = vunpack.c.h.b16 %v714
  %v800 = vunpack.c.l.b16 %v715
  %v801 = vunpack.c.h.b16 %v715
  %v802 = vunpack.c.l.b16 %v716
  %v803 = vunpack.c.h.b16 %v716
  %v804 = vunpack.c.l.b16 %v717
  %v805 = vunpack.c.h.b16 %v717
  %v806 = vunpack.c.l.b16 %v718
  %v807 = vunpack.c.h.b16 %v718
  %v808 = vunpack.c.l.b16 %v719
  %v809 = vunpack.c.h.b16 %v719
  %v810 = vunpack.c.l.b16 %v720
  %v811 = vunpack.c.h.b16 %v720
  %v812 = vunpack.c.l.b16 %v721
  %v813 = vunpack.c.h.b16 %v721
  %v814 = vunpack.c.l.b16 %v722
  %v815 = vunpack.c.h.b16 %v722
  %v816 = vunpack.c.l.b16 %v723
  %v817 = vunpack.c.h.b16 %v723
  %v818 = vunpack.c.l.b16 %v724
  %v819 = vunpack.c.h.b16 %v724
  %v820 = vunpack.c.l.b16 %v725
  %v821 = vunpack.c.h.b16 %v725
  %v822 = vpack.c.b16 %v760, %v758
  %v823 = vpack.c.b16 %v761, %v759
  %v824 = vpack.c.b16 %v764, %v762
  %v825 = vpack.c.b16 %v765, %v763
  %v826 = vpack.c.b16 %v768, %v766
  %v827 = vpack.c.b16 %v769, %v767
  %v828 = vpack.c.b16 %v772, %v770
  %v829 = vpack.c.b16 %v773, %v771
  %v830 = vpack.c.b16 %v776, %v774
  %v831 = vpack.c.b16 %v777, %v775
  %v832 = vpack.c.b16 %v780, %v778
  %v833 = vpack.c.b16 %v781, %v779
  %v834 = vpack.c.b16 %v784, %v782
  %v835 = vpack.c.b16 %v785, %v783
  %v836 = vpack.c.b16 %v788, %v786
  %v837 = vpack.c.b16 %v789, %v787
  %v838 = vpack.c.b16 %v792, %v790
  %v839 = vpack.c.b16 %v793, %v791
  %v840 = vpack.c.b16 %v796, %v794
  %v841 = vpack.c.b16 %v797, %v795
  %v842 = vpack.c.b16 %v800, %v798
  %v843 = vpack.c.b16 %v801, %v799
  %v844 = vpack.c.b16 %v804, %v802
  %v845 = vpack.c.b16 %v805, %v803
  %v846 = vpack.c.b16 %v808, %v806
  %v847 = vpack.c.b16 %v809, %v807
  %v848 = vpack.c.b16 %v812, %v810
  %v849 = vpack.c.b16 %v813, %v811
  %v850 = vpack.c.b16 %v816, %v814
  %v851 = vpack.c.b16 %v817, %v815
  %v852 = vpack.c.b16 %v820, %v818
  %v853 = vpack.c.b16 %v821, %v819
  %886 = vmatprep.subr.bf16.mxu0 %v823
  %887 = vmatpush1.bf16.msra.mxu0 %v822
  %888 = vmatprep.subr.bf16.mxu0 %v825
  %889 = vmatpush1.bf16.msra.mxu0 %v824
  %890 = vmatprep.subr.bf16.mxu0 %v827
  %891 = vmatpush1.bf16.msra.mxu0 %v826
  %892 = vmatprep.subr.bf16.mxu0 %v829
  %893 = vmatpush1.bf16.msra.mxu0 %v828
  %894 = vmatprep.subr.bf16.mxu0 %v831
  %895 = vmatpush1.bf16.msra.mxu0 %v830
  %896 = vmatprep.subr.bf16.mxu0 %v833
  %897 = vmatpush1.bf16.msra.mxu0 %v832
  %898 = vmatprep.subr.bf16.mxu0 %v835
  %899 = vmatpush1.bf16.msra.mxu0 %v834
  %900 = vmatprep.subr.bf16.mxu0 %v837
  %901 = vmatpush1.bf16.msra.mxu0 %v836
  %902 = vmatprep.subr.bf16.mxu0 %v839
  %903 = vmatpush1.bf16.msra.mxu0 %v838
  %904 = vmatprep.subr.bf16.mxu0 %v841
  %905 = vmatpush1.bf16.msra.mxu0 %v840
  %906 = vmatprep.subr.bf16.mxu0 %v843
  %907 = vmatpush1.bf16.msra.mxu0 %v842
  %908 = vmatprep.subr.bf16.mxu0 %v845
  %909 = vmatpush1.bf16.msra.mxu0 %v844
  %910 = vmatprep.subr.bf16.mxu0 %v847
  %911 = vmatpush1.bf16.msra.mxu0 %v846
  %912 = vmatprep.subr.bf16.mxu0 %v849
  %913 = vmatpush1.bf16.msra.mxu0 %v848
  %914 = vmatprep.subr.bf16.mxu0 %v851
  %915 = vmatpush1.bf16.msra.mxu0 %v850
  %916 = vmatprep.subr.bf16.mxu0 %v853
  %917 = vmatpush1.bf16.msra.mxu0 %v852
  %918 = vmatprep.mubr.bf16.mxu0 0
  %919 = vmatmul.mubr.bf16.gmra.mrb[0].mxu0 0
  %v920 = vpop.f32.mrb[0].mxu0
  %v921 = vadd.f32 0.0, %v920
  %v922 = vpop.f32.mrb[0].mxu0
  %v923 = vadd.f32 0.0, %v922
  %v924 = vpop.f32.mrb[0].mxu0
  %v925 = vpop.f32.mrb[0].mxu0
  %926 = vdwg.mxu0
  %v927 = vadd.f32 %v692, %v921
  %v928 = vadd.f32 %v693, %v923
  %v929 = vtanh.pop %v927
  %v930 = vtanh.pop %v928
  %v931 = vpack.c.bf16 %v929, %v929
  %v932 = vpack.c.bf16 %v930, %v930
  %v933 = vld [vmem:[%s4] sm:$0xff]
  %v934 = vld [vmem:[%s4 + $0x8] sm:$0xff]
  %v935 = vld [vmem:[%s4 + $0x10] sm:$0xff]
  %v936 = vld [vmem:[%s4 + $0x18] sm:$0xff]
  %v937 = vld [vmem:[%s4 + $0x20] sm:$0xff]
  %v938 = vld [vmem:[%s4 + $0x28] sm:$0xff]
  %v939 = vld [vmem:[%s4 + $0x30] sm:$0xff]
  %v940 = vld [vmem:[%s4 + $0x38] sm:$0xff]
  %v941 = vld [vmem:[%s4 + $0x40] sm:$0xff]
  %v942 = vld [vmem:[%s4 + $0x48] sm:$0xff]
  %v943 = vld [vmem:[%s4 + $0x50] sm:$0xff]
  %v944 = vld [vmem:[%s4 + $0x58] sm:$0xff]
  %v945 = vld [vmem:[%s4 + $0x60] sm:$0xff]
  %v946 = vld [vmem:[%s4 + $0x68] sm:$0xff]
  %v947 = vld [vmem:[%s4 + $0x70] sm:$0xff]
  %v948 = vld [vmem:[%s4 + $0x78] sm:$0xff]
  %v949 = vld [vmem:[%s4 + $0x80] sm:$0xff]
  %v950 = vld [vmem:[%s4 + $0x88] sm:$0xff]
  %v951 = vld [vmem:[%s4 + $0x90] sm:$0xff]
  %v952 = vld [vmem:[%s4 + $0x98] sm:$0xff]
  %v953 = vld [vmem:[%s4 + $0xa0] sm:$0xff]
  %v954 = vld [vmem:[%s4 + $0xa8] sm:$0xff]
  %v955 = vld [vmem:[%s4 + $0xb0] sm:$0xff]
  %v956 = vld [vmem:[%s4 + $0xb8] sm:$0xff]
  %v957 = vld [vmem:[%s4 + $0xc0] sm:$0xff]
  %v958 = vld [vmem:[%s4 + $0xc8] sm:$0xff]
  %v959 = vld [vmem:[%s4 + $0xd0] sm:$0xff]
  %v960 = vld [vmem:[%s4 + $0xd8] sm:$0xff]
  %v961 = vld [vmem:[%s4 + $0xe0] sm:$0xff]
  %v962 = vld [vmem:[%s4 + $0xe8] sm:$0xff]
  %v963 = vld [vmem:[%s4 + $0xf0] sm:$0xff]
  %v964 = vld [vmem:[%s4 + $0xf8] sm:$0xff]
  %v997 = vunpack.c.l.b16 %v933
  %v998 = vunpack.c.h.b16 %v933
  %v999 = vunpack.c.l.b16 %v934
  %v1000 = vunpack.c.h.b16 %v934
  %v1001 = vunpack.c.l.b16 %v935
  %v1002 = vunpack.c.h.b16 %v935
  %v1003 = vunpack.c.l.b16 %v936
  %v1004 = vunpack.c.h.b16 %v936
  %v1005 = vunpack.c.l.b16 %v937
  %v1006 = vunpack.c.h.b16 %v937
  %v1007 = vunpack.c.l.b16 %v938
  %v1008 = vunpack.c.h.b16 %v938
  %v1009 = vunpack.c.l.b16 %v939
  %v1010 = vunpack.c.h.b16 %v939
  %v1011 = vunpack.c.l.b16 %v940
  %v1012 = vunpack.c.h.b16 %v940
  %v1013 = vunpack.c.l.b16 %v941
  %v1014 = vunpack.c.h.b16 %v941
  %v1015 = vunpack.c.l.b16 %v942
  %v1016 = vunpack.c.h.b16 %v942
  %v1017 = vunpack.c.l.b16 %v943
  %v1018 = vunpack.c.h.b16 %v943
  %v1019 = vunpack.c.l.b16 %v944
  %v1020 = vunpack.c.h.b16 %v944
  %v1021 = vunpack.c.l.b16 %v945
  %v1022 = vunpack.c.h.b16 %v945
  %v1023 = vunpack.c.l.b16 %v946
  %v1024 = vunpack.c.h.b16 %v946
  %v1025 = vunpack.c.l.b16 %v947
  %v1026 = vunpack.c.h.b16 %v947
  %v1027 = vunpack.c.l.b16 %v948
  %v1028 = vunpack.c.h.b16 %v948
  %v1029 = vunpack.c.l.b16 %v949
  %v1030 = vunpack.c.h.b16 %v949
  %v1031 = vunpack.c.l.b16 %v950
  %v1032 = vunpack.c.h.b16 %v950
  %v1033 = vunpack.c.l.b16 %v951
  %v1034 = vunpack.c.h.b16 %v951
  %v1035 = vunpack.c.l.b16 %v952
  %v1036 = vunpack.c.h.b16 %v952
  %v1037 = vunpack.c.l.b16 %v953
  %v1038 = vunpack.c.h.b16 %v953
  %v1039 = vunpack.c.l.b16 %v954
  %v1040 = vunpack.c.h.b16 %v954
  %v1041 = vunpack.c.l.b16 %v955
  %v1042 = vunpack.c.h.b16 %v955
  %v1043 = vunpack.c.l.b16 %v956
  %v1044 = vunpack.c.h.b16 %v956
  %v1045 = vunpack.c.l.b16 %v957
  %v1046 = vunpack.c.h.b16 %v957
  %v1047 = vunpack.c.l.b16 %v958
  %v1048 = vunpack.c.h.b16 %v958
  %v1049 = vunpack.c.l.b16 %v959
  %v1050 = vunpack.c.h.b16 %v959
  %v1051 = vunpack.c.l.b16 %v960
  %v1052 = vunpack.c.h.b16 %v960
  %v1053 = vunpack.c.l.b16 %v961
  %v1054 = vunpack.c.h.b16 %v961
  %v1055 = vunpack.c.l.b16 %v962
  %v1056 = vunpack.c.h.b16 %v962
  %v1057 = vunpack.c.l.b16 %v963
  %v1058 = vunpack.c.h.b16 %v963
  %v1059 = vunpack.c.l.b16 %v964
  %v1060 = vunpack.c.h.b16 %v964
  %v1061 = vpack.c.b16 %v999, %v997
  %v1062 = vpack.c.b16 %v1000, %v998
  %v1063 = vpack.c.b16 %v1003, %v1001
  %v1064 = vpack.c.b16 %v1004, %v1002
  %v1065 = vpack.c.b16 %v1007, %v1005
  %v1066 = vpack.c.b16 %v1008, %v1006
  %v1067 = vpack.c.b16 %v1011, %v1009
  %v1068 = vpack.c.b16 %v1012, %v1010
  %v1069 = vpack.c.b16 %v1015, %v1013
  %v1070 = vpack.c.b16 %v1016, %v1014
  %v1071 = vpack.c.b16 %v1019, %v1017
  %v1072 = vpack.c.b16 %v1020, %v1018
  %v1073 = vpack.c.b16 %v1023, %v1021
  %v1074 = vpack.c.b16 %v1024, %v1022
  %v1075 = vpack.c.b16 %v1027, %v1025
  %v1076 = vpack.c.b16 %v1028, %v1026
  %v1077 = vpack.c.b16 %v1031, %v1029
  %v1078 = vpack.c.b16 %v1032, %v1030
  %v1079 = vpack.c.b16 %v1035, %v1033
  %v1080 = vpack.c.b16 %v1036, %v1034
  %v1081 = vpack.c.b16 %v1039, %v1037
  %v1082 = vpack.c.b16 %v1040, %v1038
  %v1083 = vpack.c.b16 %v1043, %v1041
  %v1084 = vpack.c.b16 %v1044, %v1042
  %v1085 = vpack.c.b16 %v1047, %v1045
  %v1086 = vpack.c.b16 %v1048, %v1046
  %v1087 = vpack.c.b16 %v1051, %v1049
  %v1088 = vpack.c.b16 %v1052, %v1050
  %v1089 = vpack.c.b16 %v1055, %v1053
  %v1090 = vpack.c.b16 %v1056, %v1054
  %v1091 = vpack.c.b16 %v1059, %v1057
  %v1092 = vpack.c.b16 %v1060, %v1058
  %1125 = vmatprep.subr.bf16.mxu0 %v1062
  %1126 = vmatpush1.bf16.msra.mxu0 %v1061
  %1127 = vmatprep.subr.bf16.mxu0 %v1064
  %1128 = vmatpush1.bf16.msra.mxu0 %v1063
  %1129 = vmatprep.subr.bf16.mxu0 %v1066
  %1130 = vmatpush1.bf16.msra.mxu0 %v1065
  %1131 = vmatprep.subr.bf16.mxu0 %v1068
  %1132 = vmatpush1.bf16.msra.mxu0 %v1067
  %1133 = vmatprep.subr.bf16.mxu0 %v1070
  %1134 = vmatpush1.bf16.msra.mxu0 %v1069
  %1135 = vmatprep.subr.bf16.mxu0 %v1072
  %1136 = vmatpush1.bf16.msra.mxu0 %v1071
  %1137 = vmatprep.subr.bf16.mxu0 %v1074
  %1138 = vmatpush1.bf16.msra.mxu0 %v1073
  %1139 = vmatprep.subr.bf16.mxu0 %v1076
  %1140 = vmatpush1.bf16.msra.mxu0 %v1075
  %1141 = vmatprep.subr.bf16.mxu0 %v1078
  %1142 = vmatpush1.bf16.msra.mxu0 %v1077
  %1143 = vmatprep.subr.bf16.mxu0 %v1080
  %1144 = vmatpush1.bf16.msra.mxu0 %v1079
  %1145 = vmatprep.subr.bf16.mxu0 %v1082
  %1146 = vmatpush1.bf16.msra.mxu0 %v1081
  %1147 = vmatprep.subr.bf16.mxu0 %v1084
  %1148 = vmatpush1.bf16.msra.mxu0 %v1083
  %1149 = vmatprep.subr.bf16.mxu0 %v1086
  %1150 = vmatpush1.bf16.msra.mxu0 %v1085
  %1151 = vmatprep.subr.bf16.mxu0 %v1088
  %1152 = vmatpush1.bf16.msra.mxu0 %v1087
  %1153 = vmatprep.subr.bf16.mxu0 %v1090
  %1154 = vmatpush1.bf16.msra.mxu0 %v1089
  %1155 = vmatprep.subr.bf16.mxu0 %v1092
  %1156 = vmatpush1.bf16.msra.mxu0 %v1091
  %1157 = vmatprep.mubr.bf16.mxu0 %v932
  %1158 = vmatmul.mubr.bf16.gmra.mrb[0].mxu0 %v931
  %v1159 = vpop.f32.mrb[0].mxu0
  %v1160 = vadd.f32 %v683, %v1159
  %v1161 = vpop.f32.mrb[0].mxu0
  %v1162 = vadd.f32 %v685, %v1161
  %v1163 = vpop.f32.mrb[0].mxu0
  %v1164 = vpop.f32.mrb[0].mxu0
  %1165 = vdwg.mxu0
  %v1166 = vadd.f32 %v1160, %v449
  %v1167 = vadd.f32 %v1162, %v453
  %v1168 = vtanh.pop %v1166
  %v1169 = vtanh.pop %v1167
  %v1170 = vpack.c.bf16 %v1168, %v1168
  %v1171 = vpack.c.bf16 %v1169, %v1169
  %v1172 = vld [vmem:[%s7] sm:$0xf]
  %v1173 = vld [vmem:[%s7 + $0x4] sm:$0xf]
  %v1174 = vld [vmem:[%s7 + $0x8] sm:$0xf]
  %v1175 = vld [vmem:[%s7 + $0xc] sm:$0xf]
  %v1176 = vld [vmem:[%s7 + $0x10] sm:$0xf]
  %v1177 = vld [vmem:[%s7 + $0x14] sm:$0xf]
  %v1178 = vld [vmem:[%s7 + $0x18] sm:$0xf]
  %v1179 = vld [vmem:[%s7 + $0x1c] sm:$0xf]
  %v1180 = vld [vmem:[%s7 + $0x20] sm:$0xf]
  %v1181 = vld [vmem:[%s7 + $0x24] sm:$0xf]
  %v1182 = vld [vmem:[%s7 + $0x28] sm:$0xf]
  %v1183 = vld [vmem:[%s7 + $0x2c] sm:$0xf]
  %v1184 = vld [vmem:[%s7 + $0x30] sm:$0xf]
  %v1185 = vld [vmem:[%s7 + $0x34] sm:$0xf]
  %v1186 = vld [vmem:[%s7 + $0x38] sm:$0xf]
  %v1187 = vld [vmem:[%s7 + $0x3c] sm:$0xf]
  %v1188 = vld [vmem:[%s7 + $0x40] sm:$0xf]
  %v1189 = vld [vmem:[%s7 + $0x44] sm:$0xf]
  %v1190 = vld [vmem:[%s7 + $0x48] sm:$0xf]
  %v1191 = vld [vmem:[%s7 + $0x4c] sm:$0xf]
  %v1192 = vld [vmem:[%s7 + $0x50] sm:$0xf]
  %v1193 = vld [vmem:[%s7 + $0x54] sm:$0xf]
  %v1194 = vld [vmem:[%s7 + $0x58] sm:$0xf]
  %v1195 = vld [vmem:[%s7 + $0x5c] sm:$0xf]
  %v1196 = vld [vmem:[%s7 + $0x60] sm:$0xf]
  %v1197 = vld [vmem:[%s7 + $0x64] sm:$0xf]
  %v1198 = vld [vmem:[%s7 + $0x68] sm:$0xf]
  %v1199 = vld [vmem:[%s7 + $0x6c] sm:$0xf]
  %v1200 = vld [vmem:[%s7 + $0x70] sm:$0xf]
  %v1201 = vld [vmem:[%s7 + $0x74] sm:$0xf]
  %v1202 = vld [vmem:[%s7 + $0x78] sm:$0xf]
  %v1203 = vld [vmem:[%s7 + $0x7c] sm:$0xf]
  %1204 = vmatprep.subr.bf16.mxu0 %v585
  %1205 = vmatpush1.bf16.msra.mxu0 %v584
  %1206 = vmatprep.subr.bf16.mxu0 %v587
  %1207 = vmatpush1.bf16.msra.mxu0 %v586
  %1208 = vmatprep.subr.bf16.mxu0 %v589
  %1209 = vmatpush1.bf16.msra.mxu0 %v588
  %1210 = vmatprep.subr.bf16.mxu0 %v591
  %1211 = vmatpush1.bf16.msra.mxu0 %v590
  %1212 = vmatprep.subr.bf16.mxu0 %v593
  %1213 = vmatpush1.bf16.msra.mxu0 %v592
  %1214 = vmatprep.subr.bf16.mxu0 %v595
  %1215 = vmatpush1.bf16.msra.mxu0 %v594
  %1216 = vmatprep.subr.bf16.mxu0 %v597
  %1217 = vmatpush1.bf16.msra.mxu0 %v596
  %1218 = vmatprep.subr.bf16.mxu0 %v599
  %1219 = vmatpush1.bf16.msra.mxu0 %v598
  %1220 = vmatprep.subr.bf16.mxu0 %v601
  %1221 = vmatpush1.bf16.msra.mxu0 %v600
  %1222 = vmatprep.subr.bf16.mxu0 %v603
  %1223 = vmatpush1.bf16.msra.mxu0 %v602
  %1224 = vmatprep.subr.bf16.mxu0 %v605
  %1225 = vmatpush1.bf16.msra.mxu0 %v604
  %1226 = vmatprep.subr.bf16.mxu0 %v607
  %1227 = vmatpush1.bf16.msra.mxu0 %v606
  %1228 = vmatprep.subr.bf16.mxu0 %v609
  %1229 = vmatpush1.bf16.msra.mxu0 %v608
  %1230 = vmatprep.subr.bf16.mxu0 %v611
  %1231 = vmatpush1.bf16.msra.mxu0 %v610
  %1232 = vmatprep.subr.bf16.mxu0 %v613
  %1233 = vmatpush1.bf16.msra.mxu0 %v612
  %1234 = vmatprep.subr.bf16.mxu0 %v615
  %1235 = vmatpush1.bf16.msra.mxu0 %v614
  %1236 = vmatprep.mubr.bf16.mxu0 %v1171
  %1237 = vmatmul.mubr.bf16.gmra.mrb[0].mxu0 %v1170
  %v1238 = vpop.f32.mrb[0].mxu0
  %v1239 = vadd.f32 0.0, %v1238
  %v1240 = vpop.f32.mrb[0].mxu0
  %v1241 = vadd.f32 0.0, %v1240
  %v1242 = vpop.f32.mrb[0].mxu0
  %v1243 = vpop.f32.mrb[0].mxu0
  %1244 = vdwg.mxu0
  %s1245 = smul.u32 1, 2
  %s1246 = smul.addr %s1245, 8
  %s1247 = scalar_lea.vmem [#allocation2], %s1246
  %v1248 = vld [vmem:[%s1247] sm:$0xff]
  %v1249 = vld [vmem:[%s1247 + $0x8] sm:$0xff]
  %1250 = vmatprep.subr.bf16.mxu0 %v823
  %1251 = vmatpush1.bf16.msra.mxu0 %v822
  %1252 = vmatprep.subr.bf16.mxu0 %v825
  %1253 = vmatpush1.bf16.msra.mxu0 %v824
  %1254 = vmatprep.subr.bf16.mxu0 %v827
  %1255 = vmatpush1.bf16.msra.mxu0 %v826
  %1256 = vmatprep.subr.bf16.mxu0 %v829
  %1257 = vmatpush1.bf16.msra.mxu0 %v828
  %1258 = vmatprep.subr.bf16.mxu0 %v831
  %1259 = vmatpush1.bf16.msra.mxu0 %v830
  %1260 = vmatprep.subr.bf16.mxu0 %v833
  %1261 = vmatpush1.bf16.msra.mxu0 %v832
  %1262 = vmatprep.subr.bf16.mxu0 %v835
  %1263 = vmatpush1.bf16.msra.mxu0 %v834
  %1264 = vmatprep.subr.bf16.mxu0 %v837
  %1265 = vmatpush1.bf16.msra.mxu0 %v836
  %1266 = vmatprep.subr.bf16.mxu0 %v839
  %1267 = vmatpush1.bf16.msra.mxu0 %v838
  %1268 = vmatprep.subr.bf16.mxu0 %v841
  %1269 = vmatpush1.bf16.msra.mxu0 %v840
  %1270 = vmatprep.subr.bf16.mxu0 %v843
  %1271 = vmatpush1.bf16.msra.mxu0 %v842
  %1272 = vmatprep.subr.bf16.mxu0 %v845
  %1273 = vmatpush1.bf16.msra.mxu0 %v844
  %1274 = vmatprep.subr.bf16.mxu0 %v847
  %1275 = vmatpush1.bf16.msra.mxu0 %v846
  %1276 = vmatprep.subr.bf16.mxu0 %v849
  %1277 = vmatpush1.bf16.msra.mxu0 %v848
  %1278 = vmatprep.subr.bf16.mxu0 %v851
  %1279 = vmatpush1.bf16.msra.mxu0 %v850
  %1280 = vmatprep.subr.bf16.mxu0 %v853
  %1281 = vmatpush1.bf16.msra.mxu0 %v852
  %1282 = vmatprep.mubr.bf16.mxu0 %v932
  %1283 = vmatmul.mubr.bf16.gmra.mrb[0].mxu0 %v931
  %v1284 = vpop.f32.mrb[0].mxu0
  %v1285 = vadd.f32 0.0, %v1284
  %v1286 = vpop.f32.mrb[0].mxu0
  %v1287 = vadd.f32 0.0, %v1286
  %v1288 = vpop.f32.mrb[0].mxu0
  %v1289 = vpop.f32.mrb[0].mxu0
  %1290 = vdwg.mxu0
  %v1291 = vadd.f32 %v1248, %v1285
  %v1292 = vadd.f32 %v1249, %v1287
  %v1293 = vtanh.pop %v1291
  %v1294 = vtanh.pop %v1292
  %v1295 = vpack.c.bf16 %v1293, %v1293
  %v1296 = vpack.c.bf16 %v1294, %v1294
  %1297 = vmatprep.subr.bf16.mxu0 %v1062
  %1298 = vmatpush1.bf16.msra.mxu0 %v1061
  %1299 = vmatprep.subr.bf16.mxu0 %v1064
  %1300 = vmatpush1.bf16.msra.mxu0 %v1063
  %1301 = vmatprep.subr.bf16.mxu0 %v1066
  %1302 = vmatpush1.bf16.msra.mxu0 %v1065
  %1303 = vmatprep.subr.bf16.mxu0 %v1068
  %1304 = vmatpush1.bf16.msra.mxu0 %v1067
  %1305 = vmatprep.subr.bf16.mxu0 %v1070
  %1306 = vmatpush1.bf16.msra.mxu0 %v1069
  %1307 = vmatprep.subr.bf16.mxu0 %v1072
  %1308 = vmatpush1.bf16.msra.mxu0 %v1071
  %1309 = vmatprep.subr.bf16.mxu0 %v1074
  %1310 = vmatpush1.bf16.msra.mxu0 %v1073
  %1311 = vmatprep.subr.bf16.mxu0 %v1076
  %1312 = vmatpush1.bf16.msra.mxu0 %v1075
  %1313 = vmatprep.subr.bf16.mxu0 %v1078
  %1314 = vmatpush1.bf16.msra.mxu0 %v1077
  %1315 = vmatprep.subr.bf16.mxu0 %v1080
  %1316 = vmatpush1.bf16.msra.mxu0 %v1079
  %1317 = vmatprep.subr.bf16.mxu0 %v1082
  %1318 = vmatpush1.bf16.msra.mxu0 %v1081
  %1319 = vmatprep.subr.bf16.mxu0 %v1084
  %1320 = vmatpush1.bf16.msra.mxu0 %v1083
  %1321 = vmatprep.subr.bf16.mxu0 %v1086
  %1322 = vmatpush1.bf16.msra.mxu0 %v1085
  %1323 = vmatprep.subr.bf16.mxu0 %v1088
  %1324 = vmatpush1.bf16.msra.mxu0 %v1087
  %1325 = vmatprep.subr.bf16.mxu0 %v1090
  %1326 = vmatpush1.bf16.msra.mxu0 %v1089
  %1327 = vmatprep.subr.bf16.mxu0 %v1092
  %1328 = vmatpush1.bf16.msra.mxu0 %v1091
  %1329 = vmatprep.mubr.bf16.mxu0 %v1296
  %1330 = vmatmul.mubr.bf16.gmra.mrb[0].mxu0 %v1295
  %v1331 = vpop.f32.mrb[0].mxu0
  %v1332 = vadd.f32 %v1239, %v1331
  %v1333 = vpop.f32.mrb[0].mxu0
  %v1334 = vadd.f32 %v1241, %v1333
  %v1335 = vpop.f32.mrb[0].mxu0
  %v1336 = vpop.f32.mrb[0].mxu0
  %1337 = vdwg.mxu0
  %v1338 = vadd.f32 %v1332, %v449
  %v1339 = vadd.f32 %v1334, %v453
  %v1340 = vtanh.pop %v1338
  %v1341 = vtanh.pop %v1339
  %v1342 = vpack.c.bf16 %v1340, %v1340
  %v1343 = vpack.c.bf16 %v1341, %v1341
  %s1344 = scalar_lea.vmem %s7, 128
  %v1345 = vld [vmem:[%s1344] sm:$0xf]
  %v1346 = vld [vmem:[%s1344 + $0x4] sm:$0xf]
  %v1347 = vld [vmem:[%s1344 + $0x8] sm:$0xf]
  %v1348 = vld [vmem:[%s1344 + $0xc] sm:$0xf]
  %v1349 = vld [vmem:[%s1344 + $0x10] sm:$0xf]
  %v1350 = vld [vmem:[%s1344 + $0x14] sm:$0xf]
  %v1351 = vld [vmem:[%s1344 + $0x18] sm:$0xf]
  %v1352 = vld [vmem:[%s1344 + $0x1c] sm:$0xf]
  %v1353 = vld [vmem:[%s1344 + $0x20] sm:$0xf]
  %v1354 = vld [vmem:[%s1344 + $0x24] sm:$0xf]
  %v1355 = vld [vmem:[%s1344 + $0x28] sm:$0xf]
  %v1356 = vld [vmem:[%s1344 + $0x2c] sm:$0xf]
  %v1357 = vld [vmem:[%s1344 + $0x30] sm:$0xf]
  %v1358 = vld [vmem:[%s1344 + $0x34] sm:$0xf]
  %v1359 = vld [vmem:[%s1344 + $0x38] sm:$0xf]
  %v1360 = vld [vmem:[%s1344 + $0x3c] sm:$0xf]
  %v1361 = vld [vmem:[%s1344 + $0x40] sm:$0xf]
  %v1362 = vld [vmem:[%s1344 + $0x44] sm:$0xf]
  %v1363 = vld [vmem:[%s1344 + $0x48] sm:$0xf]
  %v1364 = vld [vmem:[%s1344 + $0x4c] sm:$0xf]
  %v1365 = vld [vmem:[%s1344 + $0x50] sm:$0xf]
  %v1366 = vld [vmem:[%s1344 + $0x54] sm:$0xf]
  %v1367 = vld [vmem:[%s1344 + $0x58] sm:$0xf]
  %v1368 = vld [vmem:[%s1344 + $0x5c] sm:$0xf]
  %v1369 = vld [vmem:[%s1344 + $0x60] sm:$0xf]
  %v1370 = vld [vmem:[%s1344 + $0x64] sm:$0xf]
  %v1371 = vld [vmem:[%s1344 + $0x68] sm:$0xf]
  %v1372 = vld [vmem:[%s1344 + $0x6c] sm:$0xf]
  %v1373 = vld [vmem:[%s1344 + $0x70] sm:$0xf]
  %v1374 = vld [vmem:[%s1344 + $0x74] sm:$0xf]
  %v1375 = vld [vmem:[%s1344 + $0x78] sm:$0xf]
  %v1376 = vld [vmem:[%s1344 + $0x7c] sm:$0xf]
  %v1409 = vunpack.c.l.b16 %v1345
  %v1410 = vunpack.c.l.b16 %v1346
  %v1411 = vunpack.c.l.b16 %v1347
  %v1412 = vunpack.c.l.b16 %v1348
  %v1413 = vunpack.c.l.b16 %v1349
  %v1414 = vunpack.c.l.b16 %v1350
  %v1415 = vunpack.c.l.b16 %v1351
  %v1416 = vunpack.c.l.b16 %v1352
  %v1417 = vunpack.c.l.b16 %v1353
  %v1418 = vunpack.c.l.b16 %v1354
  %v1419 = vunpack.c.l.b16 %v1355
  %v1420 = vunpack.c.l.b16 %v1356
  %v1421 = vunpack.c.l.b16 %v1357
  %v1422 = vunpack.c.l.b16 %v1358
  %v1423 = vunpack.c.l.b16 %v1359
  %v1424 = vunpack.c.l.b16 %v1360
  %v1425 = vunpack.c.l.b16 %v1361
  %v1426 = vunpack.c.l.b16 %v1362
  %v1427 = vunpack.c.l.b16 %v1363
  %v1428 = vunpack.c.l.b16 %v1364
  %v1429 = vunpack.c.l.b16 %v1365
  %v1430 = vunpack.c.l.b16 %v1366
  %v1431 = vunpack.c.l.b16 %v1367
  %v1432 = vunpack.c.l.b16 %v1368
  %v1433 = vunpack.c.l.b16 %v1369
  %v1434 = vunpack.c.l.b16 %v1370
  %v1435 = vunpack.c.l.b16 %v1371
  %v1436 = vunpack.c.l.b16 %v1372
  %v1437 = vunpack.c.l.b16 %v1373
  %v1438 = vunpack.c.l.b16 %v1374
  %v1439 = vunpack.c.l.b16 %v1375
  %v1440 = vunpack.c.l.b16 %v1376
  %v1441 = vpack.c.b16 %v1410, %v1409
  %v1442 = vpack.c.b16 %v1412, %v1411
  %v1443 = vpack.c.b16 %v1414, %v1413
  %v1444 = vpack.c.b16 %v1416, %v1415
  %v1445 = vpack.c.b16 %v1418, %v1417
  %v1446 = vpack.c.b16 %v1420, %v1419
  %v1447 = vpack.c.b16 %v1422, %v1421
  %v1448 = vpack.c.b16 %v1424, %v1423
  %v1449 = vpack.c.b16 %v1426, %v1425
  %v1450 = vpack.c.b16 %v1428, %v1427
  %v1451 = vpack.c.b16 %v1430, %v1429
  %v1452 = vpack.c.b16 %v1432, %v1431
  %v1453 = vpack.c.b16 %v1434, %v1433
  %v1454 = vpack.c.b16 %v1436, %v1435
  %v1455 = vpack.c.b16 %v1438, %v1437
  %v1456 = vpack.c.b16 %v1440, %v1439
  %1473 = vmatprep.subr.bf16.mxu0 0
  %1474 = vmatpush1.bf16.msra.mxu0 %v1441
  %1475 = vmatprep.subr.bf16.mxu0 0
  %1476 = vmatpush1.bf16.msra.mxu0 %v1442
  %1477 = vmatprep.subr.bf16.mxu0 0
  %1478 = vmatpush1.bf16.msra.mxu0 %v1443
  %1479 = vmatprep.subr.bf16.mxu0 0
  %1480 = vmatpush1.bf16.msra.mxu0 %v1444
  %1481 = vmatprep.subr.bf16.mxu0 0
  %1482 = vmatpush1.bf16.msra.mxu0 %v1445
  %1483 = vmatprep.subr.bf16.mxu0 0
  %1484 = vmatpush1.bf16.msra.mxu0 %v1446
  %1485 = vmatprep.subr.bf16.mxu0 0
  %1486 = vmatpush1.bf16.msra.mxu0 %v1447
  %1487 = vmatprep.subr.bf16.mxu0 0
  %1488 = vmatpush1.bf16.msra.mxu0 %v1448
  %1489 = vmatprep.subr.bf16.mxu0 0
  %1490 = vmatpush1.bf16.msra.mxu0 %v1449
  %1491 = vmatprep.subr.bf16.mxu0 0
  %1492 = vmatpush1.bf16.msra.mxu0 %v1450
  %1493 = vmatprep.subr.bf16.mxu0 0
  %1494 = vmatpush1.bf16.msra.mxu0 %v1451
  %1495 = vmatprep.subr.bf16.mxu0 0
  %1496 = vmatpush1.bf16.msra.mxu0 %v1452
  %1497 = vmatprep.subr.bf16.mxu0 0
  %1498 = vmatpush1.bf16.msra.mxu0 %v1453
  %1499 = vmatprep.subr.bf16.mxu0 0
  %1500 = vmatpush1.bf16.msra.mxu0 %v1454
  %1501 = vmatprep.subr.bf16.mxu0 0
  %1502 = vmatpush1.bf16.msra.mxu0 %v1455
  %1503 = vmatprep.subr.bf16.mxu0 0
  %1504 = vmatpush1.bf16.msra.mxu0 %v1456
  %1505 = vmatprep.mubr.bf16.mxu0 %v1343
  %1506 = vmatmul.mubr.bf16.gmra.mrb[0].mxu0 %v1342
  %v1507 = vpop.f32.mrb[0].mxu0
  %v1508 = vadd.f32 0.0, %v1507
  %v1509 = vpop.f32.mrb[0].mxu0
  %v1510 = vpop.f32.mrb[0].mxu0
  %v1511 = vpop.f32.mrb[0].mxu0
  %1512 = vdwg.mxu0
  %v1545 = vunpack.c.l.b16 %v1172
  %v1546 = vunpack.c.l.b16 %v1173
  %v1547 = vunpack.c.l.b16 %v1174
  %v1548 = vunpack.c.l.b16 %v1175
  %v1549 = vunpack.c.l.b16 %v1176
  %v1550 = vunpack.c.l.b16 %v1177
  %v1551 = vunpack.c.l.b16 %v1178
  %v1552 = vunpack.c.l.b16 %v1179
  %v1553 = vunpack.c.l.b16 %v1180
  %v1554 = vunpack.c.l.b16 %v1181
  %v1555 = vunpack.c.l.b16 %v1182
  %v1556 = vunpack.c.l.b16 %v1183
  %v1557 = vunpack.c.l.b16 %v1184
  %v1558 = vunpack.c.l.b16 %v1185
  %v1559 = vunpack.c.l.b16 %v1186
  %v1560 = vunpack.c.l.b16 %v1187
  %v1561 = vunpack.c.l.b16 %v1188
  %v1562 = vunpack.c.l.b16 %v1189
  %v1563 = vunpack.c.l.b16 %v1190
  %v1564 = vunpack.c.l.b16 %v1191
  %v1565 = vunpack.c.l.b16 %v1192
  %v1566 = vunpack.c.l.b16 %v1193
  %v1567 = vunpack.c.l.b16 %v1194
  %v1568 = vunpack.c.l.b16 %v1195
  %v1569 = vunpack.c.l.b16 %v1196
  %v1570 = vunpack.c.l.b16 %v1197
  %v1571 = vunpack.c.l.b16 %v1198
  %v1572 = vunpack.c.l.b16 %v1199
  %v1573 = vunpack.c.l.b16 %v1200
  %v1574 = vunpack.c.l.b16 %v1201
  %v1575 = vunpack.c.l.b16 %v1202
  %v1576 = vunpack.c.l.b16 %v1203
  %v1577 = vpack.c.b16 %v1546, %v1545
  %v1578 = vpack.c.b16 %v1548, %v1547
  %v1579 = vpack.c.b16 %v1550, %v1549
  %v1580 = vpack.c.b16 %v1552, %v1551
  %v1581 = vpack.c.b16 %v1554, %v1553
  %v1582 = vpack.c.b16 %v1556, %v1555
  %v1583 = vpack.c.b16 %v1558, %v1557
  %v1584 = vpack.c.b16 %v1560, %v1559
  %v1585 = vpack.c.b16 %v1562, %v1561
  %v1586 = vpack.c.b16 %v1564, %v1563
  %v1587 = vpack.c.b16 %v1566, %v1565
  %v1588 = vpack.c.b16 %v1568, %v1567
  %v1589 = vpack.c.b16 %v1570, %v1569
  %v1590 = vpack.c.b16 %v1572, %v1571
  %v1591 = vpack.c.b16 %v1574, %v1573
  %v1592 = vpack.c.b16 %v1576, %v1575
  %1609 = vmatprep.subr.bf16.mxu0 0
  %1610 = vmatpush1.bf16.msra.mxu0 %v1577
  %1611 = vmatprep.subr.bf16.mxu0 0
  %1612 = vmatpush1.bf16.msra.mxu0 %v1578
  %1613 = vmatprep.subr.bf16.mxu0 0
  %1614 = vmatpush1.bf16.msra.mxu0 %v1579
  %1615 = vmatprep.subr.bf16.mxu0 0
  %1616 = vmatpush1.bf16.msra.mxu0 %v1580
  %1617 = vmatprep.subr.bf16.mxu0 0
  %1618 = vmatpush1.bf16.msra.mxu0 %v1581
  %1619 = vmatprep.subr.bf16.mxu0 0
  %1620 = vmatpush1.bf16.msra.mxu0 %v1582
  %1621 = vmatprep.subr.bf16.mxu0 0
  %1622 = vmatpush1.bf16.msra.mxu0 %v1583
  %1623 = vmatprep.subr.bf16.mxu0 0
  %1624 = vmatpush1.bf16.msra.mxu0 %v1584
  %1625 = vmatprep.subr.bf16.mxu0 0
  %1626 = vmatpush1.bf16.msra.mxu0 %v1585
  %1627 = vmatprep.subr.bf16.mxu0 0
  %1628 = vmatpush1.bf16.msra.mxu0 %v1586
  %1629 = vmatprep.subr.bf16.mxu0 0
  %1630 = vmatpush1.bf16.msra.mxu0 %v1587
  %1631 = vmatprep.subr.bf16.mxu0 0
  %1632 = vmatpush1.bf16.msra.mxu0 %v1588
  %1633 = vmatprep.subr.bf16.mxu0 0
  %1634 = vmatpush1.bf16.msra.mxu0 %v1589
  %1635 = vmatprep.subr.bf16.mxu0 0
  %1636 = vmatpush1.bf16.msra.mxu0 %v1590
  %1637 = vmatprep.subr.bf16.mxu0 0
  %1638 = vmatpush1.bf16.msra.mxu0 %v1591
  %1639 = vmatprep.subr.bf16.mxu0 0
  %1640 = vmatpush1.bf16.msra.mxu0 %v1592
  %1641 = vmatprep.mubr.bf16.mxu0 %v1171
  %1642 = vmatmul.mubr.bf16.gmra.mrb[0].mxu0 %v1170
  %v1643 = vpop.f32.mrb[0].mxu0
  %v1644 = vadd.f32 %v1508, %v1643
  %v1645 = vpop.f32.mrb[0].mxu0
  %v1646 = vpop.f32.mrb[0].mxu0
  %v1647 = vpop.f32.mrb[0].mxu0
  %1648 = vdwg.mxu0
  %1649 = vmatprep.subr.bf16.mxu0 %v585
  %1650 = vmatpush1.bf16.msra.mxu0 %v584
  %1651 = vmatprep.subr.bf16.mxu0 %v587
  %1652 = vmatpush1.bf16.msra.mxu0 %v586
  %1653 = vmatprep.subr.bf16.mxu0 %v589
  %1654 = vmatpush1.bf16.msra.mxu0 %v588
  %1655 = vmatprep.subr.bf16.mxu0 %v591
  %1656 = vmatpush1.bf16.msra.mxu0 %v590
  %1657 = vmatprep.subr.bf16.mxu0 %v593
  %1658 = vmatpush1.bf16.msra.mxu0 %v592
  %1659 = vmatprep.subr.bf16.mxu0 %v595
  %1660 = vmatpush1.bf16.msra.mxu0 %v594
  %1661 = vmatprep.subr.bf16.mxu0 %v597
  %1662 = vmatpush1.bf16.msra.mxu0 %v596
  %1663 = vmatprep.subr.bf16.mxu0 %v599
  %1664 = vmatpush1.bf16.msra.mxu0 %v598
  %1665 = vmatprep.subr.bf16.mxu0 %v601
  %1666 = vmatpush1.bf16.msra.mxu0 %v600
  %1667 = vmatprep.subr.bf16.mxu0 %v603
  %1668 = vmatpush1.bf16.msra.mxu0 %v602
  %1669 = vmatprep.subr.bf16.mxu0 %v605
  %1670 = vmatpush1.bf16.msra.mxu0 %v604
  %1671 = vmatprep.subr.bf16.mxu0 %v607
  %1672 = vmatpush1.bf16.msra.mxu0 %v606
  %1673 = vmatprep.subr.bf16.mxu0 %v609
  %1674 = vmatpush1.bf16.msra.mxu0 %v608
  %1675 = vmatprep.subr.bf16.mxu0 %v611
  %1676 = vmatpush1.bf16.msra.mxu0 %v610
  %1677 = vmatprep.subr.bf16.mxu0 %v613
  %1678 = vmatpush1.bf16.msra.mxu0 %v612
  %1679 = vmatprep.subr.bf16.mxu0 %v615
  %1680 = vmatpush1.bf16.msra.mxu0 %v614
  %1681 = vmatprep.mubr.bf16.mxu0 %v1343
  %1682 = vmatmul.mubr.bf16.gmra.mrb[0].mxu0 %v1342
  %v1683 = vpop.f32.mrb[0].mxu0
  %v1684 = vadd.f32 0.0, %v1683
  %v1685 = vpop.f32.mrb[0].mxu0
  %v1686 = vadd.f32 0.0, %v1685
  %v1687 = vpop.f32.mrb[0].mxu0
  %v1688 = vpop.f32.mrb[0].mxu0
  %1689 = vdwg.mxu0
  %s1690 = smul.u32 2, 2
  %s1691 = smul.addr %s1690, 8
  %s1692 = scalar_lea.vmem [#allocation2], %s1691
  %v1693 = vld [vmem:[%s1692] sm:$0xff]
  %v1694 = vld [vmem:[%s1692 + $0x8] sm:$0xff]
  %1695 = vmatprep.subr.bf16.mxu0 %v823
  %1696 = vmatpush1.bf16.msra.mxu0 %v822
  %1697 = vmatprep.subr.bf16.mxu0 %v825
  %1698 = vmatpush1.bf16.msra.mxu0 %v824
  %1699 = vmatprep.subr.bf16.mxu0 %v827
  %1700 = vmatpush1.bf16.msra.mxu0 %v826
  %1701 = vmatprep.subr.bf16.mxu0 %v829
  %1702 = vmatpush1.bf16.msra.mxu0 %v828
  %1703 = vmatprep.subr.bf16.mxu0 %v831
  %1704 = vmatpush1.bf16.msra.mxu0 %v830
  %1705 = vmatprep.subr.bf16.mxu0 %v833
  %1706 = vmatpush1.bf16.msra.mxu0 %v832
  %1707 = vmatprep.subr.bf16.mxu0 %v835
  %1708 = vmatpush1.bf16.msra.mxu0 %v834
  %1709 = vmatprep.subr.bf16.mxu0 %v837
  %1710 = vmatpush1.bf16.msra.mxu0 %v836
  %1711 = vmatprep.subr.bf16.mxu0 %v839
  %1712 = vmatpush1.bf16.msra.mxu0 %v838
  %1713 = vmatprep.subr.bf16.mxu0 %v841
  %1714 = vmatpush1.bf16.msra.mxu0 %v840
  %1715 = vmatprep.subr.bf16.mxu0 %v843
  %1716 = vmatpush1.bf16.msra.mxu0 %v842
  %1717 = vmatprep.subr.bf16.mxu0 %v845
  %1718 = vmatpush1.bf16.msra.mxu0 %v844
  %1719 = vmatprep.subr.bf16.mxu0 %v847
  %1720 = vmatpush1.bf16.msra.mxu0 %v846
  %1721 = vmatprep.subr.bf16.mxu0 %v849
  %1722 = vmatpush1.bf16.msra.mxu0 %v848
  %1723 = vmatprep.subr.bf16.mxu0 %v851
  %1724 = vmatpush1.bf16.msra.mxu0 %v850
  %1725 = vmatprep.subr.bf16.mxu0 %v853
  %1726 = vmatpush1.bf16.msra.mxu0 %v852
  %1727 = vmatprep.mubr.bf16.mxu0 %v1296
  %1728 = vmatmul.mubr.bf16.gmra.mrb[0].mxu0 %v1295
  %v1729 = vpop.f32.mrb[0].mxu0
  %v1730 = vadd.f32 0.0, %v1729
  %v1731 = vpop.f32.mrb[0].mxu0
  %v1732 = vadd.f32 0.0, %v1731
  %v1733 = vpop.f32.mrb[0].mxu0
  %v1734 = vpop.f32.mrb[0].mxu0
  %1735 = vdwg.mxu0
  %v1736 = vadd.f32 %v1693, %v1730
  %v1737 = vadd.f32 %v1694, %v1732
  %v1738 = vtanh.pop %v1736
  %v1739 = vtanh.pop %v1737
  %v1740 = vpack.c.bf16 %v1738, %v1738
  %v1741 = vpack.c.bf16 %v1739, %v1739
  %1742 = vmatprep.subr.bf16.mxu0 %v1062
  %1743 = vmatpush1.bf16.msra.mxu0 %v1061
  %1744 = vmatprep.subr.bf16.mxu0 %v1064
  %1745 = vmatpush1.bf16.msra.mxu0 %v1063
  %1746 = vmatprep.subr.bf16.mxu0 %v1066
  %1747 = vmatpush1.bf16.msra.mxu0 %v1065
  %1748 = vmatprep.subr.bf16.mxu0 %v1068
  %1749 = vmatpush1.bf16.msra.mxu0 %v1067
  %1750 = vmatprep.subr.bf16.mxu0 %v1070
  %1751 = vmatpush1.bf16.msra.mxu0 %v1069
  %1752 = vmatprep.subr.bf16.mxu0 %v1072
  %1753 = vmatpush1.bf16.msra.mxu0 %v1071
  %1754 = vmatprep.subr.bf16.mxu0 %v1074
  %1755 = vmatpush1.bf16.msra.mxu0 %v1073
  %1756 = vmatprep.subr.bf16.mxu0 %v1076
  %1757 = vmatpush1.bf16.msra.mxu0 %v1075
  %1758 = vmatprep.subr.bf16.mxu0 %v1078
  %1759 = vmatpush1.bf16.msra.mxu0 %v1077
  %1760 = vmatprep.subr.bf16.mxu0 %v1080
  %1761 = vmatpush1.bf16.msra.mxu0 %v1079
  %1762 = vmatprep.subr.bf16.mxu0 %v1082
  %1763 = vmatpush1.bf16.msra.mxu0 %v1081
  %1764 = vmatprep.subr.bf16.mxu0 %v1084
  %1765 = vmatpush1.bf16.msra.mxu0 %v1083
  %1766 = vmatprep.subr.bf16.mxu0 %v1086
  %1767 = vmatpush1.bf16.msra.mxu0 %v1085
  %1768 = vmatprep.subr.bf16.mxu0 %v1088
  %1769 = vmatpush1.bf16.msra.mxu0 %v1087
  %1770 = vmatprep.subr.bf16.mxu0 %v1090
  %1771 = vmatpush1.bf16.msra.mxu0 %v1089
  %1772 = vmatprep.subr.bf16.mxu0 %v1092
  %1773 = vmatpush1.bf16.msra.mxu0 %v1091
  %1774 = vmatprep.mubr.bf16.mxu0 %v1741
  %1775 = vmatmul.mubr.bf16.gmra.mrb[0].mxu0 %v1740
  %v1776 = vpop.f32.mrb[0].mxu0
  %v1777 = vadd.f32 %v1684, %v1776
  %v1778 = vpop.f32.mrb[0].mxu0
  %v1779 = vadd.f32 %v1686, %v1778
  %v1780 = vpop.f32.mrb[0].mxu0
  %v1781 = vpop.f32.mrb[0].mxu0
  %1782 = vdwg.mxu0
  %v1783 = vadd.f32 %v1777, %v449
  %v1784 = vadd.f32 %v1779, %v453
  %v1785 = vtanh.pop %v1783
  %v1786 = vtanh.pop %v1784
  %v1787 = vpack.c.bf16 %v1785, %v1785
  %v1788 = vpack.c.bf16 %v1786, %v1786
  %s1789 = scalar_lea.vmem %s7, 256
  %v1790 = vld [vmem:[%s1789] sm:$0xf]
  %v1791 = vld [vmem:[%s1789 + $0x4] sm:$0xf]
  %v1792 = vld [vmem:[%s1789 + $0x8] sm:$0xf]
  %v1793 = vld [vmem:[%s1789 + $0xc] sm:$0xf]
  %v1794 = vld [vmem:[%s1789 + $0x10] sm:$0xf]
  %v1795 = vld [vmem:[%s1789 + $0x14] sm:$0xf]
  %v1796 = vld [vmem:[%s1789 + $0x18] sm:$0xf]
  %v1797 = vld [vmem:[%s1789 + $0x1c] sm:$0xf]
  %v1798 = vld [vmem:[%s1789 + $0x20] sm:$0xf]
  %v1799 = vld [vmem:[%s1789 + $0x24] sm:$0xf]
  %v1800 = vld [vmem:[%s1789 + $0x28] sm:$0xf]
  %v1801 = vld [vmem:[%s1789 + $0x2c] sm:$0xf]
  %v1802 = vld [vmem:[%s1789 + $0x30] sm:$0xf]
  %v1803 = vld [vmem:[%s1789 + $0x34] sm:$0xf]
  %v1804 = vld [vmem:[%s1789 + $0x38] sm:$0xf]
  %v1805 = vld [vmem:[%s1789 + $0x3c] sm:$0xf]
  %v1806 = vld [vmem:[%s1789 + $0x40] sm:$0xf]
  %v1807 = vld [vmem:[%s1789 + $0x44] sm:$0xf]
  %v1808 = vld [vmem:[%s1789 + $0x48] sm:$0xf]
  %v1809 = vld [vmem:[%s1789 + $0x4c] sm:$0xf]
  %v1810 = vld [vmem:[%s1789 + $0x50] sm:$0xf]
  %v1811 = vld [vmem:[%s1789 + $0x54] sm:$0xf]
  %v1812 = vld [vmem:[%s1789 + $0x58] sm:$0xf]
  %v1813 = vld [vmem:[%s1789 + $0x5c] sm:$0xf]
  %v1814 = vld [vmem:[%s1789 + $0x60] sm:$0xf]
  %v1815 = vld [vmem:[%s1789 + $0x64] sm:$0xf]
  %v1816 = vld [vmem:[%s1789 + $0x68] sm:$0xf]
  %v1817 = vld [vmem:[%s1789 + $0x6c] sm:$0xf]
  %v1818 = vld [vmem:[%s1789 + $0x70] sm:$0xf]
  %v1819 = vld [vmem:[%s1789 + $0x74] sm:$0xf]
  %v1820 = vld [vmem:[%s1789 + $0x78] sm:$0xf]
  %v1821 = vld [vmem:[%s1789 + $0x7c] sm:$0xf]
  %v1854 = vunpack.c.l.b16 %v1790
  %v1855 = vunpack.c.l.b16 %v1791
  %v1856 = vunpack.c.l.b16 %v1792
  %v1857 = vunpack.c.l.b16 %v1793
  %v1858 = vunpack.c.l.b16 %v1794
  %v1859 = vunpack.c.l.b16 %v1795
  %v1860 = vunpack.c.l.b16 %v1796
  %v1861 = vunpack.c.l.b16 %v1797
  %v1862 = vunpack.c.l.b16 %v1798
  %v1863 = vunpack.c.l.b16 %v1799
  %v1864 = vunpack.c.l.b16 %v1800
  %v1865 = vunpack.c.l.b16 %v1801
  %v1866 = vunpack.c.l.b16 %v1802
  %v1867 = vunpack.c.l.b16 %v1803
  %v1868 = vunpack.c.l.b16 %v1804
  %v1869 = vunpack.c.l.b16 %v1805
  %v1870 = vunpack.c.l.b16 %v1806
  %v1871 = vunpack.c.l.b16 %v1807
  %v1872 = vunpack.c.l.b16 %v1808
  %v1873 = vunpack.c.l.b16 %v1809
  %v1874 = vunpack.c.l.b16 %v1810
  %v1875 = vunpack.c.l.b16 %v1811
  %v1876 = vunpack.c.l.b16 %v1812
  %v1877 = vunpack.c.l.b16 %v1813
  %v1878 = vunpack.c.l.b16 %v1814
  %v1879 = vunpack.c.l.b16 %v1815
  %v1880 = vunpack.c.l.b16 %v1816
  %v1881 = vunpack.c.l.b16 %v1817
  %v1882 = vunpack.c.l.b16 %v1818
  %v1883 = vunpack.c.l.b16 %v1819
  %v1884 = vunpack.c.l.b16 %v1820
  %v1885 = vunpack.c.l.b16 %v1821
  %v1886 = vpack.c.b16 %v1855, %v1854
  %v1887 = vpack.c.b16 %v1857, %v1856
  %v1888 = vpack.c.b16 %v1859, %v1858
  %v1889 = vpack.c.b16 %v1861, %v1860
  %v1890 = vpack.c.b16 %v1863, %v1862
  %v1891 = vpack.c.b16 %v1865, %v1864
  %v1892 = vpack.c.b16 %v1867, %v1866
  %v1893 = vpack.c.b16 %v1869, %v1868
  %v1894 = vpack.c.b16 %v1871, %v1870
  %v1895 = vpack.c.b16 %v1873, %v1872
  %v1896 = vpack.c.b16 %v1875, %v1874
  %v1897 = vpack.c.b16 %v1877, %v1876
  %v1898 = vpack.c.b16 %v1879, %v1878
  %v1899 = vpack.c.b16 %v1881, %v1880
  %v1900 = vpack.c.b16 %v1883, %v1882
  %v1901 = vpack.c.b16 %v1885, %v1884
  %1918 = vmatprep.subr.bf16.mxu0 0
  %1919 = vmatpush1.bf16.msra.mxu0 %v1886
  %1920 = vmatprep.subr.bf16.mxu0 0
  %1921 = vmatpush1.bf16.msra.mxu0 %v1887
  %1922 = vmatprep.subr.bf16.mxu0 0
  %1923 = vmatpush1.bf16.msra.mxu0 %v1888
  %1924 = vmatprep.subr.bf16.mxu0 0
  %1925 = vmatpush1.bf16.msra.mxu0 %v1889
  %1926 = vmatprep.subr.bf16.mxu0 0
  %1927 = vmatpush1.bf16.msra.mxu0 %v1890
  %1928 = vmatprep.subr.bf16.mxu0 0
  %1929 = vmatpush1.bf16.msra.mxu0 %v1891
  %1930 = vmatprep.subr.bf16.mxu0 0
  %1931 = vmatpush1.bf16.msra.mxu0 %v1892
  %1932 = vmatprep.subr.bf16.mxu0 0
  %1933 = vmatpush1.bf16.msra.mxu0 %v1893
  %1934 = vmatprep.subr.bf16.mxu0 0
  %1935 = vmatpush1.bf16.msra.mxu0 %v1894
  %1936 = vmatprep.subr.bf16.mxu0 0
  %1937 = vmatpush1.bf16.msra.mxu0 %v1895
  %1938 = vmatprep.subr.bf16.mxu0 0
  %1939 = vmatpush1.bf16.msra.mxu0 %v1896
  %1940 = vmatprep.subr.bf16.mxu0 0
  %1941 = vmatpush1.bf16.msra.mxu0 %v1897
  %1942 = vmatprep.subr.bf16.mxu0 0
  %1943 = vmatpush1.bf16.msra.mxu0 %v1898
  %1944 = vmatprep.subr.bf16.mxu0 0
  %1945 = vmatpush1.bf16.msra.mxu0 %v1899
  %1946 = vmatprep.subr.bf16.mxu0 0
  %1947 = vmatpush1.bf16.msra.mxu0 %v1900
  %1948 = vmatprep.subr.bf16.mxu0 0
  %1949 = vmatpush1.bf16.msra.mxu0 %v1901
  %1950 = vmatprep.mubr.bf16.mxu0 %v1788
  %1951 = vmatmul.mubr.bf16.gmra.mrb[0].mxu0 %v1787
  %v1952 = vpop.f32.mrb[0].mxu0
  %v1953 = vadd.f32 0.0, %v1952
  %v1954 = vpop.f32.mrb[0].mxu0
  %v1955 = vpop.f32.mrb[0].mxu0
  %v1956 = vpop.f32.mrb[0].mxu0
  %1957 = vdwg.mxu0
  %v1958 = vadd.f32 %v1644, %v1953
  %1959 = vmatprep.subr.bf16.mxu0 %v585
  %1960 = vmatpush1.bf16.msra.mxu0 %v584
  %1961 = vmatprep.subr.bf16.mxu0 %v587
  %1962 = vmatpush1.bf16.msra.mxu0 %v586
  %1963 = vmatprep.subr.bf16.mxu0 %v589
  %1964 = vmatpush1.bf16.msra.mxu0 %v588
  %1965 = vmatprep.subr.bf16.mxu0 %v591
  %1966 = vmatpush1.bf16.msra.mxu0 %v590
  %1967 = vmatprep.subr.bf16.mxu0 %v593
  %1968 = vmatpush1.bf16.msra.mxu0 %v592
  %1969 = vmatprep.subr.bf16.mxu0 %v595
  %1970 = vmatpush1.bf16.msra.mxu0 %v594
  %1971 = vmatprep.subr.bf16.mxu0 %v597
  %1972 = vmatpush1.bf16.msra.mxu0 %v596
  %1973 = vmatprep.subr.bf16.mxu0 %v599
  %1974 = vmatpush1.bf16.msra.mxu0 %v598
  %1975 = vmatprep.subr.bf16.mxu0 %v601
  %1976 = vmatpush1.bf16.msra.mxu0 %v600
  %1977 = vmatprep.subr.bf16.mxu0 %v603
  %1978 = vmatpush1.bf16.msra.mxu0 %v602
  %1979 = vmatprep.subr.bf16.mxu0 %v605
  %1980 = vmatpush1.bf16.msra.mxu0 %v604
  %1981 = vmatprep.subr.bf16.mxu0 %v607
  %1982 = vmatpush1.bf16.msra.mxu0 %v606
  %1983 = vmatprep.subr.bf16.mxu0 %v609
  %1984 = vmatpush1.bf16.msra.mxu0 %v608
  %1985 = vmatprep.subr.bf16.mxu0 %v611
  %1986 = vmatpush1.bf16.msra.mxu0 %v610
  %1987 = vmatprep.subr.bf16.mxu0 %v613
  %1988 = vmatpush1.bf16.msra.mxu0 %v612
  %1989 = vmatprep.subr.bf16.mxu0 %v615
  %1990 = vmatpush1.bf16.msra.mxu0 %v614
  %1991 = vmatprep.mubr.bf16.mxu0 %v1788
  %1992 = vmatmul.mubr.bf16.gmra.mrb[0].mxu0 %v1787
  %v1993 = vpop.f32.mrb[0].mxu0
  %v1994 = vadd.f32 0.0, %v1993
  %v1995 = vpop.f32.mrb[0].mxu0
  %v1996 = vadd.f32 0.0, %v1995
  %v1997 = vpop.f32.mrb[0].mxu0
  %v1998 = vpop.f32.mrb[0].mxu0
  %1999 = vdwg.mxu0
  %s2000 = smul.u32 3, 2
  %s2001 = smul.addr %s2000, 8
  %s2002 = scalar_lea.vmem [#allocation2], %s2001
  %v2003 = vld [vmem:[%s2002] sm:$0xff]
  %v2004 = vld [vmem:[%s2002 + $0x8] sm:$0xff]
  %2005 = vmatprep.subr.bf16.mxu0 %v823
  %2006 = vmatpush1.bf16.msra.mxu0 %v822
  %2007 = vmatprep.subr.bf16.mxu0 %v825
  %2008 = vmatpush1.bf16.msra.mxu0 %v824
  %2009 = vmatprep.subr.bf16.mxu0 %v827
  %2010 = vmatpush1.bf16.msra.mxu0 %v826
  %2011 = vmatprep.subr.bf16.mxu0 %v829
  %2012 = vmatpush1.bf16.msra.mxu0 %v828
  %2013 = vmatprep.subr.bf16.mxu0 %v831
  %2014 = vmatpush1.bf16.msra.mxu0 %v830
  %2015 = vmatprep.subr.bf16.mxu0 %v833
  %2016 = vmatpush1.bf16.msra.mxu0 %v832
  %2017 = vmatprep.subr.bf16.mxu0 %v835
  %2018 = vmatpush1.bf16.msra.mxu0 %v834
  %2019 = vmatprep.subr.bf16.mxu0 %v837
  %2020 = vmatpush1.bf16.msra.mxu0 %v836
  %2021 = vmatprep.subr.bf16.mxu0 %v839
  %2022 = vmatpush1.bf16.msra.mxu0 %v838
  %2023 = vmatprep.subr.bf16.mxu0 %v841
  %2024 = vmatpush1.bf16.msra.mxu0 %v840
  %2025 = vmatprep.subr.bf16.mxu0 %v843
  %2026 = vmatpush1.bf16.msra.mxu0 %v842
  %2027 = vmatprep.subr.bf16.mxu0 %v845
  %2028 = vmatpush1.bf16.msra.mxu0 %v844
  %2029 = vmatprep.subr.bf16.mxu0 %v847
  %2030 = vmatpush1.bf16.msra.mxu0 %v846
  %2031 = vmatprep.subr.bf16.mxu0 %v849
  %2032 = vmatpush1.bf16.msra.mxu0 %v848
  %2033 = vmatprep.subr.bf16.mxu0 %v851
  %2034 = vmatpush1.bf16.msra.mxu0 %v850
  %2035 = vmatprep.subr.bf16.mxu0 %v853
  %2036 = vmatpush1.bf16.msra.mxu0 %v852
  %2037 = vmatprep.mubr.bf16.mxu0 %v1741
  %2038 = vmatmul.mubr.bf16.gmra.mrb[0].mxu0 %v1740
  %v2039 = vpop.f32.mrb[0].mxu0
  %v2040 = vadd.f32 0.0, %v2039
  %v2041 = vpop.f32.mrb[0].mxu0
  %v2042 = vadd.f32 0.0, %v2041
  %v2043 = vpop.f32.mrb[0].mxu0
  %v2044 = vpop.f32.mrb[0].mxu0
  %2045 = vdwg.mxu0
  %v2046 = vadd.f32 %v2003, %v2040
  %v2047 = vadd.f32 %v2004, %v2042
  %v2048 = vtanh.pop %v2046
  %v2049 = vtanh.pop %v2047
  %v2050 = vpack.c.bf16 %v2048, %v2048
  %v2051 = vpack.c.bf16 %v2049, %v2049
  %2052 = vmatprep.subr.bf16.mxu0 %v1062
  %2053 = vmatpush1.bf16.msra.mxu0 %v1061
  %2054 = vmatprep.subr.bf16.mxu0 %v1064
  %2055 = vmatpush1.bf16.msra.mxu0 %v1063
  %2056 = vmatprep.subr.bf16.mxu0 %v1066
  %2057 = vmatpush1.bf16.msra.mxu0 %v1065
  %2058 = vmatprep.subr.bf16.mxu0 %v1068
  %2059 = vmatpush1.bf16.msra.mxu0 %v1067
  %2060 = vmatprep.subr.bf16.mxu0 %v1070
  %2061 = vmatpush1.bf16.msra.mxu0 %v1069
  %2062 = vmatprep.subr.bf16.mxu0 %v1072
  %2063 = vmatpush1.bf16.msra.mxu0 %v1071
  %2064 = vmatprep.subr.bf16.mxu0 %v1074
  %2065 = vmatpush1.bf16.msra.mxu0 %v1073
  %2066 = vmatprep.subr.bf16.mxu0 %v1076
  %2067 = vmatpush1.bf16.msra.mxu0 %v1075
  %2068 = vmatprep.subr.bf16.mxu0 %v1078
  %2069 = vmatpush1.bf16.msra.mxu0 %v1077
  %2070 = vmatprep.subr.bf16.mxu0 %v1080
  %2071 = vmatpush1.bf16.msra.mxu0 %v1079
  %2072 = vmatprep.subr.bf16.mxu0 %v1082
  %2073 = vmatpush1.bf16.msra.mxu0 %v1081
  %2074 = vmatprep.subr.bf16.mxu0 %v1084
  %2075 = vmatpush1.bf16.msra.mxu0 %v1083
  %2076 = vmatprep.subr.bf16.mxu0 %v1086
  %2077 = vmatpush1.bf16.msra.mxu0 %v1085
  %2078 = vmatprep.subr.bf16.mxu0 %v1088
  %2079 = vmatpush1.bf16.msra.mxu0 %v1087
  %2080 = vmatprep.subr.bf16.mxu0 %v1090
  %2081 = vmatpush1.bf16.msra.mxu0 %v1089
  %2082 = vmatprep.subr.bf16.mxu0 %v1092
  %2083 = vmatpush1.bf16.msra.mxu0 %v1091
  %2084 = vmatprep.mubr.bf16.mxu0 %v2051
  %2085 = vmatmul.mubr.bf16.gmra.mrb[0].mxu0 %v2050
  %v2086 = vpop.f32.mrb[0].mxu0
  %v2087 = vadd.f32 %v1994, %v2086
  %v2088 = vpop.f32.mrb[0].mxu0
  %v2089 = vadd.f32 %v1996, %v2088
  %v2090 = vpop.f32.mrb[0].mxu0
  %v2091 = vpop.f32.mrb[0].mxu0
  %2092 = vdwg.mxu0
  %v2093 = vadd.f32 %v2087, %v449
  %v2094 = vadd.f32 %v2089, %v453
  %v2095 = vtanh.pop %v2093
  %v2096 = vtanh.pop %v2094
  %v2097 = vpack.c.bf16 %v2095, %v2095
  %v2098 = vpack.c.bf16 %v2096, %v2096
  %s2099 = scalar_lea.vmem %s7, 384
  %v2100 = vld [vmem:[%s2099] sm:$0xf]
  %v2101 = vld [vmem:[%s2099 + $0x4] sm:$0xf]
  %v2102 = vld [vmem:[%s2099 + $0x8] sm:$0xf]
  %v2103 = vld [vmem:[%s2099 + $0xc] sm:$0xf]
  %v2104 = vld [vmem:[%s2099 + $0x10] sm:$0xf]
  %v2105 = vld [vmem:[%s2099 + $0x14] sm:$0xf]
  %v2106 = vld [vmem:[%s2099 + $0x18] sm:$0xf]
  %v2107 = vld [vmem:[%s2099 + $0x1c] sm:$0xf]
  %v2108 = vld [vmem:[%s2099 + $0x20] sm:$0xf]
  %v2109 = vld [vmem:[%s2099 + $0x24] sm:$0xf]
  %v2110 = vld [vmem:[%s2099 + $0x28] sm:$0xf]
  %v2111 = vld [vmem:[%s2099 + $0x2c] sm:$0xf]
  %v2112 = vld [vmem:[%s2099 + $0x30] sm:$0xf]
  %v2113 = vld [vmem:[%s2099 + $0x34] sm:$0xf]
  %v2114 = vld [vmem:[%s2099 + $0x38] sm:$0xf]
  %v2115 = vld [vmem:[%s2099 + $0x3c] sm:$0xf]
  %v2116 = vld [vmem:[%s2099 + $0x40] sm:$0xf]
  %v2117 = vld [vmem:[%s2099 + $0x44] sm:$0xf]
  %v2118 = vld [vmem:[%s2099 + $0x48] sm:$0xf]
  %v2119 = vld [vmem:[%s2099 + $0x4c] sm:$0xf]
  %v2120 = vld [vmem:[%s2099 + $0x50] sm:$0xf]
  %v2121 = vld [vmem:[%s2099 + $0x54] sm:$0xf]
  %v2122 = vld [vmem:[%s2099 + $0x58] sm:$0xf]
  %v2123 = vld [vmem:[%s2099 + $0x5c] sm:$0xf]
  %v2124 = vld [vmem:[%s2099 + $0x60] sm:$0xf]
  %v2125 = vld [vmem:[%s2099 + $0x64] sm:$0xf]
  %v2126 = vld [vmem:[%s2099 + $0x68] sm:$0xf]
  %v2127 = vld [vmem:[%s2099 + $0x6c] sm:$0xf]
  %v2128 = vld [vmem:[%s2099 + $0x70] sm:$0xf]
  %v2129 = vld [vmem:[%s2099 + $0x74] sm:$0xf]
  %v2130 = vld [vmem:[%s2099 + $0x78] sm:$0xf]
  %v2131 = vld [vmem:[%s2099 + $0x7c] sm:$0xf]
  %v2164 = vunpack.c.l.b16 %v2100
  %v2165 = vunpack.c.l.b16 %v2101
  %v2166 = vunpack.c.l.b16 %v2102
  %v2167 = vunpack.c.l.b16 %v2103
  %v2168 = vunpack.c.l.b16 %v2104
  %v2169 = vunpack.c.l.b16 %v2105
  %v2170 = vunpack.c.l.b16 %v2106
  %v2171 = vunpack.c.l.b16 %v2107
  %v2172 = vunpack.c.l.b16 %v2108
  %v2173 = vunpack.c.l.b16 %v2109
  %v2174 = vunpack.c.l.b16 %v2110
  %v2175 = vunpack.c.l.b16 %v2111
  %v2176 = vunpack.c.l.b16 %v2112
  %v2177 = vunpack.c.l.b16 %v2113
  %v2178 = vunpack.c.l.b16 %v2114
  %v2179 = vunpack.c.l.b16 %v2115
  %v2180 = vunpack.c.l.b16 %v2116
  %v2181 = vunpack.c.l.b16 %v2117
  %v2182 = vunpack.c.l.b16 %v2118
  %v2183 = vunpack.c.l.b16 %v2119
  %v2184 = vunpack.c.l.b16 %v2120
  %v2185 = vunpack.c.l.b16 %v2121
  %v2186 = vunpack.c.l.b16 %v2122
  %v2187 = vunpack.c.l.b16 %v2123
  %v2188 = vunpack.c.l.b16 %v2124
  %v2189 = vunpack.c.l.b16 %v2125
  %v2190 = vunpack.c.l.b16 %v2126
  %v2191 = vunpack.c.l.b16 %v2127
  %v2192 = vunpack.c.l.b16 %v2128
  %v2193 = vunpack.c.l.b16 %v2129
  %v2194 = vunpack.c.l.b16 %v2130
  %v2195 = vunpack.c.l.b16 %v2131
  %v2196 = vpack.c.b16 %v2165, %v2164
  %v2197 = vpack.c.b16 %v2167, %v2166
  %v2198 = vpack.c.b16 %v2169, %v2168
  %v2199 = vpack.c.b16 %v2171, %v2170
  %v2200 = vpack.c.b16 %v2173, %v2172
  %v2201 = vpack.c.b16 %v2175, %v2174
  %v2202 = vpack.c.b16 %v2177, %v2176
  %v2203 = vpack.c.b16 %v2179, %v2178
  %v2204 = vpack.c.b16 %v2181, %v2180
  %v2205 = vpack.c.b16 %v2183, %v2182
  %v2206 = vpack.c.b16 %v2185, %v2184
  %v2207 = vpack.c.b16 %v2187, %v2186
  %v2208 = vpack.c.b16 %v2189, %v2188
  %v2209 = vpack.c.b16 %v2191, %v2190
  %v2210 = vpack.c.b16 %v2193, %v2192
  %v2211 = vpack.c.b16 %v2195, %v2194
  %2228 = vmatprep.subr.bf16.mxu0 0
  %2229 = vmatpush1.bf16.msra.mxu0 %v2196
  %2230 = vmatprep.subr.bf16.mxu0 0
  %2231 = vmatpush1.bf16.msra.mxu0 %v2197
  %2232 = vmatprep.subr.bf16.mxu0 0
  %2233 = vmatpush1.bf16.msra.mxu0 %v2198
  %2234 = vmatprep.subr.bf16.mxu0 0
  %2235 = vmatpush1.bf16.msra.mxu0 %v2199
  %2236 = vmatprep.subr.bf16.mxu0 0
  %2237 = vmatpush1.bf16.msra.mxu0 %v2200
  %2238 = vmatprep.subr.bf16.mxu0 0
  %2239 = vmatpush1.bf16.msra.mxu0 %v2201
  %2240 = vmatprep.subr.bf16.mxu0 0
  %2241 = vmatpush1.bf16.msra.mxu0 %v2202
  %2242 = vmatprep.subr.bf16.mxu0 0
  %2243 = vmatpush1.bf16.msra.mxu0 %v2203
  %2244 = vmatprep.subr.bf16.mxu0 0
  %2245 = vmatpush1.bf16.msra.mxu0 %v2204
  %2246 = vmatprep.subr.bf16.mxu0 0
  %2247 = vmatpush1.bf16.msra.mxu0 %v2205
  %2248 = vmatprep.subr.bf16.mxu0 0
  %2249 = vmatpush1.bf16.msra.mxu0 %v2206
  %2250 = vmatprep.subr.bf16.mxu0 0
  %2251 = vmatpush1.bf16.msra.mxu0 %v2207
  %2252 = vmatprep.subr.bf16.mxu0 0
  %2253 = vmatpush1.bf16.msra.mxu0 %v2208
  %2254 = vmatprep.subr.bf16.mxu0 0
  %2255 = vmatpush1.bf16.msra.mxu0 %v2209
  %2256 = vmatprep.subr.bf16.mxu0 0
  %2257 = vmatpush1.bf16.msra.mxu0 %v2210
  %2258 = vmatprep.subr.bf16.mxu0 0
  %2259 = vmatpush1.bf16.msra.mxu0 %v2211
  %2260 = vmatprep.mubr.bf16.mxu0 %v2098
  %2261 = vmatmul.mubr.bf16.gmra.mrb[0].mxu0 %v2097
  %v2262 = vpop.f32.mrb[0].mxu0
  %v2263 = vadd.f32 0.0, %v2262
  %v2264 = vpop.f32.mrb[0].mxu0
  %v2265 = vpop.f32.mrb[0].mxu0
  %v2266 = vpop.f32.mrb[0].mxu0
  %2267 = vdwg.mxu0
  %v2268 = vadd.f32 %v1958, %v2263
  %2269 = vmatprep.subr.bf16.mxu0 %v585
  %2270 = vmatpush1.bf16.msra.mxu0 %v584
  %2271 = vmatprep.subr.bf16.mxu0 %v587
  %2272 = vmatpush1.bf16.msra.mxu0 %v586
  %2273 = vmatprep.subr.bf16.mxu0 %v589
  %2274 = vmatpush1.bf16.msra.mxu0 %v588
  %2275 = vmatprep.subr.bf16.mxu0 %v591
  %2276 = vmatpush1.bf16.msra.mxu0 %v590
  %2277 = vmatprep.subr.bf16.mxu0 %v593
  %2278 = vmatpush1.bf16.msra.mxu0 %v592
  %2279 = vmatprep.subr.bf16.mxu0 %v595
  %2280 = vmatpush1.bf16.msra.mxu0 %v594
  %2281 = vmatprep.subr.bf16.mxu0 %v597
  %2282 = vmatpush1.bf16.msra.mxu0 %v596
  %2283 = vmatprep.subr.bf16.mxu0 %v599
  %2284 = vmatpush1.bf16.msra.mxu0 %v598
  %2285 = vmatprep.subr.bf16.mxu0 %v601
  %2286 = vmatpush1.bf16.msra.mxu0 %v600
  %2287 = vmatprep.subr.bf16.mxu0 %v603
  %2288 = vmatpush1.bf16.msra.mxu0 %v602
  %2289 = vmatprep.subr.bf16.mxu0 %v605
  %2290 = vmatpush1.bf16.msra.mxu0 %v604
  %2291 = vmatprep.subr.bf16.mxu0 %v607
  %2292 = vmatpush1.bf16.msra.mxu0 %v606
  %2293 = vmatprep.subr.bf16.mxu0 %v609
  %2294 = vmatpush1.bf16.msra.mxu0 %v608
  %2295 = vmatprep.subr.bf16.mxu0 %v611
  %2296 = vmatpush1.bf16.msra.mxu0 %v610
  %2297 = vmatprep.subr.bf16.mxu0 %v613
  %2298 = vmatpush1.bf16.msra.mxu0 %v612
  %2299 = vmatprep.subr.bf16.mxu0 %v615
  %2300 = vmatpush1.bf16.msra.mxu0 %v614
  %2301 = vmatprep.mubr.bf16.mxu0 %v2098
  %2302 = vmatmul.mubr.bf16.gmra.mrb[0].mxu0 %v2097
  %v2303 = vpop.f32.mrb[0].mxu0
  %v2304 = vadd.f32 0.0, %v2303
  %v2305 = vpop.f32.mrb[0].mxu0
  %v2306 = vadd.f32 0.0, %v2305
  %v2307 = vpop.f32.mrb[0].mxu0
  %v2308 = vpop.f32.mrb[0].mxu0
  %2309 = vdwg.mxu0
  %s2310 = smul.u32 4, 2
  %s2311 = smul.addr %s2310, 8
  %s2312 = scalar_lea.vmem [#allocation2], %s2311
  %v2313 = vld [vmem:[%s2312] sm:$0xff]
  %v2314 = vld [vmem:[%s2312 + $0x8] sm:$0xff]
  %2315 = vmatprep.subr.bf16.mxu0 %v823
  %2316 = vmatpush1.bf16.msra.mxu0 %v822
  %2317 = vmatprep.subr.bf16.mxu0 %v825
  %2318 = vmatpush1.bf16.msra.mxu0 %v824
  %2319 = vmatprep.subr.bf16.mxu0 %v827
  %2320 = vmatpush1.bf16.msra.mxu0 %v826
  %2321 = vmatprep.subr.bf16.mxu0 %v829
  %2322 = vmatpush1.bf16.msra.mxu0 %v828
  %2323 = vmatprep.subr.bf16.mxu0 %v831
  %2324 = vmatpush1.bf16.msra.mxu0 %v830
  %2325 = vmatprep.subr.bf16.mxu0 %v833
  %2326 = vmatpush1.bf16.msra.mxu0 %v832
  %2327 = vmatprep.subr.bf16.mxu0 %v835
  %2328 = vmatpush1.bf16.msra.mxu0 %v834
  %2329 = vmatprep.subr.bf16.mxu0 %v837
  %2330 = vmatpush1.bf16.msra.mxu0 %v836
  %2331 = vmatprep.subr.bf16.mxu0 %v839
  %2332 = vmatpush1.bf16.msra.mxu0 %v838
  %2333 = vmatprep.subr.bf16.mxu0 %v841
  %2334 = vmatpush1.bf16.msra.mxu0 %v840
  %2335 = vmatprep.subr.bf16.mxu0 %v843
  %2336 = vmatpush1.bf16.msra.mxu0 %v842
  %2337 = vmatprep.subr.bf16.mxu0 %v845
  %2338 = vmatpush1.bf16.msra.mxu0 %v844
  %2339 = vmatprep.subr.bf16.mxu0 %v847
  %2340 = vmatpush1.bf16.msra.mxu0 %v846
  %2341 = vmatprep.subr.bf16.mxu0 %v849
  %2342 = vmatpush1.bf16.msra.mxu0 %v848
  %2343 = vmatprep.subr.bf16.mxu0 %v851
  %2344 = vmatpush1.bf16.msra.mxu0 %v850
  %2345 = vmatprep.subr.bf16.mxu0 %v853
  %2346 = vmatpush1.bf16.msra.mxu0 %v852
  %2347 = vmatprep.mubr.bf16.mxu0 %v2051
  %2348 = vmatmul.mubr.bf16.gmra.mrb[0].mxu0 %v2050
  %v2349 = vpop.f32.mrb[0].mxu0
  %v2350 = vadd.f32 0.0, %v2349
  %v2351 = vpop.f32.mrb[0].mxu0
  %v2352 = vadd.f32 0.0, %v2351
  %v2353 = vpop.f32.mrb[0].mxu0
  %v2354 = vpop.f32.mrb[0].mxu0
  %2355 = vdwg.mxu0
  %v2356 = vadd.f32 %v2313, %v2350
  %v2357 = vadd.f32 %v2314, %v2352
  %v2358 = vtanh.pop %v2356
  %v2359 = vtanh.pop %v2357
  %v2360 = vpack.c.bf16 %v2358, %v2358
  %v2361 = vpack.c.bf16 %v2359, %v2359
  %2362 = vmatprep.subr.bf16.mxu0 %v1062
  %2363 = vmatpush1.bf16.msra.mxu0 %v1061
  %2364 = vmatprep.subr.bf16.mxu0 %v1064
  %2365 = vmatpush1.bf16.msra.mxu0 %v1063
  %2366 = vmatprep.subr.bf16.mxu0 %v1066
  %2367 = vmatpush1.bf16.msra.mxu0 %v1065
  %2368 = vmatprep.subr.bf16.mxu0 %v1068
  %2369 = vmatpush1.bf16.msra.mxu0 %v1067
  %2370 = vmatprep.subr.bf16.mxu0 %v1070
  %2371 = vmatpush1.bf16.msra.mxu0 %v1069
  %2372 = vmatprep.subr.bf16.mxu0 %v1072
  %2373 = vmatpush1.bf16.msra.mxu0 %v1071
  %2374 = vmatprep.subr.bf16.mxu0 %v1074
  %2375 = vmatpush1.bf16.msra.mxu0 %v1073
  %2376 = vmatprep.subr.bf16.mxu0 %v1076
  %2377 = vmatpush1.bf16.msra.mxu0 %v1075
  %2378 = vmatprep.subr.bf16.mxu0 %v1078
  %2379 = vmatpush1.bf16.msra.mxu0 %v1077
  %2380 = vmatprep.subr.bf16.mxu0 %v1080
  %2381 = vmatpush1.bf16.msra.mxu0 %v1079
  %2382 = vmatprep.subr.bf16.mxu0 %v1082
  %2383 = vmatpush1.bf16.msra.mxu0 %v1081
  %2384 = vmatprep.subr.bf16.mxu0 %v1084
  %2385 = vmatpush1.bf16.msra.mxu0 %v1083
  %2386 = vmatprep.subr.bf16.mxu0 %v1086
  %2387 = vmatpush1.bf16.msra.mxu0 %v1085
  %2388 = vmatprep.subr.bf16.mxu0 %v1088
  %2389 = vmatpush1.bf16.msra.mxu0 %v1087
  %2390 = vmatprep.subr.bf16.mxu0 %v1090
  %2391 = vmatpush1.bf16.msra.mxu0 %v1089
  %2392 = vmatprep.subr.bf16.mxu0 %v1092
  %2393 = vmatpush1.bf16.msra.mxu0 %v1091
  %2394 = vmatprep.mubr.bf16.mxu0 %v2361
  %2395 = vmatmul.mubr.bf16.gmra.mrb[0].mxu0 %v2360
  %v2396 = vpop.f32.mrb[0].mxu0
  %v2397 = vadd.f32 %v2304, %v2396
  %v2398 = vpop.f32.mrb[0].mxu0
  %v2399 = vadd.f32 %v2306, %v2398
  %v2400 = vpop.f32.mrb[0].mxu0
  %v2401 = vpop.f32.mrb[0].mxu0
  %2402 = vdwg.mxu0
  %v2403 = vadd.f32 %v2397, %v449
  %v2404 = vadd.f32 %v2399, %v453
  %v2405 = vtanh.pop %v2403
  %v2406 = vtanh.pop %v2404
  %v2407 = vpack.c.bf16 %v2405, %v2405
  %v2408 = vpack.c.bf16 %v2406, %v2406
  %s2409 = scalar_lea.vmem %s7, 512
  %v2410 = vld [vmem:[%s2409] sm:$0xf]
  %v2411 = vld [vmem:[%s2409 + $0x4] sm:$0xf]
  %v2412 = vld [vmem:[%s2409 + $0x8] sm:$0xf]
  %v2413 = vld [vmem:[%s2409 + $0xc] sm:$0xf]
  %v2414 = vld [vmem:[%s2409 + $0x10] sm:$0xf]
  %v2415 = vld [vmem:[%s2409 + $0x14] sm:$0xf]
  %v2416 = vld [vmem:[%s2409 + $0x18] sm:$0xf]
  %v2417 = vld [vmem:[%s2409 + $0x1c] sm:$0xf]
  %v2418 = vld [vmem:[%s2409 + $0x20] sm:$0xf]
  %v2419 = vld [vmem:[%s2409 + $0x24] sm:$0xf]
  %v2420 = vld [vmem:[%s2409 + $0x28] sm:$0xf]
  %v2421 = vld [vmem:[%s2409 + $0x2c] sm:$0xf]
  %v2422 = vld [vmem:[%s2409 + $0x30] sm:$0xf]
  %v2423 = vld [vmem:[%s2409 + $0x34] sm:$0xf]
  %v2424 = vld [vmem:[%s2409 + $0x38] sm:$0xf]
  %v2425 = vld [vmem:[%s2409 + $0x3c] sm:$0xf]
  %v2426 = vld [vmem:[%s2409 + $0x40] sm:$0xf]
  %v2427 = vld [vmem:[%s2409 + $0x44] sm:$0xf]
  %v2428 = vld [vmem:[%s2409 + $0x48] sm:$0xf]
  %v2429 = vld [vmem:[%s2409 + $0x4c] sm:$0xf]
  %v2430 = vld [vmem:[%s2409 + $0x50] sm:$0xf]
  %v2431 = vld [vmem:[%s2409 + $0x54] sm:$0xf]
  %v2432 = vld [vmem:[%s2409 + $0x58] sm:$0xf]
  %v2433 = vld [vmem:[%s2409 + $0x5c] sm:$0xf]
  %v2434 = vld [vmem:[%s2409 + $0x60] sm:$0xf]
  %v2435 = vld [vmem:[%s2409 + $0x64] sm:$0xf]
  %v2436 = vld [vmem:[%s2409 + $0x68] sm:$0xf]
  %v2437 = vld [vmem:[%s2409 + $0x6c] sm:$0xf]
  %v2438 = vld [vmem:[%s2409 + $0x70] sm:$0xf]
  %v2439 = vld [vmem:[%s2409 + $0x74] sm:$0xf]
  %v2440 = vld [vmem:[%s2409 + $0x78] sm:$0xf]
  %v2441 = vld [vmem:[%s2409 + $0x7c] sm:$0xf]
  %v2474 = vunpack.c.l.b16 %v2410
  %v2475 = vunpack.c.l.b16 %v2411
  %v2476 = vunpack.c.l.b16 %v2412
  %v2477 = vunpack.c.l.b16 %v2413
  %v2478 = vunpack.c.l.b16 %v2414
  %v2479 = vunpack.c.l.b16 %v2415
  %v2480 = vunpack.c.l.b16 %v2416
  %v2481 = vunpack.c.l.b16 %v2417
  %v2482 = vunpack.c.l.b16 %v2418
  %v2483 = vunpack.c.l.b16 %v2419
  %v2484 = vunpack.c.l.b16 %v2420
  %v2485 = vunpack.c.l.b16 %v2421
  %v2486 = vunpack.c.l.b16 %v2422
  %v2487 = vunpack.c.l.b16 %v2423
  %v2488 = vunpack.c.l.b16 %v2424
  %v2489 = vunpack.c.l.b16 %v2425
  %v2490 = vunpack.c.l.b16 %v2426
  %v2491 = vunpack.c.l.b16 %v2427
  %v2492 = vunpack.c.l.b16 %v2428
  %v2493 = vunpack.c.l.b16 %v2429
  %v2494 = vunpack.c.l.b16 %v2430
  %v2495 = vunpack.c.l.b16 %v2431
  %v2496 = vunpack.c.l.b16 %v2432
  %v2497 = vunpack.c.l.b16 %v2433
  %v2498 = vunpack.c.l.b16 %v2434
  %v2499 = vunpack.c.l.b16 %v2435
  %v2500 = vunpack.c.l.b16 %v2436
  %v2501 = vunpack.c.l.b16 %v2437
  %v2502 = vunpack.c.l.b16 %v2438
  %v2503 = vunpack.c.l.b16 %v2439
  %v2504 = vunpack.c.l.b16 %v2440
  %v2505 = vunpack.c.l.b16 %v2441
  %v2506 = vpack.c.b16 %v2475, %v2474
  %v2507 = vpack.c.b16 %v2477, %v2476
  %v2508 = vpack.c.b16 %v2479, %v2478
  %v2509 = vpack.c.b16 %v2481, %v2480
  %v2510 = vpack.c.b16 %v2483, %v2482
  %v2511 = vpack.c.b16 %v2485, %v2484
  %v2512 = vpack.c.b16 %v2487, %v2486
  %v2513 = vpack.c.b16 %v2489, %v2488
  %v2514 = vpack.c.b16 %v2491, %v2490
  %v2515 = vpack.c.b16 %v2493, %v2492
  %v2516 = vpack.c.b16 %v2495, %v2494
  %v2517 = vpack.c.b16 %v2497, %v2496
  %v2518 = vpack.c.b16 %v2499, %v2498
  %v2519 = vpack.c.b16 %v2501, %v2500
  %v2520 = vpack.c.b16 %v2503, %v2502
  %v2521 = vpack.c.b16 %v2505, %v2504
  %2538 = vmatprep.subr.bf16.mxu0 0
  %2539 = vmatpush1.bf16.msra.mxu0 %v2506
  %2540 = vmatprep.subr.bf16.mxu0 0
  %2541 = vmatpush1.bf16.msra.mxu0 %v2507
  %2542 = vmatprep.subr.bf16.mxu0 0
  %2543 = vmatpush1.bf16.msra.mxu0 %v2508
  %2544 = vmatprep.subr.bf16.mxu0 0
  %2545 = vmatpush1.bf16.msra.mxu0 %v2509
  %2546 = vmatprep.subr.bf16.mxu0 0
  %2547 = vmatpush1.bf16.msra.mxu0 %v2510
  %2548 = vmatprep.subr.bf16.mxu0 0
  %2549 = vmatpush1.bf16.msra.mxu0 %v2511
  %2550 = vmatprep.subr.bf16.mxu0 0
  %2551 = vmatpush1.bf16.msra.mxu0 %v2512
  %2552 = vmatprep.subr.bf16.mxu0 0
  %2553 = vmatpush1.bf16.msra.mxu0 %v2513
  %2554 = vmatprep.subr.bf16.mxu0 0
  %2555 = vmatpush1.bf16.msra.mxu0 %v2514
  %2556 = vmatprep.subr.bf16.mxu0 0
  %2557 = vmatpush1.bf16.msra.mxu0 %v2515
  %2558 = vmatprep.subr.bf16.mxu0 0
  %2559 = vmatpush1.bf16.msra.mxu0 %v2516
  %2560 = vmatprep.subr.bf16.mxu0 0
  %2561 = vmatpush1.bf16.msra.mxu0 %v2517
  %2562 = vmatprep.subr.bf16.mxu0 0
  %2563 = vmatpush1.bf16.msra.mxu0 %v2518
  %2564 = vmatprep.subr.bf16.mxu0 0
  %2565 = vmatpush1.bf16.msra.mxu0 %v2519
  %2566 = vmatprep.subr.bf16.mxu0 0
  %2567 = vmatpush1.bf16.msra.mxu0 %v2520
  %2568 = vmatprep.subr.bf16.mxu0 0
  %2569 = vmatpush1.bf16.msra.mxu0 %v2521
  %2570 = vmatprep.mubr.bf16.mxu0 %v2408
  %2571 = vmatmul.mubr.bf16.gmra.mrb[0].mxu0 %v2407
  %v2572 = vpop.f32.mrb[0].mxu0
  %v2573 = vadd.f32 0.0, %v2572
  %v2574 = vpop.f32.mrb[0].mxu0
  %v2575 = vpop.f32.mrb[0].mxu0
  %v2576 = vpop.f32.mrb[0].mxu0
  %2577 = vdwg.mxu0
  %v2578 = vadd.f32 %v2268, %v2573
  %2579 = vmatprep.subr.bf16.mxu0 %v585
  %2580 = vmatpush1.bf16.msra.mxu0 %v584
  %2581 = vmatprep.subr.bf16.mxu0 %v587
  %2582 = vmatpush1.bf16.msra.mxu0 %v586
  %2583 = vmatprep.subr.bf16.mxu0 %v589
  %2584 = vmatpush1.bf16.msra.mxu0 %v588
  %2585 = vmatprep.subr.bf16.mxu0 %v591
  %2586 = vmatpush1.bf16.msra.mxu0 %v590
  %2587 = vmatprep.subr.bf16.mxu0 %v593
  %2588 = vmatpush1.bf16.msra.mxu0 %v592
  %2589 = vmatprep.subr.bf16.mxu0 %v595
  %2590 = vmatpush1.bf16.msra.mxu0 %v594
  %2591 = vmatprep.subr.bf16.mxu0 %v597
  %2592 = vmatpush1.bf16.msra.mxu0 %v596
  %2593 = vmatprep.subr.bf16.mxu0 %v599
  %2594 = vmatpush1.bf16.msra.mxu0 %v598
  %2595 = vmatprep.subr.bf16.mxu0 %v601
  %2596 = vmatpush1.bf16.msra.mxu0 %v600
  %2597 = vmatprep.subr.bf16.mxu0 %v603
  %2598 = vmatpush1.bf16.msra.mxu0 %v602
  %2599 = vmatprep.subr.bf16.mxu0 %v605
  %2600 = vmatpush1.bf16.msra.mxu0 %v604
  %2601 = vmatprep.subr.bf16.mxu0 %v607
  %2602 = vmatpush1.bf16.msra.mxu0 %v606
  %2603 = vmatprep.subr.bf16.mxu0 %v609
  %2604 = vmatpush1.bf16.msra.mxu0 %v608
  %2605 = vmatprep.subr.bf16.mxu0 %v611
  %2606 = vmatpush1.bf16.msra.mxu0 %v610
  %2607 = vmatprep.subr.bf16.mxu0 %v613
  %2608 = vmatpush1.bf16.msra.mxu0 %v612
  %2609 = vmatprep.subr.bf16.mxu0 %v615
  %2610 = vmatpush1.bf16.msra.mxu0 %v614
  %2611 = vmatprep.mubr.bf16.mxu0 %v2408
  %2612 = vmatmul.mubr.bf16.gmra.mrb[0].mxu0 %v2407
  %v2613 = vpop.f32.mrb[0].mxu0
  %v2614 = vadd.f32 0.0, %v2613
  %v2615 = vpop.f32.mrb[0].mxu0
  %v2616 = vadd.f32 0.0, %v2615
  %v2617 = vpop.f32.mrb[0].mxu0
  %v2618 = vpop.f32.mrb[0].mxu0
  %2619 = vdwg.mxu0
  %s2620 = smul.u32 5, 2
  %s2621 = smul.addr %s2620, 8
  %s2622 = scalar_lea.vmem [#allocation2], %s2621
  %v2623 = vld [vmem:[%s2622] sm:$0xff]
  %v2624 = vld [vmem:[%s2622 + $0x8] sm:$0xff]
  %2625 = vmatprep.subr.bf16.mxu0 %v823
  %2626 = vmatpush1.bf16.msra.mxu0 %v822
  %2627 = vmatprep.subr.bf16.mxu0 %v825
  %2628 = vmatpush1.bf16.msra.mxu0 %v824
  %2629 = vmatprep.subr.bf16.mxu0 %v827
  %2630 = vmatpush1.bf16.msra.mxu0 %v826
  %2631 = vmatprep.subr.bf16.mxu0 %v829
  %2632 = vmatpush1.bf16.msra.mxu0 %v828
  %2633 = vmatprep.subr.bf16.mxu0 %v831
  %2634 = vmatpush1.bf16.msra.mxu0 %v830
  %2635 = vmatprep.subr.bf16.mxu0 %v833
  %2636 = vmatpush1.bf16.msra.mxu0 %v832
  %2637 = vmatprep.subr.bf16.mxu0 %v835
  %2638 = vmatpush1.bf16.msra.mxu0 %v834
  %2639 = vmatprep.subr.bf16.mxu0 %v837
  %2640 = vmatpush1.bf16.msra.mxu0 %v836
  %2641 = vmatprep.subr.bf16.mxu0 %v839
  %2642 = vmatpush1.bf16.msra.mxu0 %v838
  %2643 = vmatprep.subr.bf16.mxu0 %v841
  %2644 = vmatpush1.bf16.msra.mxu0 %v840
  %2645 = vmatprep.subr.bf16.mxu0 %v843
  %2646 = vmatpush1.bf16.msra.mxu0 %v842
  %2647 = vmatprep.subr.bf16.mxu0 %v845
  %2648 = vmatpush1.bf16.msra.mxu0 %v844
  %2649 = vmatprep.subr.bf16.mxu0 %v847
  %2650 = vmatpush1.bf16.msra.mxu0 %v846
  %2651 = vmatprep.subr.bf16.mxu0 %v849
  %2652 = vmatpush1.bf16.msra.mxu0 %v848
  %2653 = vmatprep.subr.bf16.mxu0 %v851
  %2654 = vmatpush1.bf16.msra.mxu0 %v850
  %2655 = vmatprep.subr.bf16.mxu0 %v853
  %2656 = vmatpush1.bf16.msra.mxu0 %v852
  %2657 = vmatprep.mubr.bf16.mxu0 %v2361
  %2658 = vmatmul.mubr.bf16.gmra.mrb[0].mxu0 %v2360
  %v2659 = vpop.f32.mrb[0].mxu0
  %v2660 = vadd.f32 0.0, %v2659
  %v2661 = vpop.f32.mrb[0].mxu0
  %v2662 = vadd.f32 0.0, %v2661
  %v2663 = vpop.f32.mrb[0].mxu0
  %v2664 = vpop.f32.mrb[0].mxu0
  %2665 = vdwg.mxu0
  %v2666 = vadd.f32 %v2623, %v2660
  %v2667 = vadd.f32 %v2624, %v2662
  %v2668 = vtanh.pop %v2666
  %v2669 = vtanh.pop %v2667
  %v2670 = vpack.c.bf16 %v2668, %v2668
  %v2671 = vpack.c.bf16 %v2669, %v2669
  %2672 = vmatprep.subr.bf16.mxu0 %v1062
  %2673 = vmatpush1.bf16.msra.mxu0 %v1061
  %2674 = vmatprep.subr.bf16.mxu0 %v1064
  %2675 = vmatpush1.bf16.msra.mxu0 %v1063
  %2676 = vmatprep.subr.bf16.mxu0 %v1066
  %2677 = vmatpush1.bf16.msra.mxu0 %v1065
  %2678 = vmatprep.subr.bf16.mxu0 %v1068
  %2679 = vmatpush1.bf16.msra.mxu0 %v1067
  %2680 = vmatprep.subr.bf16.mxu0 %v1070
  %2681 = vmatpush1.bf16.msra.mxu0 %v1069
  %2682 = vmatprep.subr.bf16.mxu0 %v1072
  %2683 = vmatpush1.bf16.msra.mxu0 %v1071
  %2684 = vmatprep.subr.bf16.mxu0 %v1074
  %2685 = vmatpush1.bf16.msra.mxu0 %v1073
  %2686 = vmatprep.subr.bf16.mxu0 %v1076
  %2687 = vmatpush1.bf16.msra.mxu0 %v1075
  %2688 = vmatprep.subr.bf16.mxu0 %v1078
  %2689 = vmatpush1.bf16.msra.mxu0 %v1077
  %2690 = vmatprep.subr.bf16.mxu0 %v1080
  %2691 = vmatpush1.bf16.msra.mxu0 %v1079
  %2692 = vmatprep.subr.bf16.mxu0 %v1082
  %2693 = vmatpush1.bf16.msra.mxu0 %v1081
  %2694 = vmatprep.subr.bf16.mxu0 %v1084
  %2695 = vmatpush1.bf16.msra.mxu0 %v1083
  %2696 = vmatprep.subr.bf16.mxu0 %v1086
  %2697 = vmatpush1.bf16.msra.mxu0 %v1085
  %2698 = vmatprep.subr.bf16.mxu0 %v1088
  %2699 = vmatpush1.bf16.msra.mxu0 %v1087
  %2700 = vmatprep.subr.bf16.mxu0 %v1090
  %2701 = vmatpush1.bf16.msra.mxu0 %v1089
  %2702 = vmatprep.subr.bf16.mxu0 %v1092
  %2703 = vmatpush1.bf16.msra.mxu0 %v1091
  %2704 = vmatprep.mubr.bf16.mxu0 %v2671
  %2705 = vmatmul.mubr.bf16.gmra.mrb[0].mxu0 %v2670
  %v2706 = vpop.f32.mrb[0].mxu0
  %v2707 = vadd.f32 %v2614, %v2706
  %v2708 = vpop.f32.mrb[0].mxu0
  %v2709 = vadd.f32 %v2616, %v2708
  %v2710 = vpop.f32.mrb[0].mxu0
  %v2711 = vpop.f32.mrb[0].mxu0
  %2712 = vdwg.mxu0
  %v2713 = vadd.f32 %v2707, %v449
  %v2714 = vadd.f32 %v2709, %v453
  %v2715 = vtanh.pop %v2713
  %v2716 = vtanh.pop %v2714
  %v2717 = vpack.c.bf16 %v2715, %v2715
  %v2718 = vpack.c.bf16 %v2716, %v2716
  %s2719 = scalar_lea.vmem %s7, 640
  %v2720 = vld [vmem:[%s2719] sm:$0xf]
  %v2721 = vld [vmem:[%s2719 + $0x4] sm:$0xf]
  %v2722 = vld [vmem:[%s2719 + $0x8] sm:$0xf]
  %v2723 = vld [vmem:[%s2719 + $0xc] sm:$0xf]
  %v2724 = vld [vmem:[%s2719 + $0x10] sm:$0xf]
  %v2725 = vld [vmem:[%s2719 + $0x14] sm:$0xf]
  %v2726 = vld [vmem:[%s2719 + $0x18] sm:$0xf]
  %v2727 = vld [vmem:[%s2719 + $0x1c] sm:$0xf]
  %v2728 = vld [vmem:[%s2719 + $0x20] sm:$0xf]
  %v2729 = vld [vmem:[%s2719 + $0x24] sm:$0xf]
  %v2730 = vld [vmem:[%s2719 + $0x28] sm:$0xf]
  %v2731 = vld [vmem:[%s2719 + $0x2c] sm:$0xf]
  %v2732 = vld [vmem:[%s2719 + $0x30] sm:$0xf]
  %v2733 = vld [vmem:[%s2719 + $0x34] sm:$0xf]
  %v2734 = vld [vmem:[%s2719 + $0x38] sm:$0xf]
  %v2735 = vld [vmem:[%s2719 + $0x3c] sm:$0xf]
  %v2736 = vld [vmem:[%s2719 + $0x40] sm:$0xf]
  %v2737 = vld [vmem:[%s2719 + $0x44] sm:$0xf]
  %v2738 = vld [vmem:[%s2719 + $0x48] sm:$0xf]
  %v2739 = vld [vmem:[%s2719 + $0x4c] sm:$0xf]
  %v2740 = vld [vmem:[%s2719 + $0x50] sm:$0xf]
  %v2741 = vld [vmem:[%s2719 + $0x54] sm:$0xf]
  %v2742 = vld [vmem:[%s2719 + $0x58] sm:$0xf]
  %v2743 = vld [vmem:[%s2719 + $0x5c] sm:$0xf]
  %v2744 = vld [vmem:[%s2719 + $0x60] sm:$0xf]
  %v2745 = vld [vmem:[%s2719 + $0x64] sm:$0xf]
  %v2746 = vld [vmem:[%s2719 + $0x68] sm:$0xf]
  %v2747 = vld [vmem:[%s2719 + $0x6c] sm:$0xf]
  %v2748 = vld [vmem:[%s2719 + $0x70] sm:$0xf]
  %v2749 = vld [vmem:[%s2719 + $0x74] sm:$0xf]
  %v2750 = vld [vmem:[%s2719 + $0x78] sm:$0xf]
  %v2751 = vld [vmem:[%s2719 + $0x7c] sm:$0xf]
  %v2784 = vunpack.c.l.b16 %v2720
  %v2785 = vunpack.c.l.b16 %v2721
  %v2786 = vunpack.c.l.b16 %v2722
  %v2787 = vunpack.c.l.b16 %v2723
  %v2788 = vunpack.c.l.b16 %v2724
  %v2789 = vunpack.c.l.b16 %v2725
  %v2790 = vunpack.c.l.b16 %v2726
  %v2791 = vunpack.c.l.b16 %v2727
  %v2792 = vunpack.c.l.b16 %v2728
  %v2793 = vunpack.c.l.b16 %v2729
  %v2794 = vunpack.c.l.b16 %v2730
  %v2795 = vunpack.c.l.b16 %v2731
  %v2796 = vunpack.c.l.b16 %v2732
  %v2797 = vunpack.c.l.b16 %v2733
  %v2798 = vunpack.c.l.b16 %v2734
  %v2799 = vunpack.c.l.b16 %v2735
  %v2800 = vunpack.c.l.b16 %v2736
  %v2801 = vunpack.c.l.b16 %v2737
  %v2802 = vunpack.c.l.b16 %v2738
  %v2803 = vunpack.c.l.b16 %v2739
  %v2804 = vunpack.c.l.b16 %v2740
  %v2805 = vunpack.c.l.b16 %v2741
  %v2806 = vunpack.c.l.b16 %v2742
  %v2807 = vunpack.c.l.b16 %v2743
  %v2808 = vunpack.c.l.b16 %v2744
  %v2809 = vunpack.c.l.b16 %v2745
  %v2810 = vunpack.c.l.b16 %v2746
  %v2811 = vunpack.c.l.b16 %v2747
  %v2812 = vunpack.c.l.b16 %v2748
  %v2813 = vunpack.c.l.b16 %v2749
  %v2814 = vunpack.c.l.b16 %v2750
  %v2815 = vunpack.c.l.b16 %v2751
  %v2816 = vpack.c.b16 %v2785, %v2784
  %v2817 = vpack.c.b16 %v2787, %v2786
  %v2818 = vpack.c.b16 %v2789, %v2788
  %v2819 = vpack.c.b16 %v2791, %v2790
  %v2820 = vpack.c.b16 %v2793, %v2792
  %v2821 = vpack.c.b16 %v2795, %v2794
  %v2822 = vpack.c.b16 %v2797, %v2796
  %v2823 = vpack.c.b16 %v2799, %v2798
  %v2824 = vpack.c.b16 %v2801, %v2800
  %v2825 = vpack.c.b16 %v2803, %v2802
  %v2826 = vpack.c.b16 %v2805, %v2804
  %v2827 = vpack.c.b16 %v2807, %v2806
  %v2828 = vpack.c.b16 %v2809, %v2808
  %v2829 = vpack.c.b16 %v2811, %v2810
  %v2830 = vpack.c.b16 %v2813, %v2812
  %v2831 = vpack.c.b16 %v2815, %v2814
  %2848 = vmatprep.subr.bf16.mxu0 0
  %2849 = vmatpush1.bf16.msra.mxu0 %v2816
  %2850 = vmatprep.subr.bf16.mxu0 0
  %2851 = vmatpush1.bf16.msra.mxu0 %v2817
  %2852 = vmatprep.subr.bf16.mxu0 0
  %2853 = vmatpush1.bf16.msra.mxu0 %v2818
  %2854 = vmatprep.subr.bf16.mxu0 0
  %2855 = vmatpush1.bf16.msra.mxu0 %v2819
  %2856 = vmatprep.subr.bf16.mxu0 0
  %2857 = vmatpush1.bf16.msra.mxu0 %v2820
  %2858 = vmatprep.subr.bf16.mxu0 0
  %2859 = vmatpush1.bf16.msra.mxu0 %v2821
  %2860 = vmatprep.subr.bf16.mxu0 0
  %2861 = vmatpush1.bf16.msra.mxu0 %v2822
  %2862 = vmatprep.subr.bf16.mxu0 0
  %2863 = vmatpush1.bf16.msra.mxu0 %v2823
  %2864 = vmatprep.subr.bf16.mxu0 0
  %2865 = vmatpush1.bf16.msra.mxu0 %v2824
  %2866 = vmatprep.subr.bf16.mxu0 0
  %2867 = vmatpush1.bf16.msra.mxu0 %v2825
  %2868 = vmatprep.subr.bf16.mxu0 0
  %2869 = vmatpush1.bf16.msra.mxu0 %v2826
  %2870 = vmatprep.subr.bf16.mxu0 0
  %2871 = vmatpush1.bf16.msra.mxu0 %v2827
  %2872 = vmatprep.subr.bf16.mxu0 0
  %2873 = vmatpush1.bf16.msra.mxu0 %v2828
  %2874 = vmatprep.subr.bf16.mxu0 0
  %2875 = vmatpush1.bf16.msra.mxu0 %v2829
  %2876 = vmatprep.subr.bf16.mxu0 0
  %2877 = vmatpush1.bf16.msra.mxu0 %v2830
  %2878 = vmatprep.subr.bf16.mxu0 0
  %2879 = vmatpush1.bf16.msra.mxu0 %v2831
  %2880 = vmatprep.mubr.bf16.mxu0 %v2718
  %2881 = vmatmul.mubr.bf16.gmra.mrb[0].mxu0 %v2717
  %v2882 = vpop.f32.mrb[0].mxu0
  %v2883 = vadd.f32 0.0, %v2882
  %v2884 = vpop.f32.mrb[0].mxu0
  %v2885 = vpop.f32.mrb[0].mxu0
  %v2886 = vpop.f32.mrb[0].mxu0
  %2887 = vdwg.mxu0
  %v2888 = vadd.f32 %v2578, %v2883
  %2889 = vmatprep.subr.bf16.mxu0 %v585
  %2890 = vmatpush1.bf16.msra.mxu0 %v584
  %2891 = vmatprep.subr.bf16.mxu0 %v587
  %2892 = vmatpush1.bf16.msra.mxu0 %v586
  %2893 = vmatprep.subr.bf16.mxu0 %v589
  %2894 = vmatpush1.bf16.msra.mxu0 %v588
  %2895 = vmatprep.subr.bf16.mxu0 %v591
  %2896 = vmatpush1.bf16.msra.mxu0 %v590
  %2897 = vmatprep.subr.bf16.mxu0 %v593
  %2898 = vmatpush1.bf16.msra.mxu0 %v592
  %2899 = vmatprep.subr.bf16.mxu0 %v595
  %2900 = vmatpush1.bf16.msra.mxu0 %v594
  %2901 = vmatprep.subr.bf16.mxu0 %v597
  %2902 = vmatpush1.bf16.msra.mxu0 %v596
  %2903 = vmatprep.subr.bf16.mxu0 %v599
  %2904 = vmatpush1.bf16.msra.mxu0 %v598
  %2905 = vmatprep.subr.bf16.mxu0 %v601
  %2906 = vmatpush1.bf16.msra.mxu0 %v600
  %2907 = vmatprep.subr.bf16.mxu0 %v603
  %2908 = vmatpush1.bf16.msra.mxu0 %v602
  %2909 = vmatprep.subr.bf16.mxu0 %v605
  %2910 = vmatpush1.bf16.msra.mxu0 %v604
  %2911 = vmatprep.subr.bf16.mxu0 %v607
  %2912 = vmatpush1.bf16.msra.mxu0 %v606
  %2913 = vmatprep.subr.bf16.mxu0 %v609
  %2914 = vmatpush1.bf16.msra.mxu0 %v608
  %2915 = vmatprep.subr.bf16.mxu0 %v611
  %2916 = vmatpush1.bf16.msra.mxu0 %v610
  %2917 = vmatprep.subr.bf16.mxu0 %v613
  %2918 = vmatpush1.bf16.msra.mxu0 %v612
  %2919 = vmatprep.subr.bf16.mxu0 %v615
  %2920 = vmatpush1.bf16.msra.mxu0 %v614
  %2921 = vmatprep.mubr.bf16.mxu0 %v2718
  %2922 = vmatmul.mubr.bf16.gmra.mrb[0].mxu0 %v2717
  %v2923 = vpop.f32.mrb[0].mxu0
  %v2924 = vadd.f32 0.0, %v2923
  %v2925 = vpop.f32.mrb[0].mxu0
  %v2926 = vadd.f32 0.0, %v2925
  %v2927 = vpop.f32.mrb[0].mxu0
  %v2928 = vpop.f32.mrb[0].mxu0
  %2929 = vdwg.mxu0
  %s2930 = smul.u32 6, 2
  %s2931 = smul.addr %s2930, 8
  %s2932 = scalar_lea.vmem [#allocation2], %s2931
  %v2933 = vld [vmem:[%s2932] sm:$0xff]
  %v2934 = vld [vmem:[%s2932 + $0x8] sm:$0xff]
  %2935 = vmatprep.subr.bf16.mxu0 %v823
  %2936 = vmatpush1.bf16.msra.mxu0 %v822
  %2937 = vmatprep.subr.bf16.mxu0 %v825
  %2938 = vmatpush1.bf16.msra.mxu0 %v824
  %2939 = vmatprep.subr.bf16.mxu0 %v827
  %2940 = vmatpush1.bf16.msra.mxu0 %v826
  %2941 = vmatprep.subr.bf16.mxu0 %v829
  %2942 = vmatpush1.bf16.msra.mxu0 %v828
  %2943 = vmatprep.subr.bf16.mxu0 %v831
  %2944 = vmatpush1.bf16.msra.mxu0 %v830
  %2945 = vmatprep.subr.bf16.mxu0 %v833
  %2946 = vmatpush1.bf16.msra.mxu0 %v832
  %2947 = vmatprep.subr.bf16.mxu0 %v835
  %2948 = vmatpush1.bf16.msra.mxu0 %v834
  %2949 = vmatprep.subr.bf16.mxu0 %v837
  %2950 = vmatpush1.bf16.msra.mxu0 %v836
  %2951 = vmatprep.subr.bf16.mxu0 %v839
  %2952 = vmatpush1.bf16.msra.mxu0 %v838
  %2953 = vmatprep.subr.bf16.mxu0 %v841
  %2954 = vmatpush1.bf16.msra.mxu0 %v840
  %2955 = vmatprep.subr.bf16.mxu0 %v843
  %2956 = vmatpush1.bf16.msra.mxu0 %v842
  %2957 = vmatprep.subr.bf16.mxu0 %v845
  %2958 = vmatpush1.bf16.msra.mxu0 %v844
  %2959 = vmatprep.subr.bf16.mxu0 %v847
  %2960 = vmatpush1.bf16.msra.mxu0 %v846
  %2961 = vmatprep.subr.bf16.mxu0 %v849
  %2962 = vmatpush1.bf16.msra.mxu0 %v848
  %2963 = vmatprep.subr.bf16.mxu0 %v851
  %2964 = vmatpush1.bf16.msra.mxu0 %v850
  %2965 = vmatprep.subr.bf16.mxu0 %v853
  %2966 = vmatpush1.bf16.msra.mxu0 %v852
  %2967 = vmatprep.mubr.bf16.mxu0 %v2671
  %2968 = vmatmul.mubr.bf16.gmra.mrb[0].mxu0 %v2670
  %v2969 = vpop.f32.mrb[0].mxu0
  %v2970 = vadd.f32 0.0, %v2969
  %v2971 = vpop.f32.mrb[0].mxu0
  %v2972 = vadd.f32 0.0, %v2971
  %v2973 = vpop.f32.mrb[0].mxu0
  %v2974 = vpop.f32.mrb[0].mxu0
  %2975 = vdwg.mxu0
  %v2976 = vadd.f32 %v2933, %v2970
  %v2977 = vadd.f32 %v2934, %v2972
  %v2978 = vtanh.pop %v2976
  %v2979 = vtanh.pop %v2977
  %v2980 = vpack.c.bf16 %v2978, %v2978
  %v2981 = vpack.c.bf16 %v2979, %v2979
  %2982 = vmatprep.subr.bf16.mxu0 %v1062
  %2983 = vmatpush1.bf16.msra.mxu0 %v1061
  %2984 = vmatprep.subr.bf16.mxu0 %v1064
  %2985 = vmatpush1.bf16.msra.mxu0 %v1063
  %2986 = vmatprep.subr.bf16.mxu0 %v1066
  %2987 = vmatpush1.bf16.msra.mxu0 %v1065
  %2988 = vmatprep.subr.bf16.mxu0 %v1068
  %2989 = vmatpush1.bf16.msra.mxu0 %v1067
  %2990 = vmatprep.subr.bf16.mxu0 %v1070
  %2991 = vmatpush1.bf16.msra.mxu0 %v1069
  %2992 = vmatprep.subr.bf16.mxu0 %v1072
  %2993 = vmatpush1.bf16.msra.mxu0 %v1071
  %2994 = vmatprep.subr.bf16.mxu0 %v1074
  %2995 = vmatpush1.bf16.msra.mxu0 %v1073
  %2996 = vmatprep.subr.bf16.mxu0 %v1076
  %2997 = vmatpush1.bf16.msra.mxu0 %v1075
  %2998 = vmatprep.subr.bf16.mxu0 %v1078
  %2999 = vmatpush1.bf16.msra.mxu0 %v1077
  %3000 = vmatprep.subr.bf16.mxu0 %v1080
  %3001 = vmatpush1.bf16.msra.mxu0 %v1079
  %3002 = vmatprep.subr.bf16.mxu0 %v1082
  %3003 = vmatpush1.bf16.msra.mxu0 %v1081
  %3004 = vmatprep.subr.bf16.mxu0 %v1084
  %3005 = vmatpush1.bf16.msra.mxu0 %v1083
  %3006 = vmatprep.subr.bf16.mxu0 %v1086
  %3007 = vmatpush1.bf16.msra.mxu0 %v1085
  %3008 = vmatprep.subr.bf16.mxu0 %v1088
  %3009 = vmatpush1.bf16.msra.mxu0 %v1087
  %3010 = vmatprep.subr.bf16.mxu0 %v1090
  %3011 = vmatpush1.bf16.msra.mxu0 %v1089
  %3012 = vmatprep.subr.bf16.mxu0 %v1092
  %3013 = vmatpush1.bf16.msra.mxu0 %v1091
  %3014 = vmatprep.mubr.bf16.mxu0 %v2981
  %3015 = vmatmul.mubr.bf16.gmra.mrb[0].mxu0 %v2980
  %v3016 = vpop.f32.mrb[0].mxu0
  %v3017 = vadd.f32 %v2924, %v3016
  %v3018 = vpop.f32.mrb[0].mxu0
  %v3019 = vadd.f32 %v2926, %v3018
  %v3020 = vpop.f32.mrb[0].mxu0
  %v3021 = vpop.f32.mrb[0].mxu0
  %3022 = vdwg.mxu0
  %v3023 = vadd.f32 %v3017, %v449
  %v3024 = vadd.f32 %v3019, %v453
  %v3025 = vtanh.pop %v3023
  %v3026 = vtanh.pop %v3024
  %v3027 = vpack.c.bf16 %v3025, %v3025
  %v3028 = vpack.c.bf16 %v3026, %v3026
  %s3029 = scalar_lea.vmem %s7, 768
  %v3030 = vld [vmem:[%s3029] sm:$0xf]
  %v3031 = vld [vmem:[%s3029 + $0x4] sm:$0xf]
  %v3032 = vld [vmem:[%s3029 + $0x8] sm:$0xf]
  %v3033 = vld [vmem:[%s3029 + $0xc] sm:$0xf]
  %v3034 = vld [vmem:[%s3029 + $0x10] sm:$0xf]
  %v3035 = vld [vmem:[%s3029 + $0x14] sm:$0xf]
  %v3036 = vld [vmem:[%s3029 + $0x18] sm:$0xf]
  %v3037 = vld [vmem:[%s3029 + $0x1c] sm:$0xf]
  %v3038 = vld [vmem:[%s3029 + $0x20] sm:$0xf]
  %v3039 = vld [vmem:[%s3029 + $0x24] sm:$0xf]
  %v3040 = vld [vmem:[%s3029 + $0x28] sm:$0xf]
  %v3041 = vld [vmem:[%s3029 + $0x2c] sm:$0xf]
  %v3042 = vld [vmem:[%s3029 + $0x30] sm:$0xf]
  %v3043 = vld [vmem:[%s3029 + $0x34] sm:$0xf]
  %v3044 = vld [vmem:[%s3029 + $0x38] sm:$0xf]
  %v3045 = vld [vmem:[%s3029 + $0x3c] sm:$0xf]
  %v3046 = vld [vmem:[%s3029 + $0x40] sm:$0xf]
  %v3047 = vld [vmem:[%s3029 + $0x44] sm:$0xf]
  %v3048 = vld [vmem:[%s3029 + $0x48] sm:$0xf]
  %v3049 = vld [vmem:[%s3029 + $0x4c] sm:$0xf]
  %v3050 = vld [vmem:[%s3029 + $0x50] sm:$0xf]
  %v3051 = vld [vmem:[%s3029 + $0x54] sm:$0xf]
  %v3052 = vld [vmem:[%s3029 + $0x58] sm:$0xf]
  %v3053 = vld [vmem:[%s3029 + $0x5c] sm:$0xf]
  %v3054 = vld [vmem:[%s3029 + $0x60] sm:$0xf]
  %v3055 = vld [vmem:[%s3029 + $0x64] sm:$0xf]
  %v3056 = vld [vmem:[%s3029 + $0x68] sm:$0xf]
  %v3057 = vld [vmem:[%s3029 + $0x6c] sm:$0xf]
  %v3058 = vld [vmem:[%s3029 + $0x70] sm:$0xf]
  %v3059 = vld [vmem:[%s3029 + $0x74] sm:$0xf]
  %v3060 = vld [vmem:[%s3029 + $0x78] sm:$0xf]
  %v3061 = vld [vmem:[%s3029 + $0x7c] sm:$0xf]
  %v3094 = vunpack.c.l.b16 %v3030
  %v3095 = vunpack.c.l.b16 %v3031
  %v3096 = vunpack.c.l.b16 %v3032
  %v3097 = vunpack.c.l.b16 %v3033
  %v3098 = vunpack.c.l.b16 %v3034
  %v3099 = vunpack.c.l.b16 %v3035
  %v3100 = vunpack.c.l.b16 %v3036
  %v3101 = vunpack.c.l.b16 %v3037
  %v3102 = vunpack.c.l.b16 %v3038
  %v3103 = vunpack.c.l.b16 %v3039
  %v3104 = vunpack.c.l.b16 %v3040
  %v3105 = vunpack.c.l.b16 %v3041
  %v3106 = vunpack.c.l.b16 %v3042
  %v3107 = vunpack.c.l.b16 %v3043
  %v3108 = vunpack.c.l.b16 %v3044
  %v3109 = vunpack.c.l.b16 %v3045
  %v3110 = vunpack.c.l.b16 %v3046
  %v3111 = vunpack.c.l.b16 %v3047
  %v3112 = vunpack.c.l.b16 %v3048
  %v3113 = vunpack.c.l.b16 %v3049
  %v3114 = vunpack.c.l.b16 %v3050
  %v3115 = vunpack.c.l.b16 %v3051
  %v3116 = vunpack.c.l.b16 %v3052
  %v3117 = vunpack.c.l.b16 %v3053
  %v3118 = vunpack.c.l.b16 %v3054
  %v3119 = vunpack.c.l.b16 %v3055
  %v3120 = vunpack.c.l.b16 %v3056
  %v3121 = vunpack.c.l.b16 %v3057
  %v3122 = vunpack.c.l.b16 %v3058
  %v3123 = vunpack.c.l.b16 %v3059
  %v3124 = vunpack.c.l.b16 %v3060
  %v3125 = vunpack.c.l.b16 %v3061
  %v3126 = vpack.c.b16 %v3095, %v3094
  %v3127 = vpack.c.b16 %v3097, %v3096
  %v3128 = vpack.c.b16 %v3099, %v3098
  %v3129 = vpack.c.b16 %v3101, %v3100
  %v3130 = vpack.c.b16 %v3103, %v3102
  %v3131 = vpack.c.b16 %v3105, %v3104
  %v3132 = vpack.c.b16 %v3107, %v3106
  %v3133 = vpack.c.b16 %v3109, %v3108
  %v3134 = vpack.c.b16 %v3111, %v3110
  %v3135 = vpack.c.b16 %v3113, %v3112
  %v3136 = vpack.c.b16 %v3115, %v3114
  %v3137 = vpack.c.b16 %v3117, %v3116
  %v3138 = vpack.c.b16 %v3119, %v3118
  %v3139 = vpack.c.b16 %v3121, %v3120
  %v3140 = vpack.c.b16 %v3123, %v3122
  %v3141 = vpack.c.b16 %v3125, %v3124
  %3158 = vmatprep.subr.bf16.mxu0 0
  %3159 = vmatpush1.bf16.msra.mxu0 %v3126
  %3160 = vmatprep.subr.bf16.mxu0 0
  %3161 = vmatpush1.bf16.msra.mxu0 %v3127
  %3162 = vmatprep.subr.bf16.mxu0 0
  %3163 = vmatpush1.bf16.msra.mxu0 %v3128
  %3164 = vmatprep.subr.bf16.mxu0 0
  %3165 = vmatpush1.bf16.msra.mxu0 %v3129
  %3166 = vmatprep.subr.bf16.mxu0 0
  %3167 = vmatpush1.bf16.msra.mxu0 %v3130
  %3168 = vmatprep.subr.bf16.mxu0 0
  %3169 = vmatpush1.bf16.msra.mxu0 %v3131
  %3170 = vmatprep.subr.bf16.mxu0 0
  %3171 = vmatpush1.bf16.msra.mxu0 %v3132
  %3172 = vmatprep.subr.bf16.mxu0 0
  %3173 = vmatpush1.bf16.msra.mxu0 %v3133
  %3174 = vmatprep.subr.bf16.mxu0 0
  %3175 = vmatpush1.bf16.msra.mxu0 %v3134
  %3176 = vmatprep.subr.bf16.mxu0 0
  %3177 = vmatpush1.bf16.msra.mxu0 %v3135
  %3178 = vmatprep.subr.bf16.mxu0 0
  %3179 = vmatpush1.bf16.msra.mxu0 %v3136
  %3180 = vmatprep.subr.bf16.mxu0 0
  %3181 = vmatpush1.bf16.msra.mxu0 %v3137
  %3182 = vmatprep.subr.bf16.mxu0 0
  %3183 = vmatpush1.bf16.msra.mxu0 %v3138
  %3184 = vmatprep.subr.bf16.mxu0 0
  %3185 = vmatpush1.bf16.msra.mxu0 %v3139
  %3186 = vmatprep.subr.bf16.mxu0 0
  %3187 = vmatpush1.bf16.msra.mxu0 %v3140
  %3188 = vmatprep.subr.bf16.mxu0 0
  %3189 = vmatpush1.bf16.msra.mxu0 %v3141
  %3190 = vmatprep.mubr.bf16.mxu0 %v3028
  %3191 = vmatmul.mubr.bf16.gmra.mrb[0].mxu0 %v3027
  %v3192 = vpop.f32.mrb[0].mxu0
  %v3193 = vadd.f32 0.0, %v3192
  %v3194 = vpop.f32.mrb[0].mxu0
  %v3195 = vpop.f32.mrb[0].mxu0
  %v3196 = vpop.f32.mrb[0].mxu0
  %3197 = vdwg.mxu0
  %v3198 = vadd.f32 %v2888, %v3193
  %3199 = vmatprep.subr.bf16.mxu0 %v585
  %3200 = vmatpush1.bf16.msra.mxu0 %v584
  %3201 = vmatprep.subr.bf16.mxu0 %v587
  %3202 = vmatpush1.bf16.msra.mxu0 %v586
  %3203 = vmatprep.subr.bf16.mxu0 %v589
  %3204 = vmatpush1.bf16.msra.mxu0 %v588
  %3205 = vmatprep.subr.bf16.mxu0 %v591
  %3206 = vmatpush1.bf16.msra.mxu0 %v590
  %3207 = vmatprep.subr.bf16.mxu0 %v593
  %3208 = vmatpush1.bf16.msra.mxu0 %v592
  %3209 = vmatprep.subr.bf16.mxu0 %v595
  %3210 = vmatpush1.bf16.msra.mxu0 %v594
  %3211 = vmatprep.subr.bf16.mxu0 %v597
  %3212 = vmatpush1.bf16.msra.mxu0 %v596
  %3213 = vmatprep.subr.bf16.mxu0 %v599
  %3214 = vmatpush1.bf16.msra.mxu0 %v598
  %3215 = vmatprep.subr.bf16.mxu0 %v601
  %3216 = vmatpush1.bf16.msra.mxu0 %v600
  %3217 = vmatprep.subr.bf16.mxu0 %v603
  %3218 = vmatpush1.bf16.msra.mxu0 %v602
  %3219 = vmatprep.subr.bf16.mxu0 %v605
  %3220 = vmatpush1.bf16.msra.mxu0 %v604
  %3221 = vmatprep.subr.bf16.mxu0 %v607
  %3222 = vmatpush1.bf16.msra.mxu0 %v606
  %3223 = vmatprep.subr.bf16.mxu0 %v609
  %3224 = vmatpush1.bf16.msra.mxu0 %v608
  %3225 = vmatprep.subr.bf16.mxu0 %v611
  %3226 = vmatpush1.bf16.msra.mxu0 %v610
  %3227 = vmatprep.subr.bf16.mxu0 %v613
  %3228 = vmatpush1.bf16.msra.mxu0 %v612
  %3229 = vmatprep.subr.bf16.mxu0 %v615
  %3230 = vmatpush1.bf16.msra.mxu0 %v614
  %3231 = vmatprep.mubr.bf16.mxu0 %v3028
  %3232 = vmatmul.mubr.bf16.gmra.mrb[0].mxu0 %v3027
  %v3233 = vpop.f32.mrb[0].mxu0
  %v3234 = vadd.f32 0.0, %v3233
  %v3235 = vpop.f32.mrb[0].mxu0
  %v3236 = vadd.f32 0.0, %v3235
  %v3237 = vpop.f32.mrb[0].mxu0
  %v3238 = vpop.f32.mrb[0].mxu0
  %3239 = vdwg.mxu0
  %s3240 = smul.u32 7, 2
  %s3241 = smul.addr %s3240, 8
  %s3242 = scalar_lea.vmem [#allocation2], %s3241
  %v3243 = vld [vmem:[%s3242] sm:$0xff]
  %v3244 = vld [vmem:[%s3242 + $0x8] sm:$0xff]
  %3245 = vmatprep.subr.bf16.mxu0 %v823
  %3246 = vmatpush1.bf16.msra.mxu0 %v822
  %3247 = vmatprep.subr.bf16.mxu0 %v825
  %3248 = vmatpush1.bf16.msra.mxu0 %v824
  %3249 = vmatprep.subr.bf16.mxu0 %v827
  %3250 = vmatpush1.bf16.msra.mxu0 %v826
  %3251 = vmatprep.subr.bf16.mxu0 %v829
  %3252 = vmatpush1.bf16.msra.mxu0 %v828
  %3253 = vmatprep.subr.bf16.mxu0 %v831
  %3254 = vmatpush1.bf16.msra.mxu0 %v830
  %3255 = vmatprep.subr.bf16.mxu0 %v833
  %3256 = vmatpush1.bf16.msra.mxu0 %v832
  %3257 = vmatprep.subr.bf16.mxu0 %v835
  %3258 = vmatpush1.bf16.msra.mxu0 %v834
  %3259 = vmatprep.subr.bf16.mxu0 %v837
  %3260 = vmatpush1.bf16.msra.mxu0 %v836
  %3261 = vmatprep.subr.bf16.mxu0 %v839
  %3262 = vmatpush1.bf16.msra.mxu0 %v838
  %3263 = vmatprep.subr.bf16.mxu0 %v841
  %3264 = vmatpush1.bf16.msra.mxu0 %v840
  %3265 = vmatprep.subr.bf16.mxu0 %v843
  %3266 = vmatpush1.bf16.msra.mxu0 %v842
  %3267 = vmatprep.subr.bf16.mxu0 %v845
  %3268 = vmatpush1.bf16.msra.mxu0 %v844
  %3269 = vmatprep.subr.bf16.mxu0 %v847
  %3270 = vmatpush1.bf16.msra.mxu0 %v846
  %3271 = vmatprep.subr.bf16.mxu0 %v849
  %3272 = vmatpush1.bf16.msra.mxu0 %v848
  %3273 = vmatprep.subr.bf16.mxu0 %v851
  %3274 = vmatpush1.bf16.msra.mxu0 %v850
  %3275 = vmatprep.subr.bf16.mxu0 %v853
  %3276 = vmatpush1.bf16.msra.mxu0 %v852
  %3277 = vmatprep.mubr.bf16.mxu0 %v2981
  %3278 = vmatmul.mubr.bf16.gmra.mrb[0].mxu0 %v2980
  %v3279 = vpop.f32.mrb[0].mxu0
  %v3280 = vadd.f32 0.0, %v3279
  %v3281 = vpop.f32.mrb[0].mxu0
  %v3282 = vadd.f32 0.0, %v3281
  %v3283 = vpop.f32.mrb[0].mxu0
  %v3284 = vpop.f32.mrb[0].mxu0
  %3285 = vdwg.mxu0
  %v3286 = vadd.f32 %v3243, %v3280
  %v3287 = vadd.f32 %v3244, %v3282
  %v3288 = vtanh.pop %v3286
  %v3289 = vtanh.pop %v3287
  %v3290 = vpack.c.bf16 %v3288, %v3288
  %v3291 = vpack.c.bf16 %v3289, %v3289
  %3292 = vmatprep.subr.bf16.mxu0 %v1062
  %3293 = vmatpush1.bf16.msra.mxu0 %v1061
  %3294 = vmatprep.subr.bf16.mxu0 %v1064
  %3295 = vmatpush1.bf16.msra.mxu0 %v1063
  %3296 = vmatprep.subr.bf16.mxu0 %v1066
  %3297 = vmatpush1.bf16.msra.mxu0 %v1065
  %3298 = vmatprep.subr.bf16.mxu0 %v1068
  %3299 = vmatpush1.bf16.msra.mxu0 %v1067
  %3300 = vmatprep.subr.bf16.mxu0 %v1070
  %3301 = vmatpush1.bf16.msra.mxu0 %v1069
  %3302 = vmatprep.subr.bf16.mxu0 %v1072
  %3303 = vmatpush1.bf16.msra.mxu0 %v1071
  %3304 = vmatprep.subr.bf16.mxu0 %v1074
  %3305 = vmatpush1.bf16.msra.mxu0 %v1073
  %3306 = vmatprep.subr.bf16.mxu0 %v1076
  %3307 = vmatpush1.bf16.msra.mxu0 %v1075
  %3308 = vmatprep.subr.bf16.mxu0 %v1078
  %3309 = vmatpush1.bf16.msra.mxu0 %v1077
  %3310 = vmatprep.subr.bf16.mxu0 %v1080
  %3311 = vmatpush1.bf16.msra.mxu0 %v1079
  %3312 = vmatprep.subr.bf16.mxu0 %v1082
  %3313 = vmatpush1.bf16.msra.mxu0 %v1081
  %3314 = vmatprep.subr.bf16.mxu0 %v1084
  %3315 = vmatpush1.bf16.msra.mxu0 %v1083
  %3316 = vmatprep.subr.bf16.mxu0 %v1086
  %3317 = vmatpush1.bf16.msra.mxu0 %v1085
  %3318 = vmatprep.subr.bf16.mxu0 %v1088
  %3319 = vmatpush1.bf16.msra.mxu0 %v1087
  %3320 = vmatprep.subr.bf16.mxu0 %v1090
  %3321 = vmatpush1.bf16.msra.mxu0 %v1089
  %3322 = vmatprep.subr.bf16.mxu0 %v1092
  %3323 = vmatpush1.bf16.msra.mxu0 %v1091
  %3324 = vmatprep.mubr.bf16.mxu0 %v3291
  %3325 = vmatmul.mubr.bf16.gmra.mrb[0].mxu0 %v3290
  %v3326 = vpop.f32.mrb[0].mxu0
  %v3327 = vadd.f32 %v3234, %v3326
  %v3328 = vpop.f32.mrb[0].mxu0
  %v3329 = vadd.f32 %v3236, %v3328
  %v3330 = vpop.f32.mrb[0].mxu0
  %v3331 = vpop.f32.mrb[0].mxu0
  %3332 = vdwg.mxu0
  %v3333 = vadd.f32 %v3327, %v449
  %v3334 = vadd.f32 %v3329, %v453
  %v3335 = vtanh.pop %v3333
  %v3336 = vtanh.pop %v3334
  %v3337 = vpack.c.bf16 %v3335, %v3335
  %v3338 = vpack.c.bf16 %v3336, %v3336
  %s3339 = scalar_lea.vmem %s7, 896
  %v3340 = vld [vmem:[%s3339] sm:$0xf]
  %v3341 = vld [vmem:[%s3339 + $0x4] sm:$0xf]
  %v3342 = vld [vmem:[%s3339 + $0x8] sm:$0xf]
  %v3343 = vld [vmem:[%s3339 + $0xc] sm:$0xf]
  %v3344 = vld [vmem:[%s3339 + $0x10] sm:$0xf]
  %v3345 = vld [vmem:[%s3339 + $0x14] sm:$0xf]
  %v3346 = vld [vmem:[%s3339 + $0x18] sm:$0xf]
  %v3347 = vld [vmem:[%s3339 + $0x1c] sm:$0xf]
  %v3348 = vld [vmem:[%s3339 + $0x20] sm:$0xf]
  %v3349 = vld [vmem:[%s3339 + $0x24] sm:$0xf]
  %v3350 = vld [vmem:[%s3339 + $0x28] sm:$0xf]
  %v3351 = vld [vmem:[%s3339 + $0x2c] sm:$0xf]
  %v3352 = vld [vmem:[%s3339 + $0x30] sm:$0xf]
  %v3353 = vld [vmem:[%s3339 + $0x34] sm:$0xf]
  %v3354 = vld [vmem:[%s3339 + $0x38] sm:$0xf]
  %v3355 = vld [vmem:[%s3339 + $0x3c] sm:$0xf]
  %v3356 = vld [vmem:[%s3339 + $0x40] sm:$0xf]
  %v3357 = vld [vmem:[%s3339 + $0x44] sm:$0xf]
  %v3358 = vld [vmem:[%s3339 + $0x48] sm:$0xf]
  %v3359 = vld [vmem:[%s3339 + $0x4c] sm:$0xf]
  %v3360 = vld [vmem:[%s3339 + $0x50] sm:$0xf]
  %v3361 = vld [vmem:[%s3339 + $0x54] sm:$0xf]
  %v3362 = vld [vmem:[%s3339 + $0x58] sm:$0xf]
  %v3363 = vld [vmem:[%s3339 + $0x5c] sm:$0xf]
  %v3364 = vld [vmem:[%s3339 + $0x60] sm:$0xf]
  %v3365 = vld [vmem:[%s3339 + $0x64] sm:$0xf]
  %v3366 = vld [vmem:[%s3339 + $0x68] sm:$0xf]
  %v3367 = vld [vmem:[%s3339 + $0x6c] sm:$0xf]
  %v3368 = vld [vmem:[%s3339 + $0x70] sm:$0xf]
  %v3369 = vld [vmem:[%s3339 + $0x74] sm:$0xf]
  %v3370 = vld [vmem:[%s3339 + $0x78] sm:$0xf]
  %v3371 = vld [vmem:[%s3339 + $0x7c] sm:$0xf]
  %v3404 = vunpack.c.l.b16 %v3340
  %v3405 = vunpack.c.l.b16 %v3341
  %v3406 = vunpack.c.l.b16 %v3342
  %v3407 = vunpack.c.l.b16 %v3343
  %v3408 = vunpack.c.l.b16 %v3344
  %v3409 = vunpack.c.l.b16 %v3345
  %v3410 = vunpack.c.l.b16 %v3346
  %v3411 = vunpack.c.l.b16 %v3347
  %v3412 = vunpack.c.l.b16 %v3348
  %v3413 = vunpack.c.l.b16 %v3349
  %v3414 = vunpack.c.l.b16 %v3350
  %v3415 = vunpack.c.l.b16 %v3351
  %v3416 = vunpack.c.l.b16 %v3352
  %v3417 = vunpack.c.l.b16 %v3353
  %v3418 = vunpack.c.l.b16 %v3354
  %v3419 = vunpack.c.l.b16 %v3355
  %v3420 = vunpack.c.l.b16 %v3356
  %v3421 = vunpack.c.l.b16 %v3357
  %v3422 = vunpack.c.l.b16 %v3358
  %v3423 = vunpack.c.l.b16 %v3359
  %v3424 = vunpack.c.l.b16 %v3360
  %v3425 = vunpack.c.l.b16 %v3361
  %v3426 = vunpack.c.l.b16 %v3362
  %v3427 = vunpack.c.l.b16 %v3363
  %v3428 = vunpack.c.l.b16 %v3364
  %v3429 = vunpack.c.l.b16 %v3365
  %v3430 = vunpack.c.l.b16 %v3366
  %v3431 = vunpack.c.l.b16 %v3367
  %v3432 = vunpack.c.l.b16 %v3368
  %v3433 = vunpack.c.l.b16 %v3369
  %v3434 = vunpack.c.l.b16 %v3370
  %v3435 = vunpack.c.l.b16 %v3371
  %v3436 = vpack.c.b16 %v3405, %v3404
  %v3437 = vpack.c.b16 %v3407, %v3406
  %v3438 = vpack.c.b16 %v3409, %v3408
  %v3439 = vpack.c.b16 %v3411, %v3410
  %v3440 = vpack.c.b16 %v3413, %v3412
  %v3441 = vpack.c.b16 %v3415, %v3414
  %v3442 = vpack.c.b16 %v3417, %v3416
  %v3443 = vpack.c.b16 %v3419, %v3418
  %v3444 = vpack.c.b16 %v3421, %v3420
  %v3445 = vpack.c.b16 %v3423, %v3422
  %v3446 = vpack.c.b16 %v3425, %v3424
  %v3447 = vpack.c.b16 %v3427, %v3426
  %v3448 = vpack.c.b16 %v3429, %v3428
  %v3449 = vpack.c.b16 %v3431, %v3430
  %v3450 = vpack.c.b16 %v3433, %v3432
  %v3451 = vpack.c.b16 %v3435, %v3434
  %3468 = vmatprep.subr.bf16.mxu0 0
  %3469 = vmatpush1.bf16.msra.mxu0 %v3436
  %3470 = vmatprep.subr.bf16.mxu0 0
  %3471 = vmatpush1.bf16.msra.mxu0 %v3437
  %3472 = vmatprep.subr.bf16.mxu0 0
  %3473 = vmatpush1.bf16.msra.mxu0 %v3438
  %3474 = vmatprep.subr.bf16.mxu0 0
  %3475 = vmatpush1.bf16.msra.mxu0 %v3439
  %3476 = vmatprep.subr.bf16.mxu0 0
  %3477 = vmatpush1.bf16.msra.mxu0 %v3440
  %3478 = vmatprep.subr.bf16.mxu0 0
  %3479 = vmatpush1.bf16.msra.mxu0 %v3441
  %3480 = vmatprep.subr.bf16.mxu0 0
  %3481 = vmatpush1.bf16.msra.mxu0 %v3442
  %3482 = vmatprep.subr.bf16.mxu0 0
  %3483 = vmatpush1.bf16.msra.mxu0 %v3443
  %3484 = vmatprep.subr.bf16.mxu0 0
  %3485 = vmatpush1.bf16.msra.mxu0 %v3444
  %3486 = vmatprep.subr.bf16.mxu0 0
  %3487 = vmatpush1.bf16.msra.mxu0 %v3445
  %3488 = vmatprep.subr.bf16.mxu0 0
  %3489 = vmatpush1.bf16.msra.mxu0 %v3446
  %3490 = vmatprep.subr.bf16.mxu0 0
  %3491 = vmatpush1.bf16.msra.mxu0 %v3447
  %3492 = vmatprep.subr.bf16.mxu0 0
  %3493 = vmatpush1.bf16.msra.mxu0 %v3448
  %3494 = vmatprep.subr.bf16.mxu0 0
  %3495 = vmatpush1.bf16.msra.mxu0 %v3449
  %3496 = vmatprep.subr.bf16.mxu0 0
  %3497 = vmatpush1.bf16.msra.mxu0 %v3450
  %3498 = vmatprep.subr.bf16.mxu0 0
  %3499 = vmatpush1.bf16.msra.mxu0 %v3451
  %3500 = vmatprep.mubr.bf16.mxu0 %v3338
  %3501 = vmatmul.mubr.bf16.gmra.mrb[0].mxu0 %v3337
  %v3502 = vpop.f32.mrb[0].mxu0
  %v3503 = vadd.f32 0.0, %v3502
  %v3504 = vpop.f32.mrb[0].mxu0
  %v3505 = vpop.f32.mrb[0].mxu0
  %v3506 = vpop.f32.mrb[0].mxu0
  %3507 = vdwg.mxu0
  %v3508 = vadd.f32 %v3198, %v3503
  %3509 = vmatprep.subr.bf16.mxu0 %v585
  %3510 = vmatpush1.bf16.msra.mxu0 %v584
  %3511 = vmatprep.subr.bf16.mxu0 %v587
  %3512 = vmatpush1.bf16.msra.mxu0 %v586
  %3513 = vmatprep.subr.bf16.mxu0 %v589
  %3514 = vmatpush1.bf16.msra.mxu0 %v588
  %3515 = vmatprep.subr.bf16.mxu0 %v591
  %3516 = vmatpush1.bf16.msra.mxu0 %v590
  %3517 = vmatprep.subr.bf16.mxu0 %v593
  %3518 = vmatpush1.bf16.msra.mxu0 %v592
  %3519 = vmatprep.subr.bf16.mxu0 %v595
  %3520 = vmatpush1.bf16.msra.mxu0 %v594
  %3521 = vmatprep.subr.bf16.mxu0 %v597
  %3522 = vmatpush1.bf16.msra.mxu0 %v596
  %3523 = vmatprep.subr.bf16.mxu0 %v599
  %3524 = vmatpush1.bf16.msra.mxu0 %v598
  %3525 = vmatprep.subr.bf16.mxu0 %v601
  %3526 = vmatpush1.bf16.msra.mxu0 %v600
  %3527 = vmatprep.subr.bf16.mxu0 %v603
  %3528 = vmatpush1.bf16.msra.mxu0 %v602
  %3529 = vmatprep.subr.bf16.mxu0 %v605
  %3530 = vmatpush1.bf16.msra.mxu0 %v604
  %3531 = vmatprep.subr.bf16.mxu0 %v607
  %3532 = vmatpush1.bf16.msra.mxu0 %v606
  %3533 = vmatprep.subr.bf16.mxu0 %v609
  %3534 = vmatpush1.bf16.msra.mxu0 %v608
  %3535 = vmatprep.subr.bf16.mxu0 %v611
  %3536 = vmatpush1.bf16.msra.mxu0 %v610
  %3537 = vmatprep.subr.bf16.mxu0 %v613
  %3538 = vmatpush1.bf16.msra.mxu0 %v612
  %3539 = vmatprep.subr.bf16.mxu0 %v615
  %3540 = vmatpush1.bf16.msra.mxu0 %v614
  %3541 = vmatprep.mubr.bf16.mxu0 %v3338
  %3542 = vmatmul.mubr.bf16.gmra.mrb[0].mxu0 %v3337
  %v3543 = vpop.f32.mrb[0].mxu0
  %v3544 = vadd.f32 0.0, %v3543
  %v3545 = vpop.f32.mrb[0].mxu0
  %v3546 = vadd.f32 0.0, %v3545
  %v3547 = vpop.f32.mrb[0].mxu0
  %v3548 = vpop.f32.mrb[0].mxu0
  %3549 = vdwg.mxu0
  %s3550 = smul.u32 8, 2
  %s3551 = smul.addr %s3550, 8
  %s3552 = scalar_lea.vmem [#allocation2], %s3551
  %v3553 = vld [vmem:[%s3552] sm:$0xff]
  %v3554 = vld [vmem:[%s3552 + $0x8] sm:$0xff]
  %3555 = vmatprep.subr.bf16.mxu0 %v823
  %3556 = vmatpush1.bf16.msra.mxu0 %v822
  %3557 = vmatprep.subr.bf16.mxu0 %v825
  %3558 = vmatpush1.bf16.msra.mxu0 %v824
  %3559 = vmatprep.subr.bf16.mxu0 %v827
  %3560 = vmatpush1.bf16.msra.mxu0 %v826
  %3561 = vmatprep.subr.bf16.mxu0 %v829
  %3562 = vmatpush1.bf16.msra.mxu0 %v828
  %3563 = vmatprep.subr.bf16.mxu0 %v831
  %3564 = vmatpush1.bf16.msra.mxu0 %v830
  %3565 = vmatprep.subr.bf16.mxu0 %v833
  %3566 = vmatpush1.bf16.msra.mxu0 %v832
  %3567 = vmatprep.subr.bf16.mxu0 %v835
  %3568 = vmatpush1.bf16.msra.mxu0 %v834
  %3569 = vmatprep.subr.bf16.mxu0 %v837
  %3570 = vmatpush1.bf16.msra.mxu0 %v836
  %3571 = vmatprep.subr.bf16.mxu0 %v839
  %3572 = vmatpush1.bf16.msra.mxu0 %v838
  %3573 = vmatprep.subr.bf16.mxu0 %v841
  %3574 = vmatpush1.bf16.msra.mxu0 %v840
  %3575 = vmatprep.subr.bf16.mxu0 %v843
  %3576 = vmatpush1.bf16.msra.mxu0 %v842
  %3577 = vmatprep.subr.bf16.mxu0 %v845
  %3578 = vmatpush1.bf16.msra.mxu0 %v844
  %3579 = vmatprep.subr.bf16.mxu0 %v847
  %3580 = vmatpush1.bf16.msra.mxu0 %v846
  %3581 = vmatprep.subr.bf16.mxu0 %v849
  %3582 = vmatpush1.bf16.msra.mxu0 %v848
  %3583 = vmatprep.subr.bf16.mxu0 %v851
  %3584 = vmatpush1.bf16.msra.mxu0 %v850
  %3585 = vmatprep.subr.bf16.mxu0 %v853
  %3586 = vmatpush1.bf16.msra.mxu0 %v852
  %3587 = vmatprep.mubr.bf16.mxu0 %v3291
  %3588 = vmatmul.mubr.bf16.gmra.mrb[0].mxu0 %v3290
  %v3589 = vpop.f32.mrb[0].mxu0
  %v3590 = vadd.f32 0.0, %v3589
  %v3591 = vpop.f32.mrb[0].mxu0
  %v3592 = vadd.f32 0.0, %v3591
  %v3593 = vpop.f32.mrb[0].mxu0
  %v3594 = vpop.f32.mrb[0].mxu0
  %3595 = vdwg.mxu0
  %v3596 = vadd.f32 %v3553, %v3590
  %v3597 = vadd.f32 %v3554, %v3592
  %v3598 = vtanh.pop %v3596
  %v3599 = vtanh.pop %v3597
  %v3600 = vpack.c.bf16 %v3598, %v3598
  %v3601 = vpack.c.bf16 %v3599, %v3599
  %3602 = vmatprep.subr.bf16.mxu0 %v1062
  %3603 = vmatpush1.bf16.msra.mxu0 %v1061
  %3604 = vmatprep.subr.bf16.mxu0 %v1064
  %3605 = vmatpush1.bf16.msra.mxu0 %v1063
  %3606 = vmatprep.subr.bf16.mxu0 %v1066
  %3607 = vmatpush1.bf16.msra.mxu0 %v1065
  %3608 = vmatprep.subr.bf16.mxu0 %v1068
  %3609 = vmatpush1.bf16.msra.mxu0 %v1067
  %3610 = vmatprep.subr.bf16.mxu0 %v1070
  %3611 = vmatpush1.bf16.msra.mxu0 %v1069
  %3612 = vmatprep.subr.bf16.mxu0 %v1072
  %3613 = vmatpush1.bf16.msra.mxu0 %v1071
  %3614 = vmatprep.subr.bf16.mxu0 %v1074
  %3615 = vmatpush1.bf16.msra.mxu0 %v1073
  %3616 = vmatprep.subr.bf16.mxu0 %v1076
  %3617 = vmatpush1.bf16.msra.mxu0 %v1075
  %3618 = vmatprep.subr.bf16.mxu0 %v1078
  %3619 = vmatpush1.bf16.msra.mxu0 %v1077
  %3620 = vmatprep.subr.bf16.mxu0 %v1080
  %3621 = vmatpush1.bf16.msra.mxu0 %v1079
  %3622 = vmatprep.subr.bf16.mxu0 %v1082
  %3623 = vmatpush1.bf16.msra.mxu0 %v1081
  %3624 = vmatprep.subr.bf16.mxu0 %v1084
  %3625 = vmatpush1.bf16.msra.mxu0 %v1083
  %3626 = vmatprep.subr.bf16.mxu0 %v1086
  %3627 = vmatpush1.bf16.msra.mxu0 %v1085
  %3628 = vmatprep.subr.bf16.mxu0 %v1088
  %3629 = vmatpush1.bf16.msra.mxu0 %v1087
  %3630 = vmatprep.subr.bf16.mxu0 %v1090
  %3631 = vmatpush1.bf16.msra.mxu0 %v1089
  %3632 = vmatprep.subr.bf16.mxu0 %v1092
  %3633 = vmatpush1.bf16.msra.mxu0 %v1091
  %3634 = vmatprep.mubr.bf16.mxu0 %v3601
  %3635 = vmatmul.mubr.bf16.gmra.mrb[0].mxu0 %v3600
  %v3636 = vpop.f32.mrb[0].mxu0
  %v3637 = vadd.f32 %v3544, %v3636
  %v3638 = vpop.f32.mrb[0].mxu0
  %v3639 = vadd.f32 %v3546, %v3638
  %v3640 = vpop.f32.mrb[0].mxu0
  %v3641 = vpop.f32.mrb[0].mxu0
  %3642 = vdwg.mxu0
  %v3643 = vadd.f32 %v3637, %v449
  %v3644 = vadd.f32 %v3639, %v453
  %v3645 = vtanh.pop %v3643
  %v3646 = vtanh.pop %v3644
  %v3647 = vpack.c.bf16 %v3645, %v3645
  %v3648 = vpack.c.bf16 %v3646, %v3646
  %s3649 = scalar_lea.vmem %s7, 1024
  %v3650 = vld [vmem:[%s3649] sm:$0xf]
  %v3651 = vld [vmem:[%s3649 + $0x4] sm:$0xf]
  %v3652 = vld [vmem:[%s3649 + $0x8] sm:$0xf]
  %v3653 = vld [vmem:[%s3649 + $0xc] sm:$0xf]
  %v3654 = vld [vmem:[%s3649 + $0x10] sm:$0xf]
  %v3655 = vld [vmem:[%s3649 + $0x14] sm:$0xf]
  %v3656 = vld [vmem:[%s3649 + $0x18] sm:$0xf]
  %v3657 = vld [vmem:[%s3649 + $0x1c] sm:$0xf]
  %v3658 = vld [vmem:[%s3649 + $0x20] sm:$0xf]
  %v3659 = vld [vmem:[%s3649 + $0x24] sm:$0xf]
  %v3660 = vld [vmem:[%s3649 + $0x28] sm:$0xf]
  %v3661 = vld [vmem:[%s3649 + $0x2c] sm:$0xf]
  %v3662 = vld [vmem:[%s3649 + $0x30] sm:$0xf]
  %v3663 = vld [vmem:[%s3649 + $0x34] sm:$0xf]
  %v3664 = vld [vmem:[%s3649 + $0x38] sm:$0xf]
  %v3665 = vld [vmem:[%s3649 + $0x3c] sm:$0xf]
  %v3666 = vld [vmem:[%s3649 + $0x40] sm:$0xf]
  %v3667 = vld [vmem:[%s3649 + $0x44] sm:$0xf]
  %v3668 = vld [vmem:[%s3649 + $0x48] sm:$0xf]
  %v3669 = vld [vmem:[%s3649 + $0x4c] sm:$0xf]
  %v3670 = vld [vmem:[%s3649 + $0x50] sm:$0xf]
  %v3671 = vld [vmem:[%s3649 + $0x54] sm:$0xf]
  %v3672 = vld [vmem:[%s3649 + $0x58] sm:$0xf]
  %v3673 = vld [vmem:[%s3649 + $0x5c] sm:$0xf]
  %v3674 = vld [vmem:[%s3649 + $0x60] sm:$0xf]
  %v3675 = vld [vmem:[%s3649 + $0x64] sm:$0xf]
  %v3676 = vld [vmem:[%s3649 + $0x68] sm:$0xf]
  %v3677 = vld [vmem:[%s3649 + $0x6c] sm:$0xf]
  %v3678 = vld [vmem:[%s3649 + $0x70] sm:$0xf]
  %v3679 = vld [vmem:[%s3649 + $0x74] sm:$0xf]
  %v3680 = vld [vmem:[%s3649 + $0x78] sm:$0xf]
  %v3681 = vld [vmem:[%s3649 + $0x7c] sm:$0xf]
  %v3714 = vunpack.c.l.b16 %v3650
  %v3715 = vunpack.c.l.b16 %v3651
  %v3716 = vunpack.c.l.b16 %v3652
  %v3717 = vunpack.c.l.b16 %v3653
  %v3718 = vunpack.c.l.b16 %v3654
  %v3719 = vunpack.c.l.b16 %v3655
  %v3720 = vunpack.c.l.b16 %v3656
  %v3721 = vunpack.c.l.b16 %v3657
  %v3722 = vunpack.c.l.b16 %v3658
  %v3723 = vunpack.c.l.b16 %v3659
  %v3724 = vunpack.c.l.b16 %v3660
  %v3725 = vunpack.c.l.b16 %v3661
  %v3726 = vunpack.c.l.b16 %v3662
  %v3727 = vunpack.c.l.b16 %v3663
  %v3728 = vunpack.c.l.b16 %v3664
  %v3729 = vunpack.c.l.b16 %v3665
  %v3730 = vunpack.c.l.b16 %v3666
  %v3731 = vunpack.c.l.b16 %v3667
  %v3732 = vunpack.c.l.b16 %v3668
  %v3733 = vunpack.c.l.b16 %v3669
  %v3734 = vunpack.c.l.b16 %v3670
  %v3735 = vunpack.c.l.b16 %v3671
  %v3736 = vunpack.c.l.b16 %v3672
  %v3737 = vunpack.c.l.b16 %v3673
  %v3738 = vunpack.c.l.b16 %v3674
  %v3739 = vunpack.c.l.b16 %v3675
  %v3740 = vunpack.c.l.b16 %v3676
  %v3741 = vunpack.c.l.b16 %v3677
  %v3742 = vunpack.c.l.b16 %v3678
  %v3743 = vunpack.c.l.b16 %v3679
  %v3744 = vunpack.c.l.b16 %v3680
  %v3745 = vunpack.c.l.b16 %v3681
  %v3746 = vpack.c.b16 %v3715, %v3714
  %v3747 = vpack.c.b16 %v3717, %v3716
  %v3748 = vpack.c.b16 %v3719, %v3718
  %v3749 = vpack.c.b16 %v3721, %v3720
  %v3750 = vpack.c.b16 %v3723, %v3722
  %v3751 = vpack.c.b16 %v3725, %v3724
  %v3752 = vpack.c.b16 %v3727, %v3726
  %v3753 = vpack.c.b16 %v3729, %v3728
  %v3754 = vpack.c.b16 %v3731, %v3730
  %v3755 = vpack.c.b16 %v3733, %v3732
  %v3756 = vpack.c.b16 %v3735, %v3734
  %v3757 = vpack.c.b16 %v3737, %v3736
  %v3758 = vpack.c.b16 %v3739, %v3738
  %v3759 = vpack.c.b16 %v3741, %v3740
  %v3760 = vpack.c.b16 %v3743, %v3742
  %v3761 = vpack.c.b16 %v3745, %v3744
  %3778 = vmatprep.subr.bf16.mxu0 0
  %3779 = vmatpush1.bf16.msra.mxu0 %v3746
  %3780 = vmatprep.subr.bf16.mxu0 0
  %3781 = vmatpush1.bf16.msra.mxu0 %v3747
  %3782 = vmatprep.subr.bf16.mxu0 0
  %3783 = vmatpush1.bf16.msra.mxu0 %v3748
  %3784 = vmatprep.subr.bf16.mxu0 0
  %3785 = vmatpush1.bf16.msra.mxu0 %v3749
  %3786 = vmatprep.subr.bf16.mxu0 0
  %3787 = vmatpush1.bf16.msra.mxu0 %v3750
  %3788 = vmatprep.subr.bf16.mxu0 0
  %3789 = vmatpush1.bf16.msra.mxu0 %v3751
  %3790 = vmatprep.subr.bf16.mxu0 0
  %3791 = vmatpush1.bf16.msra.mxu0 %v3752
  %3792 = vmatprep.subr.bf16.mxu0 0
  %3793 = vmatpush1.bf16.msra.mxu0 %v3753
  %3794 = vmatprep.subr.bf16.mxu0 0
  %3795 = vmatpush1.bf16.msra.mxu0 %v3754
  %3796 = vmatprep.subr.bf16.mxu0 0
  %3797 = vmatpush1.bf16.msra.mxu0 %v3755
  %3798 = vmatprep.subr.bf16.mxu0 0
  %3799 = vmatpush1.bf16.msra.mxu0 %v3756
  %3800 = vmatprep.subr.bf16.mxu0 0
  %3801 = vmatpush1.bf16.msra.mxu0 %v3757
  %3802 = vmatprep.subr.bf16.mxu0 0
  %3803 = vmatpush1.bf16.msra.mxu0 %v3758
  %3804 = vmatprep.subr.bf16.mxu0 0
  %3805 = vmatpush1.bf16.msra.mxu0 %v3759
  %3806 = vmatprep.subr.bf16.mxu0 0
  %3807 = vmatpush1.bf16.msra.mxu0 %v3760
  %3808 = vmatprep.subr.bf16.mxu0 0
  %3809 = vmatpush1.bf16.msra.mxu0 %v3761
  %3810 = vmatprep.mubr.bf16.mxu0 %v3648
  %3811 = vmatmul.mubr.bf16.gmra.mrb[0].mxu0 %v3647
  %v3812 = vpop.f32.mrb[0].mxu0
  %v3813 = vadd.f32 0.0, %v3812
  %v3814 = vpop.f32.mrb[0].mxu0
  %v3815 = vpop.f32.mrb[0].mxu0
  %v3816 = vpop.f32.mrb[0].mxu0
  %3817 = vdwg.mxu0
  %v3818 = vadd.f32 %v3508, %v3813
  %3819 = vmatprep.subr.bf16.mxu0 %v585
  %3820 = vmatpush1.bf16.msra.mxu0 %v584
  %3821 = vmatprep.subr.bf16.mxu0 %v587
  %3822 = vmatpush1.bf16.msra.mxu0 %v586
  %3823 = vmatprep.subr.bf16.mxu0 %v589
  %3824 = vmatpush1.bf16.msra.mxu0 %v588
  %3825 = vmatprep.subr.bf16.mxu0 %v591
  %3826 = vmatpush1.bf16.msra.mxu0 %v590
  %3827 = vmatprep.subr.bf16.mxu0 %v593
  %3828 = vmatpush1.bf16.msra.mxu0 %v592
  %3829 = vmatprep.subr.bf16.mxu0 %v595
  %3830 = vmatpush1.bf16.msra.mxu0 %v594
  %3831 = vmatprep.subr.bf16.mxu0 %v597
  %3832 = vmatpush1.bf16.msra.mxu0 %v596
  %3833 = vmatprep.subr.bf16.mxu0 %v599
  %3834 = vmatpush1.bf16.msra.mxu0 %v598
  %3835 = vmatprep.subr.bf16.mxu0 %v601
  %3836 = vmatpush1.bf16.msra.mxu0 %v600
  %3837 = vmatprep.subr.bf16.mxu0 %v603
  %3838 = vmatpush1.bf16.msra.mxu0 %v602
  %3839 = vmatprep.subr.bf16.mxu0 %v605
  %3840 = vmatpush1.bf16.msra.mxu0 %v604
  %3841 = vmatprep.subr.bf16.mxu0 %v607
  %3842 = vmatpush1.bf16.msra.mxu0 %v606
  %3843 = vmatprep.subr.bf16.mxu0 %v609
  %3844 = vmatpush1.bf16.msra.mxu0 %v608
  %3845 = vmatprep.subr.bf16.mxu0 %v611
  %3846 = vmatpush1.bf16.msra.mxu0 %v610
  %3847 = vmatprep.subr.bf16.mxu0 %v613
  %3848 = vmatpush1.bf16.msra.mxu0 %v612
  %3849 = vmatprep.subr.bf16.mxu0 %v615
  %3850 = vmatpush1.bf16.msra.mxu0 %v614
  %3851 = vmatprep.mubr.bf16.mxu0 %v3648
  %3852 = vmatmul.mubr.bf16.gmra.mrb[0].mxu0 %v3647
  %v3853 = vpop.f32.mrb[0].mxu0
  %v3854 = vadd.f32 0.0, %v3853
  %v3855 = vpop.f32.mrb[0].mxu0
  %v3856 = vadd.f32 0.0, %v3855
  %v3857 = vpop.f32.mrb[0].mxu0
  %v3858 = vpop.f32.mrb[0].mxu0
  %3859 = vdwg.mxu0
  %s3860 = smul.u32 9, 2
  %s3861 = smul.addr %s3860, 8
  %s3862 = scalar_lea.vmem [#allocation2], %s3861
  %v3863 = vld [vmem:[%s3862] sm:$0xff]
  %v3864 = vld [vmem:[%s3862 + $0x8] sm:$0xff]
  %3865 = vmatprep.subr.bf16.mxu0 %v823
  %3866 = vmatpush1.bf16.msra.mxu0 %v822
  %3867 = vmatprep.subr.bf16.mxu0 %v825
  %3868 = vmatpush1.bf16.msra.mxu0 %v824
  %3869 = vmatprep.subr.bf16.mxu0 %v827
  %3870 = vmatpush1.bf16.msra.mxu0 %v826
  %3871 = vmatprep.subr.bf16.mxu0 %v829
  %3872 = vmatpush1.bf16.msra.mxu0 %v828
  %3873 = vmatprep.subr.bf16.mxu0 %v831
  %3874 = vmatpush1.bf16.msra.mxu0 %v830
  %3875 = vmatprep.subr.bf16.mxu0 %v833
  %3876 = vmatpush1.bf16.msra.mxu0 %v832
  %3877 = vmatprep.subr.bf16.mxu0 %v835
  %3878 = vmatpush1.bf16.msra.mxu0 %v834
  %3879 = vmatprep.subr.bf16.mxu0 %v837
  %3880 = vmatpush1.bf16.msra.mxu0 %v836
  %3881 = vmatprep.subr.bf16.mxu0 %v839
  %3882 = vmatpush1.bf16.msra.mxu0 %v838
  %3883 = vmatprep.subr.bf16.mxu0 %v841
  %3884 = vmatpush1.bf16.msra.mxu0 %v840
  %3885 = vmatprep.subr.bf16.mxu0 %v843
  %3886 = vmatpush1.bf16.msra.mxu0 %v842
  %3887 = vmatprep.subr.bf16.mxu0 %v845
  %3888 = vmatpush1.bf16.msra.mxu0 %v844
  %3889 = vmatprep.subr.bf16.mxu0 %v847
  %3890 = vmatpush1.bf16.msra.mxu0 %v846
  %3891 = vmatprep.subr.bf16.mxu0 %v849
  %3892 = vmatpush1.bf16.msra.mxu0 %v848
  %3893 = vmatprep.subr.bf16.mxu0 %v851
  %3894 = vmatpush1.bf16.msra.mxu0 %v850
  %3895 = vmatprep.subr.bf16.mxu0 %v853
  %3896 = vmatpush1.bf16.msra.mxu0 %v852
  %3897 = vmatprep.mubr.bf16.mxu0 %v3601
  %3898 = vmatmul.mubr.bf16.gmra.mrb[0].mxu0 %v3600
  %v3899 = vpop.f32.mrb[0].mxu0
  %v3900 = vadd.f32 0.0, %v3899
  %v3901 = vpop.f32.mrb[0].mxu0
  %v3902 = vadd.f32 0.0, %v3901
  %v3903 = vpop.f32.mrb[0].mxu0
  %v3904 = vpop.f32.mrb[0].mxu0
  %3905 = vdwg.mxu0
  %v3906 = vadd.f32 %v3863, %v3900
  %v3907 = vadd.f32 %v3864, %v3902
  %v3908 = vtanh.pop %v3906
  %v3909 = vtanh.pop %v3907
  %v3910 = vpack.c.bf16 %v3908, %v3908
  %v3911 = vpack.c.bf16 %v3909, %v3909
  %3912 = vmatprep.subr.bf16.mxu0 %v1062
  %3913 = vmatpush1.bf16.msra.mxu0 %v1061
  %3914 = vmatprep.subr.bf16.mxu0 %v1064
  %3915 = vmatpush1.bf16.msra.mxu0 %v1063
  %3916 = vmatprep.subr.bf16.mxu0 %v1066
  %3917 = vmatpush1.bf16.msra.mxu0 %v1065
  %3918 = vmatprep.subr.bf16.mxu0 %v1068
  %3919 = vmatpush1.bf16.msra.mxu0 %v1067
  %3920 = vmatprep.subr.bf16.mxu0 %v1070
  %3921 = vmatpush1.bf16.msra.mxu0 %v1069
  %3922 = vmatprep.subr.bf16.mxu0 %v1072
  %3923 = vmatpush1.bf16.msra.mxu0 %v1071
  %3924 = vmatprep.subr.bf16.mxu0 %v1074
  %3925 = vmatpush1.bf16.msra.mxu0 %v1073
  %3926 = vmatprep.subr.bf16.mxu0 %v1076
  %3927 = vmatpush1.bf16.msra.mxu0 %v1075
  %3928 = vmatprep.subr.bf16.mxu0 %v1078
  %3929 = vmatpush1.bf16.msra.mxu0 %v1077
  %3930 = vmatprep.subr.bf16.mxu0 %v1080
  %3931 = vmatpush1.bf16.msra.mxu0 %v1079
  %3932 = vmatprep.subr.bf16.mxu0 %v1082
  %3933 = vmatpush1.bf16.msra.mxu0 %v1081
  %3934 = vmatprep.subr.bf16.mxu0 %v1084
  %3935 = vmatpush1.bf16.msra.mxu0 %v1083
  %3936 = vmatprep.subr.bf16.mxu0 %v1086
  %3937 = vmatpush1.bf16.msra.mxu0 %v1085
  %3938 = vmatprep.subr.bf16.mxu0 %v1088
  %3939 = vmatpush1.bf16.msra.mxu0 %v1087
  %3940 = vmatprep.subr.bf16.mxu0 %v1090
  %3941 = vmatpush1.bf16.msra.mxu0 %v1089
  %3942 = vmatprep.subr.bf16.mxu0 %v1092
  %3943 = vmatpush1.bf16.msra.mxu0 %v1091
  %3944 = vmatprep.mubr.bf16.mxu0 %v3911
  %3945 = vmatmul.mubr.bf16.gmra.mrb[0].mxu0 %v3910
  %v3946 = vpop.f32.mrb[0].mxu0
  %v3947 = vadd.f32 %v3854, %v3946
  %v3948 = vpop.f32.mrb[0].mxu0
  %v3949 = vadd.f32 %v3856, %v3948
  %v3950 = vpop.f32.mrb[0].mxu0
  %v3951 = vpop.f32.mrb[0].mxu0
  %3952 = vdwg.mxu0
  %v3953 = vadd.f32 %v3947, %v449
  %v3954 = vadd.f32 %v3949, %v453
  %v3955 = vtanh.pop %v3953
  %v3956 = vtanh.pop %v3954
  %v3957 = vpack.c.bf16 %v3955, %v3955
  %v3958 = vpack.c.bf16 %v3956, %v3956
  %s3959 = scalar_lea.vmem %s7, 1152
  %v3960 = vld [vmem:[%s3959] sm:$0xf]
  %v3961 = vld [vmem:[%s3959 + $0x4] sm:$0xf]
  %v3962 = vld [vmem:[%s3959 + $0x8] sm:$0xf]
  %v3963 = vld [vmem:[%s3959 + $0xc] sm:$0xf]
  %v3964 = vld [vmem:[%s3959 + $0x10] sm:$0xf]
  %v3965 = vld [vmem:[%s3959 + $0x14] sm:$0xf]
  %v3966 = vld [vmem:[%s3959 + $0x18] sm:$0xf]
  %v3967 = vld [vmem:[%s3959 + $0x1c] sm:$0xf]
  %v3968 = vld [vmem:[%s3959 + $0x20] sm:$0xf]
  %v3969 = vld [vmem:[%s3959 + $0x24] sm:$0xf]
  %v3970 = vld [vmem:[%s3959 + $0x28] sm:$0xf]
  %v3971 = vld [vmem:[%s3959 + $0x2c] sm:$0xf]
  %v3972 = vld [vmem:[%s3959 + $0x30] sm:$0xf]
  %v3973 = vld [vmem:[%s3959 + $0x34] sm:$0xf]
  %v3974 = vld [vmem:[%s3959 + $0x38] sm:$0xf]
  %v3975 = vld [vmem:[%s3959 + $0x3c] sm:$0xf]
  %v3976 = vld [vmem:[%s3959 + $0x40] sm:$0xf]
  %v3977 = vld [vmem:[%s3959 + $0x44] sm:$0xf]
  %v3978 = vld [vmem:[%s3959 + $0x48] sm:$0xf]
  %v3979 = vld [vmem:[%s3959 + $0x4c] sm:$0xf]
  %v3980 = vld [vmem:[%s3959 + $0x50] sm:$0xf]
  %v3981 = vld [vmem:[%s3959 + $0x54] sm:$0xf]
  %v3982 = vld [vmem:[%s3959 + $0x58] sm:$0xf]
  %v3983 = vld [vmem:[%s3959 + $0x5c] sm:$0xf]
  %v3984 = vld [vmem:[%s3959 + $0x60] sm:$0xf]
  %v3985 = vld [vmem:[%s3959 + $0x64] sm:$0xf]
  %v3986 = vld [vmem:[%s3959 + $0x68] sm:$0xf]
  %v3987 = vld [vmem:[%s3959 + $0x6c] sm:$0xf]
  %v3988 = vld [vmem:[%s3959 + $0x70] sm:$0xf]
  %v3989 = vld [vmem:[%s3959 + $0x74] sm:$0xf]
  %v3990 = vld [vmem:[%s3959 + $0x78] sm:$0xf]
  %v3991 = vld [vmem:[%s3959 + $0x7c] sm:$0xf]
  %v4024 = vunpack.c.l.b16 %v3960
  %v4025 = vunpack.c.l.b16 %v3961
  %v4026 = vunpack.c.l.b16 %v3962
  %v4027 = vunpack.c.l.b16 %v3963
  %v4028 = vunpack.c.l.b16 %v3964
  %v4029 = vunpack.c.l.b16 %v3965
  %v4030 = vunpack.c.l.b16 %v3966
  %v4031 = vunpack.c.l.b16 %v3967
  %v4032 = vunpack.c.l.b16 %v3968
  %v4033 = vunpack.c.l.b16 %v3969
  %v4034 = vunpack.c.l.b16 %v3970
  %v4035 = vunpack.c.l.b16 %v3971
  %v4036 = vunpack.c.l.b16 %v3972
  %v4037 = vunpack.c.l.b16 %v3973
  %v4038 = vunpack.c.l.b16 %v3974
  %v4039 = vunpack.c.l.b16 %v3975
  %v4040 = vunpack.c.l.b16 %v3976
  %v4041 = vunpack.c.l.b16 %v3977
  %v4042 = vunpack.c.l.b16 %v3978
  %v4043 = vunpack.c.l.b16 %v3979
  %v4044 = vunpack.c.l.b16 %v3980
  %v4045 = vunpack.c.l.b16 %v3981
  %v4046 = vunpack.c.l.b16 %v3982
  %v4047 = vunpack.c.l.b16 %v3983
  %v4048 = vunpack.c.l.b16 %v3984
  %v4049 = vunpack.c.l.b16 %v3985
  %v4050 = vunpack.c.l.b16 %v3986
  %v4051 = vunpack.c.l.b16 %v3987
  %v4052 = vunpack.c.l.b16 %v3988
  %v4053 = vunpack.c.l.b16 %v3989
  %v4054 = vunpack.c.l.b16 %v3990
  %v4055 = vunpack.c.l.b16 %v3991
  %v4056 = vpack.c.b16 %v4025, %v4024
  %v4057 = vpack.c.b16 %v4027, %v4026
  %v4058 = vpack.c.b16 %v4029, %v4028
  %v4059 = vpack.c.b16 %v4031, %v4030
  %v4060 = vpack.c.b16 %v4033, %v4032
  %v4061 = vpack.c.b16 %v4035, %v4034
  %v4062 = vpack.c.b16 %v4037, %v4036
  %v4063 = vpack.c.b16 %v4039, %v4038
  %v4064 = vpack.c.b16 %v4041, %v4040
  %v4065 = vpack.c.b16 %v4043, %v4042
  %v4066 = vpack.c.b16 %v4045, %v4044
  %v4067 = vpack.c.b16 %v4047, %v4046
  %v4068 = vpack.c.b16 %v4049, %v4048
  %v4069 = vpack.c.b16 %v4051, %v4050
  %v4070 = vpack.c.b16 %v4053, %v4052
  %v4071 = vpack.c.b16 %v4055, %v4054
  %4088 = vmatprep.subr.bf16.mxu0 0
  %4089 = vmatpush1.bf16.msra.mxu0 %v4056
  %4090 = vmatprep.subr.bf16.mxu0 0
  %4091 = vmatpush1.bf16.msra.mxu0 %v4057
  %4092 = vmatprep.subr.bf16.mxu0 0
  %4093 = vmatpush1.bf16.msra.mxu0 %v4058
  %4094 = vmatprep.subr.bf16.mxu0 0
  %4095 = vmatpush1.bf16.msra.mxu0 %v4059
  %4096 = vmatprep.subr.bf16.mxu0 0
  %4097 = vmatpush1.bf16.msra.mxu0 %v4060
  %4098 = vmatprep.subr.bf16.mxu0 0
  %4099 = vmatpush1.bf16.msra.mxu0 %v4061
  %4100 = vmatprep.subr.bf16.mxu0 0
  %4101 = vmatpush1.bf16.msra.mxu0 %v4062
  %4102 = vmatprep.subr.bf16.mxu0 0
  %4103 = vmatpush1.bf16.msra.mxu0 %v4063
  %4104 = vmatprep.subr.bf16.mxu0 0
  %4105 = vmatpush1.bf16.msra.mxu0 %v4064
  %4106 = vmatprep.subr.bf16.mxu0 0
  %4107 = vmatpush1.bf16.msra.mxu0 %v4065
  %4108 = vmatprep.subr.bf16.mxu0 0
  %4109 = vmatpush1.bf16.msra.mxu0 %v4066
  %4110 = vmatprep.subr.bf16.mxu0 0
  %4111 = vmatpush1.bf16.msra.mxu0 %v4067
  %4112 = vmatprep.subr.bf16.mxu0 0
  %4113 = vmatpush1.bf16.msra.mxu0 %v4068
  %4114 = vmatprep.subr.bf16.mxu0 0
  %4115 = vmatpush1.bf16.msra.mxu0 %v4069
  %4116 = vmatprep.subr.bf16.mxu0 0
  %4117 = vmatpush1.bf16.msra.mxu0 %v4070
  %4118 = vmatprep.subr.bf16.mxu0 0
  %4119 = vmatpush1.bf16.msra.mxu0 %v4071
  %4120 = vmatprep.mubr.bf16.mxu0 %v3958
  %4121 = vmatmul.mubr.bf16.gmra.mrb[0].mxu0 %v3957
  %v4122 = vpop.f32.mrb[0].mxu0
  %v4123 = vadd.f32 0.0, %v4122
  %v4124 = vpop.f32.mrb[0].mxu0
  %v4125 = vpop.f32.mrb[0].mxu0
  %v4126 = vpop.f32.mrb[0].mxu0
  %4127 = vdwg.mxu0
  %v4128 = vadd.f32 %v3818, %v4123
  %4129 = vmatprep.subr.bf16.mxu0 %v585
  %4130 = vmatpush1.bf16.msra.mxu0 %v584
  %4131 = vmatprep.subr.bf16.mxu0 %v587
  %4132 = vmatpush1.bf16.msra.mxu0 %v586
  %4133 = vmatprep.subr.bf16.mxu0 %v589
  %4134 = vmatpush1.bf16.msra.mxu0 %v588
  %4135 = vmatprep.subr.bf16.mxu0 %v591
  %4136 = vmatpush1.bf16.msra.mxu0 %v590
  %4137 = vmatprep.subr.bf16.mxu0 %v593
  %4138 = vmatpush1.bf16.msra.mxu0 %v592
  %4139 = vmatprep.subr.bf16.mxu0 %v595
  %4140 = vmatpush1.bf16.msra.mxu0 %v594
  %4141 = vmatprep.subr.bf16.mxu0 %v597
  %4142 = vmatpush1.bf16.msra.mxu0 %v596
  %4143 = vmatprep.subr.bf16.mxu0 %v599
  %4144 = vmatpush1.bf16.msra.mxu0 %v598
  %4145 = vmatprep.subr.bf16.mxu0 %v601
  %4146 = vmatpush1.bf16.msra.mxu0 %v600
  %4147 = vmatprep.subr.bf16.mxu0 %v603
  %4148 = vmatpush1.bf16.msra.mxu0 %v602
  %4149 = vmatprep.subr.bf16.mxu0 %v605
  %4150 = vmatpush1.bf16.msra.mxu0 %v604
  %4151 = vmatprep.subr.bf16.mxu0 %v607
  %4152 = vmatpush1.bf16.msra.mxu0 %v606
  %4153 = vmatprep.subr.bf16.mxu0 %v609
  %4154 = vmatpush1.bf16.msra.mxu0 %v608
  %4155 = vmatprep.subr.bf16.mxu0 %v611
  %4156 = vmatpush1.bf16.msra.mxu0 %v610
  %4157 = vmatprep.subr.bf16.mxu0 %v613
  %4158 = vmatpush1.bf16.msra.mxu0 %v612
  %4159 = vmatprep.subr.bf16.mxu0 %v615
  %4160 = vmatpush1.bf16.msra.mxu0 %v614
  %4161 = vmatprep.mubr.bf16.mxu0 %v3958
  %4162 = vmatmul.mubr.bf16.gmra.mrb[0].mxu0 %v3957
  %v4163 = vpop.f32.mrb[0].mxu0
  %v4164 = vadd.f32 0.0, %v4163
  %v4165 = vpop.f32.mrb[0].mxu0
  %v4166 = vadd.f32 0.0, %v4165
  %v4167 = vpop.f32.mrb[0].mxu0
  %v4168 = vpop.f32.mrb[0].mxu0
  %4169 = vdwg.mxu0
  %s4170 = smul.u32 10, 2
  %s4171 = smul.addr %s4170, 8
  %s4172 = scalar_lea.vmem [#allocation2], %s4171
  %v4173 = vld [vmem:[%s4172] sm:$0xff]
  %v4174 = vld [vmem:[%s4172 + $0x8] sm:$0xff]
  %4175 = vmatprep.subr.bf16.mxu0 %v823
  %4176 = vmatpush1.bf16.msra.mxu0 %v822
  %4177 = vmatprep.subr.bf16.mxu0 %v825
  %4178 = vmatpush1.bf16.msra.mxu0 %v824
  %4179 = vmatprep.subr.bf16.mxu0 %v827
  %4180 = vmatpush1.bf16.msra.mxu0 %v826
  %4181 = vmatprep.subr.bf16.mxu0 %v829
  %4182 = vmatpush1.bf16.msra.mxu0 %v828
  %4183 = vmatprep.subr.bf16.mxu0 %v831
  %4184 = vmatpush1.bf16.msra.mxu0 %v830
  %4185 = vmatprep.subr.bf16.mxu0 %v833
  %4186 = vmatpush1.bf16.msra.mxu0 %v832
  %4187 = vmatprep.subr.bf16.mxu0 %v835
  %4188 = vmatpush1.bf16.msra.mxu0 %v834
  %4189 = vmatprep.subr.bf16.mxu0 %v837
  %4190 = vmatpush1.bf16.msra.mxu0 %v836
  %4191 = vmatprep.subr.bf16.mxu0 %v839
  %4192 = vmatpush1.bf16.msra.mxu0 %v838
  %4193 = vmatprep.subr.bf16.mxu0 %v841
  %4194 = vmatpush1.bf16.msra.mxu0 %v840
  %4195 = vmatprep.subr.bf16.mxu0 %v843
  %4196 = vmatpush1.bf16.msra.mxu0 %v842
  %4197 = vmatprep.subr.bf16.mxu0 %v845
  %4198 = vmatpush1.bf16.msra.mxu0 %v844
  %4199 = vmatprep.subr.bf16.mxu0 %v847
  %4200 = vmatpush1.bf16.msra.mxu0 %v846
  %4201 = vmatprep.subr.bf16.mxu0 %v849
  %4202 = vmatpush1.bf16.msra.mxu0 %v848
  %4203 = vmatprep.subr.bf16.mxu0 %v851
  %4204 = vmatpush1.bf16.msra.mxu0 %v850
  %4205 = vmatprep.subr.bf16.mxu0 %v853
  %4206 = vmatpush1.bf16.msra.mxu0 %v852
  %4207 = vmatprep.mubr.bf16.mxu0 %v3911
  %4208 = vmatmul.mubr.bf16.gmra.mrb[0].mxu0 %v3910
  %v4209 = vpop.f32.mrb[0].mxu0
  %v4210 = vadd.f32 0.0, %v4209
  %v4211 = vpop.f32.mrb[0].mxu0
  %v4212 = vadd.f32 0.0, %v4211
  %v4213 = vpop.f32.mrb[0].mxu0
  %v4214 = vpop.f32.mrb[0].mxu0
  %4215 = vdwg.mxu0
  %v4216 = vadd.f32 %v4173, %v4210
  %v4217 = vadd.f32 %v4174, %v4212
  %v4218 = vtanh.pop %v4216
  %v4219 = vtanh.pop %v4217
  %v4220 = vpack.c.bf16 %v4218, %v4218
  %v4221 = vpack.c.bf16 %v4219, %v4219
  %4222 = vmatprep.subr.bf16.mxu0 %v1062
  %4223 = vmatpush1.bf16.msra.mxu0 %v1061
  %4224 = vmatprep.subr.bf16.mxu0 %v1064
  %4225 = vmatpush1.bf16.msra.mxu0 %v1063
  %4226 = vmatprep.subr.bf16.mxu0 %v1066
  %4227 = vmatpush1.bf16.msra.mxu0 %v1065
  %4228 = vmatprep.subr.bf16.mxu0 %v1068
  %4229 = vmatpush1.bf16.msra.mxu0 %v1067
  %4230 = vmatprep.subr.bf16.mxu0 %v1070
  %4231 = vmatpush1.bf16.msra.mxu0 %v1069
  %4232 = vmatprep.subr.bf16.mxu0 %v1072
  %4233 = vmatpush1.bf16.msra.mxu0 %v1071
  %4234 = vmatprep.subr.bf16.mxu0 %v1074
  %4235 = vmatpush1.bf16.msra.mxu0 %v1073
  %4236 = vmatprep.subr.bf16.mxu0 %v1076
  %4237 = vmatpush1.bf16.msra.mxu0 %v1075
  %4238 = vmatprep.subr.bf16.mxu0 %v1078
  %4239 = vmatpush1.bf16.msra.mxu0 %v1077
  %4240 = vmatprep.subr.bf16.mxu0 %v1080
  %4241 = vmatpush1.bf16.msra.mxu0 %v1079
  %4242 = vmatprep.subr.bf16.mxu0 %v1082
  %4243 = vmatpush1.bf16.msra.mxu0 %v1081
  %4244 = vmatprep.subr.bf16.mxu0 %v1084
  %4245 = vmatpush1.bf16.msra.mxu0 %v1083
  %4246 = vmatprep.subr.bf16.mxu0 %v1086
  %4247 = vmatpush1.bf16.msra.mxu0 %v1085
  %4248 = vmatprep.subr.bf16.mxu0 %v1088
  %4249 = vmatpush1.bf16.msra.mxu0 %v1087
  %4250 = vmatprep.subr.bf16.mxu0 %v1090
  %4251 = vmatpush1.bf16.msra.mxu0 %v1089
  %4252 = vmatprep.subr.bf16.mxu0 %v1092
  %4253 = vmatpush1.bf16.msra.mxu0 %v1091
  %4254 = vmatprep.mubr.bf16.mxu0 %v4221
  %4255 = vmatmul.mubr.bf16.gmra.mrb[0].mxu0 %v4220
  %v4256 = vpop.f32.mrb[0].mxu0
  %v4257 = vadd.f32 %v4164, %v4256
  %v4258 = vpop.f32.mrb[0].mxu0
  %v4259 = vadd.f32 %v4166, %v4258
  %v4260 = vpop.f32.mrb[0].mxu0
  %v4261 = vpop.f32.mrb[0].mxu0
  %4262 = vdwg.mxu0
  %v4263 = vadd.f32 %v4257, %v449
  %v4264 = vadd.f32 %v4259, %v453
  %v4265 = vtanh.pop %v4263
  %v4266 = vtanh.pop %v4264
  %v4267 = vpack.c.bf16 %v4265, %v4265
  %v4268 = vpack.c.bf16 %v4266, %v4266
  %s4269 = scalar_lea.vmem %s7, 1280
  %v4270 = vld [vmem:[%s4269] sm:$0xf]
  %v4271 = vld [vmem:[%s4269 + $0x4] sm:$0xf]
  %v4272 = vld [vmem:[%s4269 + $0x8] sm:$0xf]
  %v4273 = vld [vmem:[%s4269 + $0xc] sm:$0xf]
  %v4274 = vld [vmem:[%s4269 + $0x10] sm:$0xf]
  %v4275 = vld [vmem:[%s4269 + $0x14] sm:$0xf]
  %v4276 = vld [vmem:[%s4269 + $0x18] sm:$0xf]
  %v4277 = vld [vmem:[%s4269 + $0x1c] sm:$0xf]
  %v4278 = vld [vmem:[%s4269 + $0x20] sm:$0xf]
  %v4279 = vld [vmem:[%s4269 + $0x24] sm:$0xf]
  %v4280 = vld [vmem:[%s4269 + $0x28] sm:$0xf]
  %v4281 = vld [vmem:[%s4269 + $0x2c] sm:$0xf]
  %v4282 = vld [vmem:[%s4269 + $0x30] sm:$0xf]
  %v4283 = vld [vmem:[%s4269 + $0x34] sm:$0xf]
  %v4284 = vld [vmem:[%s4269 + $0x38] sm:$0xf]
  %v4285 = vld [vmem:[%s4269 + $0x3c] sm:$0xf]
  %v4286 = vld [vmem:[%s4269 + $0x40] sm:$0xf]
  %v4287 = vld [vmem:[%s4269 + $0x44] sm:$0xf]
  %v4288 = vld [vmem:[%s4269 + $0x48] sm:$0xf]
  %v4289 = vld [vmem:[%s4269 + $0x4c] sm:$0xf]
  %v4290 = vld [vmem:[%s4269 + $0x50] sm:$0xf]
  %v4291 = vld [vmem:[%s4269 + $0x54] sm:$0xf]
  %v4292 = vld [vmem:[%s4269 + $0x58] sm:$0xf]
  %v4293 = vld [vmem:[%s4269 + $0x5c] sm:$0xf]
  %v4294 = vld [vmem:[%s4269 + $0x60] sm:$0xf]
  %v4295 = vld [vmem:[%s4269 + $0x64] sm:$0xf]
  %v4296 = vld [vmem:[%s4269 + $0x68] sm:$0xf]
  %v4297 = vld [vmem:[%s4269 + $0x6c] sm:$0xf]
  %v4298 = vld [vmem:[%s4269 + $0x70] sm:$0xf]
  %v4299 = vld [vmem:[%s4269 + $0x74] sm:$0xf]
  %v4300 = vld [vmem:[%s4269 + $0x78] sm:$0xf]
  %v4301 = vld [vmem:[%s4269 + $0x7c] sm:$0xf]
  %v4334 = vunpack.c.l.b16 %v4270
  %v4335 = vunpack.c.l.b16 %v4271
  %v4336 = vunpack.c.l.b16 %v4272
  %v4337 = vunpack.c.l.b16 %v4273
  %v4338 = vunpack.c.l.b16 %v4274
  %v4339 = vunpack.c.l.b16 %v4275
  %v4340 = vunpack.c.l.b16 %v4276
  %v4341 = vunpack.c.l.b16 %v4277
  %v4342 = vunpack.c.l.b16 %v4278
  %v4343 = vunpack.c.l.b16 %v4279
  %v4344 = vunpack.c.l.b16 %v4280
  %v4345 = vunpack.c.l.b16 %v4281
  %v4346 = vunpack.c.l.b16 %v4282
  %v4347 = vunpack.c.l.b16 %v4283
  %v4348 = vunpack.c.l.b16 %v4284
  %v4349 = vunpack.c.l.b16 %v4285
  %v4350 = vunpack.c.l.b16 %v4286
  %v4351 = vunpack.c.l.b16 %v4287
  %v4352 = vunpack.c.l.b16 %v4288
  %v4353 = vunpack.c.l.b16 %v4289
  %v4354 = vunpack.c.l.b16 %v4290
  %v4355 = vunpack.c.l.b16 %v4291
  %v4356 = vunpack.c.l.b16 %v4292
  %v4357 = vunpack.c.l.b16 %v4293
  %v4358 = vunpack.c.l.b16 %v4294
  %v4359 = vunpack.c.l.b16 %v4295
  %v4360 = vunpack.c.l.b16 %v4296
  %v4361 = vunpack.c.l.b16 %v4297
  %v4362 = vunpack.c.l.b16 %v4298
  %v4363 = vunpack.c.l.b16 %v4299
  %v4364 = vunpack.c.l.b16 %v4300
  %v4365 = vunpack.c.l.b16 %v4301
  %v4366 = vpack.c.b16 %v4335, %v4334
  %v4367 = vpack.c.b16 %v4337, %v4336
  %v4368 = vpack.c.b16 %v4339, %v4338
  %v4369 = vpack.c.b16 %v4341, %v4340
  %v4370 = vpack.c.b16 %v4343, %v4342
  %v4371 = vpack.c.b16 %v4345, %v4344
  %v4372 = vpack.c.b16 %v4347, %v4346
  %v4373 = vpack.c.b16 %v4349, %v4348
  %v4374 = vpack.c.b16 %v4351, %v4350
  %v4375 = vpack.c.b16 %v4353, %v4352
  %v4376 = vpack.c.b16 %v4355, %v4354
  %v4377 = vpack.c.b16 %v4357, %v4356
  %v4378 = vpack.c.b16 %v4359, %v4358
  %v4379 = vpack.c.b16 %v4361, %v4360
  %v4380 = vpack.c.b16 %v4363, %v4362
  %v4381 = vpack.c.b16 %v4365, %v4364
  %4398 = vmatprep.subr.bf16.mxu0 0
  %4399 = vmatpush1.bf16.msra.mxu0 %v4366
  %4400 = vmatprep.subr.bf16.mxu0 0
  %4401 = vmatpush1.bf16.msra.mxu0 %v4367
  %4402 = vmatprep.subr.bf16.mxu0 0
  %4403 = vmatpush1.bf16.msra.mxu0 %v4368
  %4404 = vmatprep.subr.bf16.mxu0 0
  %4405 = vmatpush1.bf16.msra.mxu0 %v4369
  %4406 = vmatprep.subr.bf16.mxu0 0
  %4407 = vmatpush1.bf16.msra.mxu0 %v4370
  %4408 = vmatprep.subr.bf16.mxu0 0
  %4409 = vmatpush1.bf16.msra.mxu0 %v4371
  %4410 = vmatprep.subr.bf16.mxu0 0
  %4411 = vmatpush1.bf16.msra.mxu0 %v4372
  %4412 = vmatprep.subr.bf16.mxu0 0
  %4413 = vmatpush1.bf16.msra.mxu0 %v4373
  %4414 = vmatprep.subr.bf16.mxu0 0
  %4415 = vmatpush1.bf16.msra.mxu0 %v4374
  %4416 = vmatprep.subr.bf16.mxu0 0
  %4417 = vmatpush1.bf16.msra.mxu0 %v4375
  %4418 = vmatprep.subr.bf16.mxu0 0
  %4419 = vmatpush1.bf16.msra.mxu0 %v4376
  %4420 = vmatprep.subr.bf16.mxu0 0
  %4421 = vmatpush1.bf16.msra.mxu0 %v4377
  %4422 = vmatprep.subr.bf16.mxu0 0
  %4423 = vmatpush1.bf16.msra.mxu0 %v4378
  %4424 = vmatprep.subr.bf16.mxu0 0
  %4425 = vmatpush1.bf16.msra.mxu0 %v4379
  %4426 = vmatprep.subr.bf16.mxu0 0
  %4427 = vmatpush1.bf16.msra.mxu0 %v4380
  %4428 = vmatprep.subr.bf16.mxu0 0
  %4429 = vmatpush1.bf16.msra.mxu0 %v4381
  %4430 = vmatprep.mubr.bf16.mxu0 %v4268
  %4431 = vmatmul.mubr.bf16.gmra.mrb[0].mxu0 %v4267
  %v4432 = vpop.f32.mrb[0].mxu0
  %v4433 = vadd.f32 0.0, %v4432
  %v4434 = vpop.f32.mrb[0].mxu0
  %v4435 = vpop.f32.mrb[0].mxu0
  %v4436 = vpop.f32.mrb[0].mxu0
  %4437 = vdwg.mxu0
  %v4438 = vadd.f32 %v4128, %v4433
  %4439 = vmatprep.subr.bf16.mxu0 %v585
  %4440 = vmatpush1.bf16.msra.mxu0 %v584
  %4441 = vmatprep.subr.bf16.mxu0 %v587
  %4442 = vmatpush1.bf16.msra.mxu0 %v586
  %4443 = vmatprep.subr.bf16.mxu0 %v589
  %4444 = vmatpush1.bf16.msra.mxu0 %v588
  %4445 = vmatprep.subr.bf16.mxu0 %v591
  %4446 = vmatpush1.bf16.msra.mxu0 %v590
  %4447 = vmatprep.subr.bf16.mxu0 %v593
  %4448 = vmatpush1.bf16.msra.mxu0 %v592
  %4449 = vmatprep.subr.bf16.mxu0 %v595
  %4450 = vmatpush1.bf16.msra.mxu0 %v594
  %4451 = vmatprep.subr.bf16.mxu0 %v597
  %4452 = vmatpush1.bf16.msra.mxu0 %v596
  %4453 = vmatprep.subr.bf16.mxu0 %v599
  %4454 = vmatpush1.bf16.msra.mxu0 %v598
  %4455 = vmatprep.subr.bf16.mxu0 %v601
  %4456 = vmatpush1.bf16.msra.mxu0 %v600
  %4457 = vmatprep.subr.bf16.mxu0 %v603
  %4458 = vmatpush1.bf16.msra.mxu0 %v602
  %4459 = vmatprep.subr.bf16.mxu0 %v605
  %4460 = vmatpush1.bf16.msra.mxu0 %v604
  %4461 = vmatprep.subr.bf16.mxu0 %v607
  %4462 = vmatpush1.bf16.msra.mxu0 %v606
  %4463 = vmatprep.subr.bf16.mxu0 %v609
  %4464 = vmatpush1.bf16.msra.mxu0 %v608
  %4465 = vmatprep.subr.bf16.mxu0 %v611
  %4466 = vmatpush1.bf16.msra.mxu0 %v610
  %4467 = vmatprep.subr.bf16.mxu0 %v613
  %4468 = vmatpush1.bf16.msra.mxu0 %v612
  %4469 = vmatprep.subr.bf16.mxu0 %v615
  %4470 = vmatpush1.bf16.msra.mxu0 %v614
  %4471 = vmatprep.mubr.bf16.mxu0 %v4268
  %4472 = vmatmul.mubr.bf16.gmra.mrb[0].mxu0 %v4267
  %v4473 = vpop.f32.mrb[0].mxu0
  %v4474 = vadd.f32 0.0, %v4473
  %v4475 = vpop.f32.mrb[0].mxu0
  %v4476 = vadd.f32 0.0, %v4475
  %v4477 = vpop.f32.mrb[0].mxu0
  %v4478 = vpop.f32.mrb[0].mxu0
  %4479 = vdwg.mxu0
  %s4480 = smul.u32 11, 2
  %s4481 = smul.addr %s4480, 8
  %s4482 = scalar_lea.vmem [#allocation2], %s4481
  %v4483 = vld [vmem:[%s4482] sm:$0xff]
  %v4484 = vld [vmem:[%s4482 + $0x8] sm:$0xff]
  %4485 = vmatprep.subr.bf16.mxu0 %v823
  %4486 = vmatpush1.bf16.msra.mxu0 %v822
  %4487 = vmatprep.subr.bf16.mxu0 %v825
  %4488 = vmatpush1.bf16.msra.mxu0 %v824
  %4489 = vmatprep.subr.bf16.mxu0 %v827
  %4490 = vmatpush1.bf16.msra.mxu0 %v826
  %4491 = vmatprep.subr.bf16.mxu0 %v829
  %4492 = vmatpush1.bf16.msra.mxu0 %v828
  %4493 = vmatprep.subr.bf16.mxu0 %v831
  %4494 = vmatpush1.bf16.msra.mxu0 %v830
  %4495 = vmatprep.subr.bf16.mxu0 %v833
  %4496 = vmatpush1.bf16.msra.mxu0 %v832
  %4497 = vmatprep.subr.bf16.mxu0 %v835
  %4498 = vmatpush1.bf16.msra.mxu0 %v834
  %4499 = vmatprep.subr.bf16.mxu0 %v837
  %4500 = vmatpush1.bf16.msra.mxu0 %v836
  %4501 = vmatprep.subr.bf16.mxu0 %v839
  %4502 = vmatpush1.bf16.msra.mxu0 %v838
  %4503 = vmatprep.subr.bf16.mxu0 %v841
  %4504 = vmatpush1.bf16.msra.mxu0 %v840
  %4505 = vmatprep.subr.bf16.mxu0 %v843
  %4506 = vmatpush1.bf16.msra.mxu0 %v842
  %4507 = vmatprep.subr.bf16.mxu0 %v845
  %4508 = vmatpush1.bf16.msra.mxu0 %v844
  %4509 = vmatprep.subr.bf16.mxu0 %v847
  %4510 = vmatpush1.bf16.msra.mxu0 %v846
  %4511 = vmatprep.subr.bf16.mxu0 %v849
  %4512 = vmatpush1.bf16.msra.mxu0 %v848
  %4513 = vmatprep.subr.bf16.mxu0 %v851
  %4514 = vmatpush1.bf16.msra.mxu0 %v850
  %4515 = vmatprep.subr.bf16.mxu0 %v853
  %4516 = vmatpush1.bf16.msra.mxu0 %v852
  %4517 = vmatprep.mubr.bf16.mxu0 %v4221
  %4518 = vmatmul.mubr.bf16.gmra.mrb[0].mxu0 %v4220
  %v4519 = vpop.f32.mrb[0].mxu0
  %v4520 = vadd.f32 0.0, %v4519
  %v4521 = vpop.f32.mrb[0].mxu0
  %v4522 = vadd.f32 0.0, %v4521
  %v4523 = vpop.f32.mrb[0].mxu0
  %v4524 = vpop.f32.mrb[0].mxu0
  %4525 = vdwg.mxu0
  %v4526 = vadd.f32 %v4483, %v4520
  %v4527 = vadd.f32 %v4484, %v4522
  %v4528 = vtanh.pop %v4526
  %v4529 = vtanh.pop %v4527
  %v4530 = vpack.c.bf16 %v4528, %v4528
  %v4531 = vpack.c.bf16 %v4529, %v4529
  %4532 = vmatprep.subr.bf16.mxu0 %v1062
  %4533 = vmatpush1.bf16.msra.mxu0 %v1061
  %4534 = vmatprep.subr.bf16.mxu0 %v1064
  %4535 = vmatpush1.bf16.msra.mxu0 %v1063
  %4536 = vmatprep.subr.bf16.mxu0 %v1066
  %4537 = vmatpush1.bf16.msra.mxu0 %v1065
  %4538 = vmatprep.subr.bf16.mxu0 %v1068
  %4539 = vmatpush1.bf16.msra.mxu0 %v1067
  %4540 = vmatprep.subr.bf16.mxu0 %v1070
  %4541 = vmatpush1.bf16.msra.mxu0 %v1069
  %4542 = vmatprep.subr.bf16.mxu0 %v1072
  %4543 = vmatpush1.bf16.msra.mxu0 %v1071
  %4544 = vmatprep.subr.bf16.mxu0 %v1074
  %4545 = vmatpush1.bf16.msra.mxu0 %v1073
  %4546 = vmatprep.subr.bf16.mxu0 %v1076
  %4547 = vmatpush1.bf16.msra.mxu0 %v1075
  %4548 = vmatprep.subr.bf16.mxu0 %v1078
  %4549 = vmatpush1.bf16.msra.mxu0 %v1077
  %4550 = vmatprep.subr.bf16.mxu0 %v1080
  %4551 = vmatpush1.bf16.msra.mxu0 %v1079
  %4552 = vmatprep.subr.bf16.mxu0 %v1082
  %4553 = vmatpush1.bf16.msra.mxu0 %v1081
  %4554 = vmatprep.subr.bf16.mxu0 %v1084
  %4555 = vmatpush1.bf16.msra.mxu0 %v1083
  %4556 = vmatprep.subr.bf16.mxu0 %v1086
  %4557 = vmatpush1.bf16.msra.mxu0 %v1085
  %4558 = vmatprep.subr.bf16.mxu0 %v1088
  %4559 = vmatpush1.bf16.msra.mxu0 %v1087
  %4560 = vmatprep.subr.bf16.mxu0 %v1090
  %4561 = vmatpush1.bf16.msra.mxu0 %v1089
  %4562 = vmatprep.subr.bf16.mxu0 %v1092
  %4563 = vmatpush1.bf16.msra.mxu0 %v1091
  %4564 = vmatprep.mubr.bf16.mxu0 %v4531
  %4565 = vmatmul.mubr.bf16.gmra.mrb[0].mxu0 %v4530
  %v4566 = vpop.f32.mrb[0].mxu0
  %v4567 = vadd.f32 %v4474, %v4566
  %v4568 = vpop.f32.mrb[0].mxu0
  %v4569 = vadd.f32 %v4476, %v4568
  %v4570 = vpop.f32.mrb[0].mxu0
  %v4571 = vpop.f32.mrb[0].mxu0
  %4572 = vdwg.mxu0
  %v4573 = vadd.f32 %v4567, %v449
  %v4574 = vadd.f32 %v4569, %v453
  %v4575 = vtanh.pop %v4573
  %v4576 = vtanh.pop %v4574
  %v4577 = vpack.c.bf16 %v4575, %v4575
  %v4578 = vpack.c.bf16 %v4576, %v4576
  %s4579 = scalar_lea.vmem %s7, 1408
  %v4580 = vld [vmem:[%s4579] sm:$0xf]
  %v4581 = vld [vmem:[%s4579 + $0x4] sm:$0xf]
  %v4582 = vld [vmem:[%s4579 + $0x8] sm:$0xf]
  %v4583 = vld [vmem:[%s4579 + $0xc] sm:$0xf]
  %v4584 = vld [vmem:[%s4579 + $0x10] sm:$0xf]
  %v4585 = vld [vmem:[%s4579 + $0x14] sm:$0xf]
  %v4586 = vld [vmem:[%s4579 + $0x18] sm:$0xf]
  %v4587 = vld [vmem:[%s4579 + $0x1c] sm:$0xf]
  %v4588 = vld [vmem:[%s4579 + $0x20] sm:$0xf]
  %v4589 = vld [vmem:[%s4579 + $0x24] sm:$0xf]
  %v4590 = vld [vmem:[%s4579 + $0x28] sm:$0xf]
  %v4591 = vld [vmem:[%s4579 + $0x2c] sm:$0xf]
  %v4592 = vld [vmem:[%s4579 + $0x30] sm:$0xf]
  %v4593 = vld [vmem:[%s4579 + $0x34] sm:$0xf]
  %v4594 = vld [vmem:[%s4579 + $0x38] sm:$0xf]
  %v4595 = vld [vmem:[%s4579 + $0x3c] sm:$0xf]
  %v4596 = vld [vmem:[%s4579 + $0x40] sm:$0xf]
  %v4597 = vld [vmem:[%s4579 + $0x44] sm:$0xf]
  %v4598 = vld [vmem:[%s4579 + $0x48] sm:$0xf]
  %v4599 = vld [vmem:[%s4579 + $0x4c] sm:$0xf]
  %v4600 = vld [vmem:[%s4579 + $0x50] sm:$0xf]
  %v4601 = vld [vmem:[%s4579 + $0x54] sm:$0xf]
  %v4602 = vld [vmem:[%s4579 + $0x58] sm:$0xf]
  %v4603 = vld [vmem:[%s4579 + $0x5c] sm:$0xf]
  %v4604 = vld [vmem:[%s4579 + $0x60] sm:$0xf]
  %v4605 = vld [vmem:[%s4579 + $0x64] sm:$0xf]
  %v4606 = vld [vmem:[%s4579 + $0x68] sm:$0xf]
  %v4607 = vld [vmem:[%s4579 + $0x6c] sm:$0xf]
  %v4608 = vld [vmem:[%s4579 + $0x70] sm:$0xf]
  %v4609 = vld [vmem:[%s4579 + $0x74] sm:$0xf]
  %v4610 = vld [vmem:[%s4579 + $0x78] sm:$0xf]
  %v4611 = vld [vmem:[%s4579 + $0x7c] sm:$0xf]
  %v4644 = vunpack.c.l.b16 %v4580
  %v4645 = vunpack.c.l.b16 %v4581
  %v4646 = vunpack.c.l.b16 %v4582
  %v4647 = vunpack.c.l.b16 %v4583
  %v4648 = vunpack.c.l.b16 %v4584
  %v4649 = vunpack.c.l.b16 %v4585
  %v4650 = vunpack.c.l.b16 %v4586
  %v4651 = vunpack.c.l.b16 %v4587
  %v4652 = vunpack.c.l.b16 %v4588
  %v4653 = vunpack.c.l.b16 %v4589
  %v4654 = vunpack.c.l.b16 %v4590
  %v4655 = vunpack.c.l.b16 %v4591
  %v4656 = vunpack.c.l.b16 %v4592
  %v4657 = vunpack.c.l.b16 %v4593
  %v4658 = vunpack.c.l.b16 %v4594
  %v4659 = vunpack.c.l.b16 %v4595
  %v4660 = vunpack.c.l.b16 %v4596
  %v4661 = vunpack.c.l.b16 %v4597
  %v4662 = vunpack.c.l.b16 %v4598
  %v4663 = vunpack.c.l.b16 %v4599
  %v4664 = vunpack.c.l.b16 %v4600
  %v4665 = vunpack.c.l.b16 %v4601
  %v4666 = vunpack.c.l.b16 %v4602
  %v4667 = vunpack.c.l.b16 %v4603
  %v4668 = vunpack.c.l.b16 %v4604
  %v4669 = vunpack.c.l.b16 %v4605
  %v4670 = vunpack.c.l.b16 %v4606
  %v4671 = vunpack.c.l.b16 %v4607
  %v4672 = vunpack.c.l.b16 %v4608
  %v4673 = vunpack.c.l.b16 %v4609
  %v4674 = vunpack.c.l.b16 %v4610
  %v4675 = vunpack.c.l.b16 %v4611
  %v4676 = vpack.c.b16 %v4645, %v4644
  %v4677 = vpack.c.b16 %v4647, %v4646
  %v4678 = vpack.c.b16 %v4649, %v4648
  %v4679 = vpack.c.b16 %v4651, %v4650
  %v4680 = vpack.c.b16 %v4653, %v4652
  %v4681 = vpack.c.b16 %v4655, %v4654
  %v4682 = vpack.c.b16 %v4657, %v4656
  %v4683 = vpack.c.b16 %v4659, %v4658
  %v4684 = vpack.c.b16 %v4661, %v4660
  %v4685 = vpack.c.b16 %v4663, %v4662
  %v4686 = vpack.c.b16 %v4665, %v4664
  %v4687 = vpack.c.b16 %v4667, %v4666
  %v4688 = vpack.c.b16 %v4669, %v4668
  %v4689 = vpack.c.b16 %v4671, %v4670
  %v4690 = vpack.c.b16 %v4673, %v4672
  %v4691 = vpack.c.b16 %v4675, %v4674
  %4708 = vmatprep.subr.bf16.mxu0 0
  %4709 = vmatpush1.bf16.msra.mxu0 %v4676
  %4710 = vmatprep.subr.bf16.mxu0 0
  %4711 = vmatpush1.bf16.msra.mxu0 %v4677
  %4712 = vmatprep.subr.bf16.mxu0 0
  %4713 = vmatpush1.bf16.msra.mxu0 %v4678
  %4714 = vmatprep.subr.bf16.mxu0 0
  %4715 = vmatpush1.bf16.msra.mxu0 %v4679
  %4716 = vmatprep.subr.bf16.mxu0 0
  %4717 = vmatpush1.bf16.msra.mxu0 %v4680
  %4718 = vmatprep.subr.bf16.mxu0 0
  %4719 = vmatpush1.bf16.msra.mxu0 %v4681
  %4720 = vmatprep.subr.bf16.mxu0 0
  %4721 = vmatpush1.bf16.msra.mxu0 %v4682
  %4722 = vmatprep.subr.bf16.mxu0 0
  %4723 = vmatpush1.bf16.msra.mxu0 %v4683
  %4724 = vmatprep.subr.bf16.mxu0 0
  %4725 = vmatpush1.bf16.msra.mxu0 %v4684
  %4726 = vmatprep.subr.bf16.mxu0 0
  %4727 = vmatpush1.bf16.msra.mxu0 %v4685
  %4728 = vmatprep.subr.bf16.mxu0 0
  %4729 = vmatpush1.bf16.msra.mxu0 %v4686
  %4730 = vmatprep.subr.bf16.mxu0 0
  %4731 = vmatpush1.bf16.msra.mxu0 %v4687
  %4732 = vmatprep.subr.bf16.mxu0 0
  %4733 = vmatpush1.bf16.msra.mxu0 %v4688
  %4734 = vmatprep.subr.bf16.mxu0 0
  %4735 = vmatpush1.bf16.msra.mxu0 %v4689
  %4736 = vmatprep.subr.bf16.mxu0 0
  %4737 = vmatpush1.bf16.msra.mxu0 %v4690
  %4738 = vmatprep.subr.bf16.mxu0 0
  %4739 = vmatpush1.bf16.msra.mxu0 %v4691
  %4740 = vmatprep.mubr.bf16.mxu0 %v4578
  %4741 = vmatmul.mubr.bf16.gmra.mrb[0].mxu0 %v4577
  %v4742 = vpop.f32.mrb[0].mxu0
  %v4743 = vadd.f32 0.0, %v4742
  %v4744 = vpop.f32.mrb[0].mxu0
  %v4745 = vpop.f32.mrb[0].mxu0
  %v4746 = vpop.f32.mrb[0].mxu0
  %4747 = vdwg.mxu0
  %v4748 = vadd.f32 %v4438, %v4743
  %4749 = vmatprep.subr.bf16.mxu0 %v585
  %4750 = vmatpush1.bf16.msra.mxu0 %v584
  %4751 = vmatprep.subr.bf16.mxu0 %v587
  %4752 = vmatpush1.bf16.msra.mxu0 %v586
  %4753 = vmatprep.subr.bf16.mxu0 %v589
  %4754 = vmatpush1.bf16.msra.mxu0 %v588
  %4755 = vmatprep.subr.bf16.mxu0 %v591
  %4756 = vmatpush1.bf16.msra.mxu0 %v590
  %4757 = vmatprep.subr.bf16.mxu0 %v593
  %4758 = vmatpush1.bf16.msra.mxu0 %v592
  %4759 = vmatprep.subr.bf16.mxu0 %v595
  %4760 = vmatpush1.bf16.msra.mxu0 %v594
  %4761 = vmatprep.subr.bf16.mxu0 %v597
  %4762 = vmatpush1.bf16.msra.mxu0 %v596
  %4763 = vmatprep.subr.bf16.mxu0 %v599
  %4764 = vmatpush1.bf16.msra.mxu0 %v598
  %4765 = vmatprep.subr.bf16.mxu0 %v601
  %4766 = vmatpush1.bf16.msra.mxu0 %v600
  %4767 = vmatprep.subr.bf16.mxu0 %v603
  %4768 = vmatpush1.bf16.msra.mxu0 %v602
  %4769 = vmatprep.subr.bf16.mxu0 %v605
  %4770 = vmatpush1.bf16.msra.mxu0 %v604
  %4771 = vmatprep.subr.bf16.mxu0 %v607
  %4772 = vmatpush1.bf16.msra.mxu0 %v606
  %4773 = vmatprep.subr.bf16.mxu0 %v609
  %4774 = vmatpush1.bf16.msra.mxu0 %v608
  %4775 = vmatprep.subr.bf16.mxu0 %v611
  %4776 = vmatpush1.bf16.msra.mxu0 %v610
  %4777 = vmatprep.subr.bf16.mxu0 %v613
  %4778 = vmatpush1.bf16.msra.mxu0 %v612
  %4779 = vmatprep.subr.bf16.mxu0 %v615
  %4780 = vmatpush1.bf16.msra.mxu0 %v614
  %4781 = vmatprep.mubr.bf16.mxu0 %v4578
  %4782 = vmatmul.mubr.bf16.gmra.mrb[0].mxu0 %v4577
  %v4783 = vpop.f32.mrb[0].mxu0
  %v4784 = vadd.f32 0.0, %v4783
  %v4785 = vpop.f32.mrb[0].mxu0
  %v4786 = vadd.f32 0.0, %v4785
  %v4787 = vpop.f32.mrb[0].mxu0
  %v4788 = vpop.f32.mrb[0].mxu0
  %4789 = vdwg.mxu0
  %s4790 = smul.u32 12, 2
  %s4791 = smul.addr %s4790, 8
  %s4792 = scalar_lea.vmem [#allocation2], %s4791
  %v4793 = vld [vmem:[%s4792] sm:$0xff]
  %v4794 = vld [vmem:[%s4792 + $0x8] sm:$0xff]
  %4795 = vmatprep.subr.bf16.mxu0 %v823
  %4796 = vmatpush1.bf16.msra.mxu0 %v822
  %4797 = vmatprep.subr.bf16.mxu0 %v825
  %4798 = vmatpush1.bf16.msra.mxu0 %v824
  %4799 = vmatprep.subr.bf16.mxu0 %v827
  %4800 = vmatpush1.bf16.msra.mxu0 %v826
  %4801 = vmatprep.subr.bf16.mxu0 %v829
  %4802 = vmatpush1.bf16.msra.mxu0 %v828
  %4803 = vmatprep.subr.bf16.mxu0 %v831
  %4804 = vmatpush1.bf16.msra.mxu0 %v830
  %4805 = vmatprep.subr.bf16.mxu0 %v833
  %4806 = vmatpush1.bf16.msra.mxu0 %v832
  %4807 = vmatprep.subr.bf16.mxu0 %v835
  %4808 = vmatpush1.bf16.msra.mxu0 %v834
  %4809 = vmatprep.subr.bf16.mxu0 %v837
  %4810 = vmatpush1.bf16.msra.mxu0 %v836
  %4811 = vmatprep.subr.bf16.mxu0 %v839
  %4812 = vmatpush1.bf16.msra.mxu0 %v838
  %4813 = vmatprep.subr.bf16.mxu0 %v841
  %4814 = vmatpush1.bf16.msra.mxu0 %v840
  %4815 = vmatprep.subr.bf16.mxu0 %v843
  %4816 = vmatpush1.bf16.msra.mxu0 %v842
  %4817 = vmatprep.subr.bf16.mxu0 %v845
  %4818 = vmatpush1.bf16.msra.mxu0 %v844
  %4819 = vmatprep.subr.bf16.mxu0 %v847
  %4820 = vmatpush1.bf16.msra.mxu0 %v846
  %4821 = vmatprep.subr.bf16.mxu0 %v849
  %4822 = vmatpush1.bf16.msra.mxu0 %v848
  %4823 = vmatprep.subr.bf16.mxu0 %v851
  %4824 = vmatpush1.bf16.msra.mxu0 %v850
  %4825 = vmatprep.subr.bf16.mxu0 %v853
  %4826 = vmatpush1.bf16.msra.mxu0 %v852
  %4827 = vmatprep.mubr.bf16.mxu0 %v4531
  %4828 = vmatmul.mubr.bf16.gmra.mrb[0].mxu0 %v4530
  %v4829 = vpop.f32.mrb[0].mxu0
  %v4830 = vadd.f32 0.0, %v4829
  %v4831 = vpop.f32.mrb[0].mxu0
  %v4832 = vadd.f32 0.0, %v4831
  %v4833 = vpop.f32.mrb[0].mxu0
  %v4834 = vpop.f32.mrb[0].mxu0
  %4835 = vdwg.mxu0
  %v4836 = vadd.f32 %v4793, %v4830
  %v4837 = vadd.f32 %v4794, %v4832
  %v4838 = vtanh.pop %v4836
  %v4839 = vtanh.pop %v4837
  %v4840 = vpack.c.bf16 %v4838, %v4838
  %v4841 = vpack.c.bf16 %v4839, %v4839
  %4842 = vmatprep.subr.bf16.mxu0 %v1062
  %4843 = vmatpush1.bf16.msra.mxu0 %v1061
  %4844 = vmatprep.subr.bf16.mxu0 %v1064
  %4845 = vmatpush1.bf16.msra.mxu0 %v1063
  %4846 = vmatprep.subr.bf16.mxu0 %v1066
  %4847 = vmatpush1.bf16.msra.mxu0 %v1065
  %4848 = vmatprep.subr.bf16.mxu0 %v1068
  %4849 = vmatpush1.bf16.msra.mxu0 %v1067
  %4850 = vmatprep.subr.bf16.mxu0 %v1070
  %4851 = vmatpush1.bf16.msra.mxu0 %v1069
  %4852 = vmatprep.subr.bf16.mxu0 %v1072
  %4853 = vmatpush1.bf16.msra.mxu0 %v1071
  %4854 = vmatprep.subr.bf16.mxu0 %v1074
  %4855 = vmatpush1.bf16.msra.mxu0 %v1073
  %4856 = vmatprep.subr.bf16.mxu0 %v1076
  %4857 = vmatpush1.bf16.msra.mxu0 %v1075
  %4858 = vmatprep.subr.bf16.mxu0 %v1078
  %4859 = vmatpush1.bf16.msra.mxu0 %v1077
  %4860 = vmatprep.subr.bf16.mxu0 %v1080
  %4861 = vmatpush1.bf16.msra.mxu0 %v1079
  %4862 = vmatprep.subr.bf16.mxu0 %v1082
  %4863 = vmatpush1.bf16.msra.mxu0 %v1081
  %4864 = vmatprep.subr.bf16.mxu0 %v1084
  %4865 = vmatpush1.bf16.msra.mxu0 %v1083
  %4866 = vmatprep.subr.bf16.mxu0 %v1086
  %4867 = vmatpush1.bf16.msra.mxu0 %v1085
  %4868 = vmatprep.subr.bf16.mxu0 %v1088
  %4869 = vmatpush1.bf16.msra.mxu0 %v1087
  %4870 = vmatprep.subr.bf16.mxu0 %v1090
  %4871 = vmatpush1.bf16.msra.mxu0 %v1089
  %4872 = vmatprep.subr.bf16.mxu0 %v1092
  %4873 = vmatpush1.bf16.msra.mxu0 %v1091
  %4874 = vmatprep.mubr.bf16.mxu0 %v4841
  %4875 = vmatmul.mubr.bf16.gmra.mrb[0].mxu0 %v4840
  %v4876 = vpop.f32.mrb[0].mxu0
  %v4877 = vadd.f32 %v4784, %v4876
  %v4878 = vpop.f32.mrb[0].mxu0
  %v4879 = vadd.f32 %v4786, %v4878
  %v4880 = vpop.f32.mrb[0].mxu0
  %v4881 = vpop.f32.mrb[0].mxu0
  %4882 = vdwg.mxu0
  %v4883 = vadd.f32 %v4877, %v449
  %v4884 = vadd.f32 %v4879, %v453
  %v4885 = vtanh.pop %v4883
  %v4886 = vtanh.pop %v4884
  %v4887 = vpack.c.bf16 %v4885, %v4885
  %v4888 = vpack.c.bf16 %v4886, %v4886
  %s4889 = scalar_lea.vmem %s7, 1536
  %v4890 = vld [vmem:[%s4889] sm:$0xf]
  %v4891 = vld [vmem:[%s4889 + $0x4] sm:$0xf]
  %v4892 = vld [vmem:[%s4889 + $0x8] sm:$0xf]
  %v4893 = vld [vmem:[%s4889 + $0xc] sm:$0xf]
  %v4894 = vld [vmem:[%s4889 + $0x10] sm:$0xf]
  %v4895 = vld [vmem:[%s4889 + $0x14] sm:$0xf]
  %v4896 = vld [vmem:[%s4889 + $0x18] sm:$0xf]
  %v4897 = vld [vmem:[%s4889 + $0x1c] sm:$0xf]
  %v4898 = vld [vmem:[%s4889 + $0x20] sm:$0xf]
  %v4899 = vld [vmem:[%s4889 + $0x24] sm:$0xf]
  %v4900 = vld [vmem:[%s4889 + $0x28] sm:$0xf]
  %v4901 = vld [vmem:[%s4889 + $0x2c] sm:$0xf]
  %v4902 = vld [vmem:[%s4889 + $0x30] sm:$0xf]
  %v4903 = vld [vmem:[%s4889 + $0x34] sm:$0xf]
  %v4904 = vld [vmem:[%s4889 + $0x38] sm:$0xf]
  %v4905 = vld [vmem:[%s4889 + $0x3c] sm:$0xf]
  %v4906 = vld [vmem:[%s4889 + $0x40] sm:$0xf]
  %v4907 = vld [vmem:[%s4889 + $0x44] sm:$0xf]
  %v4908 = vld [vmem:[%s4889 + $0x48] sm:$0xf]
  %v4909 = vld [vmem:[%s4889 + $0x4c] sm:$0xf]
  %v4910 = vld [vmem:[%s4889 + $0x50] sm:$0xf]
  %v4911 = vld [vmem:[%s4889 + $0x54] sm:$0xf]
  %v4912 = vld [vmem:[%s4889 + $0x58] sm:$0xf]
  %v4913 = vld [vmem:[%s4889 + $0x5c] sm:$0xf]
  %v4914 = vld [vmem:[%s4889 + $0x60] sm:$0xf]
  %v4915 = vld [vmem:[%s4889 + $0x64] sm:$0xf]
  %v4916 = vld [vmem:[%s4889 + $0x68] sm:$0xf]
  %v4917 = vld [vmem:[%s4889 + $0x6c] sm:$0xf]
  %v4918 = vld [vmem:[%s4889 + $0x70] sm:$0xf]
  %v4919 = vld [vmem:[%s4889 + $0x74] sm:$0xf]
  %v4920 = vld [vmem:[%s4889 + $0x78] sm:$0xf]
  %v4921 = vld [vmem:[%s4889 + $0x7c] sm:$0xf]
  %v4954 = vunpack.c.l.b16 %v4890
  %v4955 = vunpack.c.l.b16 %v4891
  %v4956 = vunpack.c.l.b16 %v4892
  %v4957 = vunpack.c.l.b16 %v4893
  %v4958 = vunpack.c.l.b16 %v4894
  %v4959 = vunpack.c.l.b16 %v4895
  %v4960 = vunpack.c.l.b16 %v4896
  %v4961 = vunpack.c.l.b16 %v4897
  %v4962 = vunpack.c.l.b16 %v4898
  %v4963 = vunpack.c.l.b16 %v4899
  %v4964 = vunpack.c.l.b16 %v4900
  %v4965 = vunpack.c.l.b16 %v4901
  %v4966 = vunpack.c.l.b16 %v4902
  %v4967 = vunpack.c.l.b16 %v4903
  %v4968 = vunpack.c.l.b16 %v4904
  %v4969 = vunpack.c.l.b16 %v4905
  %v4970 = vunpack.c.l.b16 %v4906
  %v4971 = vunpack.c.l.b16 %v4907
  %v4972 = vunpack.c.l.b16 %v4908
  %v4973 = vunpack.c.l.b16 %v4909
  %v4974 = vunpack.c.l.b16 %v4910
  %v4975 = vunpack.c.l.b16 %v4911
  %v4976 = vunpack.c.l.b16 %v4912
  %v4977 = vunpack.c.l.b16 %v4913
  %v4978 = vunpack.c.l.b16 %v4914
  %v4979 = vunpack.c.l.b16 %v4915
  %v4980 = vunpack.c.l.b16 %v4916
  %v4981 = vunpack.c.l.b16 %v4917
  %v4982 = vunpack.c.l.b16 %v4918
  %v4983 = vunpack.c.l.b16 %v4919
  %v4984 = vunpack.c.l.b16 %v4920
  %v4985 = vunpack.c.l.b16 %v4921
  %v4986 = vpack.c.b16 %v4955, %v4954
  %v4987 = vpack.c.b16 %v4957, %v4956
  %v4988 = vpack.c.b16 %v4959, %v4958
  %v4989 = vpack.c.b16 %v4961, %v4960
  %v4990 = vpack.c.b16 %v4963, %v4962
  %v4991 = vpack.c.b16 %v4965, %v4964
  %v4992 = vpack.c.b16 %v4967, %v4966
  %v4993 = vpack.c.b16 %v4969, %v4968
  %v4994 = vpack.c.b16 %v4971, %v4970
  %v4995 = vpack.c.b16 %v4973, %v4972
  %v4996 = vpack.c.b16 %v4975, %v4974
  %v4997 = vpack.c.b16 %v4977, %v4976
  %v4998 = vpack.c.b16 %v4979, %v4978
  %v4999 = vpack.c.b16 %v4981, %v4980
  %v5000 = vpack.c.b16 %v4983, %v4982
  %v5001 = vpack.c.b16 %v4985, %v4984
  %5018 = vmatprep.subr.bf16.mxu0 0
  %5019 = vmatpush1.bf16.msra.mxu0 %v4986
  %5020 = vmatprep.subr.bf16.mxu0 0
  %5021 = vmatpush1.bf16.msra.mxu0 %v4987
  %5022 = vmatprep.subr.bf16.mxu0 0
  %5023 = vmatpush1.bf16.msra.mxu0 %v4988
  %5024 = vmatprep.subr.bf16.mxu0 0
  %5025 = vmatpush1.bf16.msra.mxu0 %v4989
  %5026 = vmatprep.subr.bf16.mxu0 0
  %5027 = vmatpush1.bf16.msra.mxu0 %v4990
  %5028 = vmatprep.subr.bf16.mxu0 0
  %5029 = vmatpush1.bf16.msra.mxu0 %v4991
  %5030 = vmatprep.subr.bf16.mxu0 0
  %5031 = vmatpush1.bf16.msra.mxu0 %v4992
  %5032 = vmatprep.subr.bf16.mxu0 0
  %5033 = vmatpush1.bf16.msra.mxu0 %v4993
  %5034 = vmatprep.subr.bf16.mxu0 0
  %5035 = vmatpush1.bf16.msra.mxu0 %v4994
  %5036 = vmatprep.subr.bf16.mxu0 0
  %5037 = vmatpush1.bf16.msra.mxu0 %v4995
  %5038 = vmatprep.subr.bf16.mxu0 0
  %5039 = vmatpush1.bf16.msra.mxu0 %v4996
  %5040 = vmatprep.subr.bf16.mxu0 0
  %5041 = vmatpush1.bf16.msra.mxu0 %v4997
  %5042 = vmatprep.subr.bf16.mxu0 0
  %5043 = vmatpush1.bf16.msra.mxu0 %v4998
  %5044 = vmatprep.subr.bf16.mxu0 0
  %5045 = vmatpush1.bf16.msra.mxu0 %v4999
  %5046 = vmatprep.subr.bf16.mxu0 0
  %5047 = vmatpush1.bf16.msra.mxu0 %v5000
  %5048 = vmatprep.subr.bf16.mxu0 0
  %5049 = vmatpush1.bf16.msra.mxu0 %v5001
  %5050 = vmatprep.mubr.bf16.mxu0 %v4888
  %5051 = vmatmul.mubr.bf16.gmra.mrb[0].mxu0 %v4887
  %v5052 = vpop.f32.mrb[0].mxu0
  %v5053 = vadd.f32 0.0, %v5052
  %v5054 = vpop.f32.mrb[0].mxu0
  %v5055 = vpop.f32.mrb[0].mxu0
  %v5056 = vpop.f32.mrb[0].mxu0
  %5057 = vdwg.mxu0
  %v5058 = vadd.f32 %v4748, %v5053
  %5059 = vmatprep.subr.bf16.mxu0 %v585
  %5060 = vmatpush1.bf16.msra.mxu0 %v584
  %5061 = vmatprep.subr.bf16.mxu0 %v587
  %5062 = vmatpush1.bf16.msra.mxu0 %v586
  %5063 = vmatprep.subr.bf16.mxu0 %v589
  %5064 = vmatpush1.bf16.msra.mxu0 %v588
  %5065 = vmatprep.subr.bf16.mxu0 %v591
  %5066 = vmatpush1.bf16.msra.mxu0 %v590
  %5067 = vmatprep.subr.bf16.mxu0 %v593
  %5068 = vmatpush1.bf16.msra.mxu0 %v592
  %5069 = vmatprep.subr.bf16.mxu0 %v595
  %5070 = vmatpush1.bf16.msra.mxu0 %v594
  %5071 = vmatprep.subr.bf16.mxu0 %v597
  %5072 = vmatpush1.bf16.msra.mxu0 %v596
  %5073 = vmatprep.subr.bf16.mxu0 %v599
  %5074 = vmatpush1.bf16.msra.mxu0 %v598
  %5075 = vmatprep.subr.bf16.mxu0 %v601
  %5076 = vmatpush1.bf16.msra.mxu0 %v600
  %5077 = vmatprep.subr.bf16.mxu0 %v603
  %5078 = vmatpush1.bf16.msra.mxu0 %v602
  %5079 = vmatprep.subr.bf16.mxu0 %v605
  %5080 = vmatpush1.bf16.msra.mxu0 %v604
  %5081 = vmatprep.subr.bf16.mxu0 %v607
  %5082 = vmatpush1.bf16.msra.mxu0 %v606
  %5083 = vmatprep.subr.bf16.mxu0 %v609
  %5084 = vmatpush1.bf16.msra.mxu0 %v608
  %5085 = vmatprep.subr.bf16.mxu0 %v611
  %5086 = vmatpush1.bf16.msra.mxu0 %v610
  %5087 = vmatprep.subr.bf16.mxu0 %v613
  %5088 = vmatpush1.bf16.msra.mxu0 %v612
  %5089 = vmatprep.subr.bf16.mxu0 %v615
  %5090 = vmatpush1.bf16.msra.mxu0 %v614
  %5091 = vmatprep.mubr.bf16.mxu0 %v4888
  %5092 = vmatmul.mubr.bf16.gmra.mrb[0].mxu0 %v4887
  %v5093 = vpop.f32.mrb[0].mxu0
  %v5094 = vadd.f32 0.0, %v5093
  %v5095 = vpop.f32.mrb[0].mxu0
  %v5096 = vadd.f32 0.0, %v5095
  %v5097 = vpop.f32.mrb[0].mxu0
  %v5098 = vpop.f32.mrb[0].mxu0
  %5099 = vdwg.mxu0
  %s5100 = smul.u32 13, 2
  %s5101 = smul.addr %s5100, 8
  %s5102 = scalar_lea.vmem [#allocation2], %s5101
  %v5103 = vld [vmem:[%s5102] sm:$0xff]
  %v5104 = vld [vmem:[%s5102 + $0x8] sm:$0xff]
  %5105 = vmatprep.subr.bf16.mxu0 %v823
  %5106 = vmatpush1.bf16.msra.mxu0 %v822
  %5107 = vmatprep.subr.bf16.mxu0 %v825
  %5108 = vmatpush1.bf16.msra.mxu0 %v824
  %5109 = vmatprep.subr.bf16.mxu0 %v827
  %5110 = vmatpush1.bf16.msra.mxu0 %v826
  %5111 = vmatprep.subr.bf16.mxu0 %v829
  %5112 = vmatpush1.bf16.msra.mxu0 %v828
  %5113 = vmatprep.subr.bf16.mxu0 %v831
  %5114 = vmatpush1.bf16.msra.mxu0 %v830
  %5115 = vmatprep.subr.bf16.mxu0 %v833
  %5116 = vmatpush1.bf16.msra.mxu0 %v832
  %5117 = vmatprep.subr.bf16.mxu0 %v835
  %5118 = vmatpush1.bf16.msra.mxu0 %v834
  %5119 = vmatprep.subr.bf16.mxu0 %v837
  %5120 = vmatpush1.bf16.msra.mxu0 %v836
  %5121 = vmatprep.subr.bf16.mxu0 %v839
  %5122 = vmatpush1.bf16.msra.mxu0 %v838
  %5123 = vmatprep.subr.bf16.mxu0 %v841
  %5124 = vmatpush1.bf16.msra.mxu0 %v840
  %5125 = vmatprep.subr.bf16.mxu0 %v843
  %5126 = vmatpush1.bf16.msra.mxu0 %v842
  %5127 = vmatprep.subr.bf16.mxu0 %v845
  %5128 = vmatpush1.bf16.msra.mxu0 %v844
  %5129 = vmatprep.subr.bf16.mxu0 %v847
  %5130 = vmatpush1.bf16.msra.mxu0 %v846
  %5131 = vmatprep.subr.bf16.mxu0 %v849
  %5132 = vmatpush1.bf16.msra.mxu0 %v848
  %5133 = vmatprep.subr.bf16.mxu0 %v851
  %5134 = vmatpush1.bf16.msra.mxu0 %v850
  %5135 = vmatprep.subr.bf16.mxu0 %v853
  %5136 = vmatpush1.bf16.msra.mxu0 %v852
  %5137 = vmatprep.mubr.bf16.mxu0 %v4841
  %5138 = vmatmul.mubr.bf16.gmra.mrb[0].mxu0 %v4840
  %v5139 = vpop.f32.mrb[0].mxu0
  %v5140 = vadd.f32 0.0, %v5139
  %v5141 = vpop.f32.mrb[0].mxu0
  %v5142 = vadd.f32 0.0, %v5141
  %v5143 = vpop.f32.mrb[0].mxu0
  %v5144 = vpop.f32.mrb[0].mxu0
  %5145 = vdwg.mxu0
  %v5146 = vadd.f32 %v5103, %v5140
  %v5147 = vadd.f32 %v5104, %v5142
  %v5148 = vtanh.pop %v5146
  %v5149 = vtanh.pop %v5147
  %v5150 = vpack.c.bf16 %v5148, %v5148
  %v5151 = vpack.c.bf16 %v5149, %v5149
  %5152 = vmatprep.subr.bf16.mxu0 %v1062
  %5153 = vmatpush1.bf16.msra.mxu0 %v1061
  %5154 = vmatprep.subr.bf16.mxu0 %v1064
  %5155 = vmatpush1.bf16.msra.mxu0 %v1063
  %5156 = vmatprep.subr.bf16.mxu0 %v1066
  %5157 = vmatpush1.bf16.msra.mxu0 %v1065
  %5158 = vmatprep.subr.bf16.mxu0 %v1068
  %5159 = vmatpush1.bf16.msra.mxu0 %v1067
  %5160 = vmatprep.subr.bf16.mxu0 %v1070
  %5161 = vmatpush1.bf16.msra.mxu0 %v1069
  %5162 = vmatprep.subr.bf16.mxu0 %v1072
  %5163 = vmatpush1.bf16.msra.mxu0 %v1071
  %5164 = vmatprep.subr.bf16.mxu0 %v1074
  %5165 = vmatpush1.bf16.msra.mxu0 %v1073
  %5166 = vmatprep.subr.bf16.mxu0 %v1076
  %5167 = vmatpush1.bf16.msra.mxu0 %v1075
  %5168 = vmatprep.subr.bf16.mxu0 %v1078
  %5169 = vmatpush1.bf16.msra.mxu0 %v1077
  %5170 = vmatprep.subr.bf16.mxu0 %v1080
  %5171 = vmatpush1.bf16.msra.mxu0 %v1079
  %5172 = vmatprep.subr.bf16.mxu0 %v1082
  %5173 = vmatpush1.bf16.msra.mxu0 %v1081
  %5174 = vmatprep.subr.bf16.mxu0 %v1084
  %5175 = vmatpush1.bf16.msra.mxu0 %v1083
  %5176 = vmatprep.subr.bf16.mxu0 %v1086
  %5177 = vmatpush1.bf16.msra.mxu0 %v1085
  %5178 = vmatprep.subr.bf16.mxu0 %v1088
  %5179 = vmatpush1.bf16.msra.mxu0 %v1087
  %5180 = vmatprep.subr.bf16.mxu0 %v1090
  %5181 = vmatpush1.bf16.msra.mxu0 %v1089
  %5182 = vmatprep.subr.bf16.mxu0 %v1092
  %5183 = vmatpush1.bf16.msra.mxu0 %v1091
  %5184 = vmatprep.mubr.bf16.mxu0 %v5151
  %5185 = vmatmul.mubr.bf16.gmra.mrb[0].mxu0 %v5150
  %v5186 = vpop.f32.mrb[0].mxu0
  %v5187 = vadd.f32 %v5094, %v5186
  %v5188 = vpop.f32.mrb[0].mxu0
  %v5189 = vadd.f32 %v5096, %v5188
  %v5190 = vpop.f32.mrb[0].mxu0
  %v5191 = vpop.f32.mrb[0].mxu0
  %5192 = vdwg.mxu0
  %v5193 = vadd.f32 %v5187, %v449
  %v5194 = vadd.f32 %v5189, %v453
  %v5195 = vtanh.pop %v5193
  %v5196 = vtanh.pop %v5194
  %v5197 = vpack.c.bf16 %v5195, %v5195
  %v5198 = vpack.c.bf16 %v5196, %v5196
  %s5199 = scalar_lea.vmem %s7, 1664
  %v5200 = vld [vmem:[%s5199] sm:$0xf]
  %v5201 = vld [vmem:[%s5199 + $0x4] sm:$0xf]
  %v5202 = vld [vmem:[%s5199 + $0x8] sm:$0xf]
  %v5203 = vld [vmem:[%s5199 + $0xc] sm:$0xf]
  %v5204 = vld [vmem:[%s5199 + $0x10] sm:$0xf]
  %v5205 = vld [vmem:[%s5199 + $0x14] sm:$0xf]
  %v5206 = vld [vmem:[%s5199 + $0x18] sm:$0xf]
  %v5207 = vld [vmem:[%s5199 + $0x1c] sm:$0xf]
  %v5208 = vld [vmem:[%s5199 + $0x20] sm:$0xf]
  %v5209 = vld [vmem:[%s5199 + $0x24] sm:$0xf]
  %v5210 = vld [vmem:[%s5199 + $0x28] sm:$0xf]
  %v5211 = vld [vmem:[%s5199 + $0x2c] sm:$0xf]
  %v5212 = vld [vmem:[%s5199 + $0x30] sm:$0xf]
  %v5213 = vld [vmem:[%s5199 + $0x34] sm:$0xf]
  %v5214 = vld [vmem:[%s5199 + $0x38] sm:$0xf]
  %v5215 = vld [vmem:[%s5199 + $0x3c] sm:$0xf]
  %v5216 = vld [vmem:[%s5199 + $0x40] sm:$0xf]
  %v5217 = vld [vmem:[%s5199 + $0x44] sm:$0xf]
  %v5218 = vld [vmem:[%s5199 + $0x48] sm:$0xf]
  %v5219 = vld [vmem:[%s5199 + $0x4c] sm:$0xf]
  %v5220 = vld [vmem:[%s5199 + $0x50] sm:$0xf]
  %v5221 = vld [vmem:[%s5199 + $0x54] sm:$0xf]
  %v5222 = vld [vmem:[%s5199 + $0x58] sm:$0xf]
  %v5223 = vld [vmem:[%s5199 + $0x5c] sm:$0xf]
  %v5224 = vld [vmem:[%s5199 + $0x60] sm:$0xf]
  %v5225 = vld [vmem:[%s5199 + $0x64] sm:$0xf]
  %v5226 = vld [vmem:[%s5199 + $0x68] sm:$0xf]
  %v5227 = vld [vmem:[%s5199 + $0x6c] sm:$0xf]
  %v5228 = vld [vmem:[%s5199 + $0x70] sm:$0xf]
  %v5229 = vld [vmem:[%s5199 + $0x74] sm:$0xf]
  %v5230 = vld [vmem:[%s5199 + $0x78] sm:$0xf]
  %v5231 = vld [vmem:[%s5199 + $0x7c] sm:$0xf]
  %v5264 = vunpack.c.l.b16 %v5200
  %v5265 = vunpack.c.l.b16 %v5201
  %v5266 = vunpack.c.l.b16 %v5202
  %v5267 = vunpack.c.l.b16 %v5203
  %v5268 = vunpack.c.l.b16 %v5204
  %v5269 = vunpack.c.l.b16 %v5205
  %v5270 = vunpack.c.l.b16 %v5206
  %v5271 = vunpack.c.l.b16 %v5207
  %v5272 = vunpack.c.l.b16 %v5208
  %v5273 = vunpack.c.l.b16 %v5209
  %v5274 = vunpack.c.l.b16 %v5210
  %v5275 = vunpack.c.l.b16 %v5211
  %v5276 = vunpack.c.l.b16 %v5212
  %v5277 = vunpack.c.l.b16 %v5213
  %v5278 = vunpack.c.l.b16 %v5214
  %v5279 = vunpack.c.l.b16 %v5215
  %v5280 = vunpack.c.l.b16 %v5216
  %v5281 = vunpack.c.l.b16 %v5217
  %v5282 = vunpack.c.l.b16 %v5218
  %v5283 = vunpack.c.l.b16 %v5219
  %v5284 = vunpack.c.l.b16 %v5220
  %v5285 = vunpack.c.l.b16 %v5221
  %v5286 = vunpack.c.l.b16 %v5222
  %v5287 = vunpack.c.l.b16 %v5223
  %v5288 = vunpack.c.l.b16 %v5224
  %v5289 = vunpack.c.l.b16 %v5225
  %v5290 = vunpack.c.l.b16 %v5226
  %v5291 = vunpack.c.l.b16 %v5227
  %v5292 = vunpack.c.l.b16 %v5228
  %v5293 = vunpack.c.l.b16 %v5229
  %v5294 = vunpack.c.l.b16 %v5230
  %v5295 = vunpack.c.l.b16 %v5231
  %v5296 = vpack.c.b16 %v5265, %v5264
  %v5297 = vpack.c.b16 %v5267, %v5266
  %v5298 = vpack.c.b16 %v5269, %v5268
  %v5299 = vpack.c.b16 %v5271, %v5270
  %v5300 = vpack.c.b16 %v5273, %v5272
  %v5301 = vpack.c.b16 %v5275, %v5274
  %v5302 = vpack.c.b16 %v5277, %v5276
  %v5303 = vpack.c.b16 %v5279, %v5278
  %v5304 = vpack.c.b16 %v5281, %v5280
  %v5305 = vpack.c.b16 %v5283, %v5282
  %v5306 = vpack.c.b16 %v5285, %v5284
  %v5307 = vpack.c.b16 %v5287, %v5286
  %v5308 = vpack.c.b16 %v5289, %v5288
  %v5309 = vpack.c.b16 %v5291, %v5290
  %v5310 = vpack.c.b16 %v5293, %v5292
  %v5311 = vpack.c.b16 %v5295, %v5294
  %5328 = vmatprep.subr.bf16.mxu0 0
  %5329 = vmatpush1.bf16.msra.mxu0 %v5296
  %5330 = vmatprep.subr.bf16.mxu0 0
  %5331 = vmatpush1.bf16.msra.mxu0 %v5297
  %5332 = vmatprep.subr.bf16.mxu0 0
  %5333 = vmatpush1.bf16.msra.mxu0 %v5298
  %5334 = vmatprep.subr.bf16.mxu0 0
  %5335 = vmatpush1.bf16.msra.mxu0 %v5299
  %5336 = vmatprep.subr.bf16.mxu0 0
  %5337 = vmatpush1.bf16.msra.mxu0 %v5300
  %5338 = vmatprep.subr.bf16.mxu0 0
  %5339 = vmatpush1.bf16.msra.mxu0 %v5301
  %5340 = vmatprep.subr.bf16.mxu0 0
  %5341 = vmatpush1.bf16.msra.mxu0 %v5302
  %5342 = vmatprep.subr.bf16.mxu0 0
  %5343 = vmatpush1.bf16.msra.mxu0 %v5303
  %5344 = vmatprep.subr.bf16.mxu0 0
  %5345 = vmatpush1.bf16.msra.mxu0 %v5304
  %5346 = vmatprep.subr.bf16.mxu0 0
  %5347 = vmatpush1.bf16.msra.mxu0 %v5305
  %5348 = vmatprep.subr.bf16.mxu0 0
  %5349 = vmatpush1.bf16.msra.mxu0 %v5306
  %5350 = vmatprep.subr.bf16.mxu0 0
  %5351 = vmatpush1.bf16.msra.mxu0 %v5307
  %5352 = vmatprep.subr.bf16.mxu0 0
  %5353 = vmatpush1.bf16.msra.mxu0 %v5308
  %5354 = vmatprep.subr.bf16.mxu0 0
  %5355 = vmatpush1.bf16.msra.mxu0 %v5309
  %5356 = vmatprep.subr.bf16.mxu0 0
  %5357 = vmatpush1.bf16.msra.mxu0 %v5310
  %5358 = vmatprep.subr.bf16.mxu0 0
  %5359 = vmatpush1.bf16.msra.mxu0 %v5311
  %5360 = vmatprep.mubr.bf16.mxu0 %v5198
  %5361 = vmatmul.mubr.bf16.gmra.mrb[0].mxu0 %v5197
  %v5362 = vpop.f32.mrb[0].mxu0
  %v5363 = vadd.f32 0.0, %v5362
  %v5364 = vpop.f32.mrb[0].mxu0
  %v5365 = vpop.f32.mrb[0].mxu0
  %v5366 = vpop.f32.mrb[0].mxu0
  %5367 = vdwg.mxu0
  %v5368 = vadd.f32 %v5058, %v5363
  %5369 = vmatprep.subr.bf16.mxu0 %v585
  %5370 = vmatpush1.bf16.msra.mxu0 %v584
  %5371 = vmatprep.subr.bf16.mxu0 %v587
  %5372 = vmatpush1.bf16.msra.mxu0 %v586
  %5373 = vmatprep.subr.bf16.mxu0 %v589
  %5374 = vmatpush1.bf16.msra.mxu0 %v588
  %5375 = vmatprep.subr.bf16.mxu0 %v591
  %5376 = vmatpush1.bf16.msra.mxu0 %v590
  %5377 = vmatprep.subr.bf16.mxu0 %v593
  %5378 = vmatpush1.bf16.msra.mxu0 %v592
  %5379 = vmatprep.subr.bf16.mxu0 %v595
  %5380 = vmatpush1.bf16.msra.mxu0 %v594
  %5381 = vmatprep.subr.bf16.mxu0 %v597
  %5382 = vmatpush1.bf16.msra.mxu0 %v596
  %5383 = vmatprep.subr.bf16.mxu0 %v599
  %5384 = vmatpush1.bf16.msra.mxu0 %v598
  %5385 = vmatprep.subr.bf16.mxu0 %v601
  %5386 = vmatpush1.bf16.msra.mxu0 %v600
  %5387 = vmatprep.subr.bf16.mxu0 %v603
  %5388 = vmatpush1.bf16.msra.mxu0 %v602
  %5389 = vmatprep.subr.bf16.mxu0 %v605
  %5390 = vmatpush1.bf16.msra.mxu0 %v604
  %5391 = vmatprep.subr.bf16.mxu0 %v607
  %5392 = vmatpush1.bf16.msra.mxu0 %v606
  %5393 = vmatprep.subr.bf16.mxu0 %v609
  %5394 = vmatpush1.bf16.msra.mxu0 %v608
  %5395 = vmatprep.subr.bf16.mxu0 %v611
  %5396 = vmatpush1.bf16.msra.mxu0 %v610
  %5397 = vmatprep.subr.bf16.mxu0 %v613
  %5398 = vmatpush1.bf16.msra.mxu0 %v612
  %5399 = vmatprep.subr.bf16.mxu0 %v615
  %5400 = vmatpush1.bf16.msra.mxu0 %v614
  %5401 = vmatprep.mubr.bf16.mxu0 %v5198
  %5402 = vmatmul.mubr.bf16.gmra.mrb[0].mxu0 %v5197
  %v5403 = vpop.f32.mrb[0].mxu0
  %v5404 = vadd.f32 0.0, %v5403
  %v5405 = vpop.f32.mrb[0].mxu0
  %v5406 = vadd.f32 0.0, %v5405
  %v5407 = vpop.f32.mrb[0].mxu0
  %v5408 = vpop.f32.mrb[0].mxu0
  %5409 = vdwg.mxu0
  %s5410 = smul.u32 14, 2
  %s5411 = smul.addr %s5410, 8
  %s5412 = scalar_lea.vmem [#allocation2], %s5411
  %v5413 = vld [vmem:[%s5412] sm:$0xff]
  %v5414 = vld [vmem:[%s5412 + $0x8] sm:$0xff]
  %5415 = vmatprep.subr.bf16.mxu0 %v823
  %5416 = vmatpush1.bf16.msra.mxu0 %v822
  %5417 = vmatprep.subr.bf16.mxu0 %v825
  %5418 = vmatpush1.bf16.msra.mxu0 %v824
  %5419 = vmatprep.subr.bf16.mxu0 %v827
  %5420 = vmatpush1.bf16.msra.mxu0 %v826
  %5421 = vmatprep.subr.bf16.mxu0 %v829
  %5422 = vmatpush1.bf16.msra.mxu0 %v828
  %5423 = vmatprep.subr.bf16.mxu0 %v831
  %5424 = vmatpush1.bf16.msra.mxu0 %v830
  %5425 = vmatprep.subr.bf16.mxu0 %v833
  %5426 = vmatpush1.bf16.msra.mxu0 %v832
  %5427 = vmatprep.subr.bf16.mxu0 %v835
  %5428 = vmatpush1.bf16.msra.mxu0 %v834
  %5429 = vmatprep.subr.bf16.mxu0 %v837
  %5430 = vmatpush1.bf16.msra.mxu0 %v836
  %5431 = vmatprep.subr.bf16.mxu0 %v839
  %5432 = vmatpush1.bf16.msra.mxu0 %v838
  %5433 = vmatprep.subr.bf16.mxu0 %v841
  %5434 = vmatpush1.bf16.msra.mxu0 %v840
  %5435 = vmatprep.subr.bf16.mxu0 %v843
  %5436 = vmatpush1.bf16.msra.mxu0 %v842
  %5437 = vmatprep.subr.bf16.mxu0 %v845
  %5438 = vmatpush1.bf16.msra.mxu0 %v844
  %5439 = vmatprep.subr.bf16.mxu0 %v847
  %5440 = vmatpush1.bf16.msra.mxu0 %v846
  %5441 = vmatprep.subr.bf16.mxu0 %v849
  %5442 = vmatpush1.bf16.msra.mxu0 %v848
  %5443 = vmatprep.subr.bf16.mxu0 %v851
  %5444 = vmatpush1.bf16.msra.mxu0 %v850
  %5445 = vmatprep.subr.bf16.mxu0 %v853
  %5446 = vmatpush1.bf16.msra.mxu0 %v852
  %5447 = vmatprep.mubr.bf16.mxu0 %v5151
  %5448 = vmatmul.mubr.bf16.gmra.mrb[0].mxu0 %v5150
  %v5449 = vpop.f32.mrb[0].mxu0
  %v5450 = vadd.f32 0.0, %v5449
  %v5451 = vpop.f32.mrb[0].mxu0
  %v5452 = vadd.f32 0.0, %v5451
  %v5453 = vpop.f32.mrb[0].mxu0
  %v5454 = vpop.f32.mrb[0].mxu0
  %5455 = vdwg.mxu0
  %v5456 = vadd.f32 %v5413, %v5450
  %v5457 = vadd.f32 %v5414, %v5452
  %v5458 = vtanh.pop %v5456
  %v5459 = vtanh.pop %v5457
  %v5460 = vpack.c.bf16 %v5458, %v5458
  %v5461 = vpack.c.bf16 %v5459, %v5459
  %5462 = vmatprep.subr.bf16.mxu0 %v1062
  %5463 = vmatpush1.bf16.msra.mxu0 %v1061
  %5464 = vmatprep.subr.bf16.mxu0 %v1064
  %5465 = vmatpush1.bf16.msra.mxu0 %v1063
  %5466 = vmatprep.subr.bf16.mxu0 %v1066
  %5467 = vmatpush1.bf16.msra.mxu0 %v1065
  %5468 = vmatprep.subr.bf16.mxu0 %v1068
  %5469 = vmatpush1.bf16.msra.mxu0 %v1067
  %5470 = vmatprep.subr.bf16.mxu0 %v1070
  %5471 = vmatpush1.bf16.msra.mxu0 %v1069
  %5472 = vmatprep.subr.bf16.mxu0 %v1072
  %5473 = vmatpush1.bf16.msra.mxu0 %v1071
  %5474 = vmatprep.subr.bf16.mxu0 %v1074
  %5475 = vmatpush1.bf16.msra.mxu0 %v1073
  %5476 = vmatprep.subr.bf16.mxu0 %v1076
  %5477 = vmatpush1.bf16.msra.mxu0 %v1075
  %5478 = vmatprep.subr.bf16.mxu0 %v1078
  %5479 = vmatpush1.bf16.msra.mxu0 %v1077
  %5480 = vmatprep.subr.bf16.mxu0 %v1080
  %5481 = vmatpush1.bf16.msra.mxu0 %v1079
  %5482 = vmatprep.subr.bf16.mxu0 %v1082
  %5483 = vmatpush1.bf16.msra.mxu0 %v1081
  %5484 = vmatprep.subr.bf16.mxu0 %v1084
  %5485 = vmatpush1.bf16.msra.mxu0 %v1083
  %5486 = vmatprep.subr.bf16.mxu0 %v1086
  %5487 = vmatpush1.bf16.msra.mxu0 %v1085
  %5488 = vmatprep.subr.bf16.mxu0 %v1088
  %5489 = vmatpush1.bf16.msra.mxu0 %v1087
  %5490 = vmatprep.subr.bf16.mxu0 %v1090
  %5491 = vmatpush1.bf16.msra.mxu0 %v1089
  %5492 = vmatprep.subr.bf16.mxu0 %v1092
  %5493 = vmatpush1.bf16.msra.mxu0 %v1091
  %5494 = vmatprep.mubr.bf16.mxu0 %v5461
  %5495 = vmatmul.mubr.bf16.gmra.mrb[0].mxu0 %v5460
  %v5496 = vpop.f32.mrb[0].mxu0
  %v5497 = vadd.f32 %v5404, %v5496
  %v5498 = vpop.f32.mrb[0].mxu0
  %v5499 = vadd.f32 %v5406, %v5498
  %v5500 = vpop.f32.mrb[0].mxu0
  %v5501 = vpop.f32.mrb[0].mxu0
  %5502 = vdwg.mxu0
  %v5503 = vadd.f32 %v5497, %v449
  %v5504 = vadd.f32 %v5499, %v453
  %v5505 = vtanh.pop %v5503
  %v5506 = vtanh.pop %v5504
  %v5507 = vpack.c.bf16 %v5505, %v5505
  %v5508 = vpack.c.bf16 %v5506, %v5506
  %s5509 = scalar_lea.vmem %s7, 1792
  %v5510 = vld [vmem:[%s5509] sm:$0xf]
  %v5511 = vld [vmem:[%s5509 + $0x4] sm:$0xf]
  %v5512 = vld [vmem:[%s5509 + $0x8] sm:$0xf]
  %v5513 = vld [vmem:[%s5509 + $0xc] sm:$0xf]
  %v5514 = vld [vmem:[%s5509 + $0x10] sm:$0xf]
  %v5515 = vld [vmem:[%s5509 + $0x14] sm:$0xf]
  %v5516 = vld [vmem:[%s5509 + $0x18] sm:$0xf]
  %v5517 = vld [vmem:[%s5509 + $0x1c] sm:$0xf]
  %v5518 = vld [vmem:[%s5509 + $0x20] sm:$0xf]
  %v5519 = vld [vmem:[%s5509 + $0x24] sm:$0xf]
  %v5520 = vld [vmem:[%s5509 + $0x28] sm:$0xf]
  %v5521 = vld [vmem:[%s5509 + $0x2c] sm:$0xf]
  %v5522 = vld [vmem:[%s5509 + $0x30] sm:$0xf]
  %v5523 = vld [vmem:[%s5509 + $0x34] sm:$0xf]
  %v5524 = vld [vmem:[%s5509 + $0x38] sm:$0xf]
  %v5525 = vld [vmem:[%s5509 + $0x3c] sm:$0xf]
  %v5526 = vld [vmem:[%s5509 + $0x40] sm:$0xf]
  %v5527 = vld [vmem:[%s5509 + $0x44] sm:$0xf]
  %v5528 = vld [vmem:[%s5509 + $0x48] sm:$0xf]
  %v5529 = vld [vmem:[%s5509 + $0x4c] sm:$0xf]
  %v5530 = vld [vmem:[%s5509 + $0x50] sm:$0xf]
  %v5531 = vld [vmem:[%s5509 + $0x54] sm:$0xf]
  %v5532 = vld [vmem:[%s5509 + $0x58] sm:$0xf]
  %v5533 = vld [vmem:[%s5509 + $0x5c] sm:$0xf]
  %v5534 = vld [vmem:[%s5509 + $0x60] sm:$0xf]
  %v5535 = vld [vmem:[%s5509 + $0x64] sm:$0xf]
  %v5536 = vld [vmem:[%s5509 + $0x68] sm:$0xf]
  %v5537 = vld [vmem:[%s5509 + $0x6c] sm:$0xf]
  %v5538 = vld [vmem:[%s5509 + $0x70] sm:$0xf]
  %v5539 = vld [vmem:[%s5509 + $0x74] sm:$0xf]
  %v5540 = vld [vmem:[%s5509 + $0x78] sm:$0xf]
  %v5541 = vld [vmem:[%s5509 + $0x7c] sm:$0xf]
  %v5574 = vunpack.c.l.b16 %v5510
  %v5575 = vunpack.c.l.b16 %v5511
  %v5576 = vunpack.c.l.b16 %v5512
  %v5577 = vunpack.c.l.b16 %v5513
  %v5578 = vunpack.c.l.b16 %v5514
  %v5579 = vunpack.c.l.b16 %v5515
  %v5580 = vunpack.c.l.b16 %v5516
  %v5581 = vunpack.c.l.b16 %v5517
  %v5582 = vunpack.c.l.b16 %v5518
  %v5583 = vunpack.c.l.b16 %v5519
  %v5584 = vunpack.c.l.b16 %v5520
  %v5585 = vunpack.c.l.b16 %v5521
  %v5586 = vunpack.c.l.b16 %v5522
  %v5587 = vunpack.c.l.b16 %v5523
  %v5588 = vunpack.c.l.b16 %v5524
  %v5589 = vunpack.c.l.b16 %v5525
  %v5590 = vunpack.c.l.b16 %v5526
  %v5591 = vunpack.c.l.b16 %v5527
  %v5592 = vunpack.c.l.b16 %v5528
  %v5593 = vunpack.c.l.b16 %v5529
  %v5594 = vunpack.c.l.b16 %v5530
  %v5595 = vunpack.c.l.b16 %v5531
  %v5596 = vunpack.c.l.b16 %v5532
  %v5597 = vunpack.c.l.b16 %v5533
  %v5598 = vunpack.c.l.b16 %v5534
  %v5599 = vunpack.c.l.b16 %v5535
  %v5600 = vunpack.c.l.b16 %v5536
  %v5601 = vunpack.c.l.b16 %v5537
  %v5602 = vunpack.c.l.b16 %v5538
  %v5603 = vunpack.c.l.b16 %v5539
  %v5604 = vunpack.c.l.b16 %v5540
  %v5605 = vunpack.c.l.b16 %v5541
  %v5606 = vpack.c.b16 %v5575, %v5574
  %v5607 = vpack.c.b16 %v5577, %v5576
  %v5608 = vpack.c.b16 %v5579, %v5578
  %v5609 = vpack.c.b16 %v5581, %v5580
  %v5610 = vpack.c.b16 %v5583, %v5582
  %v5611 = vpack.c.b16 %v5585, %v5584
  %v5612 = vpack.c.b16 %v5587, %v5586
  %v5613 = vpack.c.b16 %v5589, %v5588
  %v5614 = vpack.c.b16 %v5591, %v5590
  %v5615 = vpack.c.b16 %v5593, %v5592
  %v5616 = vpack.c.b16 %v5595, %v5594
  %v5617 = vpack.c.b16 %v5597, %v5596
  %v5618 = vpack.c.b16 %v5599, %v5598
  %v5619 = vpack.c.b16 %v5601, %v5600
  %v5620 = vpack.c.b16 %v5603, %v5602
  %v5621 = vpack.c.b16 %v5605, %v5604
  %5638 = vmatprep.subr.bf16.mxu0 0
  %5639 = vmatpush1.bf16.msra.mxu0 %v5606
  %5640 = vmatprep.subr.bf16.mxu0 0
  %5641 = vmatpush1.bf16.msra.mxu0 %v5607
  %5642 = vmatprep.subr.bf16.mxu0 0
  %5643 = vmatpush1.bf16.msra.mxu0 %v5608
  %5644 = vmatprep.subr.bf16.mxu0 0
  %5645 = vmatpush1.bf16.msra.mxu0 %v5609
  %5646 = vmatprep.subr.bf16.mxu0 0
  %5647 = vmatpush1.bf16.msra.mxu0 %v5610
  %5648 = vmatprep.subr.bf16.mxu0 0
  %5649 = vmatpush1.bf16.msra.mxu0 %v5611
  %5650 = vmatprep.subr.bf16.mxu0 0
  %5651 = vmatpush1.bf16.msra.mxu0 %v5612
  %5652 = vmatprep.subr.bf16.mxu0 0
  %5653 = vmatpush1.bf16.msra.mxu0 %v5613
  %5654 = vmatprep.subr.bf16.mxu0 0
  %5655 = vmatpush1.bf16.msra.mxu0 %v5614
  %5656 = vmatprep.subr.bf16.mxu0 0
  %5657 = vmatpush1.bf16.msra.mxu0 %v5615
  %5658 = vmatprep.subr.bf16.mxu0 0
  %5659 = vmatpush1.bf16.msra.mxu0 %v5616
  %5660 = vmatprep.subr.bf16.mxu0 0
  %5661 = vmatpush1.bf16.msra.mxu0 %v5617
  %5662 = vmatprep.subr.bf16.mxu0 0
  %5663 = vmatpush1.bf16.msra.mxu0 %v5618
  %5664 = vmatprep.subr.bf16.mxu0 0
  %5665 = vmatpush1.bf16.msra.mxu0 %v5619
  %5666 = vmatprep.subr.bf16.mxu0 0
  %5667 = vmatpush1.bf16.msra.mxu0 %v5620
  %5668 = vmatprep.subr.bf16.mxu0 0
  %5669 = vmatpush1.bf16.msra.mxu0 %v5621
  %5670 = vmatprep.mubr.bf16.mxu0 %v5508
  %5671 = vmatmul.mubr.bf16.gmra.mrb[0].mxu0 %v5507
  %v5672 = vpop.f32.mrb[0].mxu0
  %v5673 = vadd.f32 0.0, %v5672
  %v5674 = vpop.f32.mrb[0].mxu0
  %v5675 = vpop.f32.mrb[0].mxu0
  %v5676 = vpop.f32.mrb[0].mxu0
  %5677 = vdwg.mxu0
  %v5678 = vadd.f32 %v5368, %v5673
  %5679 = vmatprep.subr.bf16.mxu0 %v585
  %5680 = vmatpush1.bf16.msra.mxu0 %v584
  %5681 = vmatprep.subr.bf16.mxu0 %v587
  %5682 = vmatpush1.bf16.msra.mxu0 %v586
  %5683 = vmatprep.subr.bf16.mxu0 %v589
  %5684 = vmatpush1.bf16.msra.mxu0 %v588
  %5685 = vmatprep.subr.bf16.mxu0 %v591
  %5686 = vmatpush1.bf16.msra.mxu0 %v590
  %5687 = vmatprep.subr.bf16.mxu0 %v593
  %5688 = vmatpush1.bf16.msra.mxu0 %v592
  %5689 = vmatprep.subr.bf16.mxu0 %v595
  %5690 = vmatpush1.bf16.msra.mxu0 %v594
  %5691 = vmatprep.subr.bf16.mxu0 %v597
  %5692 = vmatpush1.bf16.msra.mxu0 %v596
  %5693 = vmatprep.subr.bf16.mxu0 %v599
  %5694 = vmatpush1.bf16.msra.mxu0 %v598
  %5695 = vmatprep.subr.bf16.mxu0 %v601
  %5696 = vmatpush1.bf16.msra.mxu0 %v600
  %5697 = vmatprep.subr.bf16.mxu0 %v603
  %5698 = vmatpush1.bf16.msra.mxu0 %v602
  %5699 = vmatprep.subr.bf16.mxu0 %v605
  %5700 = vmatpush1.bf16.msra.mxu0 %v604
  %5701 = vmatprep.subr.bf16.mxu0 %v607
  %5702 = vmatpush1.bf16.msra.mxu0 %v606
  %5703 = vmatprep.subr.bf16.mxu0 %v609
  %5704 = vmatpush1.bf16.msra.mxu0 %v608
  %5705 = vmatprep.subr.bf16.mxu0 %v611
  %5706 = vmatpush1.bf16.msra.mxu0 %v610
  %5707 = vmatprep.subr.bf16.mxu0 %v613
  %5708 = vmatpush1.bf16.msra.mxu0 %v612
  %5709 = vmatprep.subr.bf16.mxu0 %v615
  %5710 = vmatpush1.bf16.msra.mxu0 %v614
  %5711 = vmatprep.mubr.bf16.mxu0 %v5508
  %5712 = vmatmul.mubr.bf16.gmra.mrb[0].mxu0 %v5507
  %v5713 = vpop.f32.mrb[0].mxu0
  %v5714 = vadd.f32 0.0, %v5713
  %v5715 = vpop.f32.mrb[0].mxu0
  %v5716 = vadd.f32 0.0, %v5715
  %v5717 = vpop.f32.mrb[0].mxu0
  %v5718 = vpop.f32.mrb[0].mxu0
  %5719 = vdwg.mxu0
  %s5720 = smul.u32 15, 2
  %s5721 = smul.addr %s5720, 8
  %s5722 = scalar_lea.vmem [#allocation2], %s5721
  %v5723 = vld [vmem:[%s5722] sm:$0xff]
  %v5724 = vld [vmem:[%s5722 + $0x8] sm:$0xff]
  %5725 = vmatprep.subr.bf16.mxu0 %v823
  %5726 = vmatpush1.bf16.msra.mxu0 %v822
  %5727 = vmatprep.subr.bf16.mxu0 %v825
  %5728 = vmatpush1.bf16.msra.mxu0 %v824
  %5729 = vmatprep.subr.bf16.mxu0 %v827
  %5730 = vmatpush1.bf16.msra.mxu0 %v826
  %5731 = vmatprep.subr.bf16.mxu0 %v829
  %5732 = vmatpush1.bf16.msra.mxu0 %v828
  %5733 = vmatprep.subr.bf16.mxu0 %v831
  %5734 = vmatpush1.bf16.msra.mxu0 %v830
  %5735 = vmatprep.subr.bf16.mxu0 %v833
  %5736 = vmatpush1.bf16.msra.mxu0 %v832
  %5737 = vmatprep.subr.bf16.mxu0 %v835
  %5738 = vmatpush1.bf16.msra.mxu0 %v834
  %5739 = vmatprep.subr.bf16.mxu0 %v837
  %5740 = vmatpush1.bf16.msra.mxu0 %v836
  %5741 = vmatprep.subr.bf16.mxu0 %v839
  %5742 = vmatpush1.bf16.msra.mxu0 %v838
  %5743 = vmatprep.subr.bf16.mxu0 %v841
  %5744 = vmatpush1.bf16.msra.mxu0 %v840
  %5745 = vmatprep.subr.bf16.mxu0 %v843
  %5746 = vmatpush1.bf16.msra.mxu0 %v842
  %5747 = vmatprep.subr.bf16.mxu0 %v845
  %5748 = vmatpush1.bf16.msra.mxu0 %v844
  %5749 = vmatprep.subr.bf16.mxu0 %v847
  %5750 = vmatpush1.bf16.msra.mxu0 %v846
  %5751 = vmatprep.subr.bf16.mxu0 %v849
  %5752 = vmatpush1.bf16.msra.mxu0 %v848
  %5753 = vmatprep.subr.bf16.mxu0 %v851
  %5754 = vmatpush1.bf16.msra.mxu0 %v850
  %5755 = vmatprep.subr.bf16.mxu0 %v853
  %5756 = vmatpush1.bf16.msra.mxu0 %v852
  %5757 = vmatprep.mubr.bf16.mxu0 %v5461
  %5758 = vmatmul.mubr.bf16.gmra.mrb[0].mxu0 %v5460
  %v5759 = vpop.f32.mrb[0].mxu0
  %v5760 = vadd.f32 0.0, %v5759
  %v5761 = vpop.f32.mrb[0].mxu0
  %v5762 = vadd.f32 0.0, %v5761
  %v5763 = vpop.f32.mrb[0].mxu0
  %v5764 = vpop.f32.mrb[0].mxu0
  %5765 = vdwg.mxu0
  %v5766 = vadd.f32 %v5723, %v5760
  %v5767 = vadd.f32 %v5724, %v5762
  %v5768 = vtanh.pop %v5766
  %v5769 = vtanh.pop %v5767
  %v5770 = vpack.c.bf16 %v5768, %v5768
  %v5771 = vpack.c.bf16 %v5769, %v5769
  %5772 = vmatprep.subr.bf16.mxu0 %v1062
  %5773 = vmatpush1.bf16.msra.mxu0 %v1061
  %5774 = vmatprep.subr.bf16.mxu0 %v1064
  %5775 = vmatpush1.bf16.msra.mxu0 %v1063
  %5776 = vmatprep.subr.bf16.mxu0 %v1066
  %5777 = vmatpush1.bf16.msra.mxu0 %v1065
  %5778 = vmatprep.subr.bf16.mxu0 %v1068
  %5779 = vmatpush1.bf16.msra.mxu0 %v1067
  %5780 = vmatprep.subr.bf16.mxu0 %v1070
  %5781 = vmatpush1.bf16.msra.mxu0 %v1069
  %5782 = vmatprep.subr.bf16.mxu0 %v1072
  %5783 = vmatpush1.bf16.msra.mxu0 %v1071
  %5784 = vmatprep.subr.bf16.mxu0 %v1074
  %5785 = vmatpush1.bf16.msra.mxu0 %v1073
  %5786 = vmatprep.subr.bf16.mxu0 %v1076
  %5787 = vmatpush1.bf16.msra.mxu0 %v1075
  %5788 = vmatprep.subr.bf16.mxu0 %v1078
  %5789 = vmatpush1.bf16.msra.mxu0 %v1077
  %5790 = vmatprep.subr.bf16.mxu0 %v1080
  %5791 = vmatpush1.bf16.msra.mxu0 %v1079
  %5792 = vmatprep.subr.bf16.mxu0 %v1082
  %5793 = vmatpush1.bf16.msra.mxu0 %v1081
  %5794 = vmatprep.subr.bf16.mxu0 %v1084
  %5795 = vmatpush1.bf16.msra.mxu0 %v1083
  %5796 = vmatprep.subr.bf16.mxu0 %v1086
  %5797 = vmatpush1.bf16.msra.mxu0 %v1085
  %5798 = vmatprep.subr.bf16.mxu0 %v1088
  %5799 = vmatpush1.bf16.msra.mxu0 %v1087
  %5800 = vmatprep.subr.bf16.mxu0 %v1090
  %5801 = vmatpush1.bf16.msra.mxu0 %v1089
  %5802 = vmatprep.subr.bf16.mxu0 %v1092
  %5803 = vmatpush1.bf16.msra.mxu0 %v1091
  %5804 = vmatprep.mubr.bf16.mxu0 %v5771
  %5805 = vmatmul.mubr.bf16.gmra.mrb[0].mxu0 %v5770
  %v5806 = vpop.f32.mrb[0].mxu0
  %v5807 = vadd.f32 %v5714, %v5806
  %v5808 = vpop.f32.mrb[0].mxu0
  %v5809 = vadd.f32 %v5716, %v5808
  %v5810 = vpop.f32.mrb[0].mxu0
  %v5811 = vpop.f32.mrb[0].mxu0
  %5812 = vdwg.mxu0
  %v5813 = vadd.f32 %v5807, %v449
  %v5814 = vadd.f32 %v5809, %v453
  %v5815 = vtanh.pop %v5813
  %v5816 = vtanh.pop %v5814
  %v5817 = vpack.c.bf16 %v5815, %v5815
  %v5818 = vpack.c.bf16 %v5816, %v5816
  %s5819 = scalar_lea.vmem %s7, 1920
  %v5820 = vld [vmem:[%s5819] sm:$0xf]
  %v5821 = vld [vmem:[%s5819 + $0x4] sm:$0xf]
  %v5822 = vld [vmem:[%s5819 + $0x8] sm:$0xf]
  %v5823 = vld [vmem:[%s5819 + $0xc] sm:$0xf]
  %v5824 = vld [vmem:[%s5819 + $0x10] sm:$0xf]
  %v5825 = vld [vmem:[%s5819 + $0x14] sm:$0xf]
  %v5826 = vld [vmem:[%s5819 + $0x18] sm:$0xf]
  %v5827 = vld [vmem:[%s5819 + $0x1c] sm:$0xf]
  %v5828 = vld [vmem:[%s5819 + $0x20] sm:$0xf]
  %v5829 = vld [vmem:[%s5819 + $0x24] sm:$0xf]
  %v5830 = vld [vmem:[%s5819 + $0x28] sm:$0xf]
  %v5831 = vld [vmem:[%s5819 + $0x2c] sm:$0xf]
  %v5832 = vld [vmem:[%s5819 + $0x30] sm:$0xf]
  %v5833 = vld [vmem:[%s5819 + $0x34] sm:$0xf]
  %v5834 = vld [vmem:[%s5819 + $0x38] sm:$0xf]
  %v5835 = vld [vmem:[%s5819 + $0x3c] sm:$0xf]
  %v5836 = vld [vmem:[%s5819 + $0x40] sm:$0xf]
  %v5837 = vld [vmem:[%s5819 + $0x44] sm:$0xf]
  %v5838 = vld [vmem:[%s5819 + $0x48] sm:$0xf]
  %v5839 = vld [vmem:[%s5819 + $0x4c] sm:$0xf]
  %v5840 = vld [vmem:[%s5819 + $0x50] sm:$0xf]
  %v5841 = vld [vmem:[%s5819 + $0x54] sm:$0xf]
  %v5842 = vld [vmem:[%s5819 + $0x58] sm:$0xf]
  %v5843 = vld [vmem:[%s5819 + $0x5c] sm:$0xf]
  %v5844 = vld [vmem:[%s5819 + $0x60] sm:$0xf]
  %v5845 = vld [vmem:[%s5819 + $0x64] sm:$0xf]
  %v5846 = vld [vmem:[%s5819 + $0x68] sm:$0xf]
  %v5847 = vld [vmem:[%s5819 + $0x6c] sm:$0xf]
  %v5848 = vld [vmem:[%s5819 + $0x70] sm:$0xf]
  %v5849 = vld [vmem:[%s5819 + $0x74] sm:$0xf]
  %v5850 = vld [vmem:[%s5819 + $0x78] sm:$0xf]
  %v5851 = vld [vmem:[%s5819 + $0x7c] sm:$0xf]
  %v5884 = vunpack.c.l.b16 %v5820
  %v5885 = vunpack.c.l.b16 %v5821
  %v5886 = vunpack.c.l.b16 %v5822
  %v5887 = vunpack.c.l.b16 %v5823
  %v5888 = vunpack.c.l.b16 %v5824
  %v5889 = vunpack.c.l.b16 %v5825
  %v5890 = vunpack.c.l.b16 %v5826
  %v5891 = vunpack.c.l.b16 %v5827
  %v5892 = vunpack.c.l.b16 %v5828
  %v5893 = vunpack.c.l.b16 %v5829
  %v5894 = vunpack.c.l.b16 %v5830
  %v5895 = vunpack.c.l.b16 %v5831
  %v5896 = vunpack.c.l.b16 %v5832
  %v5897 = vunpack.c.l.b16 %v5833
  %v5898 = vunpack.c.l.b16 %v5834
  %v5899 = vunpack.c.l.b16 %v5835
  %v5900 = vunpack.c.l.b16 %v5836
  %v5901 = vunpack.c.l.b16 %v5837
  %v5902 = vunpack.c.l.b16 %v5838
  %v5903 = vunpack.c.l.b16 %v5839
  %v5904 = vunpack.c.l.b16 %v5840
  %v5905 = vunpack.c.l.b16 %v5841
  %v5906 = vunpack.c.l.b16 %v5842
  %v5907 = vunpack.c.l.b16 %v5843
  %v5908 = vunpack.c.l.b16 %v5844
  %v5909 = vunpack.c.l.b16 %v5845
  %v5910 = vunpack.c.l.b16 %v5846
  %v5911 = vunpack.c.l.b16 %v5847
  %v5912 = vunpack.c.l.b16 %v5848
  %v5913 = vunpack.c.l.b16 %v5849
  %v5914 = vunpack.c.l.b16 %v5850
  %v5915 = vunpack.c.l.b16 %v5851
  %v5916 = vpack.c.b16 %v5885, %v5884
  %v5917 = vpack.c.b16 %v5887, %v5886
  %v5918 = vpack.c.b16 %v5889, %v5888
  %v5919 = vpack.c.b16 %v5891, %v5890
  %v5920 = vpack.c.b16 %v5893, %v5892
  %v5921 = vpack.c.b16 %v5895, %v5894
  %v5922 = vpack.c.b16 %v5897, %v5896
  %v5923 = vpack.c.b16 %v5899, %v5898
  %v5924 = vpack.c.b16 %v5901, %v5900
  %v5925 = vpack.c.b16 %v5903, %v5902
  %v5926 = vpack.c.b16 %v5905, %v5904
  %v5927 = vpack.c.b16 %v5907, %v5906
  %v5928 = vpack.c.b16 %v5909, %v5908
  %v5929 = vpack.c.b16 %v5911, %v5910
  %v5930 = vpack.c.b16 %v5913, %v5912
  %v5931 = vpack.c.b16 %v5915, %v5914
  %5948 = vmatprep.subr.bf16.mxu0 0
  %5949 = vmatpush1.bf16.msra.mxu0 %v5916
  %5950 = vmatprep.subr.bf16.mxu0 0
  %5951 = vmatpush1.bf16.msra.mxu0 %v5917
  %5952 = vmatprep.subr.bf16.mxu0 0
  %5953 = vmatpush1.bf16.msra.mxu0 %v5918
  %5954 = vmatprep.subr.bf16.mxu0 0
  %5955 = vmatpush1.bf16.msra.mxu0 %v5919
  %5956 = vmatprep.subr.bf16.mxu0 0
  %5957 = vmatpush1.bf16.msra.mxu0 %v5920
  %5958 = vmatprep.subr.bf16.mxu0 0
  %5959 = vmatpush1.bf16.msra.mxu0 %v5921
  %5960 = vmatprep.subr.bf16.mxu0 0
  %5961 = vmatpush1.bf16.msra.mxu0 %v5922
  %5962 = vmatprep.subr.bf16.mxu0 0
  %5963 = vmatpush1.bf16.msra.mxu0 %v5923
  %5964 = vmatprep.subr.bf16.mxu0 0
  %5965 = vmatpush1.bf16.msra.mxu0 %v5924
  %5966 = vmatprep.subr.bf16.mxu0 0
  %5967 = vmatpush1.bf16.msra.mxu0 %v5925
  %5968 = vmatprep.subr.bf16.mxu0 0
  %5969 = vmatpush1.bf16.msra.mxu0 %v5926
  %5970 = vmatprep.subr.bf16.mxu0 0
  %5971 = vmatpush1.bf16.msra.mxu0 %v5927
  %5972 = vmatprep.subr.bf16.mxu0 0
  %5973 = vmatpush1.bf16.msra.mxu0 %v5928
  %5974 = vmatprep.subr.bf16.mxu0 0
  %5975 = vmatpush1.bf16.msra.mxu0 %v5929
  %5976 = vmatprep.subr.bf16.mxu0 0
  %5977 = vmatpush1.bf16.msra.mxu0 %v5930
  %5978 = vmatprep.subr.bf16.mxu0 0
  %5979 = vmatpush1.bf16.msra.mxu0 %v5931
  %5980 = vmatprep.mubr.bf16.mxu0 %v5818
  %5981 = vmatmul.mubr.bf16.gmra.mrb[0].mxu0 %v5817
  %v5982 = vpop.f32.mrb[0].mxu0
  %v5983 = vadd.f32 0.0, %v5982
  %v5984 = vpop.f32.mrb[0].mxu0
  %v5985 = vpop.f32.mrb[0].mxu0
  %v5986 = vpop.f32.mrb[0].mxu0
  %5987 = vdwg.mxu0
  %v5988 = vadd.f32 %v5678, %v5983
  %5989 = vmatprep.subr.bf16.mxu0 %v585
  %5990 = vmatpush1.bf16.msra.mxu0 %v584
  %5991 = vmatprep.subr.bf16.mxu0 %v587
  %5992 = vmatpush1.bf16.msra.mxu0 %v586
  %5993 = vmatprep.subr.bf16.mxu0 %v589
  %5994 = vmatpush1.bf16.msra.mxu0 %v588
  %5995 = vmatprep.subr.bf16.mxu0 %v591
  %5996 = vmatpush1.bf16.msra.mxu0 %v590
  %5997 = vmatprep.subr.bf16.mxu0 %v593
  %5998 = vmatpush1.bf16.msra.mxu0 %v592
  %5999 = vmatprep.subr.bf16.mxu0 %v595
  %6000 = vmatpush1.bf16.msra.mxu0 %v594
  %6001 = vmatprep.subr.bf16.mxu0 %v597
  %6002 = vmatpush1.bf16.msra.mxu0 %v596
  %6003 = vmatprep.subr.bf16.mxu0 %v599
  %6004 = vmatpush1.bf16.msra.mxu0 %v598
  %6005 = vmatprep.subr.bf16.mxu0 %v601
  %6006 = vmatpush1.bf16.msra.mxu0 %v600
  %6007 = vmatprep.subr.bf16.mxu0 %v603
  %6008 = vmatpush1.bf16.msra.mxu0 %v602
  %6009 = vmatprep.subr.bf16.mxu0 %v605
  %6010 = vmatpush1.bf16.msra.mxu0 %v604
  %6011 = vmatprep.subr.bf16.mxu0 %v607
  %6012 = vmatpush1.bf16.msra.mxu0 %v606
  %6013 = vmatprep.subr.bf16.mxu0 %v609
  %6014 = vmatpush1.bf16.msra.mxu0 %v608
  %6015 = vmatprep.subr.bf16.mxu0 %v611
  %6016 = vmatpush1.bf16.msra.mxu0 %v610
  %6017 = vmatprep.subr.bf16.mxu0 %v613
  %6018 = vmatpush1.bf16.msra.mxu0 %v612
  %6019 = vmatprep.subr.bf16.mxu0 %v615
  %6020 = vmatpush1.bf16.msra.mxu0 %v614
  %6021 = vmatprep.mubr.bf16.mxu0 %v5818
  %6022 = vmatmul.mubr.bf16.gmra.mrb[0].mxu0 %v5817
  %v6023 = vpop.f32.mrb[0].mxu0
  %v6024 = vadd.f32 0.0, %v6023
  %v6025 = vpop.f32.mrb[0].mxu0
  %v6026 = vadd.f32 0.0, %v6025
  %v6027 = vpop.f32.mrb[0].mxu0
  %v6028 = vpop.f32.mrb[0].mxu0
  %6029 = vdwg.mxu0
  %s6030 = smul.u32 16, 2
  %s6031 = smul.addr %s6030, 8
  %s6032 = scalar_lea.vmem [#allocation2], %s6031
  %v6033 = vld [vmem:[%s6032] sm:$0xff]
  %v6034 = vld [vmem:[%s6032 + $0x8] sm:$0xff]
  %6035 = vmatprep.subr.bf16.mxu0 %v823
  %6036 = vmatpush1.bf16.msra.mxu0 %v822
  %6037 = vmatprep.subr.bf16.mxu0 %v825
  %6038 = vmatpush1.bf16.msra.mxu0 %v824
  %6039 = vmatprep.subr.bf16.mxu0 %v827
  %6040 = vmatpush1.bf16.msra.mxu0 %v826
  %6041 = vmatprep.subr.bf16.mxu0 %v829
  %6042 = vmatpush1.bf16.msra.mxu0 %v828
  %6043 = vmatprep.subr.bf16.mxu0 %v831
  %6044 = vmatpush1.bf16.msra.mxu0 %v830
  %6045 = vmatprep.subr.bf16.mxu0 %v833
  %6046 = vmatpush1.bf16.msra.mxu0 %v832
  %6047 = vmatprep.subr.bf16.mxu0 %v835
  %6048 = vmatpush1.bf16.msra.mxu0 %v834
  %6049 = vmatprep.subr.bf16.mxu0 %v837
  %6050 = vmatpush1.bf16.msra.mxu0 %v836
  %6051 = vmatprep.subr.bf16.mxu0 %v839
  %6052 = vmatpush1.bf16.msra.mxu0 %v838
  %6053 = vmatprep.subr.bf16.mxu0 %v841
  %6054 = vmatpush1.bf16.msra.mxu0 %v840
  %6055 = vmatprep.subr.bf16.mxu0 %v843
  %6056 = vmatpush1.bf16.msra.mxu0 %v842
  %6057 = vmatprep.subr.bf16.mxu0 %v845
  %6058 = vmatpush1.bf16.msra.mxu0 %v844
  %6059 = vmatprep.subr.bf16.mxu0 %v847
  %6060 = vmatpush1.bf16.msra.mxu0 %v846
  %6061 = vmatprep.subr.bf16.mxu0 %v849
  %6062 = vmatpush1.bf16.msra.mxu0 %v848
  %6063 = vmatprep.subr.bf16.mxu0 %v851
  %6064 = vmatpush1.bf16.msra.mxu0 %v850
  %6065 = vmatprep.subr.bf16.mxu0 %v853
  %6066 = vmatpush1.bf16.msra.mxu0 %v852
  %6067 = vmatprep.mubr.bf16.mxu0 %v5771
  %6068 = vmatmul.mubr.bf16.gmra.mrb[0].mxu0 %v5770
  %v6069 = vpop.f32.mrb[0].mxu0
  %v6070 = vadd.f32 0.0, %v6069
  %v6071 = vpop.f32.mrb[0].mxu0
  %v6072 = vadd.f32 0.0, %v6071
  %v6073 = vpop.f32.mrb[0].mxu0
  %v6074 = vpop.f32.mrb[0].mxu0
  %6075 = vdwg.mxu0
  %v6076 = vadd.f32 %v6033, %v6070
  %v6077 = vadd.f32 %v6034, %v6072
  %v6078 = vtanh.pop %v6076
  %v6079 = vtanh.pop %v6077
  %v6080 = vpack.c.bf16 %v6078, %v6078
  %v6081 = vpack.c.bf16 %v6079, %v6079
  %6082 = vmatprep.subr.bf16.mxu0 %v1062
  %6083 = vmatpush1.bf16.msra.mxu0 %v1061
  %6084 = vmatprep.subr.bf16.mxu0 %v1064
  %6085 = vmatpush1.bf16.msra.mxu0 %v1063
  %6086 = vmatprep.subr.bf16.mxu0 %v1066
  %6087 = vmatpush1.bf16.msra.mxu0 %v1065
  %6088 = vmatprep.subr.bf16.mxu0 %v1068
  %6089 = vmatpush1.bf16.msra.mxu0 %v1067
  %6090 = vmatprep.subr.bf16.mxu0 %v1070
  %6091 = vmatpush1.bf16.msra.mxu0 %v1069
  %6092 = vmatprep.subr.bf16.mxu0 %v1072
  %6093 = vmatpush1.bf16.msra.mxu0 %v1071
  %6094 = vmatprep.subr.bf16.mxu0 %v1074
  %6095 = vmatpush1.bf16.msra.mxu0 %v1073
  %6096 = vmatprep.subr.bf16.mxu0 %v1076
  %6097 = vmatpush1.bf16.msra.mxu0 %v1075
  %6098 = vmatprep.subr.bf16.mxu0 %v1078
  %6099 = vmatpush1.bf16.msra.mxu0 %v1077
  %6100 = vmatprep.subr.bf16.mxu0 %v1080
  %6101 = vmatpush1.bf16.msra.mxu0 %v1079
  %6102 = vmatprep.subr.bf16.mxu0 %v1082
  %6103 = vmatpush1.bf16.msra.mxu0 %v1081
  %6104 = vmatprep.subr.bf16.mxu0 %v1084
  %6105 = vmatpush1.bf16.msra.mxu0 %v1083
  %6106 = vmatprep.subr.bf16.mxu0 %v1086
  %6107 = vmatpush1.bf16.msra.mxu0 %v1085
  %6108 = vmatprep.subr.bf16.mxu0 %v1088
  %6109 = vmatpush1.bf16.msra.mxu0 %v1087
  %6110 = vmatprep.subr.bf16.mxu0 %v1090
  %6111 = vmatpush1.bf16.msra.mxu0 %v1089
  %6112 = vmatprep.subr.bf16.mxu0 %v1092
  %6113 = vmatpush1.bf16.msra.mxu0 %v1091
  %6114 = vmatprep.mubr.bf16.mxu0 %v6081
  %6115 = vmatmul.mubr.bf16.gmra.mrb[0].mxu0 %v6080
  %v6116 = vpop.f32.mrb[0].mxu0
  %v6117 = vadd.f32 %v6024, %v6116
  %v6118 = vpop.f32.mrb[0].mxu0
  %v6119 = vadd.f32 %v6026, %v6118
  %v6120 = vpop.f32.mrb[0].mxu0
  %v6121 = vpop.f32.mrb[0].mxu0
  %6122 = vdwg.mxu0
  %v6123 = vadd.f32 %v6117, %v449
  %v6124 = vadd.f32 %v6119, %v453
  %v6125 = vtanh.pop %v6123
  %v6126 = vtanh.pop %v6124
  %v6127 = vpack.c.bf16 %v6125, %v6125
  %v6128 = vpack.c.bf16 %v6126, %v6126
  %s6129 = scalar_lea.vmem %s7, 2048
  %v6130 = vld [vmem:[%s6129] sm:$0xf]
  %v6131 = vld [vmem:[%s6129 + $0x4] sm:$0xf]
  %v6132 = vld [vmem:[%s6129 + $0x8] sm:$0xf]
  %v6133 = vld [vmem:[%s6129 + $0xc] sm:$0xf]
  %v6134 = vld [vmem:[%s6129 + $0x10] sm:$0xf]
  %v6135 = vld [vmem:[%s6129 + $0x14] sm:$0xf]
  %v6136 = vld [vmem:[%s6129 + $0x18] sm:$0xf]
  %v6137 = vld [vmem:[%s6129 + $0x1c] sm:$0xf]
  %v6138 = vld [vmem:[%s6129 + $0x20] sm:$0xf]
  %v6139 = vld [vmem:[%s6129 + $0x24] sm:$0xf]
  %v6140 = vld [vmem:[%s6129 + $0x28] sm:$0xf]
  %v6141 = vld [vmem:[%s6129 + $0x2c] sm:$0xf]
  %v6142 = vld [vmem:[%s6129 + $0x30] sm:$0xf]
  %v6143 = vld [vmem:[%s6129 + $0x34] sm:$0xf]
  %v6144 = vld [vmem:[%s6129 + $0x38] sm:$0xf]
  %v6145 = vld [vmem:[%s6129 + $0x3c] sm:$0xf]
  %v6146 = vld [vmem:[%s6129 + $0x40] sm:$0xf]
  %v6147 = vld [vmem:[%s6129 + $0x44] sm:$0xf]
  %v6148 = vld [vmem:[%s6129 + $0x48] sm:$0xf]
  %v6149 = vld [vmem:[%s6129 + $0x4c] sm:$0xf]
  %v6150 = vld [vmem:[%s6129 + $0x50] sm:$0xf]
  %v6151 = vld [vmem:[%s6129 + $0x54] sm:$0xf]
  %v6152 = vld [vmem:[%s6129 + $0x58] sm:$0xf]
  %v6153 = vld [vmem:[%s6129 + $0x5c] sm:$0xf]
  %v6154 = vld [vmem:[%s6129 + $0x60] sm:$0xf]
  %v6155 = vld [vmem:[%s6129 + $0x64] sm:$0xf]
  %v6156 = vld [vmem:[%s6129 + $0x68] sm:$0xf]
  %v6157 = vld [vmem:[%s6129 + $0x6c] sm:$0xf]
  %v6158 = vld [vmem:[%s6129 + $0x70] sm:$0xf]
  %v6159 = vld [vmem:[%s6129 + $0x74] sm:$0xf]
  %v6160 = vld [vmem:[%s6129 + $0x78] sm:$0xf]
  %v6161 = vld [vmem:[%s6129 + $0x7c] sm:$0xf]
  %v6194 = vunpack.c.l.b16 %v6130
  %v6195 = vunpack.c.l.b16 %v6131
  %v6196 = vunpack.c.l.b16 %v6132
  %v6197 = vunpack.c.l.b16 %v6133
  %v6198 = vunpack.c.l.b16 %v6134
  %v6199 = vunpack.c.l.b16 %v6135
  %v6200 = vunpack.c.l.b16 %v6136
  %v6201 = vunpack.c.l.b16 %v6137
  %v6202 = vunpack.c.l.b16 %v6138
  %v6203 = vunpack.c.l.b16 %v6139
  %v6204 = vunpack.c.l.b16 %v6140
  %v6205 = vunpack.c.l.b16 %v6141
  %v6206 = vunpack.c.l.b16 %v6142
  %v6207 = vunpack.c.l.b16 %v6143
  %v6208 = vunpack.c.l.b16 %v6144
  %v6209 = vunpack.c.l.b16 %v6145
  %v6210 = vunpack.c.l.b16 %v6146
  %v6211 = vunpack.c.l.b16 %v6147
  %v6212 = vunpack.c.l.b16 %v6148
  %v6213 = vunpack.c.l.b16 %v6149
  %v6214 = vunpack.c.l.b16 %v6150
  %v6215 = vunpack.c.l.b16 %v6151
  %v6216 = vunpack.c.l.b16 %v6152
  %v6217 = vunpack.c.l.b16 %v6153
  %v6218 = vunpack.c.l.b16 %v6154
  %v6219 = vunpack.c.l.b16 %v6155
  %v6220 = vunpack.c.l.b16 %v6156
  %v6221 = vunpack.c.l.b16 %v6157
  %v6222 = vunpack.c.l.b16 %v6158
  %v6223 = vunpack.c.l.b16 %v6159
  %v6224 = vunpack.c.l.b16 %v6160
  %v6225 = vunpack.c.l.b16 %v6161
  %v6226 = vpack.c.b16 %v6195, %v6194
  %v6227 = vpack.c.b16 %v6197, %v6196
  %v6228 = vpack.c.b16 %v6199, %v6198
  %v6229 = vpack.c.b16 %v6201, %v6200
  %v6230 = vpack.c.b16 %v6203, %v6202
  %v6231 = vpack.c.b16 %v6205, %v6204
  %v6232 = vpack.c.b16 %v6207, %v6206
  %v6233 = vpack.c.b16 %v6209, %v6208
  %v6234 = vpack.c.b16 %v6211, %v6210
  %v6235 = vpack.c.b16 %v6213, %v6212
  %v6236 = vpack.c.b16 %v6215, %v6214
  %v6237 = vpack.c.b16 %v6217, %v6216
  %v6238 = vpack.c.b16 %v6219, %v6218
  %v6239 = vpack.c.b16 %v6221, %v6220
  %v6240 = vpack.c.b16 %v6223, %v6222
  %v6241 = vpack.c.b16 %v6225, %v6224
  %6258 = vmatprep.subr.bf16.mxu0 0
  %6259 = vmatpush1.bf16.msra.mxu0 %v6226
  %6260 = vmatprep.subr.bf16.mxu0 0
  %6261 = vmatpush1.bf16.msra.mxu0 %v6227
  %6262 = vmatprep.subr.bf16.mxu0 0
  %6263 = vmatpush1.bf16.msra.mxu0 %v6228
  %6264 = vmatprep.subr.bf16.mxu0 0
  %6265 = vmatpush1.bf16.msra.mxu0 %v6229
  %6266 = vmatprep.subr.bf16.mxu0 0
  %6267 = vmatpush1.bf16.msra.mxu0 %v6230
  %6268 = vmatprep.subr.bf16.mxu0 0
  %6269 = vmatpush1.bf16.msra.mxu0 %v6231
  %6270 = vmatprep.subr.bf16.mxu0 0
  %6271 = vmatpush1.bf16.msra.mxu0 %v6232
  %6272 = vmatprep.subr.bf16.mxu0 0
  %6273 = vmatpush1.bf16.msra.mxu0 %v6233
  %6274 = vmatprep.subr.bf16.mxu0 0
  %6275 = vmatpush1.bf16.msra.mxu0 %v6234
  %6276 = vmatprep.subr.bf16.mxu0 0
  %6277 = vmatpush1.bf16.msra.mxu0 %v6235
  %6278 = vmatprep.subr.bf16.mxu0 0
  %6279 = vmatpush1.bf16.msra.mxu0 %v6236
  %6280 = vmatprep.subr.bf16.mxu0 0
  %6281 = vmatpush1.bf16.msra.mxu0 %v6237
  %6282 = vmatprep.subr.bf16.mxu0 0
  %6283 = vmatpush1.bf16.msra.mxu0 %v6238
  %6284 = vmatprep.subr.bf16.mxu0 0
  %6285 = vmatpush1.bf16.msra.mxu0 %v6239
  %6286 = vmatprep.subr.bf16.mxu0 0
  %6287 = vmatpush1.bf16.msra.mxu0 %v6240
  %6288 = vmatprep.subr.bf16.mxu0 0
  %6289 = vmatpush1.bf16.msra.mxu0 %v6241
  %6290 = vmatprep.mubr.bf16.mxu0 %v6128
  %6291 = vmatmul.mubr.bf16.gmra.mrb[0].mxu0 %v6127
  %v6292 = vpop.f32.mrb[0].mxu0
  %v6293 = vadd.f32 0.0, %v6292
  %v6294 = vpop.f32.mrb[0].mxu0
  %v6295 = vpop.f32.mrb[0].mxu0
  %v6296 = vpop.f32.mrb[0].mxu0
  %6297 = vdwg.mxu0
  %v6298 = vadd.f32 %v5988, %v6293
  %6299 = vmatprep.subr.bf16.mxu0 %v585
  %6300 = vmatpush1.bf16.msra.mxu0 %v584
  %6301 = vmatprep.subr.bf16.mxu0 %v587
  %6302 = vmatpush1.bf16.msra.mxu0 %v586
  %6303 = vmatprep.subr.bf16.mxu0 %v589
  %6304 = vmatpush1.bf16.msra.mxu0 %v588
  %6305 = vmatprep.subr.bf16.mxu0 %v591
  %6306 = vmatpush1.bf16.msra.mxu0 %v590
  %6307 = vmatprep.subr.bf16.mxu0 %v593
  %6308 = vmatpush1.bf16.msra.mxu0 %v592
  %6309 = vmatprep.subr.bf16.mxu0 %v595
  %6310 = vmatpush1.bf16.msra.mxu0 %v594
  %6311 = vmatprep.subr.bf16.mxu0 %v597
  %6312 = vmatpush1.bf16.msra.mxu0 %v596
  %6313 = vmatprep.subr.bf16.mxu0 %v599
  %6314 = vmatpush1.bf16.msra.mxu0 %v598
  %6315 = vmatprep.subr.bf16.mxu0 %v601
  %6316 = vmatpush1.bf16.msra.mxu0 %v600
  %6317 = vmatprep.subr.bf16.mxu0 %v603
  %6318 = vmatpush1.bf16.msra.mxu0 %v602
  %6319 = vmatprep.subr.bf16.mxu0 %v605
  %6320 = vmatpush1.bf16.msra.mxu0 %v604
  %6321 = vmatprep.subr.bf16.mxu0 %v607
  %6322 = vmatpush1.bf16.msra.mxu0 %v606
  %6323 = vmatprep.subr.bf16.mxu0 %v609
  %6324 = vmatpush1.bf16.msra.mxu0 %v608
  %6325 = vmatprep.subr.bf16.mxu0 %v611
  %6326 = vmatpush1.bf16.msra.mxu0 %v610
  %6327 = vmatprep.subr.bf16.mxu0 %v613
  %6328 = vmatpush1.bf16.msra.mxu0 %v612
  %6329 = vmatprep.subr.bf16.mxu0 %v615
  %6330 = vmatpush1.bf16.msra.mxu0 %v614
  %6331 = vmatprep.mubr.bf16.mxu0 %v6128
  %6332 = vmatmul.mubr.bf16.gmra.mrb[0].mxu0 %v6127
  %v6333 = vpop.f32.mrb[0].mxu0
  %v6334 = vadd.f32 0.0, %v6333
  %v6335 = vpop.f32.mrb[0].mxu0
  %v6336 = vadd.f32 0.0, %v6335
  %v6337 = vpop.f32.mrb[0].mxu0
  %v6338 = vpop.f32.mrb[0].mxu0
  %6339 = vdwg.mxu0
  %s6340 = smul.u32 17, 2
  %s6341 = smul.addr %s6340, 8
  %s6342 = scalar_lea.vmem [#allocation2], %s6341
  %v6343 = vld [vmem:[%s6342] sm:$0xff]
  %v6344 = vld [vmem:[%s6342 + $0x8] sm:$0xff]
  %6345 = vmatprep.subr.bf16.mxu0 %v823
  %6346 = vmatpush1.bf16.msra.mxu0 %v822
  %6347 = vmatprep.subr.bf16.mxu0 %v825
  %6348 = vmatpush1.bf16.msra.mxu0 %v824
  %6349 = vmatprep.subr.bf16.mxu0 %v827
  %6350 = vmatpush1.bf16.msra.mxu0 %v826
  %6351 = vmatprep.subr.bf16.mxu0 %v829
  %6352 = vmatpush1.bf16.msra.mxu0 %v828
  %6353 = vmatprep.subr.bf16.mxu0 %v831
  %6354 = vmatpush1.bf16.msra.mxu0 %v830
  %6355 = vmatprep.subr.bf16.mxu0 %v833
  %6356 = vmatpush1.bf16.msra.mxu0 %v832
  %6357 = vmatprep.subr.bf16.mxu0 %v835
  %6358 = vmatpush1.bf16.msra.mxu0 %v834
  %6359 = vmatprep.subr.bf16.mxu0 %v837
  %6360 = vmatpush1.bf16.msra.mxu0 %v836
  %6361 = vmatprep.subr.bf16.mxu0 %v839
  %6362 = vmatpush1.bf16.msra.mxu0 %v838
  %6363 = vmatprep.subr.bf16.mxu0 %v841
  %6364 = vmatpush1.bf16.msra.mxu0 %v840
  %6365 = vmatprep.subr.bf16.mxu0 %v843
  %6366 = vmatpush1.bf16.msra.mxu0 %v842
  %6367 = vmatprep.subr.bf16.mxu0 %v845
  %6368 = vmatpush1.bf16.msra.mxu0 %v844
  %6369 = vmatprep.subr.bf16.mxu0 %v847
  %6370 = vmatpush1.bf16.msra.mxu0 %v846
  %6371 = vmatprep.subr.bf16.mxu0 %v849
  %6372 = vmatpush1.bf16.msra.mxu0 %v848
  %6373 = vmatprep.subr.bf16.mxu0 %v851
  %6374 = vmatpush1.bf16.msra.mxu0 %v850
  %6375 = vmatprep.subr.bf16.mxu0 %v853
  %6376 = vmatpush1.bf16.msra.mxu0 %v852
  %6377 = vmatprep.mubr.bf16.mxu0 %v6081
  %6378 = vmatmul.mubr.bf16.gmra.mrb[0].mxu0 %v6080
  %v6379 = vpop.f32.mrb[0].mxu0
  %v6380 = vadd.f32 0.0, %v6379
  %v6381 = vpop.f32.mrb[0].mxu0
  %v6382 = vadd.f32 0.0, %v6381
  %v6383 = vpop.f32.mrb[0].mxu0
  %v6384 = vpop.f32.mrb[0].mxu0
  %6385 = vdwg.mxu0
  %v6386 = vadd.f32 %v6343, %v6380
  %v6387 = vadd.f32 %v6344, %v6382
  %v6388 = vtanh.pop %v6386
  %v6389 = vtanh.pop %v6387
  %v6390 = vpack.c.bf16 %v6388, %v6388
  %v6391 = vpack.c.bf16 %v6389, %v6389
  %6392 = vmatprep.subr.bf16.mxu0 %v1062
  %6393 = vmatpush1.bf16.msra.mxu0 %v1061
  %6394 = vmatprep.subr.bf16.mxu0 %v1064
  %6395 = vmatpush1.bf16.msra.mxu0 %v1063
  %6396 = vmatprep.subr.bf16.mxu0 %v1066
  %6397 = vmatpush1.bf16.msra.mxu0 %v1065
  %6398 = vmatprep.subr.bf16.mxu0 %v1068
  %6399 = vmatpush1.bf16.msra.mxu0 %v1067
  %6400 = vmatprep.subr.bf16.mxu0 %v1070
  %6401 = vmatpush1.bf16.msra.mxu0 %v1069
  %6402 = vmatprep.subr.bf16.mxu0 %v1072
  %6403 = vmatpush1.bf16.msra.mxu0 %v1071
  %6404 = vmatprep.subr.bf16.mxu0 %v1074
  %6405 = vmatpush1.bf16.msra.mxu0 %v1073
  %6406 = vmatprep.subr.bf16.mxu0 %v1076
  %6407 = vmatpush1.bf16.msra.mxu0 %v1075
  %6408 = vmatprep.subr.bf16.mxu0 %v1078
  %6409 = vmatpush1.bf16.msra.mxu0 %v1077
  %6410 = vmatprep.subr.bf16.mxu0 %v1080
  %6411 = vmatpush1.bf16.msra.mxu0 %v1079
  %6412 = vmatprep.subr.bf16.mxu0 %v1082
  %6413 = vmatpush1.bf16.msra.mxu0 %v1081
  %6414 = vmatprep.subr.bf16.mxu0 %v1084
  %6415 = vmatpush1.bf16.msra.mxu0 %v1083
  %6416 = vmatprep.subr.bf16.mxu0 %v1086
  %6417 = vmatpush1.bf16.msra.mxu0 %v1085
  %6418 = vmatprep.subr.bf16.mxu0 %v1088
  %6419 = vmatpush1.bf16.msra.mxu0 %v1087
  %6420 = vmatprep.subr.bf16.mxu0 %v1090
  %6421 = vmatpush1.bf16.msra.mxu0 %v1089
  %6422 = vmatprep.subr.bf16.mxu0 %v1092
  %6423 = vmatpush1.bf16.msra.mxu0 %v1091
  %6424 = vmatprep.mubr.bf16.mxu0 %v6391
  %6425 = vmatmul.mubr.bf16.gmra.mrb[0].mxu0 %v6390
  %v6426 = vpop.f32.mrb[0].mxu0
  %v6427 = vadd.f32 %v6334, %v6426
  %v6428 = vpop.f32.mrb[0].mxu0
  %v6429 = vadd.f32 %v6336, %v6428
  %v6430 = vpop.f32.mrb[0].mxu0
  %v6431 = vpop.f32.mrb[0].mxu0
  %6432 = vdwg.mxu0
  %v6433 = vadd.f32 %v6427, %v449
  %v6434 = vadd.f32 %v6429, %v453
  %v6435 = vtanh.pop %v6433
  %v6436 = vtanh.pop %v6434
  %v6437 = vpack.c.bf16 %v6435, %v6435
  %v6438 = vpack.c.bf16 %v6436, %v6436
  %s6439 = scalar_lea.vmem %s7, 2176
  %v6440 = vld [vmem:[%s6439] sm:$0xf]
  %v6441 = vld [vmem:[%s6439 + $0x4] sm:$0xf]
  %v6442 = vld [vmem:[%s6439 + $0x8] sm:$0xf]
  %v6443 = vld [vmem:[%s6439 + $0xc] sm:$0xf]
  %v6444 = vld [vmem:[%s6439 + $0x10] sm:$0xf]
  %v6445 = vld [vmem:[%s6439 + $0x14] sm:$0xf]
  %v6446 = vld [vmem:[%s6439 + $0x18] sm:$0xf]
  %v6447 = vld [vmem:[%s6439 + $0x1c] sm:$0xf]
  %v6448 = vld [vmem:[%s6439 + $0x20] sm:$0xf]
  %v6449 = vld [vmem:[%s6439 + $0x24] sm:$0xf]
  %v6450 = vld [vmem:[%s6439 + $0x28] sm:$0xf]
  %v6451 = vld [vmem:[%s6439 + $0x2c] sm:$0xf]
  %v6452 = vld [vmem:[%s6439 + $0x30] sm:$0xf]
  %v6453 = vld [vmem:[%s6439 + $0x34] sm:$0xf]
  %v6454 = vld [vmem:[%s6439 + $0x38] sm:$0xf]
  %v6455 = vld [vmem:[%s6439 + $0x3c] sm:$0xf]
  %v6456 = vld [vmem:[%s6439 + $0x40] sm:$0xf]
  %v6457 = vld [vmem:[%s6439 + $0x44] sm:$0xf]
  %v6458 = vld [vmem:[%s6439 + $0x48] sm:$0xf]
  %v6459 = vld [vmem:[%s6439 + $0x4c] sm:$0xf]
  %v6460 = vld [vmem:[%s6439 + $0x50] sm:$0xf]
  %v6461 = vld [vmem:[%s6439 + $0x54] sm:$0xf]
  %v6462 = vld [vmem:[%s6439 + $0x58] sm:$0xf]
  %v6463 = vld [vmem:[%s6439 + $0x5c] sm:$0xf]
  %v6464 = vld [vmem:[%s6439 + $0x60] sm:$0xf]
  %v6465 = vld [vmem:[%s6439 + $0x64] sm:$0xf]
  %v6466 = vld [vmem:[%s6439 + $0x68] sm:$0xf]
  %v6467 = vld [vmem:[%s6439 + $0x6c] sm:$0xf]
  %v6468 = vld [vmem:[%s6439 + $0x70] sm:$0xf]
  %v6469 = vld [vmem:[%s6439 + $0x74] sm:$0xf]
  %v6470 = vld [vmem:[%s6439 + $0x78] sm:$0xf]
  %v6471 = vld [vmem:[%s6439 + $0x7c] sm:$0xf]
  %v6504 = vunpack.c.l.b16 %v6440
  %v6505 = vunpack.c.l.b16 %v6441
  %v6506 = vunpack.c.l.b16 %v6442
  %v6507 = vunpack.c.l.b16 %v6443
  %v6508 = vunpack.c.l.b16 %v6444
  %v6509 = vunpack.c.l.b16 %v6445
  %v6510 = vunpack.c.l.b16 %v6446
  %v6511 = vunpack.c.l.b16 %v6447
  %v6512 = vunpack.c.l.b16 %v6448
  %v6513 = vunpack.c.l.b16 %v6449
  %v6514 = vunpack.c.l.b16 %v6450
  %v6515 = vunpack.c.l.b16 %v6451
  %v6516 = vunpack.c.l.b16 %v6452
  %v6517 = vunpack.c.l.b16 %v6453
  %v6518 = vunpack.c.l.b16 %v6454
  %v6519 = vunpack.c.l.b16 %v6455
  %v6520 = vunpack.c.l.b16 %v6456
  %v6521 = vunpack.c.l.b16 %v6457
  %v6522 = vunpack.c.l.b16 %v6458
  %v6523 = vunpack.c.l.b16 %v6459
  %v6524 = vunpack.c.l.b16 %v6460
  %v6525 = vunpack.c.l.b16 %v6461
  %v6526 = vunpack.c.l.b16 %v6462
  %v6527 = vunpack.c.l.b16 %v6463
  %v6528 = vunpack.c.l.b16 %v6464
  %v6529 = vunpack.c.l.b16 %v6465
  %v6530 = vunpack.c.l.b16 %v6466
  %v6531 = vunpack.c.l.b16 %v6467
  %v6532 = vunpack.c.l.b16 %v6468
  %v6533 = vunpack.c.l.b16 %v6469
  %v6534 = vunpack.c.l.b16 %v6470
  %v6535 = vunpack.c.l.b16 %v6471
  %v6536 = vpack.c.b16 %v6505, %v6504
  %v6537 = vpack.c.b16 %v6507, %v6506
  %v6538 = vpack.c.b16 %v6509, %v6508
  %v6539 = vpack.c.b16 %v6511, %v6510
  %v6540 = vpack.c.b16 %v6513, %v6512
  %v6541 = vpack.c.b16 %v6515, %v6514
  %v6542 = vpack.c.b16 %v6517, %v6516
  %v6543 = vpack.c.b16 %v6519, %v6518
  %v6544 = vpack.c.b16 %v6521, %v6520
  %v6545 = vpack.c.b16 %v6523, %v6522
  %v6546 = vpack.c.b16 %v6525, %v6524
  %v6547 = vpack.c.b16 %v6527, %v6526
  %v6548 = vpack.c.b16 %v6529, %v6528
  %v6549 = vpack.c.b16 %v6531, %v6530
  %v6550 = vpack.c.b16 %v6533, %v6532
  %v6551 = vpack.c.b16 %v6535, %v6534
  %6568 = vmatprep.subr.bf16.mxu0 0
  %6569 = vmatpush1.bf16.msra.mxu0 %v6536
  %6570 = vmatprep.subr.bf16.mxu0 0
  %6571 = vmatpush1.bf16.msra.mxu0 %v6537
  %6572 = vmatprep.subr.bf16.mxu0 0
  %6573 = vmatpush1.bf16.msra.mxu0 %v6538
  %6574 = vmatprep.subr.bf16.mxu0 0
  %6575 = vmatpush1.bf16.msra.mxu0 %v6539
  %6576 = vmatprep.subr.bf16.mxu0 0
  %6577 = vmatpush1.bf16.msra.mxu0 %v6540
  %6578 = vmatprep.subr.bf16.mxu0 0
  %6579 = vmatpush1.bf16.msra.mxu0 %v6541
  %6580 = vmatprep.subr.bf16.mxu0 0
  %6581 = vmatpush1.bf16.msra.mxu0 %v6542
  %6582 = vmatprep.subr.bf16.mxu0 0
  %6583 = vmatpush1.bf16.msra.mxu0 %v6543
  %6584 = vmatprep.subr.bf16.mxu0 0
  %6585 = vmatpush1.bf16.msra.mxu0 %v6544
  %6586 = vmatprep.subr.bf16.mxu0 0
  %6587 = vmatpush1.bf16.msra.mxu0 %v6545
  %6588 = vmatprep.subr.bf16.mxu0 0
  %6589 = vmatpush1.bf16.msra.mxu0 %v6546
  %6590 = vmatprep.subr.bf16.mxu0 0
  %6591 = vmatpush1.bf16.msra.mxu0 %v6547
  %6592 = vmatprep.subr.bf16.mxu0 0
  %6593 = vmatpush1.bf16.msra.mxu0 %v6548
  %6594 = vmatprep.subr.bf16.mxu0 0
  %6595 = vmatpush1.bf16.msra.mxu0 %v6549
  %6596 = vmatprep.subr.bf16.mxu0 0
  %6597 = vmatpush1.bf16.msra.mxu0 %v6550
  %6598 = vmatprep.subr.bf16.mxu0 0
  %6599 = vmatpush1.bf16.msra.mxu0 %v6551
  %6600 = vmatprep.mubr.bf16.mxu0 %v6438
  %6601 = vmatmul.mubr.bf16.gmra.mrb[0].mxu0 %v6437
  %v6602 = vpop.f32.mrb[0].mxu0
  %v6603 = vadd.f32 0.0, %v6602
  %v6604 = vpop.f32.mrb[0].mxu0
  %v6605 = vpop.f32.mrb[0].mxu0
  %v6606 = vpop.f32.mrb[0].mxu0
  %6607 = vdwg.mxu0
  %v6608 = vadd.f32 %v6298, %v6603
  %6609 = vmatprep.subr.bf16.mxu0 %v585
  %6610 = vmatpush1.bf16.msra.mxu0 %v584
  %6611 = vmatprep.subr.bf16.mxu0 %v587
  %6612 = vmatpush1.bf16.msra.mxu0 %v586
  %6613 = vmatprep.subr.bf16.mxu0 %v589
  %6614 = vmatpush1.bf16.msra.mxu0 %v588
  %6615 = vmatprep.subr.bf16.mxu0 %v591
  %6616 = vmatpush1.bf16.msra.mxu0 %v590
  %6617 = vmatprep.subr.bf16.mxu0 %v593
  %6618 = vmatpush1.bf16.msra.mxu0 %v592
  %6619 = vmatprep.subr.bf16.mxu0 %v595
  %6620 = vmatpush1.bf16.msra.mxu0 %v594
  %6621 = vmatprep.subr.bf16.mxu0 %v597
  %6622 = vmatpush1.bf16.msra.mxu0 %v596
  %6623 = vmatprep.subr.bf16.mxu0 %v599
  %6624 = vmatpush1.bf16.msra.mxu0 %v598
  %6625 = vmatprep.subr.bf16.mxu0 %v601
  %6626 = vmatpush1.bf16.msra.mxu0 %v600
  %6627 = vmatprep.subr.bf16.mxu0 %v603
  %6628 = vmatpush1.bf16.msra.mxu0 %v602
  %6629 = vmatprep.subr.bf16.mxu0 %v605
  %6630 = vmatpush1.bf16.msra.mxu0 %v604
  %6631 = vmatprep.subr.bf16.mxu0 %v607
  %6632 = vmatpush1.bf16.msra.mxu0 %v606
  %6633 = vmatprep.subr.bf16.mxu0 %v609
  %6634 = vmatpush1.bf16.msra.mxu0 %v608
  %6635 = vmatprep.subr.bf16.mxu0 %v611
  %6636 = vmatpush1.bf16.msra.mxu0 %v610
  %6637 = vmatprep.subr.bf16.mxu0 %v613
  %6638 = vmatpush1.bf16.msra.mxu0 %v612
  %6639 = vmatprep.subr.bf16.mxu0 %v615
  %6640 = vmatpush1.bf16.msra.mxu0 %v614
  %6641 = vmatprep.mubr.bf16.mxu0 %v6438
  %6642 = vmatmul.mubr.bf16.gmra.mrb[0].mxu0 %v6437
  %v6643 = vpop.f32.mrb[0].mxu0
  %v6644 = vadd.f32 0.0, %v6643
  %v6645 = vpop.f32.mrb[0].mxu0
  %v6646 = vadd.f32 0.0, %v6645
  %v6647 = vpop.f32.mrb[0].mxu0
  %v6648 = vpop.f32.mrb[0].mxu0
  %6649 = vdwg.mxu0
  %s6650 = smul.u32 18, 2
  %s6651 = smul.addr %s6650, 8
  %s6652 = scalar_lea.vmem [#allocation2], %s6651
  %v6653 = vld [vmem:[%s6652] sm:$0xff]
  %v6654 = vld [vmem:[%s6652 + $0x8] sm:$0xff]
  %6655 = vmatprep.subr.bf16.mxu0 %v823
  %6656 = vmatpush1.bf16.msra.mxu0 %v822
  %6657 = vmatprep.subr.bf16.mxu0 %v825
  %6658 = vmatpush1.bf16.msra.mxu0 %v824
  %6659 = vmatprep.subr.bf16.mxu0 %v827
  %6660 = vmatpush1.bf16.msra.mxu0 %v826
  %6661 = vmatprep.subr.bf16.mxu0 %v829
  %6662 = vmatpush1.bf16.msra.mxu0 %v828
  %6663 = vmatprep.subr.bf16.mxu0 %v831
  %6664 = vmatpush1.bf16.msra.mxu0 %v830
  %6665 = vmatprep.subr.bf16.mxu0 %v833
  %6666 = vmatpush1.bf16.msra.mxu0 %v832
  %6667 = vmatprep.subr.bf16.mxu0 %v835
  %6668 = vmatpush1.bf16.msra.mxu0 %v834
  %6669 = vmatprep.subr.bf16.mxu0 %v837
  %6670 = vmatpush1.bf16.msra.mxu0 %v836
  %6671 = vmatprep.subr.bf16.mxu0 %v839
  %6672 = vmatpush1.bf16.msra.mxu0 %v838
  %6673 = vmatprep.subr.bf16.mxu0 %v841
  %6674 = vmatpush1.bf16.msra.mxu0 %v840
  %6675 = vmatprep.subr.bf16.mxu0 %v843
  %6676 = vmatpush1.bf16.msra.mxu0 %v842
  %6677 = vmatprep.subr.bf16.mxu0 %v845
  %6678 = vmatpush1.bf16.msra.mxu0 %v844
  %6679 = vmatprep.subr.bf16.mxu0 %v847
  %6680 = vmatpush1.bf16.msra.mxu0 %v846
  %6681 = vmatprep.subr.bf16.mxu0 %v849
  %6682 = vmatpush1.bf16.msra.mxu0 %v848
  %6683 = vmatprep.subr.bf16.mxu0 %v851
  %6684 = vmatpush1.bf16.msra.mxu0 %v850
  %6685 = vmatprep.subr.bf16.mxu0 %v853
  %6686 = vmatpush1.bf16.msra.mxu0 %v852
  %6687 = vmatprep.mubr.bf16.mxu0 %v6391
  %6688 = vmatmul.mubr.bf16.gmra.mrb[0].mxu0 %v6390
  %v6689 = vpop.f32.mrb[0].mxu0
  %v6690 = vadd.f32 0.0, %v6689
  %v6691 = vpop.f32.mrb[0].mxu0
  %v6692 = vadd.f32 0.0, %v6691
  %v6693 = vpop.f32.mrb[0].mxu0
  %v6694 = vpop.f32.mrb[0].mxu0
  %6695 = vdwg.mxu0
  %v6696 = vadd.f32 %v6653, %v6690
  %v6697 = vadd.f32 %v6654, %v6692
  %v6698 = vtanh.pop %v6696
  %v6699 = vtanh.pop %v6697
  %v6700 = vpack.c.bf16 %v6698, %v6698
  %v6701 = vpack.c.bf16 %v6699, %v6699
  %6702 = vmatprep.subr.bf16.mxu0 %v1062
  %6703 = vmatpush1.bf16.msra.mxu0 %v1061
  %6704 = vmatprep.subr.bf16.mxu0 %v1064
  %6705 = vmatpush1.bf16.msra.mxu0 %v1063
  %6706 = vmatprep.subr.bf16.mxu0 %v1066
  %6707 = vmatpush1.bf16.msra.mxu0 %v1065
  %6708 = vmatprep.subr.bf16.mxu0 %v1068
  %6709 = vmatpush1.bf16.msra.mxu0 %v1067
  %6710 = vmatprep.subr.bf16.mxu0 %v1070
  %6711 = vmatpush1.bf16.msra.mxu0 %v1069
  %6712 = vmatprep.subr.bf16.mxu0 %v1072
  %6713 = vmatpush1.bf16.msra.mxu0 %v1071
  %6714 = vmatprep.subr.bf16.mxu0 %v1074
  %6715 = vmatpush1.bf16.msra.mxu0 %v1073
  %6716 = vmatprep.subr.bf16.mxu0 %v1076
  %6717 = vmatpush1.bf16.msra.mxu0 %v1075
  %6718 = vmatprep.subr.bf16.mxu0 %v1078
  %6719 = vmatpush1.bf16.msra.mxu0 %v1077
  %6720 = vmatprep.subr.bf16.mxu0 %v1080
  %6721 = vmatpush1.bf16.msra.mxu0 %v1079
  %6722 = vmatprep.subr.bf16.mxu0 %v1082
  %6723 = vmatpush1.bf16.msra.mxu0 %v1081
  %6724 = vmatprep.subr.bf16.mxu0 %v1084
  %6725 = vmatpush1.bf16.msra.mxu0 %v1083
  %6726 = vmatprep.subr.bf16.mxu0 %v1086
  %6727 = vmatpush1.bf16.msra.mxu0 %v1085
  %6728 = vmatprep.subr.bf16.mxu0 %v1088
  %6729 = vmatpush1.bf16.msra.mxu0 %v1087
  %6730 = vmatprep.subr.bf16.mxu0 %v1090
  %6731 = vmatpush1.bf16.msra.mxu0 %v1089
  %6732 = vmatprep.subr.bf16.mxu0 %v1092
  %6733 = vmatpush1.bf16.msra.mxu0 %v1091
  %6734 = vmatprep.mubr.bf16.mxu0 %v6701
  %6735 = vmatmul.mubr.bf16.gmra.mrb[0].mxu0 %v6700
  %v6736 = vpop.f32.mrb[0].mxu0
  %v6737 = vadd.f32 %v6644, %v6736
  %v6738 = vpop.f32.mrb[0].mxu0
  %v6739 = vadd.f32 %v6646, %v6738
  %v6740 = vpop.f32.mrb[0].mxu0
  %v6741 = vpop.f32.mrb[0].mxu0
  %6742 = vdwg.mxu0
  %v6743 = vadd.f32 %v6737, %v449
  %v6744 = vadd.f32 %v6739, %v453
  %v6745 = vtanh.pop %v6743
  %v6746 = vtanh.pop %v6744
  %v6747 = vpack.c.bf16 %v6745, %v6745
  %v6748 = vpack.c.bf16 %v6746, %v6746
  %s6749 = scalar_lea.vmem %s7, 2304
  %v6750 = vld [vmem:[%s6749] sm:$0xf]
  %v6751 = vld [vmem:[%s6749 + $0x4] sm:$0xf]
  %v6752 = vld [vmem:[%s6749 + $0x8] sm:$0xf]
  %v6753 = vld [vmem:[%s6749 + $0xc] sm:$0xf]
  %v6754 = vld [vmem:[%s6749 + $0x10] sm:$0xf]
  %v6755 = vld [vmem:[%s6749 + $0x14] sm:$0xf]
  %v6756 = vld [vmem:[%s6749 + $0x18] sm:$0xf]
  %v6757 = vld [vmem:[%s6749 + $0x1c] sm:$0xf]
  %v6758 = vld [vmem:[%s6749 + $0x20] sm:$0xf]
  %v6759 = vld [vmem:[%s6749 + $0x24] sm:$0xf]
  %v6760 = vld [vmem:[%s6749 + $0x28] sm:$0xf]
  %v6761 = vld [vmem:[%s6749 + $0x2c] sm:$0xf]
  %v6762 = vld [vmem:[%s6749 + $0x30] sm:$0xf]
  %v6763 = vld [vmem:[%s6749 + $0x34] sm:$0xf]
  %v6764 = vld [vmem:[%s6749 + $0x38] sm:$0xf]
  %v6765 = vld [vmem:[%s6749 + $0x3c] sm:$0xf]
  %v6766 = vld [vmem:[%s6749 + $0x40] sm:$0xf]
  %v6767 = vld [vmem:[%s6749 + $0x44] sm:$0xf]
  %v6768 = vld [vmem:[%s6749 + $0x48] sm:$0xf]
  %v6769 = vld [vmem:[%s6749 + $0x4c] sm:$0xf]
  %v6770 = vld [vmem:[%s6749 + $0x50] sm:$0xf]
  %v6771 = vld [vmem:[%s6749 + $0x54] sm:$0xf]
  %v6772 = vld [vmem:[%s6749 + $0x58] sm:$0xf]
  %v6773 = vld [vmem:[%s6749 + $0x5c] sm:$0xf]
  %v6774 = vld [vmem:[%s6749 + $0x60] sm:$0xf]
  %v6775 = vld [vmem:[%s6749 + $0x64] sm:$0xf]
  %v6776 = vld [vmem:[%s6749 + $0x68] sm:$0xf]
  %v6777 = vld [vmem:[%s6749 + $0x6c] sm:$0xf]
  %v6778 = vld [vmem:[%s6749 + $0x70] sm:$0xf]
  %v6779 = vld [vmem:[%s6749 + $0x74] sm:$0xf]
  %v6780 = vld [vmem:[%s6749 + $0x78] sm:$0xf]
  %v6781 = vld [vmem:[%s6749 + $0x7c] sm:$0xf]
  %v6814 = vunpack.c.l.b16 %v6750
  %v6815 = vunpack.c.l.b16 %v6751
  %v6816 = vunpack.c.l.b16 %v6752
  %v6817 = vunpack.c.l.b16 %v6753
  %v6818 = vunpack.c.l.b16 %v6754
  %v6819 = vunpack.c.l.b16 %v6755
  %v6820 = vunpack.c.l.b16 %v6756
  %v6821 = vunpack.c.l.b16 %v6757
  %v6822 = vunpack.c.l.b16 %v6758
  %v6823 = vunpack.c.l.b16 %v6759
  %v6824 = vunpack.c.l.b16 %v6760
  %v6825 = vunpack.c.l.b16 %v6761
  %v6826 = vunpack.c.l.b16 %v6762
  %v6827 = vunpack.c.l.b16 %v6763
  %v6828 = vunpack.c.l.b16 %v6764
  %v6829 = vunpack.c.l.b16 %v6765
  %v6830 = vunpack.c.l.b16 %v6766
  %v6831 = vunpack.c.l.b16 %v6767
  %v6832 = vunpack.c.l.b16 %v6768
  %v6833 = vunpack.c.l.b16 %v6769
  %v6834 = vunpack.c.l.b16 %v6770
  %v6835 = vunpack.c.l.b16 %v6771
  %v6836 = vunpack.c.l.b16 %v6772
  %v6837 = vunpack.c.l.b16 %v6773
  %v6838 = vunpack.c.l.b16 %v6774
  %v6839 = vunpack.c.l.b16 %v6775
  %v6840 = vunpack.c.l.b16 %v6776
  %v6841 = vunpack.c.l.b16 %v6777
  %v6842 = vunpack.c.l.b16 %v6778
  %v6843 = vunpack.c.l.b16 %v6779
  %v6844 = vunpack.c.l.b16 %v6780
  %v6845 = vunpack.c.l.b16 %v6781
  %v6846 = vpack.c.b16 %v6815, %v6814
  %v6847 = vpack.c.b16 %v6817, %v6816
  %v6848 = vpack.c.b16 %v6819, %v6818
  %v6849 = vpack.c.b16 %v6821, %v6820
  %v6850 = vpack.c.b16 %v6823, %v6822
  %v6851 = vpack.c.b16 %v6825, %v6824
  %v6852 = vpack.c.b16 %v6827, %v6826
  %v6853 = vpack.c.b16 %v6829, %v6828
  %v6854 = vpack.c.b16 %v6831, %v6830
  %v6855 = vpack.c.b16 %v6833, %v6832
  %v6856 = vpack.c.b16 %v6835, %v6834
  %v6857 = vpack.c.b16 %v6837, %v6836
  %v6858 = vpack.c.b16 %v6839, %v6838
  %v6859 = vpack.c.b16 %v6841, %v6840
  %v6860 = vpack.c.b16 %v6843, %v6842
  %v6861 = vpack.c.b16 %v6845, %v6844
  %6878 = vmatprep.subr.bf16.mxu0 0
  %6879 = vmatpush1.bf16.msra.mxu0 %v6846
  %6880 = vmatprep.subr.bf16.mxu0 0
  %6881 = vmatpush1.bf16.msra.mxu0 %v6847
  %6882 = vmatprep.subr.bf16.mxu0 0
  %6883 = vmatpush1.bf16.msra.mxu0 %v6848
  %6884 = vmatprep.subr.bf16.mxu0 0
  %6885 = vmatpush1.bf16.msra.mxu0 %v6849
  %6886 = vmatprep.subr.bf16.mxu0 0
  %6887 = vmatpush1.bf16.msra.mxu0 %v6850
  %6888 = vmatprep.subr.bf16.mxu0 0
  %6889 = vmatpush1.bf16.msra.mxu0 %v6851
  %6890 = vmatprep.subr.bf16.mxu0 0
  %6891 = vmatpush1.bf16.msra.mxu0 %v6852
  %6892 = vmatprep.subr.bf16.mxu0 0
  %6893 = vmatpush1.bf16.msra.mxu0 %v6853
  %6894 = vmatprep.subr.bf16.mxu0 0
  %6895 = vmatpush1.bf16.msra.mxu0 %v6854
  %6896 = vmatprep.subr.bf16.mxu0 0
  %6897 = vmatpush1.bf16.msra.mxu0 %v6855
  %6898 = vmatprep.subr.bf16.mxu0 0
  %6899 = vmatpush1.bf16.msra.mxu0 %v6856
  %6900 = vmatprep.subr.bf16.mxu0 0
  %6901 = vmatpush1.bf16.msra.mxu0 %v6857
  %6902 = vmatprep.subr.bf16.mxu0 0
  %6903 = vmatpush1.bf16.msra.mxu0 %v6858
  %6904 = vmatprep.subr.bf16.mxu0 0
  %6905 = vmatpush1.bf16.msra.mxu0 %v6859
  %6906 = vmatprep.subr.bf16.mxu0 0
  %6907 = vmatpush1.bf16.msra.mxu0 %v6860
  %6908 = vmatprep.subr.bf16.mxu0 0
  %6909 = vmatpush1.bf16.msra.mxu0 %v6861
  %6910 = vmatprep.mubr.bf16.mxu0 %v6748
  %6911 = vmatmul.mubr.bf16.gmra.mrb[0].mxu0 %v6747
  %v6912 = vpop.f32.mrb[0].mxu0
  %v6913 = vadd.f32 0.0, %v6912
  %v6914 = vpop.f32.mrb[0].mxu0
  %v6915 = vpop.f32.mrb[0].mxu0
  %v6916 = vpop.f32.mrb[0].mxu0
  %6917 = vdwg.mxu0
  %v6918 = vadd.f32 %v6608, %v6913
  %6919 = vmatprep.subr.bf16.mxu0 %v585
  %6920 = vmatpush1.bf16.msra.mxu0 %v584
  %6921 = vmatprep.subr.bf16.mxu0 %v587
  %6922 = vmatpush1.bf16.msra.mxu0 %v586
  %6923 = vmatprep.subr.bf16.mxu0 %v589
  %6924 = vmatpush1.bf16.msra.mxu0 %v588
  %6925 = vmatprep.subr.bf16.mxu0 %v591
  %6926 = vmatpush1.bf16.msra.mxu0 %v590
  %6927 = vmatprep.subr.bf16.mxu0 %v593
  %6928 = vmatpush1.bf16.msra.mxu0 %v592
  %6929 = vmatprep.subr.bf16.mxu0 %v595
  %6930 = vmatpush1.bf16.msra.mxu0 %v594
  %6931 = vmatprep.subr.bf16.mxu0 %v597
  %6932 = vmatpush1.bf16.msra.mxu0 %v596
  %6933 = vmatprep.subr.bf16.mxu0 %v599
  %6934 = vmatpush1.bf16.msra.mxu0 %v598
  %6935 = vmatprep.subr.bf16.mxu0 %v601
  %6936 = vmatpush1.bf16.msra.mxu0 %v600
  %6937 = vmatprep.subr.bf16.mxu0 %v603
  %6938 = vmatpush1.bf16.msra.mxu0 %v602
  %6939 = vmatprep.subr.bf16.mxu0 %v605
  %6940 = vmatpush1.bf16.msra.mxu0 %v604
  %6941 = vmatprep.subr.bf16.mxu0 %v607
  %6942 = vmatpush1.bf16.msra.mxu0 %v606
  %6943 = vmatprep.subr.bf16.mxu0 %v609
  %6944 = vmatpush1.bf16.msra.mxu0 %v608
  %6945 = vmatprep.subr.bf16.mxu0 %v611
  %6946 = vmatpush1.bf16.msra.mxu0 %v610
  %6947 = vmatprep.subr.bf16.mxu0 %v613
  %6948 = vmatpush1.bf16.msra.mxu0 %v612
  %6949 = vmatprep.subr.bf16.mxu0 %v615
  %6950 = vmatpush1.bf16.msra.mxu0 %v614
  %6951 = vmatprep.mubr.bf16.mxu0 %v6748
  %6952 = vmatmul.mubr.bf16.gmra.mrb[0].mxu0 %v6747
  %v6953 = vpop.f32.mrb[0].mxu0
  %v6954 = vadd.f32 0.0, %v6953
  %v6955 = vpop.f32.mrb[0].mxu0
  %v6956 = vadd.f32 0.0, %v6955
  %v6957 = vpop.f32.mrb[0].mxu0
  %v6958 = vpop.f32.mrb[0].mxu0
  %6959 = vdwg.mxu0
  %s6960 = smul.u32 19, 2
  %s6961 = smul.addr %s6960, 8
  %s6962 = scalar_lea.vmem [#allocation2], %s6961
  %v6963 = vld [vmem:[%s6962] sm:$0xff]
  %v6964 = vld [vmem:[%s6962 + $0x8] sm:$0xff]
  %6965 = vmatprep.subr.bf16.mxu0 %v823
  %6966 = vmatpush1.bf16.msra.mxu0 %v822
  %6967 = vmatprep.subr.bf16.mxu0 %v825
  %6968 = vmatpush1.bf16.msra.mxu0 %v824
  %6969 = vmatprep.subr.bf16.mxu0 %v827
  %6970 = vmatpush1.bf16.msra.mxu0 %v826
  %6971 = vmatprep.subr.bf16.mxu0 %v829
  %6972 = vmatpush1.bf16.msra.mxu0 %v828
  %6973 = vmatprep.subr.bf16.mxu0 %v831
  %6974 = vmatpush1.bf16.msra.mxu0 %v830
  %6975 = vmatprep.subr.bf16.mxu0 %v833
  %6976 = vmatpush1.bf16.msra.mxu0 %v832
  %6977 = vmatprep.subr.bf16.mxu0 %v835
  %6978 = vmatpush1.bf16.msra.mxu0 %v834
  %6979 = vmatprep.subr.bf16.mxu0 %v837
  %6980 = vmatpush1.bf16.msra.mxu0 %v836
  %6981 = vmatprep.subr.bf16.mxu0 %v839
  %6982 = vmatpush1.bf16.msra.mxu0 %v838
  %6983 = vmatprep.subr.bf16.mxu0 %v841
  %6984 = vmatpush1.bf16.msra.mxu0 %v840
  %6985 = vmatprep.subr.bf16.mxu0 %v843
  %6986 = vmatpush1.bf16.msra.mxu0 %v842
  %6987 = vmatprep.subr.bf16.mxu0 %v845
  %6988 = vmatpush1.bf16.msra.mxu0 %v844
  %6989 = vmatprep.subr.bf16.mxu0 %v847
  %6990 = vmatpush1.bf16.msra.mxu0 %v846
  %6991 = vmatprep.subr.bf16.mxu0 %v849
  %6992 = vmatpush1.bf16.msra.mxu0 %v848
  %6993 = vmatprep.subr.bf16.mxu0 %v851
  %6994 = vmatpush1.bf16.msra.mxu0 %v850
  %6995 = vmatprep.subr.bf16.mxu0 %v853
  %6996 = vmatpush1.bf16.msra.mxu0 %v852
  %6997 = vmatprep.mubr.bf16.mxu0 %v6701
  %6998 = vmatmul.mubr.bf16.gmra.mrb[0].mxu0 %v6700
  %v6999 = vpop.f32.mrb[0].mxu0
  %v7000 = vadd.f32 0.0, %v6999
  %v7001 = vpop.f32.mrb[0].mxu0
  %v7002 = vadd.f32 0.0, %v7001
  %v7003 = vpop.f32.mrb[0].mxu0
  %v7004 = vpop.f32.mrb[0].mxu0
  %7005 = vdwg.mxu0
  %v7006 = vadd.f32 %v6963, %v7000
  %v7007 = vadd.f32 %v6964, %v7002
  %v7008 = vtanh.pop %v7006
  %v7009 = vtanh.pop %v7007
  %v7010 = vpack.c.bf16 %v7008, %v7008
  %v7011 = vpack.c.bf16 %v7009, %v7009
  %7012 = vmatprep.subr.bf16.mxu0 %v1062
  %7013 = vmatpush1.bf16.msra.mxu0 %v1061
  %7014 = vmatprep.subr.bf16.mxu0 %v1064
  %7015 = vmatpush1.bf16.msra.mxu0 %v1063
  %7016 = vmatprep.subr.bf16.mxu0 %v1066
  %7017 = vmatpush1.bf16.msra.mxu0 %v1065
  %7018 = vmatprep.subr.bf16.mxu0 %v1068
  %7019 = vmatpush1.bf16.msra.mxu0 %v1067
  %7020 = vmatprep.subr.bf16.mxu0 %v1070
  %7021 = vmatpush1.bf16.msra.mxu0 %v1069
  %7022 = vmatprep.subr.bf16.mxu0 %v1072
  %7023 = vmatpush1.bf16.msra.mxu0 %v1071
  %7024 = vmatprep.subr.bf16.mxu0 %v1074
  %7025 = vmatpush1.bf16.msra.mxu0 %v1073
  %7026 = vmatprep.subr.bf16.mxu0 %v1076
  %7027 = vmatpush1.bf16.msra.mxu0 %v1075
  %7028 = vmatprep.subr.bf16.mxu0 %v1078
  %7029 = vmatpush1.bf16.msra.mxu0 %v1077
  %7030 = vmatprep.subr.bf16.mxu0 %v1080
  %7031 = vmatpush1.bf16.msra.mxu0 %v1079
  %7032 = vmatprep.subr.bf16.mxu0 %v1082
  %7033 = vmatpush1.bf16.msra.mxu0 %v1081
  %7034 = vmatprep.subr.bf16.mxu0 %v1084
  %7035 = vmatpush1.bf16.msra.mxu0 %v1083
  %7036 = vmatprep.subr.bf16.mxu0 %v1086
  %7037 = vmatpush1.bf16.msra.mxu0 %v1085
  %7038 = vmatprep.subr.bf16.mxu0 %v1088
  %7039 = vmatpush1.bf16.msra.mxu0 %v1087
  %7040 = vmatprep.subr.bf16.mxu0 %v1090
  %7041 = vmatpush1.bf16.msra.mxu0 %v1089
  %7042 = vmatprep.subr.bf16.mxu0 %v1092
  %7043 = vmatpush1.bf16.msra.mxu0 %v1091
  %7044 = vmatprep.mubr.bf16.mxu0 %v7011
  %7045 = vmatmul.mubr.bf16.gmra.mrb[0].mxu0 %v7010
  %v7046 = vpop.f32.mrb[0].mxu0
  %v7047 = vadd.f32 %v6954, %v7046
  %v7048 = vpop.f32.mrb[0].mxu0
  %v7049 = vadd.f32 %v6956, %v7048
  %v7050 = vpop.f32.mrb[0].mxu0
  %v7051 = vpop.f32.mrb[0].mxu0
  %7052 = vdwg.mxu0
  %v7053 = vadd.f32 %v7047, %v449
  %v7054 = vadd.f32 %v7049, %v453
  %v7055 = vtanh.pop %v7053
  %v7056 = vtanh.pop %v7054
  %v7057 = vpack.c.bf16 %v7055, %v7055
  %v7058 = vpack.c.bf16 %v7056, %v7056
  %s7059 = scalar_lea.vmem %s7, 2432
  %v7060 = vld [vmem:[%s7059] sm:$0xf]
  %v7061 = vld [vmem:[%s7059 + $0x4] sm:$0xf]
  %v7062 = vld [vmem:[%s7059 + $0x8] sm:$0xf]
  %v7063 = vld [vmem:[%s7059 + $0xc] sm:$0xf]
  %v7064 = vld [vmem:[%s7059 + $0x10] sm:$0xf]
  %v7065 = vld [vmem:[%s7059 + $0x14] sm:$0xf]
  %v7066 = vld [vmem:[%s7059 + $0x18] sm:$0xf]
  %v7067 = vld [vmem:[%s7059 + $0x1c] sm:$0xf]
  %v7068 = vld [vmem:[%s7059 + $0x20] sm:$0xf]
  %v7069 = vld [vmem:[%s7059 + $0x24] sm:$0xf]
  %v7070 = vld [vmem:[%s7059 + $0x28] sm:$0xf]
  %v7071 = vld [vmem:[%s7059 + $0x2c] sm:$0xf]
  %v7072 = vld [vmem:[%s7059 + $0x30] sm:$0xf]
  %v7073 = vld [vmem:[%s7059 + $0x34] sm:$0xf]
  %v7074 = vld [vmem:[%s7059 + $0x38] sm:$0xf]
  %v7075 = vld [vmem:[%s7059 + $0x3c] sm:$0xf]
  %v7076 = vld [vmem:[%s7059 + $0x40] sm:$0xf]
  %v7077 = vld [vmem:[%s7059 + $0x44] sm:$0xf]
  %v7078 = vld [vmem:[%s7059 + $0x48] sm:$0xf]
  %v7079 = vld [vmem:[%s7059 + $0x4c] sm:$0xf]
  %v7080 = vld [vmem:[%s7059 + $0x50] sm:$0xf]
  %v7081 = vld [vmem:[%s7059 + $0x54] sm:$0xf]
  %v7082 = vld [vmem:[%s7059 + $0x58] sm:$0xf]
  %v7083 = vld [vmem:[%s7059 + $0x5c] sm:$0xf]
  %v7084 = vld [vmem:[%s7059 + $0x60] sm:$0xf]
  %v7085 = vld [vmem:[%s7059 + $0x64] sm:$0xf]
  %v7086 = vld [vmem:[%s7059 + $0x68] sm:$0xf]
  %v7087 = vld [vmem:[%s7059 + $0x6c] sm:$0xf]
  %v7088 = vld [vmem:[%s7059 + $0x70] sm:$0xf]
  %v7089 = vld [vmem:[%s7059 + $0x74] sm:$0xf]
  %v7090 = vld [vmem:[%s7059 + $0x78] sm:$0xf]
  %v7091 = vld [vmem:[%s7059 + $0x7c] sm:$0xf]
  %v7124 = vunpack.c.l.b16 %v7060
  %v7125 = vunpack.c.l.b16 %v7061
  %v7126 = vunpack.c.l.b16 %v7062
  %v7127 = vunpack.c.l.b16 %v7063
  %v7128 = vunpack.c.l.b16 %v7064
  %v7129 = vunpack.c.l.b16 %v7065
  %v7130 = vunpack.c.l.b16 %v7066
  %v7131 = vunpack.c.l.b16 %v7067
  %v7132 = vunpack.c.l.b16 %v7068
  %v7133 = vunpack.c.l.b16 %v7069
  %v7134 = vunpack.c.l.b16 %v7070
  %v7135 = vunpack.c.l.b16 %v7071
  %v7136 = vunpack.c.l.b16 %v7072
  %v7137 = vunpack.c.l.b16 %v7073
  %v7138 = vunpack.c.l.b16 %v7074
  %v7139 = vunpack.c.l.b16 %v7075
  %v7140 = vunpack.c.l.b16 %v7076
  %v7141 = vunpack.c.l.b16 %v7077
  %v7142 = vunpack.c.l.b16 %v7078
  %v7143 = vunpack.c.l.b16 %v7079
  %v7144 = vunpack.c.l.b16 %v7080
  %v7145 = vunpack.c.l.b16 %v7081
  %v7146 = vunpack.c.l.b16 %v7082
  %v7147 = vunpack.c.l.b16 %v7083
  %v7148 = vunpack.c.l.b16 %v7084
  %v7149 = vunpack.c.l.b16 %v7085
  %v7150 = vunpack.c.l.b16 %v7086
  %v7151 = vunpack.c.l.b16 %v7087
  %v7152 = vunpack.c.l.b16 %v7088
  %v7153 = vunpack.c.l.b16 %v7089
  %v7154 = vunpack.c.l.b16 %v7090
  %v7155 = vunpack.c.l.b16 %v7091
  %v7156 = vpack.c.b16 %v7125, %v7124
  %v7157 = vpack.c.b16 %v7127, %v7126
  %v7158 = vpack.c.b16 %v7129, %v7128
  %v7159 = vpack.c.b16 %v7131, %v7130
  %v7160 = vpack.c.b16 %v7133, %v7132
  %v7161 = vpack.c.b16 %v7135, %v7134
  %v7162 = vpack.c.b16 %v7137, %v7136
  %v7163 = vpack.c.b16 %v7139, %v7138
  %v7164 = vpack.c.b16 %v7141, %v7140
  %v7165 = vpack.c.b16 %v7143, %v7142
  %v7166 = vpack.c.b16 %v7145, %v7144
  %v7167 = vpack.c.b16 %v7147, %v7146
  %v7168 = vpack.c.b16 %v7149, %v7148
  %v7169 = vpack.c.b16 %v7151, %v7150
  %v7170 = vpack.c.b16 %v7153, %v7152
  %v7171 = vpack.c.b16 %v7155, %v7154
  %7188 = vmatprep.subr.bf16.mxu0 0
  %7189 = vmatpush1.bf16.msra.mxu0 %v7156
  %7190 = vmatprep.subr.bf16.mxu0 0
  %7191 = vmatpush1.bf16.msra.mxu0 %v7157
  %7192 = vmatprep.subr.bf16.mxu0 0
  %7193 = vmatpush1.bf16.msra.mxu0 %v7158
  %7194 = vmatprep.subr.bf16.mxu0 0
  %7195 = vmatpush1.bf16.msra.mxu0 %v7159
  %7196 = vmatprep.subr.bf16.mxu0 0
  %7197 = vmatpush1.bf16.msra.mxu0 %v7160
  %7198 = vmatprep.subr.bf16.mxu0 0
  %7199 = vmatpush1.bf16.msra.mxu0 %v7161
  %7200 = vmatprep.subr.bf16.mxu0 0
  %7201 = vmatpush1.bf16.msra.mxu0 %v7162
  %7202 = vmatprep.subr.bf16.mxu0 0
  %7203 = vmatpush1.bf16.msra.mxu0 %v7163
  %7204 = vmatprep.subr.bf16.mxu0 0
  %7205 = vmatpush1.bf16.msra.mxu0 %v7164
  %7206 = vmatprep.subr.bf16.mxu0 0
  %7207 = vmatpush1.bf16.msra.mxu0 %v7165
  %7208 = vmatprep.subr.bf16.mxu0 0
  %7209 = vmatpush1.bf16.msra.mxu0 %v7166
  %7210 = vmatprep.subr.bf16.mxu0 0
  %7211 = vmatpush1.bf16.msra.mxu0 %v7167
  %7212 = vmatprep.subr.bf16.mxu0 0
  %7213 = vmatpush1.bf16.msra.mxu0 %v7168
  %7214 = vmatprep.subr.bf16.mxu0 0
  %7215 = vmatpush1.bf16.msra.mxu0 %v7169
  %7216 = vmatprep.subr.bf16.mxu0 0
  %7217 = vmatpush1.bf16.msra.mxu0 %v7170
  %7218 = vmatprep.subr.bf16.mxu0 0
  %7219 = vmatpush1.bf16.msra.mxu0 %v7171
  %7220 = vmatprep.mubr.bf16.mxu0 %v7058
  %7221 = vmatmul.mubr.bf16.gmra.mrb[0].mxu0 %v7057
  %v7222 = vpop.f32.mrb[0].mxu0
  %v7223 = vadd.f32 0.0, %v7222
  %v7224 = vpop.f32.mrb[0].mxu0
  %v7225 = vpop.f32.mrb[0].mxu0
  %v7226 = vpop.f32.mrb[0].mxu0
  %7227 = vdwg.mxu0
  %v7228 = vadd.f32 %v6918, %v7223
  %7229 = vmatprep.subr.bf16.mxu0 %v585
  %7230 = vmatpush1.bf16.msra.mxu0 %v584
  %7231 = vmatprep.subr.bf16.mxu0 %v587
  %7232 = vmatpush1.bf16.msra.mxu0 %v586
  %7233 = vmatprep.subr.bf16.mxu0 %v589
  %7234 = vmatpush1.bf16.msra.mxu0 %v588
  %7235 = vmatprep.subr.bf16.mxu0 %v591
  %7236 = vmatpush1.bf16.msra.mxu0 %v590
  %7237 = vmatprep.subr.bf16.mxu0 %v593
  %7238 = vmatpush1.bf16.msra.mxu0 %v592
  %7239 = vmatprep.subr.bf16.mxu0 %v595
  %7240 = vmatpush1.bf16.msra.mxu0 %v594
  %7241 = vmatprep.subr.bf16.mxu0 %v597
  %7242 = vmatpush1.bf16.msra.mxu0 %v596
  %7243 = vmatprep.subr.bf16.mxu0 %v599
  %7244 = vmatpush1.bf16.msra.mxu0 %v598
  %7245 = vmatprep.subr.bf16.mxu0 %v601
  %7246 = vmatpush1.bf16.msra.mxu0 %v600
  %7247 = vmatprep.subr.bf16.mxu0 %v603
  %7248 = vmatpush1.bf16.msra.mxu0 %v602
  %7249 = vmatprep.subr.bf16.mxu0 %v605
  %7250 = vmatpush1.bf16.msra.mxu0 %v604
  %7251 = vmatprep.subr.bf16.mxu0 %v607
  %7252 = vmatpush1.bf16.msra.mxu0 %v606
  %7253 = vmatprep.subr.bf16.mxu0 %v609
  %7254 = vmatpush1.bf16.msra.mxu0 %v608
  %7255 = vmatprep.subr.bf16.mxu0 %v611
  %7256 = vmatpush1.bf16.msra.mxu0 %v610
  %7257 = vmatprep.subr.bf16.mxu0 %v613
  %7258 = vmatpush1.bf16.msra.mxu0 %v612
  %7259 = vmatprep.subr.bf16.mxu0 %v615
  %7260 = vmatpush1.bf16.msra.mxu0 %v614
  %7261 = vmatprep.mubr.bf16.mxu0 %v7058
  %7262 = vmatmul.mubr.bf16.gmra.mrb[0].mxu0 %v7057
  %v7263 = vpop.f32.mrb[0].mxu0
  %v7264 = vadd.f32 0.0, %v7263
  %v7265 = vpop.f32.mrb[0].mxu0
  %v7266 = vadd.f32 0.0, %v7265
  %v7267 = vpop.f32.mrb[0].mxu0
  %v7268 = vpop.f32.mrb[0].mxu0
  %7269 = vdwg.mxu0
  %s7270 = smul.u32 20, 2
  %s7271 = smul.addr %s7270, 8
  %s7272 = scalar_lea.vmem [#allocation2], %s7271
  %v7273 = vld [vmem:[%s7272] sm:$0xff]
  %v7274 = vld [vmem:[%s7272 + $0x8] sm:$0xff]
  %7275 = vmatprep.subr.bf16.mxu0 %v823
  %7276 = vmatpush1.bf16.msra.mxu0 %v822
  %7277 = vmatprep.subr.bf16.mxu0 %v825
  %7278 = vmatpush1.bf16.msra.mxu0 %v824
  %7279 = vmatprep.subr.bf16.mxu0 %v827
  %7280 = vmatpush1.bf16.msra.mxu0 %v826
  %7281 = vmatprep.subr.bf16.mxu0 %v829
  %7282 = vmatpush1.bf16.msra.mxu0 %v828
  %7283 = vmatprep.subr.bf16.mxu0 %v831
  %7284 = vmatpush1.bf16.msra.mxu0 %v830
  %7285 = vmatprep.subr.bf16.mxu0 %v833
  %7286 = vmatpush1.bf16.msra.mxu0 %v832
  %7287 = vmatprep.subr.bf16.mxu0 %v835
  %7288 = vmatpush1.bf16.msra.mxu0 %v834
  %7289 = vmatprep.subr.bf16.mxu0 %v837
  %7290 = vmatpush1.bf16.msra.mxu0 %v836
  %7291 = vmatprep.subr.bf16.mxu0 %v839
  %7292 = vmatpush1.bf16.msra.mxu0 %v838
  %7293 = vmatprep.subr.bf16.mxu0 %v841
  %7294 = vmatpush1.bf16.msra.mxu0 %v840
  %7295 = vmatprep.subr.bf16.mxu0 %v843
  %7296 = vmatpush1.bf16.msra.mxu0 %v842
  %7297 = vmatprep.subr.bf16.mxu0 %v845
  %7298 = vmatpush1.bf16.msra.mxu0 %v844
  %7299 = vmatprep.subr.bf16.mxu0 %v847
  %7300 = vmatpush1.bf16.msra.mxu0 %v846
  %7301 = vmatprep.subr.bf16.mxu0 %v849
  %7302 = vmatpush1.bf16.msra.mxu0 %v848
  %7303 = vmatprep.subr.bf16.mxu0 %v851
  %7304 = vmatpush1.bf16.msra.mxu0 %v850
  %7305 = vmatprep.subr.bf16.mxu0 %v853
  %7306 = vmatpush1.bf16.msra.mxu0 %v852
  %7307 = vmatprep.mubr.bf16.mxu0 %v7011
  %7308 = vmatmul.mubr.bf16.gmra.mrb[0].mxu0 %v7010
  %v7309 = vpop.f32.mrb[0].mxu0
  %v7310 = vadd.f32 0.0, %v7309
  %v7311 = vpop.f32.mrb[0].mxu0
  %v7312 = vadd.f32 0.0, %v7311
  %v7313 = vpop.f32.mrb[0].mxu0
  %v7314 = vpop.f32.mrb[0].mxu0
  %7315 = vdwg.mxu0
  %v7316 = vadd.f32 %v7273, %v7310
  %v7317 = vadd.f32 %v7274, %v7312
  %v7318 = vtanh.pop %v7316
  %v7319 = vtanh.pop %v7317
  %v7320 = vpack.c.bf16 %v7318, %v7318
  %v7321 = vpack.c.bf16 %v7319, %v7319
  %7322 = vmatprep.subr.bf16.mxu0 %v1062
  %7323 = vmatpush1.bf16.msra.mxu0 %v1061
  %7324 = vmatprep.subr.bf16.mxu0 %v1064
  %7325 = vmatpush1.bf16.msra.mxu0 %v1063
  %7326 = vmatprep.subr.bf16.mxu0 %v1066
  %7327 = vmatpush1.bf16.msra.mxu0 %v1065
  %7328 = vmatprep.subr.bf16.mxu0 %v1068
  %7329 = vmatpush1.bf16.msra.mxu0 %v1067
  %7330 = vmatprep.subr.bf16.mxu0 %v1070
  %7331 = vmatpush1.bf16.msra.mxu0 %v1069
  %7332 = vmatprep.subr.bf16.mxu0 %v1072
  %7333 = vmatpush1.bf16.msra.mxu0 %v1071
  %7334 = vmatprep.subr.bf16.mxu0 %v1074
  %7335 = vmatpush1.bf16.msra.mxu0 %v1073
  %7336 = vmatprep.subr.bf16.mxu0 %v1076
  %7337 = vmatpush1.bf16.msra.mxu0 %v1075
  %7338 = vmatprep.subr.bf16.mxu0 %v1078
  %7339 = vmatpush1.bf16.msra.mxu0 %v1077
  %7340 = vmatprep.subr.bf16.mxu0 %v1080
  %7341 = vmatpush1.bf16.msra.mxu0 %v1079
  %7342 = vmatprep.subr.bf16.mxu0 %v1082
  %7343 = vmatpush1.bf16.msra.mxu0 %v1081
  %7344 = vmatprep.subr.bf16.mxu0 %v1084
  %7345 = vmatpush1.bf16.msra.mxu0 %v1083
  %7346 = vmatprep.subr.bf16.mxu0 %v1086
  %7347 = vmatpush1.bf16.msra.mxu0 %v1085
  %7348 = vmatprep.subr.bf16.mxu0 %v1088
  %7349 = vmatpush1.bf16.msra.mxu0 %v1087
  %7350 = vmatprep.subr.bf16.mxu0 %v1090
  %7351 = vmatpush1.bf16.msra.mxu0 %v1089
  %7352 = vmatprep.subr.bf16.mxu0 %v1092
  %7353 = vmatpush1.bf16.msra.mxu0 %v1091
  %7354 = vmatprep.mubr.bf16.mxu0 %v7321
  %7355 = vmatmul.mubr.bf16.gmra.mrb[0].mxu0 %v7320
  %v7356 = vpop.f32.mrb[0].mxu0
  %v7357 = vadd.f32 %v7264, %v7356
  %v7358 = vpop.f32.mrb[0].mxu0
  %v7359 = vadd.f32 %v7266, %v7358
  %v7360 = vpop.f32.mrb[0].mxu0
  %v7361 = vpop.f32.mrb[0].mxu0
  %7362 = vdwg.mxu0
  %v7363 = vadd.f32 %v7357, %v449
  %v7364 = vadd.f32 %v7359, %v453
  %v7365 = vtanh.pop %v7363
  %v7366 = vtanh.pop %v7364
  %v7367 = vpack.c.bf16 %v7365, %v7365
  %v7368 = vpack.c.bf16 %v7366, %v7366
  %s7369 = scalar_lea.vmem %s7, 2560
  %v7370 = vld [vmem:[%s7369] sm:$0xf]
  %v7371 = vld [vmem:[%s7369 + $0x4] sm:$0xf]
  %v7372 = vld [vmem:[%s7369 + $0x8] sm:$0xf]
  %v7373 = vld [vmem:[%s7369 + $0xc] sm:$0xf]
  %v7374 = vld [vmem:[%s7369 + $0x10] sm:$0xf]
  %v7375 = vld [vmem:[%s7369 + $0x14] sm:$0xf]
  %v7376 = vld [vmem:[%s7369 + $0x18] sm:$0xf]
  %v7377 = vld [vmem:[%s7369 + $0x1c] sm:$0xf]
  %v7378 = vld [vmem:[%s7369 + $0x20] sm:$0xf]
  %v7379 = vld [vmem:[%s7369 + $0x24] sm:$0xf]
  %v7380 = vld [vmem:[%s7369 + $0x28] sm:$0xf]
  %v7381 = vld [vmem:[%s7369 + $0x2c] sm:$0xf]
  %v7382 = vld [vmem:[%s7369 + $0x30] sm:$0xf]
  %v7383 = vld [vmem:[%s7369 + $0x34] sm:$0xf]
  %v7384 = vld [vmem:[%s7369 + $0x38] sm:$0xf]
  %v7385 = vld [vmem:[%s7369 + $0x3c] sm:$0xf]
  %v7386 = vld [vmem:[%s7369 + $0x40] sm:$0xf]
  %v7387 = vld [vmem:[%s7369 + $0x44] sm:$0xf]
  %v7388 = vld [vmem:[%s7369 + $0x48] sm:$0xf]
  %v7389 = vld [vmem:[%s7369 + $0x4c] sm:$0xf]
  %v7390 = vld [vmem:[%s7369 + $0x50] sm:$0xf]
  %v7391 = vld [vmem:[%s7369 + $0x54] sm:$0xf]
  %v7392 = vld [vmem:[%s7369 + $0x58] sm:$0xf]
  %v7393 = vld [vmem:[%s7369 + $0x5c] sm:$0xf]
  %v7394 = vld [vmem:[%s7369 + $0x60] sm:$0xf]
  %v7395 = vld [vmem:[%s7369 + $0x64] sm:$0xf]
  %v7396 = vld [vmem:[%s7369 + $0x68] sm:$0xf]
  %v7397 = vld [vmem:[%s7369 + $0x6c] sm:$0xf]
  %v7398 = vld [vmem:[%s7369 + $0x70] sm:$0xf]
  %v7399 = vld [vmem:[%s7369 + $0x74] sm:$0xf]
  %v7400 = vld [vmem:[%s7369 + $0x78] sm:$0xf]
  %v7401 = vld [vmem:[%s7369 + $0x7c] sm:$0xf]
  %v7434 = vunpack.c.l.b16 %v7370
  %v7435 = vunpack.c.l.b16 %v7371
  %v7436 = vunpack.c.l.b16 %v7372
  %v7437 = vunpack.c.l.b16 %v7373
  %v7438 = vunpack.c.l.b16 %v7374
  %v7439 = vunpack.c.l.b16 %v7375
  %v7440 = vunpack.c.l.b16 %v7376
  %v7441 = vunpack.c.l.b16 %v7377
  %v7442 = vunpack.c.l.b16 %v7378
  %v7443 = vunpack.c.l.b16 %v7379
  %v7444 = vunpack.c.l.b16 %v7380
  %v7445 = vunpack.c.l.b16 %v7381
  %v7446 = vunpack.c.l.b16 %v7382
  %v7447 = vunpack.c.l.b16 %v7383
  %v7448 = vunpack.c.l.b16 %v7384
  %v7449 = vunpack.c.l.b16 %v7385
  %v7450 = vunpack.c.l.b16 %v7386
  %v7451 = vunpack.c.l.b16 %v7387
  %v7452 = vunpack.c.l.b16 %v7388
  %v7453 = vunpack.c.l.b16 %v7389
  %v7454 = vunpack.c.l.b16 %v7390
  %v7455 = vunpack.c.l.b16 %v7391
  %v7456 = vunpack.c.l.b16 %v7392
  %v7457 = vunpack.c.l.b16 %v7393
  %v7458 = vunpack.c.l.b16 %v7394
  %v7459 = vunpack.c.l.b16 %v7395
  %v7460 = vunpack.c.l.b16 %v7396
  %v7461 = vunpack.c.l.b16 %v7397
  %v7462 = vunpack.c.l.b16 %v7398
  %v7463 = vunpack.c.l.b16 %v7399
  %v7464 = vunpack.c.l.b16 %v7400
  %v7465 = vunpack.c.l.b16 %v7401
  %v7466 = vpack.c.b16 %v7435, %v7434
  %v7467 = vpack.c.b16 %v7437, %v7436
  %v7468 = vpack.c.b16 %v7439, %v7438
  %v7469 = vpack.c.b16 %v7441, %v7440
  %v7470 = vpack.c.b16 %v7443, %v7442
  %v7471 = vpack.c.b16 %v7445, %v7444
  %v7472 = vpack.c.b16 %v7447, %v7446
  %v7473 = vpack.c.b16 %v7449, %v7448
  %v7474 = vpack.c.b16 %v7451, %v7450
  %v7475 = vpack.c.b16 %v7453, %v7452
  %v7476 = vpack.c.b16 %v7455, %v7454
  %v7477 = vpack.c.b16 %v7457, %v7456
  %v7478 = vpack.c.b16 %v7459, %v7458
  %v7479 = vpack.c.b16 %v7461, %v7460
  %v7480 = vpack.c.b16 %v7463, %v7462
  %v7481 = vpack.c.b16 %v7465, %v7464
  %7498 = vmatprep.subr.bf16.mxu0 0
  %7499 = vmatpush1.bf16.msra.mxu0 %v7466
  %7500 = vmatprep.subr.bf16.mxu0 0
  %7501 = vmatpush1.bf16.msra.mxu0 %v7467
  %7502 = vmatprep.subr.bf16.mxu0 0
  %7503 = vmatpush1.bf16.msra.mxu0 %v7468
  %7504 = vmatprep.subr.bf16.mxu0 0
  %7505 = vmatpush1.bf16.msra.mxu0 %v7469
  %7506 = vmatprep.subr.bf16.mxu0 0
  %7507 = vmatpush1.bf16.msra.mxu0 %v7470
  %7508 = vmatprep.subr.bf16.mxu0 0
  %7509 = vmatpush1.bf16.msra.mxu0 %v7471
  %7510 = vmatprep.subr.bf16.mxu0 0
  %7511 = vmatpush1.bf16.msra.mxu0 %v7472
  %7512 = vmatprep.subr.bf16.mxu0 0
  %7513 = vmatpush1.bf16.msra.mxu0 %v7473
  %7514 = vmatprep.subr.bf16.mxu0 0
  %7515 = vmatpush1.bf16.msra.mxu0 %v7474
  %7516 = vmatprep.subr.bf16.mxu0 0
  %7517 = vmatpush1.bf16.msra.mxu0 %v7475
  %7518 = vmatprep.subr.bf16.mxu0 0
  %7519 = vmatpush1.bf16.msra.mxu0 %v7476
  %7520 = vmatprep.subr.bf16.mxu0 0
  %7521 = vmatpush1.bf16.msra.mxu0 %v7477
  %7522 = vmatprep.subr.bf16.mxu0 0
  %7523 = vmatpush1.bf16.msra.mxu0 %v7478
  %7524 = vmatprep.subr.bf16.mxu0 0
  %7525 = vmatpush1.bf16.msra.mxu0 %v7479
  %7526 = vmatprep.subr.bf16.mxu0 0
  %7527 = vmatpush1.bf16.msra.mxu0 %v7480
  %7528 = vmatprep.subr.bf16.mxu0 0
  %7529 = vmatpush1.bf16.msra.mxu0 %v7481
  %7530 = vmatprep.mubr.bf16.mxu0 %v7368
  %7531 = vmatmul.mubr.bf16.gmra.mrb[0].mxu0 %v7367
  %v7532 = vpop.f32.mrb[0].mxu0
  %v7533 = vadd.f32 0.0, %v7532
  %v7534 = vpop.f32.mrb[0].mxu0
  %v7535 = vpop.f32.mrb[0].mxu0
  %v7536 = vpop.f32.mrb[0].mxu0
  %7537 = vdwg.mxu0
  %v7538 = vadd.f32 %v7228, %v7533
  %7539 = vmatprep.subr.bf16.mxu0 %v585
  %7540 = vmatpush1.bf16.msra.mxu0 %v584
  %7541 = vmatprep.subr.bf16.mxu0 %v587
  %7542 = vmatpush1.bf16.msra.mxu0 %v586
  %7543 = vmatprep.subr.bf16.mxu0 %v589
  %7544 = vmatpush1.bf16.msra.mxu0 %v588
  %7545 = vmatprep.subr.bf16.mxu0 %v591
  %7546 = vmatpush1.bf16.msra.mxu0 %v590
  %7547 = vmatprep.subr.bf16.mxu0 %v593
  %7548 = vmatpush1.bf16.msra.mxu0 %v592
  %7549 = vmatprep.subr.bf16.mxu0 %v595
  %7550 = vmatpush1.bf16.msra.mxu0 %v594
  %7551 = vmatprep.subr.bf16.mxu0 %v597
  %7552 = vmatpush1.bf16.msra.mxu0 %v596
  %7553 = vmatprep.subr.bf16.mxu0 %v599
  %7554 = vmatpush1.bf16.msra.mxu0 %v598
  %7555 = vmatprep.subr.bf16.mxu0 %v601
  %7556 = vmatpush1.bf16.msra.mxu0 %v600
  %7557 = vmatprep.subr.bf16.mxu0 %v603
  %7558 = vmatpush1.bf16.msra.mxu0 %v602
  %7559 = vmatprep.subr.bf16.mxu0 %v605
  %7560 = vmatpush1.bf16.msra.mxu0 %v604
  %7561 = vmatprep.subr.bf16.mxu0 %v607
  %7562 = vmatpush1.bf16.msra.mxu0 %v606
  %7563 = vmatprep.subr.bf16.mxu0 %v609
  %7564 = vmatpush1.bf16.msra.mxu0 %v608
  %7565 = vmatprep.subr.bf16.mxu0 %v611
  %7566 = vmatpush1.bf16.msra.mxu0 %v610
  %7567 = vmatprep.subr.bf16.mxu0 %v613
  %7568 = vmatpush1.bf16.msra.mxu0 %v612
  %7569 = vmatprep.subr.bf16.mxu0 %v615
  %7570 = vmatpush1.bf16.msra.mxu0 %v614
  %7571 = vmatprep.mubr.bf16.mxu0 %v7368
  %7572 = vmatmul.mubr.bf16.gmra.mrb[0].mxu0 %v7367
  %v7573 = vpop.f32.mrb[0].mxu0
  %v7574 = vadd.f32 0.0, %v7573
  %v7575 = vpop.f32.mrb[0].mxu0
  %v7576 = vadd.f32 0.0, %v7575
  %v7577 = vpop.f32.mrb[0].mxu0
  %v7578 = vpop.f32.mrb[0].mxu0
  %7579 = vdwg.mxu0
  %s7580 = smul.u32 21, 2
  %s7581 = smul.addr %s7580, 8
  %s7582 = scalar_lea.vmem [#allocation2], %s7581
  %v7583 = vld [vmem:[%s7582] sm:$0xff]
  %v7584 = vld [vmem:[%s7582 + $0x8] sm:$0xff]
  %7585 = vmatprep.subr.bf16.mxu0 %v823
  %7586 = vmatpush1.bf16.msra.mxu0 %v822
  %7587 = vmatprep.subr.bf16.mxu0 %v825
  %7588 = vmatpush1.bf16.msra.mxu0 %v824
  %7589 = vmatprep.subr.bf16.mxu0 %v827
  %7590 = vmatpush1.bf16.msra.mxu0 %v826
  %7591 = vmatprep.subr.bf16.mxu0 %v829
  %7592 = vmatpush1.bf16.msra.mxu0 %v828
  %7593 = vmatprep.subr.bf16.mxu0 %v831
  %7594 = vmatpush1.bf16.msra.mxu0 %v830
  %7595 = vmatprep.subr.bf16.mxu0 %v833
  %7596 = vmatpush1.bf16.msra.mxu0 %v832
  %7597 = vmatprep.subr.bf16.mxu0 %v835
  %7598 = vmatpush1.bf16.msra.mxu0 %v834
  %7599 = vmatprep.subr.bf16.mxu0 %v837
  %7600 = vmatpush1.bf16.msra.mxu0 %v836
  %7601 = vmatprep.subr.bf16.mxu0 %v839
  %7602 = vmatpush1.bf16.msra.mxu0 %v838
  %7603 = vmatprep.subr.bf16.mxu0 %v841
  %7604 = vmatpush1.bf16.msra.mxu0 %v840
  %7605 = vmatprep.subr.bf16.mxu0 %v843
  %7606 = vmatpush1.bf16.msra.mxu0 %v842
  %7607 = vmatprep.subr.bf16.mxu0 %v845
  %7608 = vmatpush1.bf16.msra.mxu0 %v844
  %7609 = vmatprep.subr.bf16.mxu0 %v847
  %7610 = vmatpush1.bf16.msra.mxu0 %v846
  %7611 = vmatprep.subr.bf16.mxu0 %v849
  %7612 = vmatpush1.bf16.msra.mxu0 %v848
  %7613 = vmatprep.subr.bf16.mxu0 %v851
  %7614 = vmatpush1.bf16.msra.mxu0 %v850
  %7615 = vmatprep.subr.bf16.mxu0 %v853
  %7616 = vmatpush1.bf16.msra.mxu0 %v852
  %7617 = vmatprep.mubr.bf16.mxu0 %v7321
  %7618 = vmatmul.mubr.bf16.gmra.mrb[0].mxu0 %v7320
  %v7619 = vpop.f32.mrb[0].mxu0
  %v7620 = vadd.f32 0.0, %v7619
  %v7621 = vpop.f32.mrb[0].mxu0
  %v7622 = vadd.f32 0.0, %v7621
  %v7623 = vpop.f32.mrb[0].mxu0
  %v7624 = vpop.f32.mrb[0].mxu0
  %7625 = vdwg.mxu0
  %v7626 = vadd.f32 %v7583, %v7620
  %v7627 = vadd.f32 %v7584, %v7622
  %v7628 = vtanh.pop %v7626
  %v7629 = vtanh.pop %v7627
  %v7630 = vpack.c.bf16 %v7628, %v7628
  %v7631 = vpack.c.bf16 %v7629, %v7629
  %7632 = vmatprep.subr.bf16.mxu0 %v1062
  %7633 = vmatpush1.bf16.msra.mxu0 %v1061
  %7634 = vmatprep.subr.bf16.mxu0 %v1064
  %7635 = vmatpush1.bf16.msra.mxu0 %v1063
  %7636 = vmatprep.subr.bf16.mxu0 %v1066
  %7637 = vmatpush1.bf16.msra.mxu0 %v1065
  %7638 = vmatprep.subr.bf16.mxu0 %v1068
  %7639 = vmatpush1.bf16.msra.mxu0 %v1067
  %7640 = vmatprep.subr.bf16.mxu0 %v1070
  %7641 = vmatpush1.bf16.msra.mxu0 %v1069
  %7642 = vmatprep.subr.bf16.mxu0 %v1072
  %7643 = vmatpush1.bf16.msra.mxu0 %v1071
  %7644 = vmatprep.subr.bf16.mxu0 %v1074
  %7645 = vmatpush1.bf16.msra.mxu0 %v1073
  %7646 = vmatprep.subr.bf16.mxu0 %v1076
  %7647 = vmatpush1.bf16.msra.mxu0 %v1075
  %7648 = vmatprep.subr.bf16.mxu0 %v1078
  %7649 = vmatpush1.bf16.msra.mxu0 %v1077
  %7650 = vmatprep.subr.bf16.mxu0 %v1080
  %7651 = vmatpush1.bf16.msra.mxu0 %v1079
  %7652 = vmatprep.subr.bf16.mxu0 %v1082
  %7653 = vmatpush1.bf16.msra.mxu0 %v1081
  %7654 = vmatprep.subr.bf16.mxu0 %v1084
  %7655 = vmatpush1.bf16.msra.mxu0 %v1083
  %7656 = vmatprep.subr.bf16.mxu0 %v1086
  %7657 = vmatpush1.bf16.msra.mxu0 %v1085
  %7658 = vmatprep.subr.bf16.mxu0 %v1088
  %7659 = vmatpush1.bf16.msra.mxu0 %v1087
  %7660 = vmatprep.subr.bf16.mxu0 %v1090
  %7661 = vmatpush1.bf16.msra.mxu0 %v1089
  %7662 = vmatprep.subr.bf16.mxu0 %v1092
  %7663 = vmatpush1.bf16.msra.mxu0 %v1091
  %7664 = vmatprep.mubr.bf16.mxu0 %v7631
  %7665 = vmatmul.mubr.bf16.gmra.mrb[0].mxu0 %v7630
  %v7666 = vpop.f32.mrb[0].mxu0
  %v7667 = vadd.f32 %v7574, %v7666
  %v7668 = vpop.f32.mrb[0].mxu0
  %v7669 = vadd.f32 %v7576, %v7668
  %v7670 = vpop.f32.mrb[0].mxu0
  %v7671 = vpop.f32.mrb[0].mxu0
  %7672 = vdwg.mxu0
  %v7673 = vadd.f32 %v7667, %v449
  %v7674 = vadd.f32 %v7669, %v453
  %v7675 = vtanh.pop %v7673
  %v7676 = vtanh.pop %v7674
  %v7677 = vpack.c.bf16 %v7675, %v7675
  %v7678 = vpack.c.bf16 %v7676, %v7676
  %s7679 = scalar_lea.vmem %s7, 2688
  %v7680 = vld [vmem:[%s7679] sm:$0xf]
  %v7681 = vld [vmem:[%s7679 + $0x4] sm:$0xf]
  %v7682 = vld [vmem:[%s7679 + $0x8] sm:$0xf]
  %v7683 = vld [vmem:[%s7679 + $0xc] sm:$0xf]
  %v7684 = vld [vmem:[%s7679 + $0x10] sm:$0xf]
  %v7685 = vld [vmem:[%s7679 + $0x14] sm:$0xf]
  %v7686 = vld [vmem:[%s7679 + $0x18] sm:$0xf]
  %v7687 = vld [vmem:[%s7679 + $0x1c] sm:$0xf]
  %v7688 = vld [vmem:[%s7679 + $0x20] sm:$0xf]
  %v7689 = vld [vmem:[%s7679 + $0x24] sm:$0xf]
  %v7690 = vld [vmem:[%s7679 + $0x28] sm:$0xf]
  %v7691 = vld [vmem:[%s7679 + $0x2c] sm:$0xf]
  %v7692 = vld [vmem:[%s7679 + $0x30] sm:$0xf]
  %v7693 = vld [vmem:[%s7679 + $0x34] sm:$0xf]
  %v7694 = vld [vmem:[%s7679 + $0x38] sm:$0xf]
  %v7695 = vld [vmem:[%s7679 + $0x3c] sm:$0xf]
  %v7696 = vld [vmem:[%s7679 + $0x40] sm:$0xf]
  %v7697 = vld [vmem:[%s7679 + $0x44] sm:$0xf]
  %v7698 = vld [vmem:[%s7679 + $0x48] sm:$0xf]
  %v7699 = vld [vmem:[%s7679 + $0x4c] sm:$0xf]
  %v7700 = vld [vmem:[%s7679 + $0x50] sm:$0xf]
  %v7701 = vld [vmem:[%s7679 + $0x54] sm:$0xf]
  %v7702 = vld [vmem:[%s7679 + $0x58] sm:$0xf]
  %v7703 = vld [vmem:[%s7679 + $0x5c] sm:$0xf]
  %v7704 = vld [vmem:[%s7679 + $0x60] sm:$0xf]
  %v7705 = vld [vmem:[%s7679 + $0x64] sm:$0xf]
  %v7706 = vld [vmem:[%s7679 + $0x68] sm:$0xf]
  %v7707 = vld [vmem:[%s7679 + $0x6c] sm:$0xf]
  %v7708 = vld [vmem:[%s7679 + $0x70] sm:$0xf]
  %v7709 = vld [vmem:[%s7679 + $0x74] sm:$0xf]
  %v7710 = vld [vmem:[%s7679 + $0x78] sm:$0xf]
  %v7711 = vld [vmem:[%s7679 + $0x7c] sm:$0xf]
  %v7744 = vunpack.c.l.b16 %v7680
  %v7745 = vunpack.c.l.b16 %v7681
  %v7746 = vunpack.c.l.b16 %v7682
  %v7747 = vunpack.c.l.b16 %v7683
  %v7748 = vunpack.c.l.b16 %v7684
  %v7749 = vunpack.c.l.b16 %v7685
  %v7750 = vunpack.c.l.b16 %v7686
  %v7751 = vunpack.c.l.b16 %v7687
  %v7752 = vunpack.c.l.b16 %v7688
  %v7753 = vunpack.c.l.b16 %v7689
  %v7754 = vunpack.c.l.b16 %v7690
  %v7755 = vunpack.c.l.b16 %v7691
  %v7756 = vunpack.c.l.b16 %v7692
  %v7757 = vunpack.c.l.b16 %v7693
  %v7758 = vunpack.c.l.b16 %v7694
  %v7759 = vunpack.c.l.b16 %v7695
  %v7760 = vunpack.c.l.b16 %v7696
  %v7761 = vunpack.c.l.b16 %v7697
  %v7762 = vunpack.c.l.b16 %v7698
  %v7763 = vunpack.c.l.b16 %v7699
  %v7764 = vunpack.c.l.b16 %v7700
  %v7765 = vunpack.c.l.b16 %v7701
  %v7766 = vunpack.c.l.b16 %v7702
  %v7767 = vunpack.c.l.b16 %v7703
  %v7768 = vunpack.c.l.b16 %v7704
  %v7769 = vunpack.c.l.b16 %v7705
  %v7770 = vunpack.c.l.b16 %v7706
  %v7771 = vunpack.c.l.b16 %v7707
  %v7772 = vunpack.c.l.b16 %v7708
  %v7773 = vunpack.c.l.b16 %v7709
  %v7774 = vunpack.c.l.b16 %v7710
  %v7775 = vunpack.c.l.b16 %v7711
  %v7776 = vpack.c.b16 %v7745, %v7744
  %v7777 = vpack.c.b16 %v7747, %v7746
  %v7778 = vpack.c.b16 %v7749, %v7748
  %v7779 = vpack.c.b16 %v7751, %v7750
  %v7780 = vpack.c.b16 %v7753, %v7752
  %v7781 = vpack.c.b16 %v7755, %v7754
  %v7782 = vpack.c.b16 %v7757, %v7756
  %v7783 = vpack.c.b16 %v7759, %v7758
  %v7784 = vpack.c.b16 %v7761, %v7760
  %v7785 = vpack.c.b16 %v7763, %v7762
  %v7786 = vpack.c.b16 %v7765, %v7764
  %v7787 = vpack.c.b16 %v7767, %v7766
  %v7788 = vpack.c.b16 %v7769, %v7768
  %v7789 = vpack.c.b16 %v7771, %v7770
  %v7790 = vpack.c.b16 %v7773, %v7772
  %v7791 = vpack.c.b16 %v7775, %v7774
  %7808 = vmatprep.subr.bf16.mxu0 0
  %7809 = vmatpush1.bf16.msra.mxu0 %v7776
  %7810 = vmatprep.subr.bf16.mxu0 0
  %7811 = vmatpush1.bf16.msra.mxu0 %v7777
  %7812 = vmatprep.subr.bf16.mxu0 0
  %7813 = vmatpush1.bf16.msra.mxu0 %v7778
  %7814 = vmatprep.subr.bf16.mxu0 0
  %7815 = vmatpush1.bf16.msra.mxu0 %v7779
  %7816 = vmatprep.subr.bf16.mxu0 0
  %7817 = vmatpush1.bf16.msra.mxu0 %v7780
  %7818 = vmatprep.subr.bf16.mxu0 0
  %7819 = vmatpush1.bf16.msra.mxu0 %v7781
  %7820 = vmatprep.subr.bf16.mxu0 0
  %7821 = vmatpush1.bf16.msra.mxu0 %v7782
  %7822 = vmatprep.subr.bf16.mxu0 0
  %7823 = vmatpush1.bf16.msra.mxu0 %v7783
  %7824 = vmatprep.subr.bf16.mxu0 0
  %7825 = vmatpush1.bf16.msra.mxu0 %v7784
  %7826 = vmatprep.subr.bf16.mxu0 0
  %7827 = vmatpush1.bf16.msra.mxu0 %v7785
  %7828 = vmatprep.subr.bf16.mxu0 0
  %7829 = vmatpush1.bf16.msra.mxu0 %v7786
  %7830 = vmatprep.subr.bf16.mxu0 0
  %7831 = vmatpush1.bf16.msra.mxu0 %v7787
  %7832 = vmatprep.subr.bf16.mxu0 0
  %7833 = vmatpush1.bf16.msra.mxu0 %v7788
  %7834 = vmatprep.subr.bf16.mxu0 0
  %7835 = vmatpush1.bf16.msra.mxu0 %v7789
  %7836 = vmatprep.subr.bf16.mxu0 0
  %7837 = vmatpush1.bf16.msra.mxu0 %v7790
  %7838 = vmatprep.subr.bf16.mxu0 0
  %7839 = vmatpush1.bf16.msra.mxu0 %v7791
  %7840 = vmatprep.mubr.bf16.mxu0 %v7678
  %7841 = vmatmul.mubr.bf16.gmra.mrb[0].mxu0 %v7677
  %v7842 = vpop.f32.mrb[0].mxu0
  %v7843 = vadd.f32 0.0, %v7842
  %v7844 = vpop.f32.mrb[0].mxu0
  %v7845 = vpop.f32.mrb[0].mxu0
  %v7846 = vpop.f32.mrb[0].mxu0
  %7847 = vdwg.mxu0
  %v7848 = vadd.f32 %v7538, %v7843
  %7849 = vmatprep.subr.bf16.mxu0 %v585
  %7850 = vmatpush1.bf16.msra.mxu0 %v584
  %7851 = vmatprep.subr.bf16.mxu0 %v587
  %7852 = vmatpush1.bf16.msra.mxu0 %v586
  %7853 = vmatprep.subr.bf16.mxu0 %v589
  %7854 = vmatpush1.bf16.msra.mxu0 %v588
  %7855 = vmatprep.subr.bf16.mxu0 %v591
  %7856 = vmatpush1.bf16.msra.mxu0 %v590
  %7857 = vmatprep.subr.bf16.mxu0 %v593
  %7858 = vmatpush1.bf16.msra.mxu0 %v592
  %7859 = vmatprep.subr.bf16.mxu0 %v595
  %7860 = vmatpush1.bf16.msra.mxu0 %v594
  %7861 = vmatprep.subr.bf16.mxu0 %v597
  %7862 = vmatpush1.bf16.msra.mxu0 %v596
  %7863 = vmatprep.subr.bf16.mxu0 %v599
  %7864 = vmatpush1.bf16.msra.mxu0 %v598
  %7865 = vmatprep.subr.bf16.mxu0 %v601
  %7866 = vmatpush1.bf16.msra.mxu0 %v600
  %7867 = vmatprep.subr.bf16.mxu0 %v603
  %7868 = vmatpush1.bf16.msra.mxu0 %v602
  %7869 = vmatprep.subr.bf16.mxu0 %v605
  %7870 = vmatpush1.bf16.msra.mxu0 %v604
  %7871 = vmatprep.subr.bf16.mxu0 %v607
  %7872 = vmatpush1.bf16.msra.mxu0 %v606
  %7873 = vmatprep.subr.bf16.mxu0 %v609
  %7874 = vmatpush1.bf16.msra.mxu0 %v608
  %7875 = vmatprep.subr.bf16.mxu0 %v611
  %7876 = vmatpush1.bf16.msra.mxu0 %v610
  %7877 = vmatprep.subr.bf16.mxu0 %v613
  %7878 = vmatpush1.bf16.msra.mxu0 %v612
  %7879 = vmatprep.subr.bf16.mxu0 %v615
  %7880 = vmatpush1.bf16.msra.mxu0 %v614
  %7881 = vmatprep.mubr.bf16.mxu0 %v7678
  %7882 = vmatmul.mubr.bf16.gmra.mrb[0].mxu0 %v7677
  %v7883 = vpop.f32.mrb[0].mxu0
  %v7884 = vadd.f32 0.0, %v7883
  %v7885 = vpop.f32.mrb[0].mxu0
  %v7886 = vadd.f32 0.0, %v7885
  %v7887 = vpop.f32.mrb[0].mxu0
  %v7888 = vpop.f32.mrb[0].mxu0
  %7889 = vdwg.mxu0
  %s7890 = smul.u32 22, 2
  %s7891 = smul.addr %s7890, 8
  %s7892 = scalar_lea.vmem [#allocation2], %s7891
  %v7893 = vld [vmem:[%s7892] sm:$0xff]
  %v7894 = vld [vmem:[%s7892 + $0x8] sm:$0xff]
  %7895 = vmatprep.subr.bf16.mxu0 %v823
  %7896 = vmatpush1.bf16.msra.mxu0 %v822
  %7897 = vmatprep.subr.bf16.mxu0 %v825
  %7898 = vmatpush1.bf16.msra.mxu0 %v824
  %7899 = vmatprep.subr.bf16.mxu0 %v827
  %7900 = vmatpush1.bf16.msra.mxu0 %v826
  %7901 = vmatprep.subr.bf16.mxu0 %v829
  %7902 = vmatpush1.bf16.msra.mxu0 %v828
  %7903 = vmatprep.subr.bf16.mxu0 %v831
  %7904 = vmatpush1.bf16.msra.mxu0 %v830
  %7905 = vmatprep.subr.bf16.mxu0 %v833
  %7906 = vmatpush1.bf16.msra.mxu0 %v832
  %7907 = vmatprep.subr.bf16.mxu0 %v835
  %7908 = vmatpush1.bf16.msra.mxu0 %v834
  %7909 = vmatprep.subr.bf16.mxu0 %v837
  %7910 = vmatpush1.bf16.msra.mxu0 %v836
  %7911 = vmatprep.subr.bf16.mxu0 %v839
  %7912 = vmatpush1.bf16.msra.mxu0 %v838
  %7913 = vmatprep.subr.bf16.mxu0 %v841
  %7914 = vmatpush1.bf16.msra.mxu0 %v840
  %7915 = vmatprep.subr.bf16.mxu0 %v843
  %7916 = vmatpush1.bf16.msra.mxu0 %v842
  %7917 = vmatprep.subr.bf16.mxu0 %v845
  %7918 = vmatpush1.bf16.msra.mxu0 %v844
  %7919 = vmatprep.subr.bf16.mxu0 %v847
  %7920 = vmatpush1.bf16.msra.mxu0 %v846
  %7921 = vmatprep.subr.bf16.mxu0 %v849
  %7922 = vmatpush1.bf16.msra.mxu0 %v848
  %7923 = vmatprep.subr.bf16.mxu0 %v851
  %7924 = vmatpush1.bf16.msra.mxu0 %v850
  %7925 = vmatprep.subr.bf16.mxu0 %v853
  %7926 = vmatpush1.bf16.msra.mxu0 %v852
  %7927 = vmatprep.mubr.bf16.mxu0 %v7631
  %7928 = vmatmul.mubr.bf16.gmra.mrb[0].mxu0 %v7630
  %v7929 = vpop.f32.mrb[0].mxu0
  %v7930 = vadd.f32 0.0, %v7929
  %v7931 = vpop.f32.mrb[0].mxu0
  %v7932 = vadd.f32 0.0, %v7931
  %v7933 = vpop.f32.mrb[0].mxu0
  %v7934 = vpop.f32.mrb[0].mxu0
  %7935 = vdwg.mxu0
  %v7936 = vadd.f32 %v7893, %v7930
  %v7937 = vadd.f32 %v7894, %v7932
  %v7938 = vtanh.pop %v7936
  %v7939 = vtanh.pop %v7937
  %v7940 = vpack.c.bf16 %v7938, %v7938
  %v7941 = vpack.c.bf16 %v7939, %v7939
  %7942 = vmatprep.subr.bf16.mxu0 %v1062
  %7943 = vmatpush1.bf16.msra.mxu0 %v1061
  %7944 = vmatprep.subr.bf16.mxu0 %v1064
  %7945 = vmatpush1.bf16.msra.mxu0 %v1063
  %7946 = vmatprep.subr.bf16.mxu0 %v1066
  %7947 = vmatpush1.bf16.msra.mxu0 %v1065
  %7948 = vmatprep.subr.bf16.mxu0 %v1068
  %7949 = vmatpush1.bf16.msra.mxu0 %v1067
  %7950 = vmatprep.subr.bf16.mxu0 %v1070
  %7951 = vmatpush1.bf16.msra.mxu0 %v1069
  %7952 = vmatprep.subr.bf16.mxu0 %v1072
  %7953 = vmatpush1.bf16.msra.mxu0 %v1071
  %7954 = vmatprep.subr.bf16.mxu0 %v1074
  %7955 = vmatpush1.bf16.msra.mxu0 %v1073
  %7956 = vmatprep.subr.bf16.mxu0 %v1076
  %7957 = vmatpush1.bf16.msra.mxu0 %v1075
  %7958 = vmatprep.subr.bf16.mxu0 %v1078
  %7959 = vmatpush1.bf16.msra.mxu0 %v1077
  %7960 = vmatprep.subr.bf16.mxu0 %v1080
  %7961 = vmatpush1.bf16.msra.mxu0 %v1079
  %7962 = vmatprep.subr.bf16.mxu0 %v1082
  %7963 = vmatpush1.bf16.msra.mxu0 %v1081
  %7964 = vmatprep.subr.bf16.mxu0 %v1084
  %7965 = vmatpush1.bf16.msra.mxu0 %v1083
  %7966 = vmatprep.subr.bf16.mxu0 %v1086
  %7967 = vmatpush1.bf16.msra.mxu0 %v1085
  %7968 = vmatprep.subr.bf16.mxu0 %v1088
  %7969 = vmatpush1.bf16.msra.mxu0 %v1087
  %7970 = vmatprep.subr.bf16.mxu0 %v1090
  %7971 = vmatpush1.bf16.msra.mxu0 %v1089
  %7972 = vmatprep.subr.bf16.mxu0 %v1092
  %7973 = vmatpush1.bf16.msra.mxu0 %v1091
  %7974 = vmatprep.mubr.bf16.mxu0 %v7941
  %7975 = vmatmul.mubr.bf16.gmra.mrb[0].mxu0 %v7940
  %v7976 = vpop.f32.mrb[0].mxu0
  %v7977 = vadd.f32 %v7884, %v7976
  %v7978 = vpop.f32.mrb[0].mxu0
  %v7979 = vadd.f32 %v7886, %v7978
  %v7980 = vpop.f32.mrb[0].mxu0
  %v7981 = vpop.f32.mrb[0].mxu0
  %7982 = vdwg.mxu0
  %v7983 = vadd.f32 %v7977, %v449
  %v7984 = vadd.f32 %v7979, %v453
  %v7985 = vtanh.pop %v7983
  %v7986 = vtanh.pop %v7984
  %v7987 = vpack.c.bf16 %v7985, %v7985
  %v7988 = vpack.c.bf16 %v7986, %v7986
  %s7989 = scalar_lea.vmem %s7, 2816
  %v7990 = vld [vmem:[%s7989] sm:$0xf]
  %v7991 = vld [vmem:[%s7989 + $0x4] sm:$0xf]
  %v7992 = vld [vmem:[%s7989 + $0x8] sm:$0xf]
  %v7993 = vld [vmem:[%s7989 + $0xc] sm:$0xf]
  %v7994 = vld [vmem:[%s7989 + $0x10] sm:$0xf]
  %v7995 = vld [vmem:[%s7989 + $0x14] sm:$0xf]
  %v7996 = vld [vmem:[%s7989 + $0x18] sm:$0xf]
  %v7997 = vld [vmem:[%s7989 + $0x1c] sm:$0xf]
  %v7998 = vld [vmem:[%s7989 + $0x20] sm:$0xf]
  %v7999 = vld [vmem:[%s7989 + $0x24] sm:$0xf]
  %v8000 = vld [vmem:[%s7989 + $0x28] sm:$0xf]
  %v8001 = vld [vmem:[%s7989 + $0x2c] sm:$0xf]
  %v8002 = vld [vmem:[%s7989 + $0x30] sm:$0xf]
  %v8003 = vld [vmem:[%s7989 + $0x34] sm:$0xf]
  %v8004 = vld [vmem:[%s7989 + $0x38] sm:$0xf]
  %v8005 = vld [vmem:[%s7989 + $0x3c] sm:$0xf]
  %v8006 = vld [vmem:[%s7989 + $0x40] sm:$0xf]
  %v8007 = vld [vmem:[%s7989 + $0x44] sm:$0xf]
  %v8008 = vld [vmem:[%s7989 + $0x48] sm:$0xf]
  %v8009 = vld [vmem:[%s7989 + $0x4c] sm:$0xf]
  %v8010 = vld [vmem:[%s7989 + $0x50] sm:$0xf]
  %v8011 = vld [vmem:[%s7989 + $0x54] sm:$0xf]
  %v8012 = vld [vmem:[%s7989 + $0x58] sm:$0xf]
  %v8013 = vld [vmem:[%s7989 + $0x5c] sm:$0xf]
  %v8014 = vld [vmem:[%s7989 + $0x60] sm:$0xf]
  %v8015 = vld [vmem:[%s7989 + $0x64] sm:$0xf]
  %v8016 = vld [vmem:[%s7989 + $0x68] sm:$0xf]
  %v8017 = vld [vmem:[%s7989 + $0x6c] sm:$0xf]
  %v8018 = vld [vmem:[%s7989 + $0x70] sm:$0xf]
  %v8019 = vld [vmem:[%s7989 + $0x74] sm:$0xf]
  %v8020 = vld [vmem:[%s7989 + $0x78] sm:$0xf]
  %v8021 = vld [vmem:[%s7989 + $0x7c] sm:$0xf]
  %v8054 = vunpack.c.l.b16 %v7990
  %v8055 = vunpack.c.l.b16 %v7991
  %v8056 = vunpack.c.l.b16 %v7992
  %v8057 = vunpack.c.l.b16 %v7993
  %v8058 = vunpack.c.l.b16 %v7994
  %v8059 = vunpack.c.l.b16 %v7995
  %v8060 = vunpack.c.l.b16 %v7996
  %v8061 = vunpack.c.l.b16 %v7997
  %v8062 = vunpack.c.l.b16 %v7998
  %v8063 = vunpack.c.l.b16 %v7999
  %v8064 = vunpack.c.l.b16 %v8000
  %v8065 = vunpack.c.l.b16 %v8001
  %v8066 = vunpack.c.l.b16 %v8002
  %v8067 = vunpack.c.l.b16 %v8003
  %v8068 = vunpack.c.l.b16 %v8004
  %v8069 = vunpack.c.l.b16 %v8005
  %v8070 = vunpack.c.l.b16 %v8006
  %v8071 = vunpack.c.l.b16 %v8007
  %v8072 = vunpack.c.l.b16 %v8008
  %v8073 = vunpack.c.l.b16 %v8009
  %v8074 = vunpack.c.l.b16 %v8010
  %v8075 = vunpack.c.l.b16 %v8011
  %v8076 = vunpack.c.l.b16 %v8012
  %v8077 = vunpack.c.l.b16 %v8013
  %v8078 = vunpack.c.l.b16 %v8014
  %v8079 = vunpack.c.l.b16 %v8015
  %v8080 = vunpack.c.l.b16 %v8016
  %v8081 = vunpack.c.l.b16 %v8017
  %v8082 = vunpack.c.l.b16 %v8018
  %v8083 = vunpack.c.l.b16 %v8019
  %v8084 = vunpack.c.l.b16 %v8020
  %v8085 = vunpack.c.l.b16 %v8021
  %v8086 = vpack.c.b16 %v8055, %v8054
  %v8087 = vpack.c.b16 %v8057, %v8056
  %v8088 = vpack.c.b16 %v8059, %v8058
  %v8089 = vpack.c.b16 %v8061, %v8060
  %v8090 = vpack.c.b16 %v8063, %v8062
  %v8091 = vpack.c.b16 %v8065, %v8064
  %v8092 = vpack.c.b16 %v8067, %v8066
  %v8093 = vpack.c.b16 %v8069, %v8068
  %v8094 = vpack.c.b16 %v8071, %v8070
  %v8095 = vpack.c.b16 %v8073, %v8072
  %v8096 = vpack.c.b16 %v8075, %v8074
  %v8097 = vpack.c.b16 %v8077, %v8076
  %v8098 = vpack.c.b16 %v8079, %v8078
  %v8099 = vpack.c.b16 %v8081, %v8080
  %v8100 = vpack.c.b16 %v8083, %v8082
  %v8101 = vpack.c.b16 %v8085, %v8084
  %8118 = vmatprep.subr.bf16.mxu0 0
  %8119 = vmatpush1.bf16.msra.mxu0 %v8086
  %8120 = vmatprep.subr.bf16.mxu0 0
  %8121 = vmatpush1.bf16.msra.mxu0 %v8087
  %8122 = vmatprep.subr.bf16.mxu0 0
  %8123 = vmatpush1.bf16.msra.mxu0 %v8088
  %8124 = vmatprep.subr.bf16.mxu0 0
  %8125 = vmatpush1.bf16.msra.mxu0 %v8089
  %8126 = vmatprep.subr.bf16.mxu0 0
  %8127 = vmatpush1.bf16.msra.mxu0 %v8090
  %8128 = vmatprep.subr.bf16.mxu0 0
  %8129 = vmatpush1.bf16.msra.mxu0 %v8091
  %8130 = vmatprep.subr.bf16.mxu0 0
  %8131 = vmatpush1.bf16.msra.mxu0 %v8092
  %8132 = vmatprep.subr.bf16.mxu0 0
  %8133 = vmatpush1.bf16.msra.mxu0 %v8093
  %8134 = vmatprep.subr.bf16.mxu0 0
  %8135 = vmatpush1.bf16.msra.mxu0 %v8094
  %8136 = vmatprep.subr.bf16.mxu0 0
  %8137 = vmatpush1.bf16.msra.mxu0 %v8095
  %8138 = vmatprep.subr.bf16.mxu0 0
  %8139 = vmatpush1.bf16.msra.mxu0 %v8096
  %8140 = vmatprep.subr.bf16.mxu0 0
  %8141 = vmatpush1.bf16.msra.mxu0 %v8097
  %8142 = vmatprep.subr.bf16.mxu0 0
  %8143 = vmatpush1.bf16.msra.mxu0 %v8098
  %8144 = vmatprep.subr.bf16.mxu0 0
  %8145 = vmatpush1.bf16.msra.mxu0 %v8099
  %8146 = vmatprep.subr.bf16.mxu0 0
  %8147 = vmatpush1.bf16.msra.mxu0 %v8100
  %8148 = vmatprep.subr.bf16.mxu0 0
  %8149 = vmatpush1.bf16.msra.mxu0 %v8101
  %8150 = vmatprep.mubr.bf16.mxu0 %v7988
  %8151 = vmatmul.mubr.bf16.gmra.mrb[0].mxu0 %v7987
  %v8152 = vpop.f32.mrb[0].mxu0
  %v8153 = vadd.f32 0.0, %v8152
  %v8154 = vpop.f32.mrb[0].mxu0
  %v8155 = vpop.f32.mrb[0].mxu0
  %v8156 = vpop.f32.mrb[0].mxu0
  %8157 = vdwg.mxu0
  %v8158 = vadd.f32 %v7848, %v8153
  %8159 = vmatprep.subr.bf16.mxu0 %v585
  %8160 = vmatpush1.bf16.msra.mxu0 %v584
  %8161 = vmatprep.subr.bf16.mxu0 %v587
  %8162 = vmatpush1.bf16.msra.mxu0 %v586
  %8163 = vmatprep.subr.bf16.mxu0 %v589
  %8164 = vmatpush1.bf16.msra.mxu0 %v588
  %8165 = vmatprep.subr.bf16.mxu0 %v591
  %8166 = vmatpush1.bf16.msra.mxu0 %v590
  %8167 = vmatprep.subr.bf16.mxu0 %v593
  %8168 = vmatpush1.bf16.msra.mxu0 %v592
  %8169 = vmatprep.subr.bf16.mxu0 %v595
  %8170 = vmatpush1.bf16.msra.mxu0 %v594
  %8171 = vmatprep.subr.bf16.mxu0 %v597
  %8172 = vmatpush1.bf16.msra.mxu0 %v596
  %8173 = vmatprep.subr.bf16.mxu0 %v599
  %8174 = vmatpush1.bf16.msra.mxu0 %v598
  %8175 = vmatprep.subr.bf16.mxu0 %v601
  %8176 = vmatpush1.bf16.msra.mxu0 %v600
  %8177 = vmatprep.subr.bf16.mxu0 %v603
  %8178 = vmatpush1.bf16.msra.mxu0 %v602
  %8179 = vmatprep.subr.bf16.mxu0 %v605
  %8180 = vmatpush1.bf16.msra.mxu0 %v604
  %8181 = vmatprep.subr.bf16.mxu0 %v607
  %8182 = vmatpush1.bf16.msra.mxu0 %v606
  %8183 = vmatprep.subr.bf16.mxu0 %v609
  %8184 = vmatpush1.bf16.msra.mxu0 %v608
  %8185 = vmatprep.subr.bf16.mxu0 %v611
  %8186 = vmatpush1.bf16.msra.mxu0 %v610
  %8187 = vmatprep.subr.bf16.mxu0 %v613
  %8188 = vmatpush1.bf16.msra.mxu0 %v612
  %8189 = vmatprep.subr.bf16.mxu0 %v615
  %8190 = vmatpush1.bf16.msra.mxu0 %v614
  %8191 = vmatprep.mubr.bf16.mxu0 %v7988
  %8192 = vmatmul.mubr.bf16.gmra.mrb[0].mxu0 %v7987
  %v8193 = vpop.f32.mrb[0].mxu0
  %v8194 = vadd.f32 0.0, %v8193
  %v8195 = vpop.f32.mrb[0].mxu0
  %v8196 = vadd.f32 0.0, %v8195
  %v8197 = vpop.f32.mrb[0].mxu0
  %v8198 = vpop.f32.mrb[0].mxu0
  %8199 = vdwg.mxu0
  %s8200 = smul.u32 23, 2
  %s8201 = smul.addr %s8200, 8
  %s8202 = scalar_lea.vmem [#allocation2], %s8201
  %v8203 = vld [vmem:[%s8202] sm:$0xff]
  %v8204 = vld [vmem:[%s8202 + $0x8] sm:$0xff]
  %8205 = vmatprep.subr.bf16.mxu0 %v823
  %8206 = vmatpush1.bf16.msra.mxu0 %v822
  %8207 = vmatprep.subr.bf16.mxu0 %v825
  %8208 = vmatpush1.bf16.msra.mxu0 %v824
  %8209 = vmatprep.subr.bf16.mxu0 %v827
  %8210 = vmatpush1.bf16.msra.mxu0 %v826
  %8211 = vmatprep.subr.bf16.mxu0 %v829
  %8212 = vmatpush1.bf16.msra.mxu0 %v828
  %8213 = vmatprep.subr.bf16.mxu0 %v831
  %8214 = vmatpush1.bf16.msra.mxu0 %v830
  %8215 = vmatprep.subr.bf16.mxu0 %v833
  %8216 = vmatpush1.bf16.msra.mxu0 %v832
  %8217 = vmatprep.subr.bf16.mxu0 %v835
  %8218 = vmatpush1.bf16.msra.mxu0 %v834
  %8219 = vmatprep.subr.bf16.mxu0 %v837
  %8220 = vmatpush1.bf16.msra.mxu0 %v836
  %8221 = vmatprep.subr.bf16.mxu0 %v839
  %8222 = vmatpush1.bf16.msra.mxu0 %v838
  %8223 = vmatprep.subr.bf16.mxu0 %v841
  %8224 = vmatpush1.bf16.msra.mxu0 %v840
  %8225 = vmatprep.subr.bf16.mxu0 %v843
  %8226 = vmatpush1.bf16.msra.mxu0 %v842
  %8227 = vmatprep.subr.bf16.mxu0 %v845
  %8228 = vmatpush1.bf16.msra.mxu0 %v844
  %8229 = vmatprep.subr.bf16.mxu0 %v847
  %8230 = vmatpush1.bf16.msra.mxu0 %v846
  %8231 = vmatprep.subr.bf16.mxu0 %v849
  %8232 = vmatpush1.bf16.msra.mxu0 %v848
  %8233 = vmatprep.subr.bf16.mxu0 %v851
  %8234 = vmatpush1.bf16.msra.mxu0 %v850
  %8235 = vmatprep.subr.bf16.mxu0 %v853
  %8236 = vmatpush1.bf16.msra.mxu0 %v852
  %8237 = vmatprep.mubr.bf16.mxu0 %v7941
  %8238 = vmatmul.mubr.bf16.gmra.mrb[0].mxu0 %v7940
  %v8239 = vpop.f32.mrb[0].mxu0
  %v8240 = vadd.f32 0.0, %v8239
  %v8241 = vpop.f32.mrb[0].mxu0
  %v8242 = vadd.f32 0.0, %v8241
  %v8243 = vpop.f32.mrb[0].mxu0
  %v8244 = vpop.f32.mrb[0].mxu0
  %8245 = vdwg.mxu0
  %v8246 = vadd.f32 %v8203, %v8240
  %v8247 = vadd.f32 %v8204, %v8242
  %v8248 = vtanh.pop %v8246
  %v8249 = vtanh.pop %v8247
  %v8250 = vpack.c.bf16 %v8248, %v8248
  %v8251 = vpack.c.bf16 %v8249, %v8249
  %8252 = vmatprep.subr.bf16.mxu0 %v1062
  %8253 = vmatpush1.bf16.msra.mxu0 %v1061
  %8254 = vmatprep.subr.bf16.mxu0 %v1064
  %8255 = vmatpush1.bf16.msra.mxu0 %v1063
  %8256 = vmatprep.subr.bf16.mxu0 %v1066
  %8257 = vmatpush1.bf16.msra.mxu0 %v1065
  %8258 = vmatprep.subr.bf16.mxu0 %v1068
  %8259 = vmatpush1.bf16.msra.mxu0 %v1067
  %8260 = vmatprep.subr.bf16.mxu0 %v1070
  %8261 = vmatpush1.bf16.msra.mxu0 %v1069
  %8262 = vmatprep.subr.bf16.mxu0 %v1072
  %8263 = vmatpush1.bf16.msra.mxu0 %v1071
  %8264 = vmatprep.subr.bf16.mxu0 %v1074
  %8265 = vmatpush1.bf16.msra.mxu0 %v1073
  %8266 = vmatprep.subr.bf16.mxu0 %v1076
  %8267 = vmatpush1.bf16.msra.mxu0 %v1075
  %8268 = vmatprep.subr.bf16.mxu0 %v1078
  %8269 = vmatpush1.bf16.msra.mxu0 %v1077
  %8270 = vmatprep.subr.bf16.mxu0 %v1080
  %8271 = vmatpush1.bf16.msra.mxu0 %v1079
  %8272 = vmatprep.subr.bf16.mxu0 %v1082
  %8273 = vmatpush1.bf16.msra.mxu0 %v1081
  %8274 = vmatprep.subr.bf16.mxu0 %v1084
  %8275 = vmatpush1.bf16.msra.mxu0 %v1083
  %8276 = vmatprep.subr.bf16.mxu0 %v1086
  %8277 = vmatpush1.bf16.msra.mxu0 %v1085
  %8278 = vmatprep.subr.bf16.mxu0 %v1088
  %8279 = vmatpush1.bf16.msra.mxu0 %v1087
  %8280 = vmatprep.subr.bf16.mxu0 %v1090
  %8281 = vmatpush1.bf16.msra.mxu0 %v1089
  %8282 = vmatprep.subr.bf16.mxu0 %v1092
  %8283 = vmatpush1.bf16.msra.mxu0 %v1091
  %8284 = vmatprep.mubr.bf16.mxu0 %v8251
  %8285 = vmatmul.mubr.bf16.gmra.mrb[0].mxu0 %v8250
  %v8286 = vpop.f32.mrb[0].mxu0
  %v8287 = vadd.f32 %v8194, %v8286
  %v8288 = vpop.f32.mrb[0].mxu0
  %v8289 = vadd.f32 %v8196, %v8288
  %v8290 = vpop.f32.mrb[0].mxu0
  %v8291 = vpop.f32.mrb[0].mxu0
  %8292 = vdwg.mxu0
  %v8293 = vadd.f32 %v8287, %v449
  %v8294 = vadd.f32 %v8289, %v453
  %v8295 = vtanh.pop %v8293
  %v8296 = vtanh.pop %v8294
  %v8297 = vpack.c.bf16 %v8295, %v8295
  %v8298 = vpack.c.bf16 %v8296, %v8296
  %s8299 = scalar_lea.vmem %s7, 2944
  %v8300 = vld [vmem:[%s8299] sm:$0xf]
  %v8301 = vld [vmem:[%s8299 + $0x4] sm:$0xf]
  %v8302 = vld [vmem:[%s8299 + $0x8] sm:$0xf]
  %v8303 = vld [vmem:[%s8299 + $0xc] sm:$0xf]
  %v8304 = vld [vmem:[%s8299 + $0x10] sm:$0xf]
  %v8305 = vld [vmem:[%s8299 + $0x14] sm:$0xf]
  %v8306 = vld [vmem:[%s8299 + $0x18] sm:$0xf]
  %v8307 = vld [vmem:[%s8299 + $0x1c] sm:$0xf]
  %v8308 = vld [vmem:[%s8299 + $0x20] sm:$0xf]
  %v8309 = vld [vmem:[%s8299 + $0x24] sm:$0xf]
  %v8310 = vld [vmem:[%s8299 + $0x28] sm:$0xf]
  %v8311 = vld [vmem:[%s8299 + $0x2c] sm:$0xf]
  %v8312 = vld [vmem:[%s8299 + $0x30] sm:$0xf]
  %v8313 = vld [vmem:[%s8299 + $0x34] sm:$0xf]
  %v8314 = vld [vmem:[%s8299 + $0x38] sm:$0xf]
  %v8315 = vld [vmem:[%s8299 + $0x3c] sm:$0xf]
  %v8316 = vld [vmem:[%s8299 + $0x40] sm:$0xf]
  %v8317 = vld [vmem:[%s8299 + $0x44] sm:$0xf]
  %v8318 = vld [vmem:[%s8299 + $0x48] sm:$0xf]
  %v8319 = vld [vmem:[%s8299 + $0x4c] sm:$0xf]
  %v8320 = vld [vmem:[%s8299 + $0x50] sm:$0xf]
  %v8321 = vld [vmem:[%s8299 + $0x54] sm:$0xf]
  %v8322 = vld [vmem:[%s8299 + $0x58] sm:$0xf]
  %v8323 = vld [vmem:[%s8299 + $0x5c] sm:$0xf]
  %v8324 = vld [vmem:[%s8299 + $0x60] sm:$0xf]
  %v8325 = vld [vmem:[%s8299 + $0x64] sm:$0xf]
  %v8326 = vld [vmem:[%s8299 + $0x68] sm:$0xf]
  %v8327 = vld [vmem:[%s8299 + $0x6c] sm:$0xf]
  %v8328 = vld [vmem:[%s8299 + $0x70] sm:$0xf]
  %v8329 = vld [vmem:[%s8299 + $0x74] sm:$0xf]
  %v8330 = vld [vmem:[%s8299 + $0x78] sm:$0xf]
  %v8331 = vld [vmem:[%s8299 + $0x7c] sm:$0xf]
  %v8364 = vunpack.c.l.b16 %v8300
  %v8365 = vunpack.c.l.b16 %v8301
  %v8366 = vunpack.c.l.b16 %v8302
  %v8367 = vunpack.c.l.b16 %v8303
  %v8368 = vunpack.c.l.b16 %v8304
  %v8369 = vunpack.c.l.b16 %v8305
  %v8370 = vunpack.c.l.b16 %v8306
  %v8371 = vunpack.c.l.b16 %v8307
  %v8372 = vunpack.c.l.b16 %v8308
  %v8373 = vunpack.c.l.b16 %v8309
  %v8374 = vunpack.c.l.b16 %v8310
  %v8375 = vunpack.c.l.b16 %v8311
  %v8376 = vunpack.c.l.b16 %v8312
  %v8377 = vunpack.c.l.b16 %v8313
  %v8378 = vunpack.c.l.b16 %v8314
  %v8379 = vunpack.c.l.b16 %v8315
  %v8380 = vunpack.c.l.b16 %v8316
  %v8381 = vunpack.c.l.b16 %v8317
  %v8382 = vunpack.c.l.b16 %v8318
  %v8383 = vunpack.c.l.b16 %v8319
  %v8384 = vunpack.c.l.b16 %v8320
  %v8385 = vunpack.c.l.b16 %v8321
  %v8386 = vunpack.c.l.b16 %v8322
  %v8387 = vunpack.c.l.b16 %v8323
  %v8388 = vunpack.c.l.b16 %v8324
  %v8389 = vunpack.c.l.b16 %v8325
  %v8390 = vunpack.c.l.b16 %v8326
  %v8391 = vunpack.c.l.b16 %v8327
  %v8392 = vunpack.c.l.b16 %v8328
  %v8393 = vunpack.c.l.b16 %v8329
  %v8394 = vunpack.c.l.b16 %v8330
  %v8395 = vunpack.c.l.b16 %v8331
  %v8396 = vpack.c.b16 %v8365, %v8364
  %v8397 = vpack.c.b16 %v8367, %v8366
  %v8398 = vpack.c.b16 %v8369, %v8368
  %v8399 = vpack.c.b16 %v8371, %v8370
  %v8400 = vpack.c.b16 %v8373, %v8372
  %v8401 = vpack.c.b16 %v8375, %v8374
  %v8402 = vpack.c.b16 %v8377, %v8376
  %v8403 = vpack.c.b16 %v8379, %v8378
  %v8404 = vpack.c.b16 %v8381, %v8380
  %v8405 = vpack.c.b16 %v8383, %v8382
  %v8406 = vpack.c.b16 %v8385, %v8384
  %v8407 = vpack.c.b16 %v8387, %v8386
  %v8408 = vpack.c.b16 %v8389, %v8388
  %v8409 = vpack.c.b16 %v8391, %v8390
  %v8410 = vpack.c.b16 %v8393, %v8392
  %v8411 = vpack.c.b16 %v8395, %v8394
  %8428 = vmatprep.subr.bf16.mxu0 0
  %8429 = vmatpush1.bf16.msra.mxu0 %v8396
  %8430 = vmatprep.subr.bf16.mxu0 0
  %8431 = vmatpush1.bf16.msra.mxu0 %v8397
  %8432 = vmatprep.subr.bf16.mxu0 0
  %8433 = vmatpush1.bf16.msra.mxu0 %v8398
  %8434 = vmatprep.subr.bf16.mxu0 0
  %8435 = vmatpush1.bf16.msra.mxu0 %v8399
  %8436 = vmatprep.subr.bf16.mxu0 0
  %8437 = vmatpush1.bf16.msra.mxu0 %v8400
  %8438 = vmatprep.subr.bf16.mxu0 0
  %8439 = vmatpush1.bf16.msra.mxu0 %v8401
  %8440 = vmatprep.subr.bf16.mxu0 0
  %8441 = vmatpush1.bf16.msra.mxu0 %v8402
  %8442 = vmatprep.subr.bf16.mxu0 0
  %8443 = vmatpush1.bf16.msra.mxu0 %v8403
  %8444 = vmatprep.subr.bf16.mxu0 0
  %8445 = vmatpush1.bf16.msra.mxu0 %v8404
  %8446 = vmatprep.subr.bf16.mxu0 0
  %8447 = vmatpush1.bf16.msra.mxu0 %v8405
  %8448 = vmatprep.subr.bf16.mxu0 0
  %8449 = vmatpush1.bf16.msra.mxu0 %v8406
  %8450 = vmatprep.subr.bf16.mxu0 0
  %8451 = vmatpush1.bf16.msra.mxu0 %v8407
  %8452 = vmatprep.subr.bf16.mxu0 0
  %8453 = vmatpush1.bf16.msra.mxu0 %v8408
  %8454 = vmatprep.subr.bf16.mxu0 0
  %8455 = vmatpush1.bf16.msra.mxu0 %v8409
  %8456 = vmatprep.subr.bf16.mxu0 0
  %8457 = vmatpush1.bf16.msra.mxu0 %v8410
  %8458 = vmatprep.subr.bf16.mxu0 0
  %8459 = vmatpush1.bf16.msra.mxu0 %v8411
  %8460 = vmatprep.mubr.bf16.mxu0 %v8298
  %8461 = vmatmul.mubr.bf16.gmra.mrb[0].mxu0 %v8297
  %v8462 = vpop.f32.mrb[0].mxu0
  %v8463 = vadd.f32 0.0, %v8462
  %v8464 = vpop.f32.mrb[0].mxu0
  %v8465 = vpop.f32.mrb[0].mxu0
  %v8466 = vpop.f32.mrb[0].mxu0
  %8467 = vdwg.mxu0
  %v8468 = vadd.f32 %v8158, %v8463
  %8469 = vmatprep.subr.bf16.mxu0 %v585
  %8470 = vmatpush1.bf16.msra.mxu0 %v584
  %8471 = vmatprep.subr.bf16.mxu0 %v587
  %8472 = vmatpush1.bf16.msra.mxu0 %v586
  %8473 = vmatprep.subr.bf16.mxu0 %v589
  %8474 = vmatpush1.bf16.msra.mxu0 %v588
  %8475 = vmatprep.subr.bf16.mxu0 %v591
  %8476 = vmatpush1.bf16.msra.mxu0 %v590
  %8477 = vmatprep.subr.bf16.mxu0 %v593
  %8478 = vmatpush1.bf16.msra.mxu0 %v592
  %8479 = vmatprep.subr.bf16.mxu0 %v595
  %8480 = vmatpush1.bf16.msra.mxu0 %v594
  %8481 = vmatprep.subr.bf16.mxu0 %v597
  %8482 = vmatpush1.bf16.msra.mxu0 %v596
  %8483 = vmatprep.subr.bf16.mxu0 %v599
  %8484 = vmatpush1.bf16.msra.mxu0 %v598
  %8485 = vmatprep.subr.bf16.mxu0 %v601
  %8486 = vmatpush1.bf16.msra.mxu0 %v600
  %8487 = vmatprep.subr.bf16.mxu0 %v603
  %8488 = vmatpush1.bf16.msra.mxu0 %v602
  %8489 = vmatprep.subr.bf16.mxu0 %v605
  %8490 = vmatpush1.bf16.msra.mxu0 %v604
  %8491 = vmatprep.subr.bf16.mxu0 %v607
  %8492 = vmatpush1.bf16.msra.mxu0 %v606
  %8493 = vmatprep.subr.bf16.mxu0 %v609
  %8494 = vmatpush1.bf16.msra.mxu0 %v608
  %8495 = vmatprep.subr.bf16.mxu0 %v611
  %8496 = vmatpush1.bf16.msra.mxu0 %v610
  %8497 = vmatprep.subr.bf16.mxu0 %v613
  %8498 = vmatpush1.bf16.msra.mxu0 %v612
  %8499 = vmatprep.subr.bf16.mxu0 %v615
  %8500 = vmatpush1.bf16.msra.mxu0 %v614
  %8501 = vmatprep.mubr.bf16.mxu0 %v8298
  %8502 = vmatmul.mubr.bf16.gmra.mrb[0].mxu0 %v8297
  %v8503 = vpop.f32.mrb[0].mxu0
  %v8504 = vadd.f32 0.0, %v8503
  %v8505 = vpop.f32.mrb[0].mxu0
  %v8506 = vadd.f32 0.0, %v8505
  %v8507 = vpop.f32.mrb[0].mxu0
  %v8508 = vpop.f32.mrb[0].mxu0
  %8509 = vdwg.mxu0
  %s8510 = smul.u32 24, 2
  %s8511 = smul.addr %s8510, 8
  %s8512 = scalar_lea.vmem [#allocation2], %s8511
  %v8513 = vld [vmem:[%s8512] sm:$0xff]
  %v8514 = vld [vmem:[%s8512 + $0x8] sm:$0xff]
  %8515 = vmatprep.subr.bf16.mxu0 %v823
  %8516 = vmatpush1.bf16.msra.mxu0 %v822
  %8517 = vmatprep.subr.bf16.mxu0 %v825
  %8518 = vmatpush1.bf16.msra.mxu0 %v824
  %8519 = vmatprep.subr.bf16.mxu0 %v827
  %8520 = vmatpush1.bf16.msra.mxu0 %v826
  %8521 = vmatprep.subr.bf16.mxu0 %v829
  %8522 = vmatpush1.bf16.msra.mxu0 %v828
  %8523 = vmatprep.subr.bf16.mxu0 %v831
  %8524 = vmatpush1.bf16.msra.mxu0 %v830
  %8525 = vmatprep.subr.bf16.mxu0 %v833
  %8526 = vmatpush1.bf16.msra.mxu0 %v832
  %8527 = vmatprep.subr.bf16.mxu0 %v835
  %8528 = vmatpush1.bf16.msra.mxu0 %v834
  %8529 = vmatprep.subr.bf16.mxu0 %v837
  %8530 = vmatpush1.bf16.msra.mxu0 %v836
  %8531 = vmatprep.subr.bf16.mxu0 %v839
  %8532 = vmatpush1.bf16.msra.mxu0 %v838
  %8533 = vmatprep.subr.bf16.mxu0 %v841
  %8534 = vmatpush1.bf16.msra.mxu0 %v840
  %8535 = vmatprep.subr.bf16.mxu0 %v843
  %8536 = vmatpush1.bf16.msra.mxu0 %v842
  %8537 = vmatprep.subr.bf16.mxu0 %v845
  %8538 = vmatpush1.bf16.msra.mxu0 %v844
  %8539 = vmatprep.subr.bf16.mxu0 %v847
  %8540 = vmatpush1.bf16.msra.mxu0 %v846
  %8541 = vmatprep.subr.bf16.mxu0 %v849
  %8542 = vmatpush1.bf16.msra.mxu0 %v848
  %8543 = vmatprep.subr.bf16.mxu0 %v851
  %8544 = vmatpush1.bf16.msra.mxu0 %v850
  %8545 = vmatprep.subr.bf16.mxu0 %v853
  %8546 = vmatpush1.bf16.msra.mxu0 %v852
  %8547 = vmatprep.mubr.bf16.mxu0 %v8251
  %8548 = vmatmul.mubr.bf16.gmra.mrb[0].mxu0 %v8250
  %v8549 = vpop.f32.mrb[0].mxu0
  %v8550 = vadd.f32 0.0, %v8549
  %v8551 = vpop.f32.mrb[0].mxu0
  %v8552 = vadd.f32 0.0, %v8551
  %v8553 = vpop.f32.mrb[0].mxu0
  %v8554 = vpop.f32.mrb[0].mxu0
  %8555 = vdwg.mxu0
  %v8556 = vadd.f32 %v8513, %v8550
  %v8557 = vadd.f32 %v8514, %v8552
  %v8558 = vtanh.pop %v8556
  %v8559 = vtanh.pop %v8557
  %v8560 = vpack.c.bf16 %v8558, %v8558
  %v8561 = vpack.c.bf16 %v8559, %v8559
  %8562 = vmatprep.subr.bf16.mxu0 %v1062
  %8563 = vmatpush1.bf16.msra.mxu0 %v1061
  %8564 = vmatprep.subr.bf16.mxu0 %v1064
  %8565 = vmatpush1.bf16.msra.mxu0 %v1063
  %8566 = vmatprep.subr.bf16.mxu0 %v1066
  %8567 = vmatpush1.bf16.msra.mxu0 %v1065
  %8568 = vmatprep.subr.bf16.mxu0 %v1068
  %8569 = vmatpush1.bf16.msra.mxu0 %v1067
  %8570 = vmatprep.subr.bf16.mxu0 %v1070
  %8571 = vmatpush1.bf16.msra.mxu0 %v1069
  %8572 = vmatprep.subr.bf16.mxu0 %v1072
  %8573 = vmatpush1.bf16.msra.mxu0 %v1071
  %8574 = vmatprep.subr.bf16.mxu0 %v1074
  %8575 = vmatpush1.bf16.msra.mxu0 %v1073
  %8576 = vmatprep.subr.bf16.mxu0 %v1076
  %8577 = vmatpush1.bf16.msra.mxu0 %v1075
  %8578 = vmatprep.subr.bf16.mxu0 %v1078
  %8579 = vmatpush1.bf16.msra.mxu0 %v1077
  %8580 = vmatprep.subr.bf16.mxu0 %v1080
  %8581 = vmatpush1.bf16.msra.mxu0 %v1079
  %8582 = vmatprep.subr.bf16.mxu0 %v1082
  %8583 = vmatpush1.bf16.msra.mxu0 %v1081
  %8584 = vmatprep.subr.bf16.mxu0 %v1084
  %8585 = vmatpush1.bf16.msra.mxu0 %v1083
  %8586 = vmatprep.subr.bf16.mxu0 %v1086
  %8587 = vmatpush1.bf16.msra.mxu0 %v1085
  %8588 = vmatprep.subr.bf16.mxu0 %v1088
  %8589 = vmatpush1.bf16.msra.mxu0 %v1087
  %8590 = vmatprep.subr.bf16.mxu0 %v1090
  %8591 = vmatpush1.bf16.msra.mxu0 %v1089
  %8592 = vmatprep.subr.bf16.mxu0 %v1092
  %8593 = vmatpush1.bf16.msra.mxu0 %v1091
  %8594 = vmatprep.mubr.bf16.mxu0 %v8561
  %8595 = vmatmul.mubr.bf16.gmra.mrb[0].mxu0 %v8560
  %v8596 = vpop.f32.mrb[0].mxu0
  %v8597 = vadd.f32 %v8504, %v8596
  %v8598 = vpop.f32.mrb[0].mxu0
  %v8599 = vadd.f32 %v8506, %v8598
  %v8600 = vpop.f32.mrb[0].mxu0
  %v8601 = vpop.f32.mrb[0].mxu0
  %8602 = vdwg.mxu0
  %v8603 = vadd.f32 %v8597, %v449
  %v8604 = vadd.f32 %v8599, %v453
  %v8605 = vtanh.pop %v8603
  %v8606 = vtanh.pop %v8604
  %v8607 = vpack.c.bf16 %v8605, %v8605
  %v8608 = vpack.c.bf16 %v8606, %v8606
  %s8609 = scalar_lea.vmem %s7, 3072
  %v8610 = vld [vmem:[%s8609] sm:$0xf]
  %v8611 = vld [vmem:[%s8609 + $0x4] sm:$0xf]
  %v8612 = vld [vmem:[%s8609 + $0x8] sm:$0xf]
  %v8613 = vld [vmem:[%s8609 + $0xc] sm:$0xf]
  %v8614 = vld [vmem:[%s8609 + $0x10] sm:$0xf]
  %v8615 = vld [vmem:[%s8609 + $0x14] sm:$0xf]
  %v8616 = vld [vmem:[%s8609 + $0x18] sm:$0xf]
  %v8617 = vld [vmem:[%s8609 + $0x1c] sm:$0xf]
  %v8618 = vld [vmem:[%s8609 + $0x20] sm:$0xf]
  %v8619 = vld [vmem:[%s8609 + $0x24] sm:$0xf]
  %v8620 = vld [vmem:[%s8609 + $0x28] sm:$0xf]
  %v8621 = vld [vmem:[%s8609 + $0x2c] sm:$0xf]
  %v8622 = vld [vmem:[%s8609 + $0x30] sm:$0xf]
  %v8623 = vld [vmem:[%s8609 + $0x34] sm:$0xf]
  %v8624 = vld [vmem:[%s8609 + $0x38] sm:$0xf]
  %v8625 = vld [vmem:[%s8609 + $0x3c] sm:$0xf]
  %v8626 = vld [vmem:[%s8609 + $0x40] sm:$0xf]
  %v8627 = vld [vmem:[%s8609 + $0x44] sm:$0xf]
  %v8628 = vld [vmem:[%s8609 + $0x48] sm:$0xf]
  %v8629 = vld [vmem:[%s8609 + $0x4c] sm:$0xf]
  %v8630 = vld [vmem:[%s8609 + $0x50] sm:$0xf]
  %v8631 = vld [vmem:[%s8609 + $0x54] sm:$0xf]
  %v8632 = vld [vmem:[%s8609 + $0x58] sm:$0xf]
  %v8633 = vld [vmem:[%s8609 + $0x5c] sm:$0xf]
  %v8634 = vld [vmem:[%s8609 + $0x60] sm:$0xf]
  %v8635 = vld [vmem:[%s8609 + $0x64] sm:$0xf]
  %v8636 = vld [vmem:[%s8609 + $0x68] sm:$0xf]
  %v8637 = vld [vmem:[%s8609 + $0x6c] sm:$0xf]
  %v8638 = vld [vmem:[%s8609 + $0x70] sm:$0xf]
  %v8639 = vld [vmem:[%s8609 + $0x74] sm:$0xf]
  %v8640 = vld [vmem:[%s8609 + $0x78] sm:$0xf]
  %v8641 = vld [vmem:[%s8609 + $0x7c] sm:$0xf]
  %v8674 = vunpack.c.l.b16 %v8610
  %v8675 = vunpack.c.l.b16 %v8611
  %v8676 = vunpack.c.l.b16 %v8612
  %v8677 = vunpack.c.l.b16 %v8613
  %v8678 = vunpack.c.l.b16 %v8614
  %v8679 = vunpack.c.l.b16 %v8615
  %v8680 = vunpack.c.l.b16 %v8616
  %v8681 = vunpack.c.l.b16 %v8617
  %v8682 = vunpack.c.l.b16 %v8618
  %v8683 = vunpack.c.l.b16 %v8619
  %v8684 = vunpack.c.l.b16 %v8620
  %v8685 = vunpack.c.l.b16 %v8621
  %v8686 = vunpack.c.l.b16 %v8622
  %v8687 = vunpack.c.l.b16 %v8623
  %v8688 = vunpack.c.l.b16 %v8624
  %v8689 = vunpack.c.l.b16 %v8625
  %v8690 = vunpack.c.l.b16 %v8626
  %v8691 = vunpack.c.l.b16 %v8627
  %v8692 = vunpack.c.l.b16 %v8628
  %v8693 = vunpack.c.l.b16 %v8629
  %v8694 = vunpack.c.l.b16 %v8630
  %v8695 = vunpack.c.l.b16 %v8631
  %v8696 = vunpack.c.l.b16 %v8632
  %v8697 = vunpack.c.l.b16 %v8633
  %v8698 = vunpack.c.l.b16 %v8634
  %v8699 = vunpack.c.l.b16 %v8635
  %v8700 = vunpack.c.l.b16 %v8636
  %v8701 = vunpack.c.l.b16 %v8637
  %v8702 = vunpack.c.l.b16 %v8638
  %v8703 = vunpack.c.l.b16 %v8639
  %v8704 = vunpack.c.l.b16 %v8640
  %v8705 = vunpack.c.l.b16 %v8641
  %v8706 = vpack.c.b16 %v8675, %v8674
  %v8707 = vpack.c.b16 %v8677, %v8676
  %v8708 = vpack.c.b16 %v8679, %v8678
  %v8709 = vpack.c.b16 %v8681, %v8680
  %v8710 = vpack.c.b16 %v8683, %v8682
  %v8711 = vpack.c.b16 %v8685, %v8684
  %v8712 = vpack.c.b16 %v8687, %v8686
  %v8713 = vpack.c.b16 %v8689, %v8688
  %v8714 = vpack.c.b16 %v8691, %v8690
  %v8715 = vpack.c.b16 %v8693, %v8692
  %v8716 = vpack.c.b16 %v8695, %v8694
  %v8717 = vpack.c.b16 %v8697, %v8696
  %v8718 = vpack.c.b16 %v8699, %v8698
  %v8719 = vpack.c.b16 %v8701, %v8700
  %v8720 = vpack.c.b16 %v8703, %v8702
  %v8721 = vpack.c.b16 %v8705, %v8704
  %8738 = vmatprep.subr.bf16.mxu0 0
  %8739 = vmatpush1.bf16.msra.mxu0 %v8706
  %8740 = vmatprep.subr.bf16.mxu0 0
  %8741 = vmatpush1.bf16.msra.mxu0 %v8707
  %8742 = vmatprep.subr.bf16.mxu0 0
  %8743 = vmatpush1.bf16.msra.mxu0 %v8708
  %8744 = vmatprep.subr.bf16.mxu0 0
  %8745 = vmatpush1.bf16.msra.mxu0 %v8709
  %8746 = vmatprep.subr.bf16.mxu0 0
  %8747 = vmatpush1.bf16.msra.mxu0 %v8710
  %8748 = vmatprep.subr.bf16.mxu0 0
  %8749 = vmatpush1.bf16.msra.mxu0 %v8711
  %8750 = vmatprep.subr.bf16.mxu0 0
  %8751 = vmatpush1.bf16.msra.mxu0 %v8712
  %8752 = vmatprep.subr.bf16.mxu0 0
  %8753 = vmatpush1.bf16.msra.mxu0 %v8713
  %8754 = vmatprep.subr.bf16.mxu0 0
  %8755 = vmatpush1.bf16.msra.mxu0 %v8714
  %8756 = vmatprep.subr.bf16.mxu0 0
  %8757 = vmatpush1.bf16.msra.mxu0 %v8715
  %8758 = vmatprep.subr.bf16.mxu0 0
  %8759 = vmatpush1.bf16.msra.mxu0 %v8716
  %8760 = vmatprep.subr.bf16.mxu0 0
  %8761 = vmatpush1.bf16.msra.mxu0 %v8717
  %8762 = vmatprep.subr.bf16.mxu0 0
  %8763 = vmatpush1.bf16.msra.mxu0 %v8718
  %8764 = vmatprep.subr.bf16.mxu0 0
  %8765 = vmatpush1.bf16.msra.mxu0 %v8719
  %8766 = vmatprep.subr.bf16.mxu0 0
  %8767 = vmatpush1.bf16.msra.mxu0 %v8720
  %8768 = vmatprep.subr.bf16.mxu0 0
  %8769 = vmatpush1.bf16.msra.mxu0 %v8721
  %8770 = vmatprep.mubr.bf16.mxu0 %v8608
  %8771 = vmatmul.mubr.bf16.gmra.mrb[0].mxu0 %v8607
  %v8772 = vpop.f32.mrb[0].mxu0
  %v8773 = vadd.f32 0.0, %v8772
  %v8774 = vpop.f32.mrb[0].mxu0
  %v8775 = vpop.f32.mrb[0].mxu0
  %v8776 = vpop.f32.mrb[0].mxu0
  %8777 = vdwg.mxu0
  %v8778 = vadd.f32 %v8468, %v8773
  %8779 = vmatprep.subr.bf16.mxu0 %v585
  %8780 = vmatpush1.bf16.msra.mxu0 %v584
  %8781 = vmatprep.subr.bf16.mxu0 %v587
  %8782 = vmatpush1.bf16.msra.mxu0 %v586
  %8783 = vmatprep.subr.bf16.mxu0 %v589
  %8784 = vmatpush1.bf16.msra.mxu0 %v588
  %8785 = vmatprep.subr.bf16.mxu0 %v591
  %8786 = vmatpush1.bf16.msra.mxu0 %v590
  %8787 = vmatprep.subr.bf16.mxu0 %v593
  %8788 = vmatpush1.bf16.msra.mxu0 %v592
  %8789 = vmatprep.subr.bf16.mxu0 %v595
  %8790 = vmatpush1.bf16.msra.mxu0 %v594
  %8791 = vmatprep.subr.bf16.mxu0 %v597
  %8792 = vmatpush1.bf16.msra.mxu0 %v596
  %8793 = vmatprep.subr.bf16.mxu0 %v599
  %8794 = vmatpush1.bf16.msra.mxu0 %v598
  %8795 = vmatprep.subr.bf16.mxu0 %v601
  %8796 = vmatpush1.bf16.msra.mxu0 %v600
  %8797 = vmatprep.subr.bf16.mxu0 %v603
  %8798 = vmatpush1.bf16.msra.mxu0 %v602
  %8799 = vmatprep.subr.bf16.mxu0 %v605
  %8800 = vmatpush1.bf16.msra.mxu0 %v604
  %8801 = vmatprep.subr.bf16.mxu0 %v607
  %8802 = vmatpush1.bf16.msra.mxu0 %v606
  %8803 = vmatprep.subr.bf16.mxu0 %v609
  %8804 = vmatpush1.bf16.msra.mxu0 %v608
  %8805 = vmatprep.subr.bf16.mxu0 %v611
  %8806 = vmatpush1.bf16.msra.mxu0 %v610
  %8807 = vmatprep.subr.bf16.mxu0 %v613
  %8808 = vmatpush1.bf16.msra.mxu0 %v612
  %8809 = vmatprep.subr.bf16.mxu0 %v615
  %8810 = vmatpush1.bf16.msra.mxu0 %v614
  %8811 = vmatprep.mubr.bf16.mxu0 %v8608
  %8812 = vmatmul.mubr.bf16.gmra.mrb[0].mxu0 %v8607
  %v8813 = vpop.f32.mrb[0].mxu0
  %v8814 = vadd.f32 0.0, %v8813
  %v8815 = vpop.f32.mrb[0].mxu0
  %v8816 = vadd.f32 0.0, %v8815
  %v8817 = vpop.f32.mrb[0].mxu0
  %v8818 = vpop.f32.mrb[0].mxu0
  %8819 = vdwg.mxu0
  %s8820 = smul.u32 25, 2
  %s8821 = smul.addr %s8820, 8
  %s8822 = scalar_lea.vmem [#allocation2], %s8821
  %v8823 = vld [vmem:[%s8822] sm:$0xff]
  %v8824 = vld [vmem:[%s8822 + $0x8] sm:$0xff]
  %8825 = vmatprep.subr.bf16.mxu0 %v823
  %8826 = vmatpush1.bf16.msra.mxu0 %v822
  %8827 = vmatprep.subr.bf16.mxu0 %v825
  %8828 = vmatpush1.bf16.msra.mxu0 %v824
  %8829 = vmatprep.subr.bf16.mxu0 %v827
  %8830 = vmatpush1.bf16.msra.mxu0 %v826
  %8831 = vmatprep.subr.bf16.mxu0 %v829
  %8832 = vmatpush1.bf16.msra.mxu0 %v828
  %8833 = vmatprep.subr.bf16.mxu0 %v831
  %8834 = vmatpush1.bf16.msra.mxu0 %v830
  %8835 = vmatprep.subr.bf16.mxu0 %v833
  %8836 = vmatpush1.bf16.msra.mxu0 %v832
  %8837 = vmatprep.subr.bf16.mxu0 %v835
  %8838 = vmatpush1.bf16.msra.mxu0 %v834
  %8839 = vmatprep.subr.bf16.mxu0 %v837
  %8840 = vmatpush1.bf16.msra.mxu0 %v836
  %8841 = vmatprep.subr.bf16.mxu0 %v839
  %8842 = vmatpush1.bf16.msra.mxu0 %v838
  %8843 = vmatprep.subr.bf16.mxu0 %v841
  %8844 = vmatpush1.bf16.msra.mxu0 %v840
  %8845 = vmatprep.subr.bf16.mxu0 %v843
  %8846 = vmatpush1.bf16.msra.mxu0 %v842
  %8847 = vmatprep.subr.bf16.mxu0 %v845
  %8848 = vmatpush1.bf16.msra.mxu0 %v844
  %8849 = vmatprep.subr.bf16.mxu0 %v847
  %8850 = vmatpush1.bf16.msra.mxu0 %v846
  %8851 = vmatprep.subr.bf16.mxu0 %v849
  %8852 = vmatpush1.bf16.msra.mxu0 %v848
  %8853 = vmatprep.subr.bf16.mxu0 %v851
  %8854 = vmatpush1.bf16.msra.mxu0 %v850
  %8855 = vmatprep.subr.bf16.mxu0 %v853
  %8856 = vmatpush1.bf16.msra.mxu0 %v852
  %8857 = vmatprep.mubr.bf16.mxu0 %v8561
  %8858 = vmatmul.mubr.bf16.gmra.mrb[0].mxu0 %v8560
  %v8859 = vpop.f32.mrb[0].mxu0
  %v8860 = vadd.f32 0.0, %v8859
  %v8861 = vpop.f32.mrb[0].mxu0
  %v8862 = vadd.f32 0.0, %v8861
  %v8863 = vpop.f32.mrb[0].mxu0
  %v8864 = vpop.f32.mrb[0].mxu0
  %8865 = vdwg.mxu0
  %v8866 = vadd.f32 %v8823, %v8860
  %v8867 = vadd.f32 %v8824, %v8862
  %v8868 = vtanh.pop %v8866
  %v8869 = vtanh.pop %v8867
  %v8870 = vpack.c.bf16 %v8868, %v8868
  %v8871 = vpack.c.bf16 %v8869, %v8869
  %8872 = vmatprep.subr.bf16.mxu0 %v1062
  %8873 = vmatpush1.bf16.msra.mxu0 %v1061
  %8874 = vmatprep.subr.bf16.mxu0 %v1064
  %8875 = vmatpush1.bf16.msra.mxu0 %v1063
  %8876 = vmatprep.subr.bf16.mxu0 %v1066
  %8877 = vmatpush1.bf16.msra.mxu0 %v1065
  %8878 = vmatprep.subr.bf16.mxu0 %v1068
  %8879 = vmatpush1.bf16.msra.mxu0 %v1067
  %8880 = vmatprep.subr.bf16.mxu0 %v1070
  %8881 = vmatpush1.bf16.msra.mxu0 %v1069
  %8882 = vmatprep.subr.bf16.mxu0 %v1072
  %8883 = vmatpush1.bf16.msra.mxu0 %v1071
  %8884 = vmatprep.subr.bf16.mxu0 %v1074
  %8885 = vmatpush1.bf16.msra.mxu0 %v1073
  %8886 = vmatprep.subr.bf16.mxu0 %v1076
  %8887 = vmatpush1.bf16.msra.mxu0 %v1075
  %8888 = vmatprep.subr.bf16.mxu0 %v1078
  %8889 = vmatpush1.bf16.msra.mxu0 %v1077
  %8890 = vmatprep.subr.bf16.mxu0 %v1080
  %8891 = vmatpush1.bf16.msra.mxu0 %v1079
  %8892 = vmatprep.subr.bf16.mxu0 %v1082
  %8893 = vmatpush1.bf16.msra.mxu0 %v1081
  %8894 = vmatprep.subr.bf16.mxu0 %v1084
  %8895 = vmatpush1.bf16.msra.mxu0 %v1083
  %8896 = vmatprep.subr.bf16.mxu0 %v1086
  %8897 = vmatpush1.bf16.msra.mxu0 %v1085
  %8898 = vmatprep.subr.bf16.mxu0 %v1088
  %8899 = vmatpush1.bf16.msra.mxu0 %v1087
  %8900 = vmatprep.subr.bf16.mxu0 %v1090
  %8901 = vmatpush1.bf16.msra.mxu0 %v1089
  %8902 = vmatprep.subr.bf16.mxu0 %v1092
  %8903 = vmatpush1.bf16.msra.mxu0 %v1091
  %8904 = vmatprep.mubr.bf16.mxu0 %v8871
  %8905 = vmatmul.mubr.bf16.gmra.mrb[0].mxu0 %v8870
  %v8906 = vpop.f32.mrb[0].mxu0
  %v8907 = vadd.f32 %v8814, %v8906
  %v8908 = vpop.f32.mrb[0].mxu0
  %v8909 = vadd.f32 %v8816, %v8908
  %v8910 = vpop.f32.mrb[0].mxu0
  %v8911 = vpop.f32.mrb[0].mxu0
  %8912 = vdwg.mxu0
  %v8913 = vadd.f32 %v8907, %v449
  %v8914 = vadd.f32 %v8909, %v453
  %v8915 = vtanh.pop %v8913
  %v8916 = vtanh.pop %v8914
  %v8917 = vpack.c.bf16 %v8915, %v8915
  %v8918 = vpack.c.bf16 %v8916, %v8916
  %s8919 = scalar_lea.vmem %s7, 3200
  %v8920 = vld [vmem:[%s8919] sm:$0xf]
  %v8921 = vld [vmem:[%s8919 + $0x4] sm:$0xf]
  %v8922 = vld [vmem:[%s8919 + $0x8] sm:$0xf]
  %v8923 = vld [vmem:[%s8919 + $0xc] sm:$0xf]
  %v8924 = vld [vmem:[%s8919 + $0x10] sm:$0xf]
  %v8925 = vld [vmem:[%s8919 + $0x14] sm:$0xf]
  %v8926 = vld [vmem:[%s8919 + $0x18] sm:$0xf]
  %v8927 = vld [vmem:[%s8919 + $0x1c] sm:$0xf]
  %v8928 = vld [vmem:[%s8919 + $0x20] sm:$0xf]
  %v8929 = vld [vmem:[%s8919 + $0x24] sm:$0xf]
  %v8930 = vld [vmem:[%s8919 + $0x28] sm:$0xf]
  %v8931 = vld [vmem:[%s8919 + $0x2c] sm:$0xf]
  %v8932 = vld [vmem:[%s8919 + $0x30] sm:$0xf]
  %v8933 = vld [vmem:[%s8919 + $0x34] sm:$0xf]
  %v8934 = vld [vmem:[%s8919 + $0x38] sm:$0xf]
  %v8935 = vld [vmem:[%s8919 + $0x3c] sm:$0xf]
  %v8936 = vld [vmem:[%s8919 + $0x40] sm:$0xf]
  %v8937 = vld [vmem:[%s8919 + $0x44] sm:$0xf]
  %v8938 = vld [vmem:[%s8919 + $0x48] sm:$0xf]
  %v8939 = vld [vmem:[%s8919 + $0x4c] sm:$0xf]
  %v8940 = vld [vmem:[%s8919 + $0x50] sm:$0xf]
  %v8941 = vld [vmem:[%s8919 + $0x54] sm:$0xf]
  %v8942 = vld [vmem:[%s8919 + $0x58] sm:$0xf]
  %v8943 = vld [vmem:[%s8919 + $0x5c] sm:$0xf]
  %v8944 = vld [vmem:[%s8919 + $0x60] sm:$0xf]
  %v8945 = vld [vmem:[%s8919 + $0x64] sm:$0xf]
  %v8946 = vld [vmem:[%s8919 + $0x68] sm:$0xf]
  %v8947 = vld [vmem:[%s8919 + $0x6c] sm:$0xf]
  %v8948 = vld [vmem:[%s8919 + $0x70] sm:$0xf]
  %v8949 = vld [vmem:[%s8919 + $0x74] sm:$0xf]
  %v8950 = vld [vmem:[%s8919 + $0x78] sm:$0xf]
  %v8951 = vld [vmem:[%s8919 + $0x7c] sm:$0xf]
  %v8984 = vunpack.c.l.b16 %v8920
  %v8985 = vunpack.c.l.b16 %v8921
  %v8986 = vunpack.c.l.b16 %v8922
  %v8987 = vunpack.c.l.b16 %v8923
  %v8988 = vunpack.c.l.b16 %v8924
  %v8989 = vunpack.c.l.b16 %v8925
  %v8990 = vunpack.c.l.b16 %v8926
  %v8991 = vunpack.c.l.b16 %v8927
  %v8992 = vunpack.c.l.b16 %v8928
  %v8993 = vunpack.c.l.b16 %v8929
  %v8994 = vunpack.c.l.b16 %v8930
  %v8995 = vunpack.c.l.b16 %v8931
  %v8996 = vunpack.c.l.b16 %v8932
  %v8997 = vunpack.c.l.b16 %v8933
  %v8998 = vunpack.c.l.b16 %v8934
  %v8999 = vunpack.c.l.b16 %v8935
  %v9000 = vunpack.c.l.b16 %v8936
  %v9001 = vunpack.c.l.b16 %v8937
  %v9002 = vunpack.c.l.b16 %v8938
  %v9003 = vunpack.c.l.b16 %v8939
  %v9004 = vunpack.c.l.b16 %v8940
  %v9005 = vunpack.c.l.b16 %v8941
  %v9006 = vunpack.c.l.b16 %v8942
  %v9007 = vunpack.c.l.b16 %v8943
  %v9008 = vunpack.c.l.b16 %v8944
  %v9009 = vunpack.c.l.b16 %v8945
  %v9010 = vunpack.c.l.b16 %v8946
  %v9011 = vunpack.c.l.b16 %v8947
  %v9012 = vunpack.c.l.b16 %v8948
  %v9013 = vunpack.c.l.b16 %v8949
  %v9014 = vunpack.c.l.b16 %v8950
  %v9015 = vunpack.c.l.b16 %v8951
  %v9016 = vpack.c.b16 %v8985, %v8984
  %v9017 = vpack.c.b16 %v8987, %v8986
  %v9018 = vpack.c.b16 %v8989, %v8988
  %v9019 = vpack.c.b16 %v8991, %v8990
  %v9020 = vpack.c.b16 %v8993, %v8992
  %v9021 = vpack.c.b16 %v8995, %v8994
  %v9022 = vpack.c.b16 %v8997, %v8996
  %v9023 = vpack.c.b16 %v8999, %v8998
  %v9024 = vpack.c.b16 %v9001, %v9000
  %v9025 = vpack.c.b16 %v9003, %v9002
  %v9026 = vpack.c.b16 %v9005, %v9004
  %v9027 = vpack.c.b16 %v9007, %v9006
  %v9028 = vpack.c.b16 %v9009, %v9008
  %v9029 = vpack.c.b16 %v9011, %v9010
  %v9030 = vpack.c.b16 %v9013, %v9012
  %v9031 = vpack.c.b16 %v9015, %v9014
  %9048 = vmatprep.subr.bf16.mxu0 0
  %9049 = vmatpush1.bf16.msra.mxu0 %v9016
  %9050 = vmatprep.subr.bf16.mxu0 0
  %9051 = vmatpush1.bf16.msra.mxu0 %v9017
  %9052 = vmatprep.subr.bf16.mxu0 0
  %9053 = vmatpush1.bf16.msra.mxu0 %v9018
  %9054 = vmatprep.subr.bf16.mxu0 0
  %9055 = vmatpush1.bf16.msra.mxu0 %v9019
  %9056 = vmatprep.subr.bf16.mxu0 0
  %9057 = vmatpush1.bf16.msra.mxu0 %v9020
  %9058 = vmatprep.subr.bf16.mxu0 0
  %9059 = vmatpush1.bf16.msra.mxu0 %v9021
  %9060 = vmatprep.subr.bf16.mxu0 0
  %9061 = vmatpush1.bf16.msra.mxu0 %v9022
  %9062 = vmatprep.subr.bf16.mxu0 0
  %9063 = vmatpush1.bf16.msra.mxu0 %v9023
  %9064 = vmatprep.subr.bf16.mxu0 0
  %9065 = vmatpush1.bf16.msra.mxu0 %v9024
  %9066 = vmatprep.subr.bf16.mxu0 0
  %9067 = vmatpush1.bf16.msra.mxu0 %v9025
  %9068 = vmatprep.subr.bf16.mxu0 0
  %9069 = vmatpush1.bf16.msra.mxu0 %v9026
  %9070 = vmatprep.subr.bf16.mxu0 0
  %9071 = vmatpush1.bf16.msra.mxu0 %v9027
  %9072 = vmatprep.subr.bf16.mxu0 0
  %9073 = vmatpush1.bf16.msra.mxu0 %v9028
  %9074 = vmatprep.subr.bf16.mxu0 0
  %9075 = vmatpush1.bf16.msra.mxu0 %v9029
  %9076 = vmatprep.subr.bf16.mxu0 0
  %9077 = vmatpush1.bf16.msra.mxu0 %v9030
  %9078 = vmatprep.subr.bf16.mxu0 0
  %9079 = vmatpush1.bf16.msra.mxu0 %v9031
  %9080 = vmatprep.mubr.bf16.mxu0 %v8918
  %9081 = vmatmul.mubr.bf16.gmra.mrb[0].mxu0 %v8917
  %v9082 = vpop.f32.mrb[0].mxu0
  %v9083 = vadd.f32 0.0, %v9082
  %v9084 = vpop.f32.mrb[0].mxu0
  %v9085 = vpop.f32.mrb[0].mxu0
  %v9086 = vpop.f32.mrb[0].mxu0
  %9087 = vdwg.mxu0
  %v9088 = vadd.f32 %v8778, %v9083
  %9089 = vmatprep.subr.bf16.mxu0 %v585
  %9090 = vmatpush1.bf16.msra.mxu0 %v584
  %9091 = vmatprep.subr.bf16.mxu0 %v587
  %9092 = vmatpush1.bf16.msra.mxu0 %v586
  %9093 = vmatprep.subr.bf16.mxu0 %v589
  %9094 = vmatpush1.bf16.msra.mxu0 %v588
  %9095 = vmatprep.subr.bf16.mxu0 %v591
  %9096 = vmatpush1.bf16.msra.mxu0 %v590
  %9097 = vmatprep.subr.bf16.mxu0 %v593
  %9098 = vmatpush1.bf16.msra.mxu0 %v592
  %9099 = vmatprep.subr.bf16.mxu0 %v595
  %9100 = vmatpush1.bf16.msra.mxu0 %v594
  %9101 = vmatprep.subr.bf16.mxu0 %v597
  %9102 = vmatpush1.bf16.msra.mxu0 %v596
  %9103 = vmatprep.subr.bf16.mxu0 %v599
  %9104 = vmatpush1.bf16.msra.mxu0 %v598
  %9105 = vmatprep.subr.bf16.mxu0 %v601
  %9106 = vmatpush1.bf16.msra.mxu0 %v600
  %9107 = vmatprep.subr.bf16.mxu0 %v603
  %9108 = vmatpush1.bf16.msra.mxu0 %v602
  %9109 = vmatprep.subr.bf16.mxu0 %v605
  %9110 = vmatpush1.bf16.msra.mxu0 %v604
  %9111 = vmatprep.subr.bf16.mxu0 %v607
  %9112 = vmatpush1.bf16.msra.mxu0 %v606
  %9113 = vmatprep.subr.bf16.mxu0 %v609
  %9114 = vmatpush1.bf16.msra.mxu0 %v608
  %9115 = vmatprep.subr.bf16.mxu0 %v611
  %9116 = vmatpush1.bf16.msra.mxu0 %v610
  %9117 = vmatprep.subr.bf16.mxu0 %v613
  %9118 = vmatpush1.bf16.msra.mxu0 %v612
  %9119 = vmatprep.subr.bf16.mxu0 %v615
  %9120 = vmatpush1.bf16.msra.mxu0 %v614
  %9121 = vmatprep.mubr.bf16.mxu0 %v8918
  %9122 = vmatmul.mubr.bf16.gmra.mrb[0].mxu0 %v8917
  %v9123 = vpop.f32.mrb[0].mxu0
  %v9124 = vadd.f32 0.0, %v9123
  %v9125 = vpop.f32.mrb[0].mxu0
  %v9126 = vadd.f32 0.0, %v9125
  %v9127 = vpop.f32.mrb[0].mxu0
  %v9128 = vpop.f32.mrb[0].mxu0
  %9129 = vdwg.mxu0
  %s9130 = smul.u32 26, 2
  %s9131 = smul.addr %s9130, 8
  %s9132 = scalar_lea.vmem [#allocation2], %s9131
  %v9133 = vld [vmem:[%s9132] sm:$0xff]
  %v9134 = vld [vmem:[%s9132 + $0x8] sm:$0xff]
  %9135 = vmatprep.subr.bf16.mxu0 %v823
  %9136 = vmatpush1.bf16.msra.mxu0 %v822
  %9137 = vmatprep.subr.bf16.mxu0 %v825
  %9138 = vmatpush1.bf16.msra.mxu0 %v824
  %9139 = vmatprep.subr.bf16.mxu0 %v827
  %9140 = vmatpush1.bf16.msra.mxu0 %v826
  %9141 = vmatprep.subr.bf16.mxu0 %v829
  %9142 = vmatpush1.bf16.msra.mxu0 %v828
  %9143 = vmatprep.subr.bf16.mxu0 %v831
  %9144 = vmatpush1.bf16.msra.mxu0 %v830
  %9145 = vmatprep.subr.bf16.mxu0 %v833
  %9146 = vmatpush1.bf16.msra.mxu0 %v832
  %9147 = vmatprep.subr.bf16.mxu0 %v835
  %9148 = vmatpush1.bf16.msra.mxu0 %v834
  %9149 = vmatprep.subr.bf16.mxu0 %v837
  %9150 = vmatpush1.bf16.msra.mxu0 %v836
  %9151 = vmatprep.subr.bf16.mxu0 %v839
  %9152 = vmatpush1.bf16.msra.mxu0 %v838
  %9153 = vmatprep.subr.bf16.mxu0 %v841
  %9154 = vmatpush1.bf16.msra.mxu0 %v840
  %9155 = vmatprep.subr.bf16.mxu0 %v843
  %9156 = vmatpush1.bf16.msra.mxu0 %v842
  %9157 = vmatprep.subr.bf16.mxu0 %v845
  %9158 = vmatpush1.bf16.msra.mxu0 %v844
  %9159 = vmatprep.subr.bf16.mxu0 %v847
  %9160 = vmatpush1.bf16.msra.mxu0 %v846
  %9161 = vmatprep.subr.bf16.mxu0 %v849
  %9162 = vmatpush1.bf16.msra.mxu0 %v848
  %9163 = vmatprep.subr.bf16.mxu0 %v851
  %9164 = vmatpush1.bf16.msra.mxu0 %v850
  %9165 = vmatprep.subr.bf16.mxu0 %v853
  %9166 = vmatpush1.bf16.msra.mxu0 %v852
  %9167 = vmatprep.mubr.bf16.mxu0 %v8871
  %9168 = vmatmul.mubr.bf16.gmra.mrb[0].mxu0 %v8870
  %v9169 = vpop.f32.mrb[0].mxu0
  %v9170 = vadd.f32 0.0, %v9169
  %v9171 = vpop.f32.mrb[0].mxu0
  %v9172 = vadd.f32 0.0, %v9171
  %v9173 = vpop.f32.mrb[0].mxu0
  %v9174 = vpop.f32.mrb[0].mxu0
  %9175 = vdwg.mxu0
  %v9176 = vadd.f32 %v9133, %v9170
  %v9177 = vadd.f32 %v9134, %v9172
  %v9178 = vtanh.pop %v9176
  %v9179 = vtanh.pop %v9177
  %v9180 = vpack.c.bf16 %v9178, %v9178
  %v9181 = vpack.c.bf16 %v9179, %v9179
  %9182 = vmatprep.subr.bf16.mxu0 %v1062
  %9183 = vmatpush1.bf16.msra.mxu0 %v1061
  %9184 = vmatprep.subr.bf16.mxu0 %v1064
  %9185 = vmatpush1.bf16.msra.mxu0 %v1063
  %9186 = vmatprep.subr.bf16.mxu0 %v1066
  %9187 = vmatpush1.bf16.msra.mxu0 %v1065
  %9188 = vmatprep.subr.bf16.mxu0 %v1068
  %9189 = vmatpush1.bf16.msra.mxu0 %v1067
  %9190 = vmatprep.subr.bf16.mxu0 %v1070
  %9191 = vmatpush1.bf16.msra.mxu0 %v1069
  %9192 = vmatprep.subr.bf16.mxu0 %v1072
  %9193 = vmatpush1.bf16.msra.mxu0 %v1071
  %9194 = vmatprep.subr.bf16.mxu0 %v1074
  %9195 = vmatpush1.bf16.msra.mxu0 %v1073
  %9196 = vmatprep.subr.bf16.mxu0 %v1076
  %9197 = vmatpush1.bf16.msra.mxu0 %v1075
  %9198 = vmatprep.subr.bf16.mxu0 %v1078
  %9199 = vmatpush1.bf16.msra.mxu0 %v1077
  %9200 = vmatprep.subr.bf16.mxu0 %v1080
  %9201 = vmatpush1.bf16.msra.mxu0 %v1079
  %9202 = vmatprep.subr.bf16.mxu0 %v1082
  %9203 = vmatpush1.bf16.msra.mxu0 %v1081
  %9204 = vmatprep.subr.bf16.mxu0 %v1084
  %9205 = vmatpush1.bf16.msra.mxu0 %v1083
  %9206 = vmatprep.subr.bf16.mxu0 %v1086
  %9207 = vmatpush1.bf16.msra.mxu0 %v1085
  %9208 = vmatprep.subr.bf16.mxu0 %v1088
  %9209 = vmatpush1.bf16.msra.mxu0 %v1087
  %9210 = vmatprep.subr.bf16.mxu0 %v1090
  %9211 = vmatpush1.bf16.msra.mxu0 %v1089
  %9212 = vmatprep.subr.bf16.mxu0 %v1092
  %9213 = vmatpush1.bf16.msra.mxu0 %v1091
  %9214 = vmatprep.mubr.bf16.mxu0 %v9181
  %9215 = vmatmul.mubr.bf16.gmra.mrb[0].mxu0 %v9180
  %v9216 = vpop.f32.mrb[0].mxu0
  %v9217 = vadd.f32 %v9124, %v9216
  %v9218 = vpop.f32.mrb[0].mxu0
  %v9219 = vadd.f32 %v9126, %v9218
  %v9220 = vpop.f32.mrb[0].mxu0
  %v9221 = vpop.f32.mrb[0].mxu0
  %9222 = vdwg.mxu0
  %v9223 = vadd.f32 %v9217, %v449
  %v9224 = vadd.f32 %v9219, %v453
  %v9225 = vtanh.pop %v9223
  %v9226 = vtanh.pop %v9224
  %v9227 = vpack.c.bf16 %v9225, %v9225
  %v9228 = vpack.c.bf16 %v9226, %v9226
  %s9229 = scalar_lea.vmem %s7, 3328
  %v9230 = vld [vmem:[%s9229] sm:$0xf]
  %v9231 = vld [vmem:[%s9229 + $0x4] sm:$0xf]
  %v9232 = vld [vmem:[%s9229 + $0x8] sm:$0xf]
  %v9233 = vld [vmem:[%s9229 + $0xc] sm:$0xf]
  %v9234 = vld [vmem:[%s9229 + $0x10] sm:$0xf]
  %v9235 = vld [vmem:[%s9229 + $0x14] sm:$0xf]
  %v9236 = vld [vmem:[%s9229 + $0x18] sm:$0xf]
  %v9237 = vld [vmem:[%s9229 + $0x1c] sm:$0xf]
  %v9238 = vld [vmem:[%s9229 + $0x20] sm:$0xf]
  %v9239 = vld [vmem:[%s9229 + $0x24] sm:$0xf]
  %v9240 = vld [vmem:[%s9229 + $0x28] sm:$0xf]
  %v9241 = vld [vmem:[%s9229 + $0x2c] sm:$0xf]
  %v9242 = vld [vmem:[%s9229 + $0x30] sm:$0xf]
  %v9243 = vld [vmem:[%s9229 + $0x34] sm:$0xf]
  %v9244 = vld [vmem:[%s9229 + $0x38] sm:$0xf]
  %v9245 = vld [vmem:[%s9229 + $0x3c] sm:$0xf]
  %v9246 = vld [vmem:[%s9229 + $0x40] sm:$0xf]
  %v9247 = vld [vmem:[%s9229 + $0x44] sm:$0xf]
  %v9248 = vld [vmem:[%s9229 + $0x48] sm:$0xf]
  %v9249 = vld [vmem:[%s9229 + $0x4c] sm:$0xf]
  %v9250 = vld [vmem:[%s9229 + $0x50] sm:$0xf]
  %v9251 = vld [vmem:[%s9229 + $0x54] sm:$0xf]
  %v9252 = vld [vmem:[%s9229 + $0x58] sm:$0xf]
  %v9253 = vld [vmem:[%s9229 + $0x5c] sm:$0xf]
  %v9254 = vld [vmem:[%s9229 + $0x60] sm:$0xf]
  %v9255 = vld [vmem:[%s9229 + $0x64] sm:$0xf]
  %v9256 = vld [vmem:[%s9229 + $0x68] sm:$0xf]
  %v9257 = vld [vmem:[%s9229 + $0x6c] sm:$0xf]
  %v9258 = vld [vmem:[%s9229 + $0x70] sm:$0xf]
  %v9259 = vld [vmem:[%s9229 + $0x74] sm:$0xf]
  %v9260 = vld [vmem:[%s9229 + $0x78] sm:$0xf]
  %v9261 = vld [vmem:[%s9229 + $0x7c] sm:$0xf]
  %v9294 = vunpack.c.l.b16 %v9230
  %v9295 = vunpack.c.l.b16 %v9231
  %v9296 = vunpack.c.l.b16 %v9232
  %v9297 = vunpack.c.l.b16 %v9233
  %v9298 = vunpack.c.l.b16 %v9234
  %v9299 = vunpack.c.l.b16 %v9235
  %v9300 = vunpack.c.l.b16 %v9236
  %v9301 = vunpack.c.l.b16 %v9237
  %v9302 = vunpack.c.l.b16 %v9238
  %v9303 = vunpack.c.l.b16 %v9239
  %v9304 = vunpack.c.l.b16 %v9240
  %v9305 = vunpack.c.l.b16 %v9241
  %v9306 = vunpack.c.l.b16 %v9242
  %v9307 = vunpack.c.l.b16 %v9243
  %v9308 = vunpack.c.l.b16 %v9244
  %v9309 = vunpack.c.l.b16 %v9245
  %v9310 = vunpack.c.l.b16 %v9246
  %v9311 = vunpack.c.l.b16 %v9247
  %v9312 = vunpack.c.l.b16 %v9248
  %v9313 = vunpack.c.l.b16 %v9249
  %v9314 = vunpack.c.l.b16 %v9250
  %v9315 = vunpack.c.l.b16 %v9251
  %v9316 = vunpack.c.l.b16 %v9252
  %v9317 = vunpack.c.l.b16 %v9253
  %v9318 = vunpack.c.l.b16 %v9254
  %v9319 = vunpack.c.l.b16 %v9255
  %v9320 = vunpack.c.l.b16 %v9256
  %v9321 = vunpack.c.l.b16 %v9257
  %v9322 = vunpack.c.l.b16 %v9258
  %v9323 = vunpack.c.l.b16 %v9259
  %v9324 = vunpack.c.l.b16 %v9260
  %v9325 = vunpack.c.l.b16 %v9261
  %v9326 = vpack.c.b16 %v9295, %v9294
  %v9327 = vpack.c.b16 %v9297, %v9296
  %v9328 = vpack.c.b16 %v9299, %v9298
  %v9329 = vpack.c.b16 %v9301, %v9300
  %v9330 = vpack.c.b16 %v9303, %v9302
  %v9331 = vpack.c.b16 %v9305, %v9304
  %v9332 = vpack.c.b16 %v9307, %v9306
  %v9333 = vpack.c.b16 %v9309, %v9308
  %v9334 = vpack.c.b16 %v9311, %v9310
  %v9335 = vpack.c.b16 %v9313, %v9312
  %v9336 = vpack.c.b16 %v9315, %v9314
  %v9337 = vpack.c.b16 %v9317, %v9316
  %v9338 = vpack.c.b16 %v9319, %v9318
  %v9339 = vpack.c.b16 %v9321, %v9320
  %v9340 = vpack.c.b16 %v9323, %v9322
  %v9341 = vpack.c.b16 %v9325, %v9324
  %9358 = vmatprep.subr.bf16.mxu0 0
  %9359 = vmatpush1.bf16.msra.mxu0 %v9326
  %9360 = vmatprep.subr.bf16.mxu0 0
  %9361 = vmatpush1.bf16.msra.mxu0 %v9327
  %9362 = vmatprep.subr.bf16.mxu0 0
  %9363 = vmatpush1.bf16.msra.mxu0 %v9328
  %9364 = vmatprep.subr.bf16.mxu0 0
  %9365 = vmatpush1.bf16.msra.mxu0 %v9329
  %9366 = vmatprep.subr.bf16.mxu0 0
  %9367 = vmatpush1.bf16.msra.mxu0 %v9330
  %9368 = vmatprep.subr.bf16.mxu0 0
  %9369 = vmatpush1.bf16.msra.mxu0 %v9331
  %9370 = vmatprep.subr.bf16.mxu0 0
  %9371 = vmatpush1.bf16.msra.mxu0 %v9332
  %9372 = vmatprep.subr.bf16.mxu0 0
  %9373 = vmatpush1.bf16.msra.mxu0 %v9333
  %9374 = vmatprep.subr.bf16.mxu0 0
  %9375 = vmatpush1.bf16.msra.mxu0 %v9334
  %9376 = vmatprep.subr.bf16.mxu0 0
  %9377 = vmatpush1.bf16.msra.mxu0 %v9335
  %9378 = vmatprep.subr.bf16.mxu0 0
  %9379 = vmatpush1.bf16.msra.mxu0 %v9336
  %9380 = vmatprep.subr.bf16.mxu0 0
  %9381 = vmatpush1.bf16.msra.mxu0 %v9337
  %9382 = vmatprep.subr.bf16.mxu0 0
  %9383 = vmatpush1.bf16.msra.mxu0 %v9338
  %9384 = vmatprep.subr.bf16.mxu0 0
  %9385 = vmatpush1.bf16.msra.mxu0 %v9339
  %9386 = vmatprep.subr.bf16.mxu0 0
  %9387 = vmatpush1.bf16.msra.mxu0 %v9340
  %9388 = vmatprep.subr.bf16.mxu0 0
  %9389 = vmatpush1.bf16.msra.mxu0 %v9341
  %9390 = vmatprep.mubr.bf16.mxu0 %v9228
  %9391 = vmatmul.mubr.bf16.gmra.mrb[0].mxu0 %v9227
  %v9392 = vpop.f32.mrb[0].mxu0
  %v9393 = vadd.f32 0.0, %v9392
  %v9394 = vpop.f32.mrb[0].mxu0
  %v9395 = vpop.f32.mrb[0].mxu0
  %v9396 = vpop.f32.mrb[0].mxu0
  %9397 = vdwg.mxu0
  %v9398 = vadd.f32 %v9088, %v9393
  %9399 = vmatprep.subr.bf16.mxu0 %v585
  %9400 = vmatpush1.bf16.msra.mxu0 %v584
  %9401 = vmatprep.subr.bf16.mxu0 %v587
  %9402 = vmatpush1.bf16.msra.mxu0 %v586
  %9403 = vmatprep.subr.bf16.mxu0 %v589
  %9404 = vmatpush1.bf16.msra.mxu0 %v588
  %9405 = vmatprep.subr.bf16.mxu0 %v591
  %9406 = vmatpush1.bf16.msra.mxu0 %v590
  %9407 = vmatprep.subr.bf16.mxu0 %v593
  %9408 = vmatpush1.bf16.msra.mxu0 %v592
  %9409 = vmatprep.subr.bf16.mxu0 %v595
  %9410 = vmatpush1.bf16.msra.mxu0 %v594
  %9411 = vmatprep.subr.bf16.mxu0 %v597
  %9412 = vmatpush1.bf16.msra.mxu0 %v596
  %9413 = vmatprep.subr.bf16.mxu0 %v599
  %9414 = vmatpush1.bf16.msra.mxu0 %v598
  %9415 = vmatprep.subr.bf16.mxu0 %v601
  %9416 = vmatpush1.bf16.msra.mxu0 %v600
  %9417 = vmatprep.subr.bf16.mxu0 %v603
  %9418 = vmatpush1.bf16.msra.mxu0 %v602
  %9419 = vmatprep.subr.bf16.mxu0 %v605
  %9420 = vmatpush1.bf16.msra.mxu0 %v604
  %9421 = vmatprep.subr.bf16.mxu0 %v607
  %9422 = vmatpush1.bf16.msra.mxu0 %v606
  %9423 = vmatprep.subr.bf16.mxu0 %v609
  %9424 = vmatpush1.bf16.msra.mxu0 %v608
  %9425 = vmatprep.subr.bf16.mxu0 %v611
  %9426 = vmatpush1.bf16.msra.mxu0 %v610
  %9427 = vmatprep.subr.bf16.mxu0 %v613
  %9428 = vmatpush1.bf16.msra.mxu0 %v612
  %9429 = vmatprep.subr.bf16.mxu0 %v615
  %9430 = vmatpush1.bf16.msra.mxu0 %v614
  %9431 = vmatprep.mubr.bf16.mxu0 %v9228
  %9432 = vmatmul.mubr.bf16.gmra.mrb[0].mxu0 %v9227
  %v9433 = vpop.f32.mrb[0].mxu0
  %v9434 = vadd.f32 0.0, %v9433
  %v9435 = vpop.f32.mrb[0].mxu0
  %v9436 = vadd.f32 0.0, %v9435
  %v9437 = vpop.f32.mrb[0].mxu0
  %v9438 = vpop.f32.mrb[0].mxu0
  %9439 = vdwg.mxu0
  %s9440 = smul.u32 27, 2
  %s9441 = smul.addr %s9440, 8
  %s9442 = scalar_lea.vmem [#allocation2], %s9441
  %v9443 = vld [vmem:[%s9442] sm:$0xff]
  %v9444 = vld [vmem:[%s9442 + $0x8] sm:$0xff]
  %9445 = vmatprep.subr.bf16.mxu0 %v823
  %9446 = vmatpush1.bf16.msra.mxu0 %v822
  %9447 = vmatprep.subr.bf16.mxu0 %v825
  %9448 = vmatpush1.bf16.msra.mxu0 %v824
  %9449 = vmatprep.subr.bf16.mxu0 %v827
  %9450 = vmatpush1.bf16.msra.mxu0 %v826
  %9451 = vmatprep.subr.bf16.mxu0 %v829
  %9452 = vmatpush1.bf16.msra.mxu0 %v828
  %9453 = vmatprep.subr.bf16.mxu0 %v831
  %9454 = vmatpush1.bf16.msra.mxu0 %v830
  %9455 = vmatprep.subr.bf16.mxu0 %v833
  %9456 = vmatpush1.bf16.msra.mxu0 %v832
  %9457 = vmatprep.subr.bf16.mxu0 %v835
  %9458 = vmatpush1.bf16.msra.mxu0 %v834
  %9459 = vmatprep.subr.bf16.mxu0 %v837
  %9460 = vmatpush1.bf16.msra.mxu0 %v836
  %9461 = vmatprep.subr.bf16.mxu0 %v839
  %9462 = vmatpush1.bf16.msra.mxu0 %v838
  %9463 = vmatprep.subr.bf16.mxu0 %v841
  %9464 = vmatpush1.bf16.msra.mxu0 %v840
  %9465 = vmatprep.subr.bf16.mxu0 %v843
  %9466 = vmatpush1.bf16.msra.mxu0 %v842
  %9467 = vmatprep.subr.bf16.mxu0 %v845
  %9468 = vmatpush1.bf16.msra.mxu0 %v844
  %9469 = vmatprep.subr.bf16.mxu0 %v847
  %9470 = vmatpush1.bf16.msra.mxu0 %v846
  %9471 = vmatprep.subr.bf16.mxu0 %v849
  %9472 = vmatpush1.bf16.msra.mxu0 %v848
  %9473 = vmatprep.subr.bf16.mxu0 %v851
  %9474 = vmatpush1.bf16.msra.mxu0 %v850
  %9475 = vmatprep.subr.bf16.mxu0 %v853
  %9476 = vmatpush1.bf16.msra.mxu0 %v852
  %9477 = vmatprep.mubr.bf16.mxu0 %v9181
  %9478 = vmatmul.mubr.bf16.gmra.mrb[0].mxu0 %v9180
  %v9479 = vpop.f32.mrb[0].mxu0
  %v9480 = vadd.f32 0.0, %v9479
  %v9481 = vpop.f32.mrb[0].mxu0
  %v9482 = vadd.f32 0.0, %v9481
  %v9483 = vpop.f32.mrb[0].mxu0
  %v9484 = vpop.f32.mrb[0].mxu0
  %9485 = vdwg.mxu0
  %v9486 = vadd.f32 %v9443, %v9480
  %v9487 = vadd.f32 %v9444, %v9482
  %v9488 = vtanh.pop %v9486
  %v9489 = vtanh.pop %v9487
  %v9490 = vpack.c.bf16 %v9488, %v9488
  %v9491 = vpack.c.bf16 %v9489, %v9489
  %9492 = vmatprep.subr.bf16.mxu0 %v1062
  %9493 = vmatpush1.bf16.msra.mxu0 %v1061
  %9494 = vmatprep.subr.bf16.mxu0 %v1064
  %9495 = vmatpush1.bf16.msra.mxu0 %v1063
  %9496 = vmatprep.subr.bf16.mxu0 %v1066
  %9497 = vmatpush1.bf16.msra.mxu0 %v1065
  %9498 = vmatprep.subr.bf16.mxu0 %v1068
  %9499 = vmatpush1.bf16.msra.mxu0 %v1067
  %9500 = vmatprep.subr.bf16.mxu0 %v1070
  %9501 = vmatpush1.bf16.msra.mxu0 %v1069
  %9502 = vmatprep.subr.bf16.mxu0 %v1072
  %9503 = vmatpush1.bf16.msra.mxu0 %v1071
  %9504 = vmatprep.subr.bf16.mxu0 %v1074
  %9505 = vmatpush1.bf16.msra.mxu0 %v1073
  %9506 = vmatprep.subr.bf16.mxu0 %v1076
  %9507 = vmatpush1.bf16.msra.mxu0 %v1075
  %9508 = vmatprep.subr.bf16.mxu0 %v1078
  %9509 = vmatpush1.bf16.msra.mxu0 %v1077
  %9510 = vmatprep.subr.bf16.mxu0 %v1080
  %9511 = vmatpush1.bf16.msra.mxu0 %v1079
  %9512 = vmatprep.subr.bf16.mxu0 %v1082
  %9513 = vmatpush1.bf16.msra.mxu0 %v1081
  %9514 = vmatprep.subr.bf16.mxu0 %v1084
  %9515 = vmatpush1.bf16.msra.mxu0 %v1083
  %9516 = vmatprep.subr.bf16.mxu0 %v1086
  %9517 = vmatpush1.bf16.msra.mxu0 %v1085
  %9518 = vmatprep.subr.bf16.mxu0 %v1088
  %9519 = vmatpush1.bf16.msra.mxu0 %v1087
  %9520 = vmatprep.subr.bf16.mxu0 %v1090
  %9521 = vmatpush1.bf16.msra.mxu0 %v1089
  %9522 = vmatprep.subr.bf16.mxu0 %v1092
  %9523 = vmatpush1.bf16.msra.mxu0 %v1091
  %9524 = vmatprep.mubr.bf16.mxu0 %v9491
  %9525 = vmatmul.mubr.bf16.gmra.mrb[0].mxu0 %v9490
  %v9526 = vpop.f32.mrb[0].mxu0
  %v9527 = vadd.f32 %v9434, %v9526
  %v9528 = vpop.f32.mrb[0].mxu0
  %v9529 = vadd.f32 %v9436, %v9528
  %v9530 = vpop.f32.mrb[0].mxu0
  %v9531 = vpop.f32.mrb[0].mxu0
  %9532 = vdwg.mxu0
  %v9533 = vadd.f32 %v9527, %v449
  %v9534 = vadd.f32 %v9529, %v453
  %v9535 = vtanh.pop %v9533
  %v9536 = vtanh.pop %v9534
  %v9537 = vpack.c.bf16 %v9535, %v9535
  %v9538 = vpack.c.bf16 %v9536, %v9536
  %s9539 = scalar_lea.vmem %s7, 3456
  %v9540 = vld [vmem:[%s9539] sm:$0xf]
  %v9541 = vld [vmem:[%s9539 + $0x4] sm:$0xf]
  %v9542 = vld [vmem:[%s9539 + $0x8] sm:$0xf]
  %v9543 = vld [vmem:[%s9539 + $0xc] sm:$0xf]
  %v9544 = vld [vmem:[%s9539 + $0x10] sm:$0xf]
  %v9545 = vld [vmem:[%s9539 + $0x14] sm:$0xf]
  %v9546 = vld [vmem:[%s9539 + $0x18] sm:$0xf]
  %v9547 = vld [vmem:[%s9539 + $0x1c] sm:$0xf]
  %v9548 = vld [vmem:[%s9539 + $0x20] sm:$0xf]
  %v9549 = vld [vmem:[%s9539 + $0x24] sm:$0xf]
  %v9550 = vld [vmem:[%s9539 + $0x28] sm:$0xf]
  %v9551 = vld [vmem:[%s9539 + $0x2c] sm:$0xf]
  %v9552 = vld [vmem:[%s9539 + $0x30] sm:$0xf]
  %v9553 = vld [vmem:[%s9539 + $0x34] sm:$0xf]
  %v9554 = vld [vmem:[%s9539 + $0x38] sm:$0xf]
  %v9555 = vld [vmem:[%s9539 + $0x3c] sm:$0xf]
  %v9556 = vld [vmem:[%s9539 + $0x40] sm:$0xf]
  %v9557 = vld [vmem:[%s9539 + $0x44] sm:$0xf]
  %v9558 = vld [vmem:[%s9539 + $0x48] sm:$0xf]
  %v9559 = vld [vmem:[%s9539 + $0x4c] sm:$0xf]
  %v9560 = vld [vmem:[%s9539 + $0x50] sm:$0xf]
  %v9561 = vld [vmem:[%s9539 + $0x54] sm:$0xf]
  %v9562 = vld [vmem:[%s9539 + $0x58] sm:$0xf]
  %v9563 = vld [vmem:[%s9539 + $0x5c] sm:$0xf]
  %v9564 = vld [vmem:[%s9539 + $0x60] sm:$0xf]
  %v9565 = vld [vmem:[%s9539 + $0x64] sm:$0xf]
  %v9566 = vld [vmem:[%s9539 + $0x68] sm:$0xf]
  %v9567 = vld [vmem:[%s9539 + $0x6c] sm:$0xf]
  %v9568 = vld [vmem:[%s9539 + $0x70] sm:$0xf]
  %v9569 = vld [vmem:[%s9539 + $0x74] sm:$0xf]
  %v9570 = vld [vmem:[%s9539 + $0x78] sm:$0xf]
  %v9571 = vld [vmem:[%s9539 + $0x7c] sm:$0xf]
  %v9604 = vunpack.c.l.b16 %v9540
  %v9605 = vunpack.c.l.b16 %v9541
  %v9606 = vunpack.c.l.b16 %v9542
  %v9607 = vunpack.c.l.b16 %v9543
  %v9608 = vunpack.c.l.b16 %v9544
  %v9609 = vunpack.c.l.b16 %v9545
  %v9610 = vunpack.c.l.b16 %v9546
  %v9611 = vunpack.c.l.b16 %v9547
  %v9612 = vunpack.c.l.b16 %v9548
  %v9613 = vunpack.c.l.b16 %v9549
  %v9614 = vunpack.c.l.b16 %v9550
  %v9615 = vunpack.c.l.b16 %v9551
  %v9616 = vunpack.c.l.b16 %v9552
  %v9617 = vunpack.c.l.b16 %v9553
  %v9618 = vunpack.c.l.b16 %v9554
  %v9619 = vunpack.c.l.b16 %v9555
  %v9620 = vunpack.c.l.b16 %v9556
  %v9621 = vunpack.c.l.b16 %v9557
  %v9622 = vunpack.c.l.b16 %v9558
  %v9623 = vunpack.c.l.b16 %v9559
  %v9624 = vunpack.c.l.b16 %v9560
  %v9625 = vunpack.c.l.b16 %v9561
  %v9626 = vunpack.c.l.b16 %v9562
  %v9627 = vunpack.c.l.b16 %v9563
  %v9628 = vunpack.c.l.b16 %v9564
  %v9629 = vunpack.c.l.b16 %v9565
  %v9630 = vunpack.c.l.b16 %v9566
  %v9631 = vunpack.c.l.b16 %v9567
  %v9632 = vunpack.c.l.b16 %v9568
  %v9633 = vunpack.c.l.b16 %v9569
  %v9634 = vunpack.c.l.b16 %v9570
  %v9635 = vunpack.c.l.b16 %v9571
  %v9636 = vpack.c.b16 %v9605, %v9604
  %v9637 = vpack.c.b16 %v9607, %v9606
  %v9638 = vpack.c.b16 %v9609, %v9608
  %v9639 = vpack.c.b16 %v9611, %v9610
  %v9640 = vpack.c.b16 %v9613, %v9612
  %v9641 = vpack.c.b16 %v9615, %v9614
  %v9642 = vpack.c.b16 %v9617, %v9616
  %v9643 = vpack.c.b16 %v9619, %v9618
  %v9644 = vpack.c.b16 %v9621, %v9620
  %v9645 = vpack.c.b16 %v9623, %v9622
  %v9646 = vpack.c.b16 %v9625, %v9624
  %v9647 = vpack.c.b16 %v9627, %v9626
  %v9648 = vpack.c.b16 %v9629, %v9628
  %v9649 = vpack.c.b16 %v9631, %v9630
  %v9650 = vpack.c.b16 %v9633, %v9632
  %v9651 = vpack.c.b16 %v9635, %v9634
  %9668 = vmatprep.subr.bf16.mxu0 0
  %9669 = vmatpush1.bf16.msra.mxu0 %v9636
  %9670 = vmatprep.subr.bf16.mxu0 0
  %9671 = vmatpush1.bf16.msra.mxu0 %v9637
  %9672 = vmatprep.subr.bf16.mxu0 0
  %9673 = vmatpush1.bf16.msra.mxu0 %v9638
  %9674 = vmatprep.subr.bf16.mxu0 0
  %9675 = vmatpush1.bf16.msra.mxu0 %v9639
  %9676 = vmatprep.subr.bf16.mxu0 0
  %9677 = vmatpush1.bf16.msra.mxu0 %v9640
  %9678 = vmatprep.subr.bf16.mxu0 0
  %9679 = vmatpush1.bf16.msra.mxu0 %v9641
  %9680 = vmatprep.subr.bf16.mxu0 0
  %9681 = vmatpush1.bf16.msra.mxu0 %v9642
  %9682 = vmatprep.subr.bf16.mxu0 0
  %9683 = vmatpush1.bf16.msra.mxu0 %v9643
  %9684 = vmatprep.subr.bf16.mxu0 0
  %9685 = vmatpush1.bf16.msra.mxu0 %v9644
  %9686 = vmatprep.subr.bf16.mxu0 0
  %9687 = vmatpush1.bf16.msra.mxu0 %v9645
  %9688 = vmatprep.subr.bf16.mxu0 0
  %9689 = vmatpush1.bf16.msra.mxu0 %v9646
  %9690 = vmatprep.subr.bf16.mxu0 0
  %9691 = vmatpush1.bf16.msra.mxu0 %v9647
  %9692 = vmatprep.subr.bf16.mxu0 0
  %9693 = vmatpush1.bf16.msra.mxu0 %v9648
  %9694 = vmatprep.subr.bf16.mxu0 0
  %9695 = vmatpush1.bf16.msra.mxu0 %v9649
  %9696 = vmatprep.subr.bf16.mxu0 0
  %9697 = vmatpush1.bf16.msra.mxu0 %v9650
  %9698 = vmatprep.subr.bf16.mxu0 0
  %9699 = vmatpush1.bf16.msra.mxu0 %v9651
  %9700 = vmatprep.mubr.bf16.mxu0 %v9538
  %9701 = vmatmul.mubr.bf16.gmra.mrb[0].mxu0 %v9537
  %v9702 = vpop.f32.mrb[0].mxu0
  %v9703 = vadd.f32 0.0, %v9702
  %v9704 = vpop.f32.mrb[0].mxu0
  %v9705 = vpop.f32.mrb[0].mxu0
  %v9706 = vpop.f32.mrb[0].mxu0
  %9707 = vdwg.mxu0
  %v9708 = vadd.f32 %v9398, %v9703
  %v9709 = vld [vmem:[%s8] sm:$0x1]
  %v9711 = vlaneseq
  %v9712 = vshrl.u32 %v9711, 7
  %v9713 = vsub.s32 0, %v9712
  %v9714 = vrot.slane %v9709, %v9713
  %v9716 = vadd.f32 %v9708, %v9714
  %9717 = vst [vmem:[%s9] sm:$0xff] %v9716
  // Predicated region
  $region38: #{rnn_forward.1} parent=0 // pred_check
    _
  $region39: #{rnn_forward.1} parent=0 // pred_check_branch
    %9719 = sbr.rel (0) target = $region41
  $region40: #{rnn_forward.1} parent=0 // pred_region
    _
  $region41: #{rnn_forward.1} parent=0 // pred_fallthru
    _
  // Predicated region
  $region42: #{rnn_forward.1} parent=0 // pred_check
    _
  $region43: #{rnn_forward.1} parent=0 // pred_check_branch
    %9721 = sbr.rel (0) target = $region45
  $region44: #{rnn_forward.1} parent=0 // pred_region
    _
  $region45: #{rnn_forward.1} parent=0 // pred_fallthru
    _

</llo_original>
